<compile_context>
chip_gen: v5e
topology: v5e:2x2
jax: 0.10.0
libtpu: 0.0.40
codegen_flags: <defaults>
</compile_context>

<pallas_src>
import functools

import jax
import jax.numpy as jnp
import numpy as np
from jax.experimental import pallas as pl
from jax.experimental.pallas import tpu as pltpu

_LANE = 128
_SUBLANE = 8


def _round_up(x, m):
    return ((x + m - 1) // m) * m


# ----------------------------------------------------------------------------
# Wrapper-side weight canonicalization (one-time, weight-sized work only).
# Padded gate layout along the 3*Hp axis is [r | z | n], each Hp wide with the valid H
# channels first; padded rows/cols are zero, so padded hidden channels stay exactly 0.
# ----------------------------------------------------------------------------
def _pad_gate_cols(w_t, H, Hp):
    """w_t: (E, 3H) gate-blocked [r|z|n] -> (E, 3*Hp)."""
    if Hp == H:
        return w_t
    E = w_t.shape[0]
    out = jnp.zeros((E, 3 * Hp), w_t.dtype)
    for g in range(3):
        out = out.at[:, g * Hp:g * Hp + H].set(w_t[:, g * H:(g + 1) * H])
    return out


def _pad_gate_bias(b, H, Hp):
    """b: (3H,) -> (1, 3*Hp) float32 (biases stay f32; they add into f32 accumulators)."""
    b = b.astype(jnp.float32)
    if Hp == H:
        return b.reshape(1, 3 * H)
    out = jnp.zeros((3 * Hp,), jnp.float32)
    for g in range(3):
        out = out.at[g * Hp:g * Hp + H].set(b[g * H:(g + 1) * H])
    return out.reshape(1, 3 * Hp)


def _prep_wih(w_ih, col_slices, padded_widths, H, Hp, dtype):
    """Split W_ih (3H, E_total) per input stream, transpose, lane-pad gates, row-pad streams."""
    outs = []
    for sl, wpad in zip(col_slices, padded_widths):
        part = jnp.transpose(w_ih[:, sl])           # (E_s, 3H)
        part = _pad_gate_cols(part, H, Hp)          # (E_s, 3Hp)
        e_s = part.shape[0]
        if wpad > e_s:
            part = jnp.pad(part, ((0, wpad - e_s), (0, 0)))
        outs.append(part.astype(dtype))
    return outs


def _prep_whh_blockdiag(w_hh_f, w_hh_b, H, Hp, dtype):
    """Block-diag([W_hh_f^T, W_hh_b^T]) -> (2Hp, 6Hp): one MXU matmul serves both directions."""
    def one(w):
        wt = _pad_gate_cols(jnp.transpose(w), H, Hp)      # (H, 3Hp)
        return jnp.pad(wt, ((0, Hp - H), (0, 0)))         # (Hp, 3Hp)
    bd = jnp.zeros((2 * Hp, 6 * Hp), jnp.float32)
    bd = bd.at[:Hp, :3 * Hp].set(one(w_hh_f))
    bd = bd.at[Hp:, 3 * Hp:].set(one(w_hh_b))
    return bd.astype(dtype)


# ----------------------------------------------------------------------------
# Fused bidirectional-GRU chunk kernel:
#   preamble: chunk-level input projection for both directions (parallel MXU work, VMEM-only)
#   loop:     serial recurrence, one block-diagonal MXU matmul + VPU gate math per step
# ----------------------------------------------------------------------------
def _make_bigru_kernel(*, n_streams, Tc, B, Hp, nc, T_real, mxu_dtype, unroll, needs_mask):
    H3 = 3 * Hp

    def kernel(*refs):
        assert len(refs) == 4 * n_streams + 4 + 3 + 3
        k = 0
        xf, xb, wf, wb = [], [], [], []
        for _ in range(n_streams):
            xf.append(refs[k + 0]); xb.append(refs[k + 1])
            wf.append(refs[k + 2]); wb.append(refs[k + 3])
            k += 4
        bih_f, bih_b, whh_ref, bhh_ref = refs[k:k + 4]; k += 4
        outf_ref, outb_ref, hN_ref = refs[k:k + 3]; k += 3
        gif_scr, gib_scr, h_scr = refs[k:k + 3]

        c = pl.program_id(0)

        @pl.when(c == 0)
        def _init():
            h_scr[...] = jnp.zeros_like(h_scr)      # GRU h0 == 0 -> no h0 input DMA

        # ---- chunk-level input projection (fused; gi never leaves VMEM) ----
        def project(x_refs, w_refs, b_ref, gi_scr):
            acc = None
            for s in range(n_streams):
                d = jnp.dot(x_refs[s][...], w_refs[s][...],
                            preferred_element_type=jnp.float32)
                acc = d if acc is None else acc + d
            gi_scr[...] = acc + b_ref[...]

        project(xf, wf, bih_f, gif_scr)             # gi for forward-time chunk c
        project(xb, wb, bih_b, gib_scr)             # gi for backward-time chunk nc-1-c

        # ---- serial recurrence over the chunk (both directions per step) ----
        whh = whh_ref[...]                                      # (2Hp, 6Hp) block-diag, hoisted
        bhh = jnp.broadcast_to(bhh_ref[...], (B, 2 * H3))       # hoisted out of the loop

        def gru_gates(gi, gh, h_prev):
            rz = jax.nn.sigmoid(gi[:, :2 * Hp] + gh[:, :2 * Hp])   # one wide sigmoid for r,z
            r = rz[:, :Hp]
            z = rz[:, Hp:]
            n = jnp.tanh(gi[:, 2 * Hp:] + r * gh[:, 2 * Hp:])
            return (1.0 - z) * n + z * h_prev

        def step(i, carry):
            row_f = pl.multiple_of(i * B, B)                    # sublane-aligned (B % 8 == 0)
            row_b = pl.multiple_of((Tc - 1 - i) * B, B)
            h_cat = h_scr[...]                                  # (B, 2Hp) f32 carried state
            gh = jnp.dot(h_cat.astype(mxu_dtype), whh,
                         preferred_element_type=jnp.float32) + bhh   # one MXU op, both dirs
            h_f_prev = h_cat[:, :Hp]
            h_b_prev = h_cat[:, Hp:]
            hf = gru_gates(gif_scr[pl.ds(row_f, B), :], gh[:, :H3], h_f_prev)
            hb = gru_gates(gib_scr[pl.ds(row_b, B), :], gh[:, H3:], h_b_prev)
            if needs_mask:
                # timesteps padded past the true T keep h unchanged (correct hN and out_bwd)
                hf = jnp.where(c * Tc + i < T_real, hf, h_f_prev)
                hb = jnp.where((nc - 1 - c) * Tc + (Tc - 1 - i) < T_real, hb, h_b_prev)
            h_scr[...] = jnp.concatenate([hf, hb], axis=-1)
            outf_ref[pl.ds(row_f, B), :] = hf.astype(outf_ref.dtype)
            outb_ref[pl.ds(row_b, B), :] = hb.astype(outb_ref.dtype)
            return carry

        jax.lax.fori_loop(0, Tc, step, 0, unroll=unroll)

        @pl.when(c == pl.num_programs(0) - 1)
        def _final():
            hN_ref[0] = h_scr[:, :Hp].astype(hN_ref.dtype)
            hN_ref[1] = h_scr[:, Hp:].astype(hN_ref.dtype)

    return kernel


def bigru_layer(streams, wih_f, wih_b, bih_f, bih_b, whh_bd, bhh_cat, *,
                Tc, nc, B_pad, Hp, T_real, mxu_dtype, unroll):
    """streams: list of (T_pad*B_pad, E_s) time-major activations.
    Returns out_f, out_b: (T_pad*B_pad, Hp) and hN: (2, B_pad, Hp)."""
    n_streams = len(streams)
    rows = nc * Tc * B_pad
    if unroll is True or (isinstance(unroll, int) and unroll >= Tc):
        unroll_eff = True
    else:
        unroll_eff = max(1, int(unroll))

    kernel = _make_bigru_kernel(
        n_streams=n_streams, Tc=Tc, B=B_pad, Hp=Hp, nc=nc, T_real=T_real,
        mxu_dtype=mxu_dtype, unroll=unroll_eff, needs_mask=(nc * Tc != T_real))

    in_specs, args = [], []
    for x, w_f, w_b in zip(streams, wih_f, wih_b):
        e_s = x.shape[-1]
        in_specs += [
            pl.BlockSpec((Tc * B_pad, e_s), lambda c: (c, 0)),            # fwd-time chunk
            pl.BlockSpec((Tc * B_pad, e_s), lambda c: (nc - 1 - c, 0)),   # bwd-time chunk (reversed)
            pl.BlockSpec((e_s, 3 * Hp), lambda c: (0, 0)),                # W_ih fwd (pre-T, padded)
            pl.BlockSpec((e_s, 3 * Hp), lambda c: (0, 0)),                # W_ih bwd
        ]
        args += [x, x, w_f, w_b]
    in_specs += [
        pl.BlockSpec((1, 3 * Hp), lambda c: (0, 0)),                      # b_ih fwd
        pl.BlockSpec((1, 3 * Hp), lambda c: (0, 0)),                      # b_ih bwd
        pl.BlockSpec((2 * Hp, 6 * Hp), lambda c: (0, 0)),                 # block-diag W_hh
        pl.BlockSpec((1, 6 * Hp), lambda c: (0, 0)),                      # [b_hh fwd | b_hh bwd]
    ]
    args += [bih_f, bih_b, whh_bd, bhh_cat]

    out_dtype = mxu_dtype
    out_f, out_b, hN = pl.pallas_call(
        kernel,
        out_shape=(jax.ShapeDtypeStruct((rows, Hp), out_dtype),
                   jax.ShapeDtypeStruct((rows, Hp), out_dtype),
                   jax.ShapeDtypeStruct((2, B_pad, Hp), out_dtype)),
        grid_spec=pltpu.PrefetchScalarGridSpec(
            num_scalar_prefetch=0,
            grid=(nc,),
            in_specs=in_specs,
            out_specs=[
                pl.BlockSpec((Tc * B_pad, Hp), lambda c: (c, 0)),             # out fwd
                pl.BlockSpec((Tc * B_pad, Hp), lambda c: (nc - 1 - c, 0)),    # out bwd (reversed)
                pl.BlockSpec((2, B_pad, Hp), lambda c: (0, 0, 0)),            # final hidden
            ],
            scratch_shapes=[
                pltpu.VMEM((Tc * B_pad, 3 * Hp), jnp.float32),   # gi fwd chunk (VMEM only)
                pltpu.VMEM((Tc * B_pad, 3 * Hp), jnp.float32),   # gi bwd chunk (VMEM only)
                pltpu.VMEM((B_pad, 2 * Hp), jnp.float32),        # [h_fwd | h_bwd] f32 carry
            ]),
        compiler_params=pltpu.CompilerParams(
            dimension_semantics=("arbitrary",),          # hidden state carries across chunks
            vmem_limit_bytes=32 * 1024 * 1024),          # explicit budget, safe on v5e/v6e/v7x
    )(*args)
    return out_f, out_b, hN


# ----------------------------------------------------------------------------
# Encoder forward (embedding gather + stacked bidirectional GRU).
# ----------------------------------------------------------------------------
def encoder_forward(source, params, n_layers, hidden_size, *,
                    time_chunk=32, mxu_dtype=jnp.float32, unroll=8):
    """source: (T, B) int32 tokens. Returns output (T, B, 2H), hidden (2*n_layers, B, H)."""
    T, B = source.shape
    H = hidden_size
    Hp = _round_up(H, _LANE)
    B_pad = _round_up(B, _SUBLANE)
    Tc = min(time_chunk, T)
    T_pad = _round_up(T, Tc)
    nc = T_pad // Tc

    # Embedding lookup; nn.Dropout is identity in eval mode.
    # TODO(synk): training-mode dropout (PRNG mask) not emitted.
    # TODO(synk): the gather could be fused into the kernel (scalar-prefetched ids + pl.Element
    #             row-gather BlockSpec); kept as jnp.take — minor win at these sizes.
    x = jnp.take(params["embedding"], source, axis=0).astype(mxu_dtype)   # (T, B, E)
    x = jnp.pad(x, ((0, T_pad - T), (0, B_pad - B), (0, 0)))
    E = x.shape[-1]
    streams = [x.reshape(T_pad * B_pad, E)]   # collapse (T, B) -> rows; metadata-only reshape

    finals = []
    for layer in range(n_layers):
        w_ih_f, w_hh_f, b_ih_f, b_hh_f = params[f"l{layer}_fwd"]
        w_ih_b, w_hh_b, b_ih_b, b_hh_b = params[f"l{layer}_bwd"]

        if layer == 0:
            col_slices, widths = [slice(0, E)], [E]
        else:
            # Previous layer's fwd/bwd outputs stay separate (no (T,B,2H) concat round trip);
            # W_ih is split into its fwd-half / bwd-half input columns instead.
            col_slices, widths = [slice(0, H), slice(H, 2 * H)], [Hp, Hp]

        out_f, out_b, hN = bigru_layer(
            streams,
            _prep_wih(w_ih_f, col_slices, widths, H, Hp, mxu_dtype),
            _prep_wih(w_ih_b, col_slices, widths, H, Hp, mxu_dtype),
            _pad_gate_bias(b_ih_f, H, Hp),
            _pad_gate_bias(b_ih_b, H, Hp),
            _prep_whh_blockdiag(w_hh_f, w_hh_b, H, Hp, mxu_dtype),
            jnp.concatenate([_pad_gate_bias(b_hh_f, H, Hp),
                             _pad_gate_bias(b_hh_b, H, Hp)], axis=-1),
            Tc=Tc, nc=nc, B_pad=B_pad, Hp=Hp, T_real=T,
            mxu_dtype=mxu_dtype, unroll=unroll)
        streams = [out_f, out_b]
        finals.append(hN)

    out_f = streams[0].reshape(T_pad, B_pad, Hp)[:T, :B, :H]
    out_b = streams[1].reshape(T_pad, B_pad, Hp)[:T, :B, :H]
    output = jnp.concatenate([out_f, out_b], axis=-1).astype(jnp.float32)
    hidden = jnp.concatenate([h[:, :B, :H] for h in finals], axis=0).astype(jnp.float32)
    return output, hidden


# ----------------------------------------------------------------------------
# Pure-JAX reference (lax.scan) for correctness checking.
# ----------------------------------------------------------------------------
def _ref_gru_direction(x, h0, w_ih, w_hh, b_ih, b_hh):
    H = h0.shape[-1]

    def step(h, x_t):
        gi = x_t @ w_ih.T + b_ih
        gh = h @ w_hh.T + b_hh
        r = jax.nn.sigmoid(gi[:, :H] + gh[:, :H])
        z = jax.nn.sigmoid(gi[:, H:2 * H] + gh[:, H:2 * H])
        n = jnp.tanh(gi[:, 2 * H:] + r * gh[:, 2 * H:])
        h_new = (1.0 - z) * n + z * h
        return h_new, h_new

    hN, out = jax.lax.scan(step, h0, x)
    return out, hN


def encoder_forward_ref(source, params, n_layers, hidden_size):
    T, B = source.shape
    x = jnp.take(params["embedding"], source, axis=0)
    h0 = jnp.zeros((B, hidden_size), jnp.float32)
    finals = []
    for layer in range(n_layers):
        out_f, h_f = _ref_gru_direction(x, h0, *params[f"l{layer}_fwd"])
        out_b_rev, h_b = _ref_gru_direction(jnp.flip(x, axis=0), h0, *params[f"l{layer}_bwd"])
        out_b = jnp.flip(out_b_rev, axis=0)
        x = jnp.concatenate([out_f, out_b], axis=-1)
        finals += [h_f, h_b]
    return x, jnp.stack(finals, axis=0)


# ----------------------------------------------------------------------------
# Deterministic parameter init (matches nn.Embedding / nn.GRU shapes).
# ----------------------------------------------------------------------------
def init_params(key, input_size, embed_size, hidden_size, n_layers):
    params = {}
    k_emb, key = jax.random.split(key)
    params["embedding"] = jax.random.normal(k_emb, (input_size, embed_size), jnp.float32)

    bound = 1.0 / np.sqrt(hidden_size)
    for layer in range(n_layers):
        e_in = embed_size if layer == 0 else 2 * hidden_size
        for tag in ("fwd", "bwd"):
            key, k1, k2, k3, k4 = jax.random.split(key, 5)
            w_ih = jax.random.uniform(k1, (3 * hidden_size, e_in), jnp.float32, -bound, bound)
            w_hh = jax.random.uniform(k2, (3 * hidden_size, hidden_size), jnp.float32, -bound, bound)
            b_ih = jax.random.uniform(k3, (3 * hidden_size,), jnp.float32, -bound, bound)
            b_hh = jax.random.uniform(k4, (3 * hidden_size,), jnp.float32, -bound, bound)
            params[f"l{layer}_{tag}"] = (w_ih, w_hh, b_ih, b_hh)
    return params


if __name__ == "__main__":
    INPUT_SIZE = 50      # vocab
    EMBED_SIZE = 16
    HIDDEN_SIZE = 32
    N_LAYERS = 2
    T, B = 8, 2

    key = jax.random.PRNGKey(0)
    k_src, k_par = jax.random.split(key)
    source = jax.random.randint(k_src, (T, B), 0, INPUT_SIZE, dtype=jnp.int32)
    params = init_params(k_par, INPUT_SIZE, EMBED_SIZE, HIDDEN_SIZE, N_LAYERS)

    out_ref, hid_ref = encoder_forward_ref(source, params, N_LAYERS, HIDDEN_SIZE)

    # Config A: f32 MXU path, time_chunk=5 -> T padded 8->10 with 2 chunks, exercising the
    # reversed index_maps, the in-kernel tail masking and the lane/sublane padding paths.
    fwd_f32 = functools.partial(encoder_forward, n_layers=N_LAYERS, hidden_size=HIDDEN_SIZE,
                                time_chunk=5, mxu_dtype=jnp.float32, unroll=8)
    out32, hid32 = jax.block_until_ready(jax.jit(fwd_f32)(source, params))
    assert out32.shape == (T, B, 2 * HIDDEN_SIZE), out32.shape
    assert hid32.shape == (N_LAYERS * 2, B, HIDDEN_SIZE), hid32.shape
    np.testing.assert_allclose(np.asarray(out32), np.asarray(out_ref), rtol=1e-4, atol=1e-4)
    np.testing.assert_allclose(np.asarray(hid32), np.asarray(hid_ref), rtol=1e-4, atol=1e-4)

    # Config B: bf16 MXU operands / bf16 inter-layer activations (f32 accumulate, f32 carried
    # hidden state), exact chunking; looser tolerance for the low-precision path.
    fwd_bf16 = functools.partial(encoder_forward, n_layers=N_LAYERS, hidden_size=HIDDEN_SIZE,
                                 time_chunk=4, mxu_dtype=jnp.bfloat16, unroll=8)
    outbf, hidbf = jax.block_until_ready(jax.jit(fwd_bf16)(source, params))
    np.testing.assert_allclose(np.asarray(outbf), np.asarray(out_ref), rtol=5e-2, atol=1e-1)
    np.testing.assert_allclose(np.asarray(hidbf), np.asarray(hid_ref), rtol=5e-2, atol=1e-1)

    print("KERNEL_OK")
</pallas_src>

<mosaic_0001>
module attributes {stable_mosaic.version = 11 : i64} {
  func.func @kernel(%arg0: i32, %arg1: memref<40x128xf32, #tpu.memory_space<vmem>>, %arg2: memref<40x128xf32, #tpu.memory_space<vmem>>, %arg3: memref<128x384xf32, #tpu.memory_space<vmem>>, %arg4: memref<128x384xf32, #tpu.memory_space<vmem>>, %arg5: memref<40x128xf32, #tpu.memory_space<vmem>>, %arg6: memref<40x128xf32, #tpu.memory_space<vmem>>, %arg7: memref<128x384xf32, #tpu.memory_space<vmem>>, %arg8: memref<128x384xf32, #tpu.memory_space<vmem>>, %arg9: memref<1x384xf32, #tpu.memory_space<vmem>>, %arg10: memref<1x384xf32, #tpu.memory_space<vmem>>, %arg11: memref<256x768xf32, #tpu.memory_space<vmem>>, %arg12: memref<1x768xf32, #tpu.memory_space<vmem>>, %arg13: memref<40x128xf32, #tpu.memory_space<vmem>>, %arg14: memref<40x128xf32, #tpu.memory_space<vmem>>, %arg15: memref<2x8x128xf32, #tpu.memory_space<vmem>>, %arg16: memref<40x384xf32, #tpu.memory_space<vmem>>, %arg17: memref<40x384xf32, #tpu.memory_space<vmem>>, %arg18: memref<8x256xf32, #tpu.memory_space<vmem>>) attributes {dimension_semantics = [#tpu.dimension_semantics<arbitrary>], iteration_bounds = array<i64: 2>, scalar_prefetch = 0 : i64, scratch_operands = 3 : i64, tpu.core_type = #tpu.core_type<tc>, window_params = [{transform_indices = @transform_0, window_bounds = array<i64: 40, 128>}, {transform_indices = @transform_1, window_bounds = array<i64: 40, 128>}, {pipeline_mode = #tpu.pipeline_mode<synchronous>, transform_indices = @transform_2, window_bounds = array<i64: 128, 384>}, {pipeline_mode = #tpu.pipeline_mode<synchronous>, transform_indices = @transform_3, window_bounds = array<i64: 128, 384>}, {transform_indices = @transform_4, window_bounds = array<i64: 40, 128>}, {transform_indices = @transform_5, window_bounds = array<i64: 40, 128>}, {pipeline_mode = #tpu.pipeline_mode<synchronous>, transform_indices = @transform_6, window_bounds = array<i64: 128, 384>}, {pipeline_mode = #tpu.pipeline_mode<synchronous>, transform_indices = @transform_7, window_bounds = array<i64: 128, 384>}, {pipeline_mode = #tpu.pipeline_mode<synchronous>, transform_indices = @transform_8, window_bounds = array<i64: 1, 384>}, {pipeline_mode = #tpu.pipeline_mode<synchronous>, transform_indices = @transform_9, window_bounds = array<i64: 1, 384>}, {pipeline_mode = #tpu.pipeline_mode<synchronous>, transform_indices = @transform_10, window_bounds = array<i64: 256, 768>}, {pipeline_mode = #tpu.pipeline_mode<synchronous>, transform_indices = @transform_11, window_bounds = array<i64: 1, 768>}, {transform_indices = @transform_12, window_bounds = array<i64: 40, 128>}, {transform_indices = @transform_13, window_bounds = array<i64: 40, 128>}, {pipeline_mode = #tpu.pipeline_mode<synchronous>, transform_indices = @transform_14, window_bounds = array<i64: 2, 8, 128>}]} {
    %c0_i32 = arith.constant 0 : i32
    %0 = arith.cmpi eq, %arg0, %c0_i32 : i32
    %1 = arith.extui %0 : i1 to i32
    %c0_i32_0 = arith.constant 0 : i32
    %2 = arith.cmpi ne, %1, %c0_i32_0 : i32
    scf.if %2 {
      %cst_143 = arith.constant 0.000000e+00 : f32
      %392 = vector.broadcast %cst_143 : f32 to vector<8x256xf32>
      %c0_144 = arith.constant 0 : index
      %c0_145 = arith.constant 0 : index
      %393 = vector.load %arg18[%c0_144, %c0_145] : memref<8x256xf32, #tpu.memory_space<vmem>>, vector<8x256xf32>
      tpu.vector_store %arg18[%c0_144, %c0_145], %392 {strides = array<i32>} : memref<8x256xf32, #tpu.memory_space<vmem>>, vector<8x256xf32>,
    } else {
    }
    %c0 = arith.constant 0 : index
    %c0_1 = arith.constant 0 : index
    %3 = vector.load %arg1[%c0, %c0_1] : memref<40x128xf32, #tpu.memory_space<vmem>>, vector<40x128xf32>
    %c0_2 = arith.constant 0 : index
    %c0_3 = arith.constant 0 : index
    %4 = vector.load %arg3[%c0_2, %c0_3] : memref<128x384xf32, #tpu.memory_space<vmem>>, vector<128x384xf32>
    %cst = arith.constant dense<0.000000e+00> : vector<40x384xf32>
    %5 = tpu.matmul %3, %4, %cst {dimension_numbers = #tpu.dot_dimension_numbers<[1], [0], [0], [1], [0, 0, 1, 1], [], []>} : vector<40x128xf32>, vector<128x384xf32>, vector<40x384xf32> -> vector<40x384xf32>
    %c0_4 = arith.constant 0 : index
    %c0_5 = arith.constant 0 : index
    %6 = vector.load %arg5[%c0_4, %c0_5] : memref<40x128xf32, #tpu.memory_space<vmem>>, vector<40x128xf32>
    %c0_6 = arith.constant 0 : index
    %c0_7 = arith.constant 0 : index
    %7 = vector.load %arg7[%c0_6, %c0_7] : memref<128x384xf32, #tpu.memory_space<vmem>>, vector<128x384xf32>
    %cst_8 = arith.constant dense<0.000000e+00> : vector<40x384xf32>
    %8 = tpu.matmul %6, %7, %cst_8 {dimension_numbers = #tpu.dot_dimension_numbers<[1], [0], [0], [1], [0, 0, 1, 1], [], []>} : vector<40x128xf32>, vector<128x384xf32>, vector<40x384xf32> -> vector<40x384xf32>
    %9 = arith.addf %5, %8 : vector<40x384xf32>
    %c0_9 = arith.constant 0 : index
    %c0_10 = arith.constant 0 : index
    %10 = vector.load %arg9[%c0_9, %c0_10] : memref<1x384xf32, #tpu.memory_space<vmem>>, vector<1x384xf32>
    %11 = vector.broadcast %10 : vector<1x384xf32> to vector<40x384xf32>
    %12 = arith.addf %9, %11 : vector<40x384xf32>
    %c0_11 = arith.constant 0 : index
    %c0_12 = arith.constant 0 : index
    %13 = vector.load %arg16[%c0_11, %c0_12] : memref<40x384xf32, #tpu.memory_space<vmem>>, vector<40x384xf32>
    tpu.vector_store %arg16[%c0_11, %c0_12], %12 {strides = array<i32>} : memref<40x384xf32, #tpu.memory_space<vmem>>, vector<40x384xf32>,
    %c0_13 = arith.constant 0 : index
    %c0_14 = arith.constant 0 : index
    %14 = vector.load %arg2[%c0_13, %c0_14] : memref<40x128xf32, #tpu.memory_space<vmem>>, vector<40x128xf32>
    %c0_15 = arith.constant 0 : index
    %c0_16 = arith.constant 0 : index
    %15 = vector.load %arg4[%c0_15, %c0_16] : memref<128x384xf32, #tpu.memory_space<vmem>>, vector<128x384xf32>
    %cst_17 = arith.constant dense<0.000000e+00> : vector<40x384xf32>
    %16 = tpu.matmul %14, %15, %cst_17 {dimension_numbers = #tpu.dot_dimension_numbers<[1], [0], [0], [1], [0, 0, 1, 1], [], []>} : vector<40x128xf32>, vector<128x384xf32>, vector<40x384xf32> -> vector<40x384xf32>
    %c0_18 = arith.constant 0 : index
    %c0_19 = arith.constant 0 : index
    %17 = vector.load %arg6[%c0_18, %c0_19] : memref<40x128xf32, #tpu.memory_space<vmem>>, vector<40x128xf32>
    %c0_20 = arith.constant 0 : index
    %c0_21 = arith.constant 0 : index
    %18 = vector.load %arg8[%c0_20, %c0_21] : memref<128x384xf32, #tpu.memory_space<vmem>>, vector<128x384xf32>
    %cst_22 = arith.constant dense<0.000000e+00> : vector<40x384xf32>
    %19 = tpu.matmul %17, %18, %cst_22 {dimension_numbers = #tpu.dot_dimension_numbers<[1], [0], [0], [1], [0, 0, 1, 1], [], []>} : vector<40x128xf32>, vector<128x384xf32>, vector<40x384xf32> -> vector<40x384xf32>
    %20 = arith.addf %16, %19 : vector<40x384xf32>
    %c0_23 = arith.constant 0 : index
    %c0_24 = arith.constant 0 : index
    %21 = vector.load %arg10[%c0_23, %c0_24] : memref<1x384xf32, #tpu.memory_space<vmem>>, vector<1x384xf32>
    %22 = vector.broadcast %21 : vector<1x384xf32> to vector<40x384xf32>
    %23 = arith.addf %20, %22 : vector<40x384xf32>
    %c0_25 = arith.constant 0 : index
    %c0_26 = arith.constant 0 : index
    %24 = vector.load %arg17[%c0_25, %c0_26] : memref<40x384xf32, #tpu.memory_space<vmem>>, vector<40x384xf32>
    tpu.vector_store %arg17[%c0_25, %c0_26], %23 {strides = array<i32>} : memref<40x384xf32, #tpu.memory_space<vmem>>, vector<40x384xf32>,
    %c0_27 = arith.constant 0 : index
    %c0_28 = arith.constant 0 : index
    %25 = vector.load %arg11[%c0_27, %c0_28] : memref<256x768xf32, #tpu.memory_space<vmem>>, vector<256x768xf32>
    %c0_29 = arith.constant 0 : index
    %c0_30 = arith.constant 0 : index
    %26 = vector.load %arg12[%c0_29, %c0_30] : memref<1x768xf32, #tpu.memory_space<vmem>>, vector<1x768xf32>
    %27 = vector.shape_cast %26 : vector<1x768xf32> to vector<1x768xf32>
    %28 = vector.broadcast %27 : vector<1x768xf32> to vector<8x768xf32>
    %c0_i32_31 = arith.constant 0 : i32
    %c8_i32 = arith.constant 8 : i32
    %29 = arith.muli %c0_i32_31, %c8_i32 : i32
    %30 = tpu.assume_multiple %29, 8 : i32
    %c4_i32 = arith.constant 4 : i32
    %31 = arith.subi %c4_i32, %c0_i32_31 : i32
    %c8_i32_32 = arith.constant 8 : i32
    %32 = arith.muli %31, %c8_i32_32 : i32
    %33 = tpu.assume_multiple %32, 8 : i32
    %c0_33 = arith.constant 0 : index
    %c0_34 = arith.constant 0 : index
    %34 = vector.load %arg18[%c0_33, %c0_34] : memref<8x256xf32, #tpu.memory_space<vmem>>, vector<8x256xf32>
    %cst_35 = arith.constant dense<0.000000e+00> : vector<8x768xf32>
    %35 = tpu.matmul %34, %25, %cst_35 {dimension_numbers = #tpu.dot_dimension_numbers<[1], [0], [0], [1], [0, 0, 1, 1], [], []>} : vector<8x256xf32>, vector<256x768xf32>, vector<8x768xf32> -> vector<8x768xf32>
    %36 = arith.addf %35, %28 : vector<8x768xf32>
    %37 = vector.extract_strided_slice %34 {offsets = [0, 0], sizes = [8, 128], strides = [1, 1]} : vector<8x256xf32> to vector<8x128xf32>
    %38 = vector.extract_strided_slice %34 {offsets = [0, 128], sizes = [8, 128], strides = [1, 1]} : vector<8x256xf32> to vector<8x128xf32>
    %39 = arith.index_cast %30 : i32 to index
    %c0_36 = arith.constant 0 : index
    %40 = vector.load %arg16[%39, %c0_36] : memref<40x384xf32, #tpu.memory_space<vmem>>, vector<8x384xf32>
    %41 = vector.extract_strided_slice %36 {offsets = [0, 0], sizes = [8, 384], strides = [1, 1]} : vector<8x768xf32> to vector<8x384xf32>
    %42 = vector.extract_strided_slice %40 {offsets = [0, 0], sizes = [8, 256], strides = [1, 1]} : vector<8x384xf32> to vector<8x256xf32>
    %43 = vector.extract_strided_slice %41 {offsets = [0, 0], sizes = [8, 256], strides = [1, 1]} : vector<8x384xf32> to vector<8x256xf32>
    %44 = arith.addf %42, %43 : vector<8x256xf32>
    %45 = arith.negf %44 : vector<8x256xf32>
    %46 = math.exp %45 : vector<8x256xf32>
    %cst_37 = arith.constant 1.000000e+00 : f32
    %47 = vector.broadcast %cst_37 : f32 to vector<8x256xf32>
    %48 = arith.addf %47, %46 : vector<8x256xf32>
    %49 = arith.divf %47, %48 : vector<8x256xf32>
    %50 = vector.extract_strided_slice %49 {offsets = [0, 0], sizes = [8, 128], strides = [1, 1]} : vector<8x256xf32> to vector<8x128xf32>
    %51 = vector.extract_strided_slice %49 {offsets = [0, 128], sizes = [8, 128], strides = [1, 1]} : vector<8x256xf32> to vector<8x128xf32>
    %52 = vector.extract_strided_slice %40 {offsets = [0, 256], sizes = [8, 128], strides = [1, 1]} : vector<8x384xf32> to vector<8x128xf32>
    %53 = vector.extract_strided_slice %41 {offsets = [0, 256], sizes = [8, 128], strides = [1, 1]} : vector<8x384xf32> to vector<8x128xf32>
    %54 = arith.mulf %50, %53 : vector<8x128xf32>
    %55 = arith.addf %52, %54 : vector<8x128xf32>
    %56 = math.tanh %55 : vector<8x128xf32>
    %cst_38 = arith.constant 1.000000e+00 : f32
    %57 = vector.broadcast %cst_38 : f32 to vector<8x128xf32>
    %58 = arith.subf %57, %51 : vector<8x128xf32>
    %59 = arith.mulf %58, %56 : vector<8x128xf32>
    %60 = arith.mulf %51, %37 : vector<8x128xf32>
    %61 = arith.addf %59, %60 : vector<8x128xf32>
    %62 = arith.index_cast %33 : i32 to index
    %c0_39 = arith.constant 0 : index
    %63 = vector.load %arg17[%62, %c0_39] : memref<40x384xf32, #tpu.memory_space<vmem>>, vector<8x384xf32>
    %64 = vector.extract_strided_slice %36 {offsets = [0, 384], sizes = [8, 384], strides = [1, 1]} : vector<8x768xf32> to vector<8x384xf32>
    %65 = vector.extract_strided_slice %63 {offsets = [0, 0], sizes = [8, 256], strides = [1, 1]} : vector<8x384xf32> to vector<8x256xf32>
    %66 = vector.extract_strided_slice %64 {offsets = [0, 0], sizes = [8, 256], strides = [1, 1]} : vector<8x384xf32> to vector<8x256xf32>
    %67 = arith.addf %65, %66 : vector<8x256xf32>
    %68 = arith.negf %67 : vector<8x256xf32>
    %69 = math.exp %68 : vector<8x256xf32>
    %cst_40 = arith.constant 1.000000e+00 : f32
    %70 = vector.broadcast %cst_40 : f32 to vector<8x256xf32>
    %71 = arith.addf %70, %69 : vector<8x256xf32>
    %72 = arith.divf %70, %71 : vector<8x256xf32>
    %73 = vector.extract_strided_slice %72 {offsets = [0, 0], sizes = [8, 128], strides = [1, 1]} : vector<8x256xf32> to vector<8x128xf32>
    %74 = vector.extract_strided_slice %72 {offsets = [0, 128], sizes = [8, 128], strides = [1, 1]} : vector<8x256xf32> to vector<8x128xf32>
    %75 = vector.extract_strided_slice %63 {offsets = [0, 256], sizes = [8, 128], strides = [1, 1]} : vector<8x384xf32> to vector<8x128xf32>
    %76 = vector.extract_strided_slice %64 {offsets = [0, 256], sizes = [8, 128], strides = [1, 1]} : vector<8x384xf32> to vector<8x128xf32>
    %77 = arith.mulf %73, %76 : vector<8x128xf32>
    %78 = arith.addf %75, %77 : vector<8x128xf32>
    %79 = math.tanh %78 : vector<8x128xf32>
    %cst_41 = arith.constant 1.000000e+00 : f32
    %80 = vector.broadcast %cst_41 : f32 to vector<8x128xf32>
    %81 = arith.subf %80, %74 : vector<8x128xf32>
    %82 = arith.mulf %81, %79 : vector<8x128xf32>
    %83 = arith.mulf %74, %38 : vector<8x128xf32>
    %84 = arith.addf %82, %83 : vector<8x128xf32>
    %c5_i32 = arith.constant 5 : i32
    %85 = arith.muli %arg0, %c5_i32 : i32
    %86 = arith.addi %85, %c0_i32_31 : i32
    %c8_i32_42 = arith.constant 8 : i32
    %87 = arith.cmpi slt, %86, %c8_i32_42 : i32
    %88 = arith.select %87, %61, %37 : vector<8x128xf32>
    %c1_i32 = arith.constant 1 : i32
    %89 = arith.subi %c1_i32, %arg0 : i32
    %c5_i32_43 = arith.constant 5 : i32
    %90 = arith.muli %89, %c5_i32_43 : i32
    %c4_i32_44 = arith.constant 4 : i32
    %91 = arith.subi %c4_i32_44, %c0_i32_31 : i32
    %92 = arith.addi %90, %91 : i32
    %c8_i32_45 = arith.constant 8 : i32
    %93 = arith.cmpi slt, %92, %c8_i32_45 : i32
    %94 = arith.select %93, %84, %38 : vector<8x128xf32>
    %95 = tpu.concatenate %88, %94 in 1 : vector<8x128xf32>, vector<8x128xf32> -> vector<8x256xf32>
    %c0_46 = arith.constant 0 : index
    %c0_47 = arith.constant 0 : index
    %96 = vector.load %arg18[%c0_46, %c0_47] : memref<8x256xf32, #tpu.memory_space<vmem>>, vector<8x256xf32>
    tpu.vector_store %arg18[%c0_46, %c0_47], %95 {strides = array<i32>} : memref<8x256xf32, #tpu.memory_space<vmem>>, vector<8x256xf32>,
    %97 = arith.index_cast %30 : i32 to index
    %c0_48 = arith.constant 0 : index
    %98 = vector.load %arg13[%97, %c0_48] : memref<40x128xf32, #tpu.memory_space<vmem>>, vector<8x128xf32>
    tpu.vector_store %arg13[%97, %c0_48], %88 {strides = array<i32>} : memref<40x128xf32, #tpu.memory_space<vmem>>, vector<8x128xf32>,
    %99 = arith.index_cast %33 : i32 to index
    %c0_49 = arith.constant 0 : index
    %100 = vector.load %arg14[%99, %c0_49] : memref<40x128xf32, #tpu.memory_space<vmem>>, vector<8x128xf32>
    tpu.vector_store %arg14[%99, %c0_49], %94 {strides = array<i32>} : memref<40x128xf32, #tpu.memory_space<vmem>>, vector<8x128xf32>,
    %c1_i32_50 = arith.constant 1 : i32
    %c8_i32_51 = arith.constant 8 : i32
    %101 = arith.muli %c1_i32_50, %c8_i32_51 : i32
    %102 = tpu.assume_multiple %101, 8 : i32
    %c4_i32_52 = arith.constant 4 : i32
    %103 = arith.subi %c4_i32_52, %c1_i32_50 : i32
    %c8_i32_53 = arith.constant 8 : i32
    %104 = arith.muli %103, %c8_i32_53 : i32
    %105 = tpu.assume_multiple %104, 8 : i32
    %c0_54 = arith.constant 0 : index
    %c0_55 = arith.constant 0 : index
    %106 = vector.load %arg18[%c0_54, %c0_55] : memref<8x256xf32, #tpu.memory_space<vmem>>, vector<8x256xf32>
    %cst_56 = arith.constant dense<0.000000e+00> : vector<8x768xf32>
    %107 = tpu.matmul %106, %25, %cst_56 {dimension_numbers = #tpu.dot_dimension_numbers<[1], [0], [0], [1], [0, 0, 1, 1], [], []>} : vector<8x256xf32>, vector<256x768xf32>, vector<8x768xf32> -> vector<8x768xf32>
    %108 = arith.addf %107, %28 : vector<8x768xf32>
    %109 = vector.extract_strided_slice %106 {offsets = [0, 0], sizes = [8, 128], strides = [1, 1]} : vector<8x256xf32> to vector<8x128xf32>
    %110 = vector.extract_strided_slice %106 {offsets = [0, 128], sizes = [8, 128], strides = [1, 1]} : vector<8x256xf32> to vector<8x128xf32>
    %111 = arith.index_cast %102 : i32 to index
    %c0_57 = arith.constant 0 : index
    %112 = vector.load %arg16[%111, %c0_57] : memref<40x384xf32, #tpu.memory_space<vmem>>, vector<8x384xf32>
    %113 = vector.extract_strided_slice %108 {offsets = [0, 0], sizes = [8, 384], strides = [1, 1]} : vector<8x768xf32> to vector<8x384xf32>
    %114 = vector.extract_strided_slice %112 {offsets = [0, 0], sizes = [8, 256], strides = [1, 1]} : vector<8x384xf32> to vector<8x256xf32>
    %115 = vector.extract_strided_slice %113 {offsets = [0, 0], sizes = [8, 256], strides = [1, 1]} : vector<8x384xf32> to vector<8x256xf32>
    %116 = arith.addf %114, %115 : vector<8x256xf32>
    %117 = arith.negf %116 : vector<8x256xf32>
    %118 = math.exp %117 : vector<8x256xf32>
    %cst_58 = arith.constant 1.000000e+00 : f32
    %119 = vector.broadcast %cst_58 : f32 to vector<8x256xf32>
    %120 = arith.addf %119, %118 : vector<8x256xf32>
    %121 = arith.divf %119, %120 : vector<8x256xf32>
    %122 = vector.extract_strided_slice %121 {offsets = [0, 0], sizes = [8, 128], strides = [1, 1]} : vector<8x256xf32> to vector<8x128xf32>
    %123 = vector.extract_strided_slice %121 {offsets = [0, 128], sizes = [8, 128], strides = [1, 1]} : vector<8x256xf32> to vector<8x128xf32>
    %124 = vector.extract_strided_slice %112 {offsets = [0, 256], sizes = [8, 128], strides = [1, 1]} : vector<8x384xf32> to vector<8x128xf32>
    %125 = vector.extract_strided_slice %113 {offsets = [0, 256], sizes = [8, 128], strides = [1, 1]} : vector<8x384xf32> to vector<8x128xf32>
    %126 = arith.mulf %122, %125 : vector<8x128xf32>
    %127 = arith.addf %124, %126 : vector<8x128xf32>
    %128 = math.tanh %127 : vector<8x128xf32>
    %cst_59 = arith.constant 1.000000e+00 : f32
    %129 = vector.broadcast %cst_59 : f32 to vector<8x128xf32>
    %130 = arith.subf %129, %123 : vector<8x128xf32>
    %131 = arith.mulf %130, %128 : vector<8x128xf32>
    %132 = arith.mulf %123, %109 : vector<8x128xf32>
    %133 = arith.addf %131, %132 : vector<8x128xf32>
    %134 = arith.index_cast %105 : i32 to index
    %c0_60 = arith.constant 0 : index
    %135 = vector.load %arg17[%134, %c0_60] : memref<40x384xf32, #tpu.memory_space<vmem>>, vector<8x384xf32>
    %136 = vector.extract_strided_slice %108 {offsets = [0, 384], sizes = [8, 384], strides = [1, 1]} : vector<8x768xf32> to vector<8x384xf32>
    %137 = vector.extract_strided_slice %135 {offsets = [0, 0], sizes = [8, 256], strides = [1, 1]} : vector<8x384xf32> to vector<8x256xf32>
    %138 = vector.extract_strided_slice %136 {offsets = [0, 0], sizes = [8, 256], strides = [1, 1]} : vector<8x384xf32> to vector<8x256xf32>
    %139 = arith.addf %137, %138 : vector<8x256xf32>
    %140 = arith.negf %139 : vector<8x256xf32>
    %141 = math.exp %140 : vector<8x256xf32>
    %cst_61 = arith.constant 1.000000e+00 : f32
    %142 = vector.broadcast %cst_61 : f32 to vector<8x256xf32>
    %143 = arith.addf %142, %141 : vector<8x256xf32>
    %144 = arith.divf %142, %143 : vector<8x256xf32>
    %145 = vector.extract_strided_slice %144 {offsets = [0, 0], sizes = [8, 128], strides = [1, 1]} : vector<8x256xf32> to vector<8x128xf32>
    %146 = vector.extract_strided_slice %144 {offsets = [0, 128], sizes = [8, 128], strides = [1, 1]} : vector<8x256xf32> to vector<8x128xf32>
    %147 = vector.extract_strided_slice %135 {offsets = [0, 256], sizes = [8, 128], strides = [1, 1]} : vector<8x384xf32> to vector<8x128xf32>
    %148 = vector.extract_strided_slice %136 {offsets = [0, 256], sizes = [8, 128], strides = [1, 1]} : vector<8x384xf32> to vector<8x128xf32>
    %149 = arith.mulf %145, %148 : vector<8x128xf32>
    %150 = arith.addf %147, %149 : vector<8x128xf32>
    %151 = math.tanh %150 : vector<8x128xf32>
    %cst_62 = arith.constant 1.000000e+00 : f32
    %152 = vector.broadcast %cst_62 : f32 to vector<8x128xf32>
    %153 = arith.subf %152, %146 : vector<8x128xf32>
    %154 = arith.mulf %153, %151 : vector<8x128xf32>
    %155 = arith.mulf %146, %110 : vector<8x128xf32>
    %156 = arith.addf %154, %155 : vector<8x128xf32>
    %c5_i32_63 = arith.constant 5 : i32
    %157 = arith.muli %arg0, %c5_i32_63 : i32
    %158 = arith.addi %157, %c1_i32_50 : i32
    %c8_i32_64 = arith.constant 8 : i32
    %159 = arith.cmpi slt, %158, %c8_i32_64 : i32
    %160 = arith.select %159, %133, %109 : vector<8x128xf32>
    %c1_i32_65 = arith.constant 1 : i32
    %161 = arith.subi %c1_i32_65, %arg0 : i32
    %c5_i32_66 = arith.constant 5 : i32
    %162 = arith.muli %161, %c5_i32_66 : i32
    %c4_i32_67 = arith.constant 4 : i32
    %163 = arith.subi %c4_i32_67, %c1_i32_50 : i32
    %164 = arith.addi %162, %163 : i32
    %c8_i32_68 = arith.constant 8 : i32
    %165 = arith.cmpi slt, %164, %c8_i32_68 : i32
    %166 = arith.select %165, %156, %110 : vector<8x128xf32>
    %167 = tpu.concatenate %160, %166 in 1 : vector<8x128xf32>, vector<8x128xf32> -> vector<8x256xf32>
    %c0_69 = arith.constant 0 : index
    %c0_70 = arith.constant 0 : index
    %168 = vector.load %arg18[%c0_69, %c0_70] : memref<8x256xf32, #tpu.memory_space<vmem>>, vector<8x256xf32>
    tpu.vector_store %arg18[%c0_69, %c0_70], %167 {strides = array<i32>} : memref<8x256xf32, #tpu.memory_space<vmem>>, vector<8x256xf32>,
    %169 = arith.index_cast %102 : i32 to index
    %c0_71 = arith.constant 0 : index
    %170 = vector.load %arg13[%169, %c0_71] : memref<40x128xf32, #tpu.memory_space<vmem>>, vector<8x128xf32>
    tpu.vector_store %arg13[%169, %c0_71], %160 {strides = array<i32>} : memref<40x128xf32, #tpu.memory_space<vmem>>, vector<8x128xf32>,
    %171 = arith.index_cast %105 : i32 to index
    %c0_72 = arith.constant 0 : index
    %172 = vector.load %arg14[%171, %c0_72] : memref<40x128xf32, #tpu.memory_space<vmem>>, vector<8x128xf32>
    tpu.vector_store %arg14[%171, %c0_72], %166 {strides = array<i32>} : memref<40x128xf32, #tpu.memory_space<vmem>>, vector<8x128xf32>,
    %c2_i32 = arith.constant 2 : i32
    %c8_i32_73 = arith.constant 8 : i32
    %173 = arith.muli %c2_i32, %c8_i32_73 : i32
    %174 = tpu.assume_multiple %173, 8 : i32
    %c4_i32_74 = arith.constant 4 : i32
    %175 = arith.subi %c4_i32_74, %c2_i32 : i32
    %c8_i32_75 = arith.constant 8 : i32
    %176 = arith.muli %175, %c8_i32_75 : i32
    %177 = tpu.assume_multiple %176, 8 : i32
    %c0_76 = arith.constant 0 : index
    %c0_77 = arith.constant 0 : index
    %178 = vector.load %arg18[%c0_76, %c0_77] : memref<8x256xf32, #tpu.memory_space<vmem>>, vector<8x256xf32>
    %cst_78 = arith.constant dense<0.000000e+00> : vector<8x768xf32>
    %179 = tpu.matmul %178, %25, %cst_78 {dimension_numbers = #tpu.dot_dimension_numbers<[1], [0], [0], [1], [0, 0, 1, 1], [], []>} : vector<8x256xf32>, vector<256x768xf32>, vector<8x768xf32> -> vector<8x768xf32>
    %180 = arith.addf %179, %28 : vector<8x768xf32>
    %181 = vector.extract_strided_slice %178 {offsets = [0, 0], sizes = [8, 128], strides = [1, 1]} : vector<8x256xf32> to vector<8x128xf32>
    %182 = vector.extract_strided_slice %178 {offsets = [0, 128], sizes = [8, 128], strides = [1, 1]} : vector<8x256xf32> to vector<8x128xf32>
    %183 = arith.index_cast %174 : i32 to index
    %c0_79 = arith.constant 0 : index
    %184 = vector.load %arg16[%183, %c0_79] : memref<40x384xf32, #tpu.memory_space<vmem>>, vector<8x384xf32>
    %185 = vector.extract_strided_slice %180 {offsets = [0, 0], sizes = [8, 384], strides = [1, 1]} : vector<8x768xf32> to vector<8x384xf32>
    %186 = vector.extract_strided_slice %184 {offsets = [0, 0], sizes = [8, 256], strides = [1, 1]} : vector<8x384xf32> to vector<8x256xf32>
    %187 = vector.extract_strided_slice %185 {offsets = [0, 0], sizes = [8, 256], strides = [1, 1]} : vector<8x384xf32> to vector<8x256xf32>
    %188 = arith.addf %186, %187 : vector<8x256xf32>
    %189 = arith.negf %188 : vector<8x256xf32>
    %190 = math.exp %189 : vector<8x256xf32>
    %cst_80 = arith.constant 1.000000e+00 : f32
    %191 = vector.broadcast %cst_80 : f32 to vector<8x256xf32>
    %192 = arith.addf %191, %190 : vector<8x256xf32>
    %193 = arith.divf %191, %192 : vector<8x256xf32>
    %194 = vector.extract_strided_slice %193 {offsets = [0, 0], sizes = [8, 128], strides = [1, 1]} : vector<8x256xf32> to vector<8x128xf32>
    %195 = vector.extract_strided_slice %193 {offsets = [0, 128], sizes = [8, 128], strides = [1, 1]} : vector<8x256xf32> to vector<8x128xf32>
    %196 = vector.extract_strided_slice %184 {offsets = [0, 256], sizes = [8, 128], strides = [1, 1]} : vector<8x384xf32> to vector<8x128xf32>
    %197 = vector.extract_strided_slice %185 {offsets = [0, 256], sizes = [8, 128], strides = [1, 1]} : vector<8x384xf32> to vector<8x128xf32>
    %198 = arith.mulf %194, %197 : vector<8x128xf32>
    %199 = arith.addf %196, %198 : vector<8x128xf32>
    %200 = math.tanh %199 : vector<8x128xf32>
    %cst_81 = arith.constant 1.000000e+00 : f32
    %201 = vector.broadcast %cst_81 : f32 to vector<8x128xf32>
    %202 = arith.subf %201, %195 : vector<8x128xf32>
    %203 = arith.mulf %202, %200 : vector<8x128xf32>
    %204 = arith.mulf %195, %181 : vector<8x128xf32>
    %205 = arith.addf %203, %204 : vector<8x128xf32>
    %206 = arith.index_cast %177 : i32 to index
    %c0_82 = arith.constant 0 : index
    %207 = vector.load %arg17[%206, %c0_82] : memref<40x384xf32, #tpu.memory_space<vmem>>, vector<8x384xf32>
    %208 = vector.extract_strided_slice %180 {offsets = [0, 384], sizes = [8, 384], strides = [1, 1]} : vector<8x768xf32> to vector<8x384xf32>
    %209 = vector.extract_strided_slice %207 {offsets = [0, 0], sizes = [8, 256], strides = [1, 1]} : vector<8x384xf32> to vector<8x256xf32>
    %210 = vector.extract_strided_slice %208 {offsets = [0, 0], sizes = [8, 256], strides = [1, 1]} : vector<8x384xf32> to vector<8x256xf32>
    %211 = arith.addf %209, %210 : vector<8x256xf32>
    %212 = arith.negf %211 : vector<8x256xf32>
    %213 = math.exp %212 : vector<8x256xf32>
    %cst_83 = arith.constant 1.000000e+00 : f32
    %214 = vector.broadcast %cst_83 : f32 to vector<8x256xf32>
    %215 = arith.addf %214, %213 : vector<8x256xf32>
    %216 = arith.divf %214, %215 : vector<8x256xf32>
    %217 = vector.extract_strided_slice %216 {offsets = [0, 0], sizes = [8, 128], strides = [1, 1]} : vector<8x256xf32> to vector<8x128xf32>
    %218 = vector.extract_strided_slice %216 {offsets = [0, 128], sizes = [8, 128], strides = [1, 1]} : vector<8x256xf32> to vector<8x128xf32>
    %219 = vector.extract_strided_slice %207 {offsets = [0, 256], sizes = [8, 128], strides = [1, 1]} : vector<8x384xf32> to vector<8x128xf32>
    %220 = vector.extract_strided_slice %208 {offsets = [0, 256], sizes = [8, 128], strides = [1, 1]} : vector<8x384xf32> to vector<8x128xf32>
    %221 = arith.mulf %217, %220 : vector<8x128xf32>
    %222 = arith.addf %219, %221 : vector<8x128xf32>
    %223 = math.tanh %222 : vector<8x128xf32>
    %cst_84 = arith.constant 1.000000e+00 : f32
    %224 = vector.broadcast %cst_84 : f32 to vector<8x128xf32>
    %225 = arith.subf %224, %218 : vector<8x128xf32>
    %226 = arith.mulf %225, %223 : vector<8x128xf32>
    %227 = arith.mulf %218, %182 : vector<8x128xf32>
    %228 = arith.addf %226, %227 : vector<8x128xf32>
    %c5_i32_85 = arith.constant 5 : i32
    %229 = arith.muli %arg0, %c5_i32_85 : i32
    %230 = arith.addi %229, %c2_i32 : i32
    %c8_i32_86 = arith.constant 8 : i32
    %231 = arith.cmpi slt, %230, %c8_i32_86 : i32
    %232 = arith.select %231, %205, %181 : vector<8x128xf32>
    %c1_i32_87 = arith.constant 1 : i32
    %233 = arith.subi %c1_i32_87, %arg0 : i32
    %c5_i32_88 = arith.constant 5 : i32
    %234 = arith.muli %233, %c5_i32_88 : i32
    %c4_i32_89 = arith.constant 4 : i32
    %235 = arith.subi %c4_i32_89, %c2_i32 : i32
    %236 = arith.addi %234, %235 : i32
    %c8_i32_90 = arith.constant 8 : i32
    %237 = arith.cmpi slt, %236, %c8_i32_90 : i32
    %238 = arith.select %237, %228, %182 : vector<8x128xf32>
    %239 = tpu.concatenate %232, %238 in 1 : vector<8x128xf32>, vector<8x128xf32> -> vector<8x256xf32>
    %c0_91 = arith.constant 0 : index
    %c0_92 = arith.constant 0 : index
    %240 = vector.load %arg18[%c0_91, %c0_92] : memref<8x256xf32, #tpu.memory_space<vmem>>, vector<8x256xf32>
    tpu.vector_store %arg18[%c0_91, %c0_92], %239 {strides = array<i32>} : memref<8x256xf32, #tpu.memory_space<vmem>>, vector<8x256xf32>,
    %241 = arith.index_cast %174 : i32 to index
    %c0_93 = arith.constant 0 : index
    %242 = vector.load %arg13[%241, %c0_93] : memref<40x128xf32, #tpu.memory_space<vmem>>, vector<8x128xf32>
    tpu.vector_store %arg13[%241, %c0_93], %232 {strides = array<i32>} : memref<40x128xf32, #tpu.memory_space<vmem>>, vector<8x128xf32>,
    %243 = arith.index_cast %177 : i32 to index
    %c0_94 = arith.constant 0 : index
    %244 = vector.load %arg14[%243, %c0_94] : memref<40x128xf32, #tpu.memory_space<vmem>>, vector<8x128xf32>
    tpu.vector_store %arg14[%243, %c0_94], %238 {strides = array<i32>} : memref<40x128xf32, #tpu.memory_space<vmem>>, vector<8x128xf32>,
    %c3_i32 = arith.constant 3 : i32
    %c8_i32_95 = arith.constant 8 : i32
    %245 = arith.muli %c3_i32, %c8_i32_95 : i32
    %246 = tpu.assume_multiple %245, 8 : i32
    %c4_i32_96 = arith.constant 4 : i32
    %247 = arith.subi %c4_i32_96, %c3_i32 : i32
    %c8_i32_97 = arith.constant 8 : i32
    %248 = arith.muli %247, %c8_i32_97 : i32
    %249 = tpu.assume_multiple %248, 8 : i32
    %c0_98 = arith.constant 0 : index
    %c0_99 = arith.constant 0 : index
    %250 = vector.load %arg18[%c0_98, %c0_99] : memref<8x256xf32, #tpu.memory_space<vmem>>, vector<8x256xf32>
    %cst_100 = arith.constant dense<0.000000e+00> : vector<8x768xf32>
    %251 = tpu.matmul %250, %25, %cst_100 {dimension_numbers = #tpu.dot_dimension_numbers<[1], [0], [0], [1], [0, 0, 1, 1], [], []>} : vector<8x256xf32>, vector<256x768xf32>, vector<8x768xf32> -> vector<8x768xf32>
    %252 = arith.addf %251, %28 : vector<8x768xf32>
    %253 = vector.extract_strided_slice %250 {offsets = [0, 0], sizes = [8, 128], strides = [1, 1]} : vector<8x256xf32> to vector<8x128xf32>
    %254 = vector.extract_strided_slice %250 {offsets = [0, 128], sizes = [8, 128], strides = [1, 1]} : vector<8x256xf32> to vector<8x128xf32>
    %255 = arith.index_cast %246 : i32 to index
    %c0_101 = arith.constant 0 : index
    %256 = vector.load %arg16[%255, %c0_101] : memref<40x384xf32, #tpu.memory_space<vmem>>, vector<8x384xf32>
    %257 = vector.extract_strided_slice %252 {offsets = [0, 0], sizes = [8, 384], strides = [1, 1]} : vector<8x768xf32> to vector<8x384xf32>
    %258 = vector.extract_strided_slice %256 {offsets = [0, 0], sizes = [8, 256], strides = [1, 1]} : vector<8x384xf32> to vector<8x256xf32>
    %259 = vector.extract_strided_slice %257 {offsets = [0, 0], sizes = [8, 256], strides = [1, 1]} : vector<8x384xf32> to vector<8x256xf32>
    %260 = arith.addf %258, %259 : vector<8x256xf32>
    %261 = arith.negf %260 : vector<8x256xf32>
    %262 = math.exp %261 : vector<8x256xf32>
    %cst_102 = arith.constant 1.000000e+00 : f32
    %263 = vector.broadcast %cst_102 : f32 to vector<8x256xf32>
    %264 = arith.addf %263, %262 : vector<8x256xf32>
    %265 = arith.divf %263, %264 : vector<8x256xf32>
    %266 = vector.extract_strided_slice %265 {offsets = [0, 0], sizes = [8, 128], strides = [1, 1]} : vector<8x256xf32> to vector<8x128xf32>
    %267 = vector.extract_strided_slice %265 {offsets = [0, 128], sizes = [8, 128], strides = [1, 1]} : vector<8x256xf32> to vector<8x128xf32>
    %268 = vector.extract_strided_slice %256 {offsets = [0, 256], sizes = [8, 128], strides = [1, 1]} : vector<8x384xf32> to vector<8x128xf32>
    %269 = vector.extract_strided_slice %257 {offsets = [0, 256], sizes = [8, 128], strides = [1, 1]} : vector<8x384xf32> to vector<8x128xf32>
    %270 = arith.mulf %266, %269 : vector<8x128xf32>
    %271 = arith.addf %268, %270 : vector<8x128xf32>
    %272 = math.tanh %271 : vector<8x128xf32>
    %cst_103 = arith.constant 1.000000e+00 : f32
    %273 = vector.broadcast %cst_103 : f32 to vector<8x128xf32>
    %274 = arith.subf %273, %267 : vector<8x128xf32>
    %275 = arith.mulf %274, %272 : vector<8x128xf32>
    %276 = arith.mulf %267, %253 : vector<8x128xf32>
    %277 = arith.addf %275, %276 : vector<8x128xf32>
    %278 = arith.index_cast %249 : i32 to index
    %c0_104 = arith.constant 0 : index
    %279 = vector.load %arg17[%278, %c0_104] : memref<40x384xf32, #tpu.memory_space<vmem>>, vector<8x384xf32>
    %280 = vector.extract_strided_slice %252 {offsets = [0, 384], sizes = [8, 384], strides = [1, 1]} : vector<8x768xf32> to vector<8x384xf32>
    %281 = vector.extract_strided_slice %279 {offsets = [0, 0], sizes = [8, 256], strides = [1, 1]} : vector<8x384xf32> to vector<8x256xf32>
    %282 = vector.extract_strided_slice %280 {offsets = [0, 0], sizes = [8, 256], strides = [1, 1]} : vector<8x384xf32> to vector<8x256xf32>
    %283 = arith.addf %281, %282 : vector<8x256xf32>
    %284 = arith.negf %283 : vector<8x256xf32>
    %285 = math.exp %284 : vector<8x256xf32>
    %cst_105 = arith.constant 1.000000e+00 : f32
    %286 = vector.broadcast %cst_105 : f32 to vector<8x256xf32>
    %287 = arith.addf %286, %285 : vector<8x256xf32>
    %288 = arith.divf %286, %287 : vector<8x256xf32>
    %289 = vector.extract_strided_slice %288 {offsets = [0, 0], sizes = [8, 128], strides = [1, 1]} : vector<8x256xf32> to vector<8x128xf32>
    %290 = vector.extract_strided_slice %288 {offsets = [0, 128], sizes = [8, 128], strides = [1, 1]} : vector<8x256xf32> to vector<8x128xf32>
    %291 = vector.extract_strided_slice %279 {offsets = [0, 256], sizes = [8, 128], strides = [1, 1]} : vector<8x384xf32> to vector<8x128xf32>
    %292 = vector.extract_strided_slice %280 {offsets = [0, 256], sizes = [8, 128], strides = [1, 1]} : vector<8x384xf32> to vector<8x128xf32>
    %293 = arith.mulf %289, %292 : vector<8x128xf32>
    %294 = arith.addf %291, %293 : vector<8x128xf32>
    %295 = math.tanh %294 : vector<8x128xf32>
    %cst_106 = arith.constant 1.000000e+00 : f32
    %296 = vector.broadcast %cst_106 : f32 to vector<8x128xf32>
    %297 = arith.subf %296, %290 : vector<8x128xf32>
    %298 = arith.mulf %297, %295 : vector<8x128xf32>
    %299 = arith.mulf %290, %254 : vector<8x128xf32>
    %300 = arith.addf %298, %299 : vector<8x128xf32>
    %c5_i32_107 = arith.constant 5 : i32
    %301 = arith.muli %arg0, %c5_i32_107 : i32
    %302 = arith.addi %301, %c3_i32 : i32
    %c8_i32_108 = arith.constant 8 : i32
    %303 = arith.cmpi slt, %302, %c8_i32_108 : i32
    %304 = arith.select %303, %277, %253 : vector<8x128xf32>
    %c1_i32_109 = arith.constant 1 : i32
    %305 = arith.subi %c1_i32_109, %arg0 : i32
    %c5_i32_110 = arith.constant 5 : i32
    %306 = arith.muli %305, %c5_i32_110 : i32
    %c4_i32_111 = arith.constant 4 : i32
    %307 = arith.subi %c4_i32_111, %c3_i32 : i32
    %308 = arith.addi %306, %307 : i32
    %c8_i32_112 = arith.constant 8 : i32
    %309 = arith.cmpi slt, %308, %c8_i32_112 : i32
    %310 = arith.select %309, %300, %254 : vector<8x128xf32>
    %311 = tpu.concatenate %304, %310 in 1 : vector<8x128xf32>, vector<8x128xf32> -> vector<8x256xf32>
    %c0_113 = arith.constant 0 : index
    %c0_114 = arith.constant 0 : index
    %312 = vector.load %arg18[%c0_113, %c0_114] : memref<8x256xf32, #tpu.memory_space<vmem>>, vector<8x256xf32>
    tpu.vector_store %arg18[%c0_113, %c0_114], %311 {strides = array<i32>} : memref<8x256xf32, #tpu.memory_space<vmem>>, vector<8x256xf32>,
    %313 = arith.index_cast %246 : i32 to index
    %c0_115 = arith.constant 0 : index
    %314 = vector.load %arg13[%313, %c0_115] : memref<40x128xf32, #tpu.memory_space<vmem>>, vector<8x128xf32>
    tpu.vector_store %arg13[%313, %c0_115], %304 {strides = array<i32>} : memref<40x128xf32, #tpu.memory_space<vmem>>, vector<8x128xf32>,
    %315 = arith.index_cast %249 : i32 to index
    %c0_116 = arith.constant 0 : index
    %316 = vector.load %arg14[%315, %c0_116] : memref<40x128xf32, #tpu.memory_space<vmem>>, vector<8x128xf32>
    tpu.vector_store %arg14[%315, %c0_116], %310 {strides = array<i32>} : memref<40x128xf32, #tpu.memory_space<vmem>>, vector<8x128xf32>,
    %c4_i32_117 = arith.constant 4 : i32
    %c8_i32_118 = arith.constant 8 : i32
    %317 = arith.muli %c4_i32_117, %c8_i32_118 : i32
    %318 = tpu.assume_multiple %317, 8 : i32
    %c4_i32_119 = arith.constant 4 : i32
    %319 = arith.subi %c4_i32_119, %c4_i32_117 : i32
    %c8_i32_120 = arith.constant 8 : i32
    %320 = arith.muli %319, %c8_i32_120 : i32
    %321 = tpu.assume_multiple %320, 8 : i32
    %c0_121 = arith.constant 0 : index
    %c0_122 = arith.constant 0 : index
    %322 = vector.load %arg18[%c0_121, %c0_122] : memref<8x256xf32, #tpu.memory_space<vmem>>, vector<8x256xf32>
    %cst_123 = arith.constant dense<0.000000e+00> : vector<8x768xf32>
    %323 = tpu.matmul %322, %25, %cst_123 {dimension_numbers = #tpu.dot_dimension_numbers<[1], [0], [0], [1], [0, 0, 1, 1], [], []>} : vector<8x256xf32>, vector<256x768xf32>, vector<8x768xf32> -> vector<8x768xf32>
    %324 = arith.addf %323, %28 : vector<8x768xf32>
    %325 = vector.extract_strided_slice %322 {offsets = [0, 0], sizes = [8, 128], strides = [1, 1]} : vector<8x256xf32> to vector<8x128xf32>
    %326 = vector.extract_strided_slice %322 {offsets = [0, 128], sizes = [8, 128], strides = [1, 1]} : vector<8x256xf32> to vector<8x128xf32>
    %327 = arith.index_cast %318 : i32 to index
    %c0_124 = arith.constant 0 : index
    %328 = vector.load %arg16[%327, %c0_124] : memref<40x384xf32, #tpu.memory_space<vmem>>, vector<8x384xf32>
    %329 = vector.extract_strided_slice %324 {offsets = [0, 0], sizes = [8, 384], strides = [1, 1]} : vector<8x768xf32> to vector<8x384xf32>
    %330 = vector.extract_strided_slice %328 {offsets = [0, 0], sizes = [8, 256], strides = [1, 1]} : vector<8x384xf32> to vector<8x256xf32>
    %331 = vector.extract_strided_slice %329 {offsets = [0, 0], sizes = [8, 256], strides = [1, 1]} : vector<8x384xf32> to vector<8x256xf32>
    %332 = arith.addf %330, %331 : vector<8x256xf32>
    %333 = arith.negf %332 : vector<8x256xf32>
    %334 = math.exp %333 : vector<8x256xf32>
    %cst_125 = arith.constant 1.000000e+00 : f32
    %335 = vector.broadcast %cst_125 : f32 to vector<8x256xf32>
    %336 = arith.addf %335, %334 : vector<8x256xf32>
    %337 = arith.divf %335, %336 : vector<8x256xf32>
    %338 = vector.extract_strided_slice %337 {offsets = [0, 0], sizes = [8, 128], strides = [1, 1]} : vector<8x256xf32> to vector<8x128xf32>
    %339 = vector.extract_strided_slice %337 {offsets = [0, 128], sizes = [8, 128], strides = [1, 1]} : vector<8x256xf32> to vector<8x128xf32>
    %340 = vector.extract_strided_slice %328 {offsets = [0, 256], sizes = [8, 128], strides = [1, 1]} : vector<8x384xf32> to vector<8x128xf32>
    %341 = vector.extract_strided_slice %329 {offsets = [0, 256], sizes = [8, 128], strides = [1, 1]} : vector<8x384xf32> to vector<8x128xf32>
    %342 = arith.mulf %338, %341 : vector<8x128xf32>
    %343 = arith.addf %340, %342 : vector<8x128xf32>
    %344 = math.tanh %343 : vector<8x128xf32>
    %cst_126 = arith.constant 1.000000e+00 : f32
    %345 = vector.broadcast %cst_126 : f32 to vector<8x128xf32>
    %346 = arith.subf %345, %339 : vector<8x128xf32>
    %347 = arith.mulf %346, %344 : vector<8x128xf32>
    %348 = arith.mulf %339, %325 : vector<8x128xf32>
    %349 = arith.addf %347, %348 : vector<8x128xf32>
    %350 = arith.index_cast %321 : i32 to index
    %c0_127 = arith.constant 0 : index
    %351 = vector.load %arg17[%350, %c0_127] : memref<40x384xf32, #tpu.memory_space<vmem>>, vector<8x384xf32>
    %352 = vector.extract_strided_slice %324 {offsets = [0, 384], sizes = [8, 384], strides = [1, 1]} : vector<8x768xf32> to vector<8x384xf32>
    %353 = vector.extract_strided_slice %351 {offsets = [0, 0], sizes = [8, 256], strides = [1, 1]} : vector<8x384xf32> to vector<8x256xf32>
    %354 = vector.extract_strided_slice %352 {offsets = [0, 0], sizes = [8, 256], strides = [1, 1]} : vector<8x384xf32> to vector<8x256xf32>
    %355 = arith.addf %353, %354 : vector<8x256xf32>
    %356 = arith.negf %355 : vector<8x256xf32>
    %357 = math.exp %356 : vector<8x256xf32>
    %cst_128 = arith.constant 1.000000e+00 : f32
    %358 = vector.broadcast %cst_128 : f32 to vector<8x256xf32>
    %359 = arith.addf %358, %357 : vector<8x256xf32>
    %360 = arith.divf %358, %359 : vector<8x256xf32>
    %361 = vector.extract_strided_slice %360 {offsets = [0, 0], sizes = [8, 128], strides = [1, 1]} : vector<8x256xf32> to vector<8x128xf32>
    %362 = vector.extract_strided_slice %360 {offsets = [0, 128], sizes = [8, 128], strides = [1, 1]} : vector<8x256xf32> to vector<8x128xf32>
    %363 = vector.extract_strided_slice %351 {offsets = [0, 256], sizes = [8, 128], strides = [1, 1]} : vector<8x384xf32> to vector<8x128xf32>
    %364 = vector.extract_strided_slice %352 {offsets = [0, 256], sizes = [8, 128], strides = [1, 1]} : vector<8x384xf32> to vector<8x128xf32>
    %365 = arith.mulf %361, %364 : vector<8x128xf32>
    %366 = arith.addf %363, %365 : vector<8x128xf32>
    %367 = math.tanh %366 : vector<8x128xf32>
    %cst_129 = arith.constant 1.000000e+00 : f32
    %368 = vector.broadcast %cst_129 : f32 to vector<8x128xf32>
    %369 = arith.subf %368, %362 : vector<8x128xf32>
    %370 = arith.mulf %369, %367 : vector<8x128xf32>
    %371 = arith.mulf %362, %326 : vector<8x128xf32>
    %372 = arith.addf %370, %371 : vector<8x128xf32>
    %c5_i32_130 = arith.constant 5 : i32
    %373 = arith.muli %arg0, %c5_i32_130 : i32
    %374 = arith.addi %373, %c4_i32_117 : i32
    %c8_i32_131 = arith.constant 8 : i32
    %375 = arith.cmpi slt, %374, %c8_i32_131 : i32
    %376 = arith.select %375, %349, %325 : vector<8x128xf32>
    %c1_i32_132 = arith.constant 1 : i32
    %377 = arith.subi %c1_i32_132, %arg0 : i32
    %c5_i32_133 = arith.constant 5 : i32
    %378 = arith.muli %377, %c5_i32_133 : i32
    %c4_i32_134 = arith.constant 4 : i32
    %379 = arith.subi %c4_i32_134, %c4_i32_117 : i32
    %380 = arith.addi %378, %379 : i32
    %c8_i32_135 = arith.constant 8 : i32
    %381 = arith.cmpi slt, %380, %c8_i32_135 : i32
    %382 = arith.select %381, %372, %326 : vector<8x128xf32>
    %383 = tpu.concatenate %376, %382 in 1 : vector<8x128xf32>, vector<8x128xf32> -> vector<8x256xf32>
    %c0_136 = arith.constant 0 : index
    %c0_137 = arith.constant 0 : index
    %384 = vector.load %arg18[%c0_136, %c0_137] : memref<8x256xf32, #tpu.memory_space<vmem>>, vector<8x256xf32>
    tpu.vector_store %arg18[%c0_136, %c0_137], %383 {strides = array<i32>} : memref<8x256xf32, #tpu.memory_space<vmem>>, vector<8x256xf32>,
    %385 = arith.index_cast %318 : i32 to index
    %c0_138 = arith.constant 0 : index
    %386 = vector.load %arg13[%385, %c0_138] : memref<40x128xf32, #tpu.memory_space<vmem>>, vector<8x128xf32>
    tpu.vector_store %arg13[%385, %c0_138], %376 {strides = array<i32>} : memref<40x128xf32, #tpu.memory_space<vmem>>, vector<8x128xf32>,
    %387 = arith.index_cast %321 : i32 to index
    %c0_139 = arith.constant 0 : index
    %388 = vector.load %arg14[%387, %c0_139] : memref<40x128xf32, #tpu.memory_space<vmem>>, vector<8x128xf32>
    tpu.vector_store %arg14[%387, %c0_139], %382 {strides = array<i32>} : memref<40x128xf32, #tpu.memory_space<vmem>>, vector<8x128xf32>,
    %c5_i32_140 = arith.constant 5 : i32
    %c1_i32_141 = arith.constant 1 : i32
    %389 = arith.cmpi eq, %arg0, %c1_i32_141 : i32
    %390 = arith.extui %389 : i1 to i32
    %c0_i32_142 = arith.constant 0 : i32
    %391 = arith.cmpi ne, %390, %c0_i32_142 : i32
    scf.if %391 {
      %c0_143 = arith.constant 0 : index
      %c0_144 = arith.constant 0 : index
      %392 = vector.load %arg18[%c0_143, %c0_144] : memref<8x256xf32, #tpu.memory_space<vmem>>, vector<8x128xf32>
      %c0_145 = arith.constant 0 : index
      %c0_146 = arith.constant 0 : index
      %c0_147 = arith.constant 0 : index
      %393 = vector.load %arg15[%c0_145, %c0_146, %c0_147] : memref<2x8x128xf32, #tpu.memory_space<vmem>>, vector<1x8x128xf32>
      %394 = vector.shape_cast %393 : vector<1x8x128xf32> to vector<8x128xf32>
      %395 = vector.shape_cast %392 : vector<8x128xf32> to vector<1x8x128xf32>
      tpu.vector_store %arg15[%c0_145, %c0_146, %c0_147], %395 {strides = array<i32>} : memref<2x8x128xf32, #tpu.memory_space<vmem>>, vector<1x8x128xf32>,
      %c0_148 = arith.constant 0 : index
      %c128 = arith.constant 128 : index
      %396 = vector.load %arg18[%c0_148, %c128] : memref<8x256xf32, #tpu.memory_space<vmem>>, vector<8x128xf32>
      %c1 = arith.constant 1 : index
      %c0_149 = arith.constant 0 : index
      %c0_150 = arith.constant 0 : index
      %397 = vector.load %arg15[%c1, %c0_149, %c0_150] : memref<2x8x128xf32, #tpu.memory_space<vmem>>, vector<1x8x128xf32>
      %398 = vector.shape_cast %397 : vector<1x8x128xf32> to vector<8x128xf32>
      %399 = vector.shape_cast %396 : vector<8x128xf32> to vector<1x8x128xf32>
      tpu.vector_store %arg15[%c1, %c0_149, %c0_150], %399 {strides = array<i32>} : memref<2x8x128xf32, #tpu.memory_space<vmem>>, vector<1x8x128xf32>,
    } else {
    }
    return
  }
  func.func @transform_0(%arg0: i32) -> (i32, i32) {
    %c0_i32 = arith.constant 0 : i32
    %c0_i32_0 = arith.constant 0 : i32
    return %arg0, %c0_i32 : i32, i32
  }
  func.func @transform_1(%arg0: i32) -> (i32, i32) {
    %c1_i32 = arith.constant 1 : i32
    %0 = arith.subi %c1_i32, %arg0 : i32
    %c0_i32 = arith.constant 0 : i32
    %c0_i32_0 = arith.constant 0 : i32
    return %0, %c0_i32 : i32, i32
  }
  func.func @transform_2(%arg0: i32) -> (i32, i32) {
    %c0_i32 = arith.constant 0 : i32
    %c0_i32_0 = arith.constant 0 : i32
    %c0_i32_1 = arith.constant 0 : i32
    return %c0_i32, %c0_i32_0 : i32, i32
  }
  func.func @transform_3(%arg0: i32) -> (i32, i32) {
    %c0_i32 = arith.constant 0 : i32
    %c0_i32_0 = arith.constant 0 : i32
    %c0_i32_1 = arith.constant 0 : i32
    return %c0_i32, %c0_i32_0 : i32, i32
  }
  func.func @transform_4(%arg0: i32) -> (i32, i32) {
    %c0_i32 = arith.constant 0 : i32
    %c0_i32_0 = arith.constant 0 : i32
    return %arg0, %c0_i32 : i32, i32
  }
  func.func @transform_5(%arg0: i32) -> (i32, i32) {
    %c1_i32 = arith.constant 1 : i32
    %0 = arith.subi %c1_i32, %arg0 : i32
    %c0_i32 = arith.constant 0 : i32
    %c0_i32_0 = arith.constant 0 : i32
    return %0, %c0_i32 : i32, i32
  }
  func.func @transform_6(%arg0: i32) -> (i32, i32) {
    %c0_i32 = arith.constant 0 : i32
    %c0_i32_0 = arith.constant 0 : i32
    %c0_i32_1 = arith.constant 0 : i32
    return %c0_i32, %c0_i32_0 : i32, i32
  }
  func.func @transform_7(%arg0: i32) -> (i32, i32) {
    %c0_i32 = arith.constant 0 : i32
    %c0_i32_0 = arith.constant 0 : i32
    %c0_i32_1 = arith.constant 0 : i32
    return %c0_i32, %c0_i32_0 : i32, i32
  }
  func.func @transform_8(%arg0: i32) -> (i32, i32) {
    %c0_i32 = arith.constant 0 : i32
    %c0_i32_0 = arith.constant 0 : i32
    %c0_i32_1 = arith.constant 0 : i32
    return %c0_i32, %c0_i32_0 : i32, i32
  }
  func.func @transform_9(%arg0: i32) -> (i32, i32) {
    %c0_i32 = arith.constant 0 : i32
    %c0_i32_0 = arith.constant 0 : i32
    %c0_i32_1 = arith.constant 0 : i32
    return %c0_i32, %c0_i32_0 : i32, i32
  }
  func.func @transform_10(%arg0: i32) -> (i32, i32) {
    %c0_i32 = arith.constant 0 : i32
    %c0_i32_0 = arith.constant 0 : i32
    %c0_i32_1 = arith.constant 0 : i32
    return %c0_i32, %c0_i32_0 : i32, i32
  }
  func.func @transform_11(%arg0: i32) -> (i32, i32) {
    %c0_i32 = arith.constant 0 : i32
    %c0_i32_0 = arith.constant 0 : i32
    %c0_i32_1 = arith.constant 0 : i32
    return %c0_i32, %c0_i32_0 : i32, i32
  }
  func.func @transform_12(%arg0: i32) -> (i32, i32) {
    %c0_i32 = arith.constant 0 : i32
    %c0_i32_0 = arith.constant 0 : i32
    return %arg0, %c0_i32 : i32, i32
  }
  func.func @transform_13(%arg0: i32) -> (i32, i32) {
    %c1_i32 = arith.constant 1 : i32
    %0 = arith.subi %c1_i32, %arg0 : i32
    %c0_i32 = arith.constant 0 : i32
    %c0_i32_0 = arith.constant 0 : i32
    return %0, %c0_i32 : i32, i32
  }
  func.func @transform_14(%arg0: i32) -> (i32, i32, i32) {
    %c0_i32 = arith.constant 0 : i32
    %c0_i32_0 = arith.constant 0 : i32
    %c0_i32_1 = arith.constant 0 : i32
    %c0_i32_2 = arith.constant 0 : i32
    return %c0_i32, %c0_i32_0, %c0_i32_1 : i32, i32, i32
  }
}

module attributes {stable_mosaic.version = 11 : i64} {
  func.func @kernel(%arg0: i32, %arg1: memref<40x16xf32, #tpu.memory_space<vmem>>, %arg2: memref<40x16xf32, #tpu.memory_space<vmem>>, %arg3: memref<16x384xf32, #tpu.memory_space<vmem>>, %arg4: memref<16x384xf32, #tpu.memory_space<vmem>>, %arg5: memref<1x384xf32, #tpu.memory_space<vmem>>, %arg6: memref<1x384xf32, #tpu.memory_space<vmem>>, %arg7: memref<256x768xf32, #tpu.memory_space<vmem>>, %arg8: memref<1x768xf32, #tpu.memory_space<vmem>>, %arg9: memref<40x128xf32, #tpu.memory_space<vmem>>, %arg10: memref<40x128xf32, #tpu.memory_space<vmem>>, %arg11: memref<2x8x128xf32, #tpu.memory_space<vmem>>, %arg12: memref<40x384xf32, #tpu.memory_space<vmem>>, %arg13: memref<40x384xf32, #tpu.memory_space<vmem>>, %arg14: memref<8x256xf32, #tpu.memory_space<vmem>>) attributes {dimension_semantics = [#tpu.dimension_semantics<arbitrary>], iteration_bounds = array<i64: 2>, scalar_prefetch = 0 : i64, scratch_operands = 3 : i64, tpu.core_type = #tpu.core_type<tc>, window_params = [{transform_indices = @transform_0, window_bounds = array<i64: 40, 16>}, {transform_indices = @transform_1, window_bounds = array<i64: 40, 16>}, {pipeline_mode = #tpu.pipeline_mode<synchronous>, transform_indices = @transform_2, window_bounds = array<i64: 16, 384>}, {pipeline_mode = #tpu.pipeline_mode<synchronous>, transform_indices = @transform_3, window_bounds = array<i64: 16, 384>}, {pipeline_mode = #tpu.pipeline_mode<synchronous>, transform_indices = @transform_4, window_bounds = array<i64: 1, 384>}, {pipeline_mode = #tpu.pipeline_mode<synchronous>, transform_indices = @transform_5, window_bounds = array<i64: 1, 384>}, {pipeline_mode = #tpu.pipeline_mode<synchronous>, transform_indices = @transform_6, window_bounds = array<i64: 256, 768>}, {pipeline_mode = #tpu.pipeline_mode<synchronous>, transform_indices = @transform_7, window_bounds = array<i64: 1, 768>}, {transform_indices = @transform_8, window_bounds = array<i64: 40, 128>}, {transform_indices = @transform_9, window_bounds = array<i64: 40, 128>}, {pipeline_mode = #tpu.pipeline_mode<synchronous>, transform_indices = @transform_10, window_bounds = array<i64: 2, 8, 128>}]} {
    %c0_i32 = arith.constant 0 : i32
    %0 = arith.cmpi eq, %arg0, %c0_i32 : i32
    %1 = arith.extui %0 : i1 to i32
    %c0_i32_0 = arith.constant 0 : i32
    %2 = arith.cmpi ne, %1, %c0_i32_0 : i32
    scf.if %2 {
      %cst_133 = arith.constant 0.000000e+00 : f32
      %384 = vector.broadcast %cst_133 : f32 to vector<8x256xf32>
      %c0_134 = arith.constant 0 : index
      %c0_135 = arith.constant 0 : index
      %385 = vector.load %arg14[%c0_134, %c0_135] : memref<8x256xf32, #tpu.memory_space<vmem>>, vector<8x256xf32>
      tpu.vector_store %arg14[%c0_134, %c0_135], %384 {strides = array<i32>} : memref<8x256xf32, #tpu.memory_space<vmem>>, vector<8x256xf32>,
    } else {
    }
    %c0 = arith.constant 0 : index
    %c0_1 = arith.constant 0 : index
    %3 = vector.load %arg1[%c0, %c0_1] : memref<40x16xf32, #tpu.memory_space<vmem>>, vector<40x16xf32>
    %c0_2 = arith.constant 0 : index
    %c0_3 = arith.constant 0 : index
    %4 = vector.load %arg3[%c0_2, %c0_3] : memref<16x384xf32, #tpu.memory_space<vmem>>, vector<16x384xf32>
    %cst = arith.constant dense<0.000000e+00> : vector<40x384xf32>
    %5 = tpu.matmul %3, %4, %cst {dimension_numbers = #tpu.dot_dimension_numbers<[1], [0], [0], [1], [0, 0, 1, 1], [], []>} : vector<40x16xf32>, vector<16x384xf32>, vector<40x384xf32> -> vector<40x384xf32>
    %c0_4 = arith.constant 0 : index
    %c0_5 = arith.constant 0 : index
    %6 = vector.load %arg5[%c0_4, %c0_5] : memref<1x384xf32, #tpu.memory_space<vmem>>, vector<1x384xf32>
    %7 = vector.broadcast %6 : vector<1x384xf32> to vector<40x384xf32>
    %8 = arith.addf %5, %7 : vector<40x384xf32>
    %c0_6 = arith.constant 0 : index
    %c0_7 = arith.constant 0 : index
    %9 = vector.load %arg12[%c0_6, %c0_7] : memref<40x384xf32, #tpu.memory_space<vmem>>, vector<40x384xf32>
    tpu.vector_store %arg12[%c0_6, %c0_7], %8 {strides = array<i32>} : memref<40x384xf32, #tpu.memory_space<vmem>>, vector<40x384xf32>,
    %c0_8 = arith.constant 0 : index
    %c0_9 = arith.constant 0 : index
    %10 = vector.load %arg2[%c0_8, %c0_9] : memref<40x16xf32, #tpu.memory_space<vmem>>, vector<40x16xf32>
    %c0_10 = arith.constant 0 : index
    %c0_11 = arith.constant 0 : index
    %11 = vector.load %arg4[%c0_10, %c0_11] : memref<16x384xf32, #tpu.memory_space<vmem>>, vector<16x384xf32>
    %cst_12 = arith.constant dense<0.000000e+00> : vector<40x384xf32>
    %12 = tpu.matmul %10, %11, %cst_12 {dimension_numbers = #tpu.dot_dimension_numbers<[1], [0], [0], [1], [0, 0, 1, 1], [], []>} : vector<40x16xf32>, vector<16x384xf32>, vector<40x384xf32> -> vector<40x384xf32>
    %c0_13 = arith.constant 0 : index
    %c0_14 = arith.constant 0 : index
    %13 = vector.load %arg6[%c0_13, %c0_14] : memref<1x384xf32, #tpu.memory_space<vmem>>, vector<1x384xf32>
    %14 = vector.broadcast %13 : vector<1x384xf32> to vector<40x384xf32>
    %15 = arith.addf %12, %14 : vector<40x384xf32>
    %c0_15 = arith.constant 0 : index
    %c0_16 = arith.constant 0 : index
    %16 = vector.load %arg13[%c0_15, %c0_16] : memref<40x384xf32, #tpu.memory_space<vmem>>, vector<40x384xf32>
    tpu.vector_store %arg13[%c0_15, %c0_16], %15 {strides = array<i32>} : memref<40x384xf32, #tpu.memory_space<vmem>>, vector<40x384xf32>,
    %c0_17 = arith.constant 0 : index
    %c0_18 = arith.constant 0 : index
    %17 = vector.load %arg7[%c0_17, %c0_18] : memref<256x768xf32, #tpu.memory_space<vmem>>, vector<256x768xf32>
    %c0_19 = arith.constant 0 : index
    %c0_20 = arith.constant 0 : index
    %18 = vector.load %arg8[%c0_19, %c0_20] : memref<1x768xf32, #tpu.memory_space<vmem>>, vector<1x768xf32>
    %19 = vector.shape_cast %18 : vector<1x768xf32> to vector<1x768xf32>
    %20 = vector.broadcast %19 : vector<1x768xf32> to vector<8x768xf32>
    %c0_i32_21 = arith.constant 0 : i32
    %c8_i32 = arith.constant 8 : i32
    %21 = arith.muli %c0_i32_21, %c8_i32 : i32
    %22 = tpu.assume_multiple %21, 8 : i32
    %c4_i32 = arith.constant 4 : i32
    %23 = arith.subi %c4_i32, %c0_i32_21 : i32
    %c8_i32_22 = arith.constant 8 : i32
    %24 = arith.muli %23, %c8_i32_22 : i32
    %25 = tpu.assume_multiple %24, 8 : i32
    %c0_23 = arith.constant 0 : index
    %c0_24 = arith.constant 0 : index
    %26 = vector.load %arg14[%c0_23, %c0_24] : memref<8x256xf32, #tpu.memory_space<vmem>>, vector<8x256xf32>
    %cst_25 = arith.constant dense<0.000000e+00> : vector<8x768xf32>
    %27 = tpu.matmul %26, %17, %cst_25 {dimension_numbers = #tpu.dot_dimension_numbers<[1], [0], [0], [1], [0, 0, 1, 1], [], []>} : vector<8x256xf32>, vector<256x768xf32>, vector<8x768xf32> -> vector<8x768xf32>
    %28 = arith.addf %27, %20 : vector<8x768xf32>
    %29 = vector.extract_strided_slice %26 {offsets = [0, 0], sizes = [8, 128], strides = [1, 1]} : vector<8x256xf32> to vector<8x128xf32>
    %30 = vector.extract_strided_slice %26 {offsets = [0, 128], sizes = [8, 128], strides = [1, 1]} : vector<8x256xf32> to vector<8x128xf32>
    %31 = arith.index_cast %22 : i32 to index
    %c0_26 = arith.constant 0 : index
    %32 = vector.load %arg12[%31, %c0_26] : memref<40x384xf32, #tpu.memory_space<vmem>>, vector<8x384xf32>
    %33 = vector.extract_strided_slice %28 {offsets = [0, 0], sizes = [8, 384], strides = [1, 1]} : vector<8x768xf32> to vector<8x384xf32>
    %34 = vector.extract_strided_slice %32 {offsets = [0, 0], sizes = [8, 256], strides = [1, 1]} : vector<8x384xf32> to vector<8x256xf32>
    %35 = vector.extract_strided_slice %33 {offsets = [0, 0], sizes = [8, 256], strides = [1, 1]} : vector<8x384xf32> to vector<8x256xf32>
    %36 = arith.addf %34, %35 : vector<8x256xf32>
    %37 = arith.negf %36 : vector<8x256xf32>
    %38 = math.exp %37 : vector<8x256xf32>
    %cst_27 = arith.constant 1.000000e+00 : f32
    %39 = vector.broadcast %cst_27 : f32 to vector<8x256xf32>
    %40 = arith.addf %39, %38 : vector<8x256xf32>
    %41 = arith.divf %39, %40 : vector<8x256xf32>
    %42 = vector.extract_strided_slice %41 {offsets = [0, 0], sizes = [8, 128], strides = [1, 1]} : vector<8x256xf32> to vector<8x128xf32>
    %43 = vector.extract_strided_slice %41 {offsets = [0, 128], sizes = [8, 128], strides = [1, 1]} : vector<8x256xf32> to vector<8x128xf32>
    %44 = vector.extract_strided_slice %32 {offsets = [0, 256], sizes = [8, 128], strides = [1, 1]} : vector<8x384xf32> to vector<8x128xf32>
    %45 = vector.extract_strided_slice %33 {offsets = [0, 256], sizes = [8, 128], strides = [1, 1]} : vector<8x384xf32> to vector<8x128xf32>
    %46 = arith.mulf %42, %45 : vector<8x128xf32>
    %47 = arith.addf %44, %46 : vector<8x128xf32>
    %48 = math.tanh %47 : vector<8x128xf32>
    %cst_28 = arith.constant 1.000000e+00 : f32
    %49 = vector.broadcast %cst_28 : f32 to vector<8x128xf32>
    %50 = arith.subf %49, %43 : vector<8x128xf32>
    %51 = arith.mulf %50, %48 : vector<8x128xf32>
    %52 = arith.mulf %43, %29 : vector<8x128xf32>
    %53 = arith.addf %51, %52 : vector<8x128xf32>
    %54 = arith.index_cast %25 : i32 to index
    %c0_29 = arith.constant 0 : index
    %55 = vector.load %arg13[%54, %c0_29] : memref<40x384xf32, #tpu.memory_space<vmem>>, vector<8x384xf32>
    %56 = vector.extract_strided_slice %28 {offsets = [0, 384], sizes = [8, 384], strides = [1, 1]} : vector<8x768xf32> to vector<8x384xf32>
    %57 = vector.extract_strided_slice %55 {offsets = [0, 0], sizes = [8, 256], strides = [1, 1]} : vector<8x384xf32> to vector<8x256xf32>
    %58 = vector.extract_strided_slice %56 {offsets = [0, 0], sizes = [8, 256], strides = [1, 1]} : vector<8x384xf32> to vector<8x256xf32>
    %59 = arith.addf %57, %58 : vector<8x256xf32>
    %60 = arith.negf %59 : vector<8x256xf32>
    %61 = math.exp %60 : vector<8x256xf32>
    %cst_30 = arith.constant 1.000000e+00 : f32
    %62 = vector.broadcast %cst_30 : f32 to vector<8x256xf32>
    %63 = arith.addf %62, %61 : vector<8x256xf32>
    %64 = arith.divf %62, %63 : vector<8x256xf32>
    %65 = vector.extract_strided_slice %64 {offsets = [0, 0], sizes = [8, 128], strides = [1, 1]} : vector<8x256xf32> to vector<8x128xf32>
    %66 = vector.extract_strided_slice %64 {offsets = [0, 128], sizes = [8, 128], strides = [1, 1]} : vector<8x256xf32> to vector<8x128xf32>
    %67 = vector.extract_strided_slice %55 {offsets = [0, 256], sizes = [8, 128], strides = [1, 1]} : vector<8x384xf32> to vector<8x128xf32>
    %68 = vector.extract_strided_slice %56 {offsets = [0, 256], sizes = [8, 128], strides = [1, 1]} : vector<8x384xf32> to vector<8x128xf32>
    %69 = arith.mulf %65, %68 : vector<8x128xf32>
    %70 = arith.addf %67, %69 : vector<8x128xf32>
    %71 = math.tanh %70 : vector<8x128xf32>
    %cst_31 = arith.constant 1.000000e+00 : f32
    %72 = vector.broadcast %cst_31 : f32 to vector<8x128xf32>
    %73 = arith.subf %72, %66 : vector<8x128xf32>
    %74 = arith.mulf %73, %71 : vector<8x128xf32>
    %75 = arith.mulf %66, %30 : vector<8x128xf32>
    %76 = arith.addf %74, %75 : vector<8x128xf32>
    %c5_i32 = arith.constant 5 : i32
    %77 = arith.muli %arg0, %c5_i32 : i32
    %78 = arith.addi %77, %c0_i32_21 : i32
    %c8_i32_32 = arith.constant 8 : i32
    %79 = arith.cmpi slt, %78, %c8_i32_32 : i32
    %80 = arith.select %79, %53, %29 : vector<8x128xf32>
    %c1_i32 = arith.constant 1 : i32
    %81 = arith.subi %c1_i32, %arg0 : i32
    %c5_i32_33 = arith.constant 5 : i32
    %82 = arith.muli %81, %c5_i32_33 : i32
    %c4_i32_34 = arith.constant 4 : i32
    %83 = arith.subi %c4_i32_34, %c0_i32_21 : i32
    %84 = arith.addi %82, %83 : i32
    %c8_i32_35 = arith.constant 8 : i32
    %85 = arith.cmpi slt, %84, %c8_i32_35 : i32
    %86 = arith.select %85, %76, %30 : vector<8x128xf32>
    %87 = tpu.concatenate %80, %86 in 1 : vector<8x128xf32>, vector<8x128xf32> -> vector<8x256xf32>
    %c0_36 = arith.constant 0 : index
    %c0_37 = arith.constant 0 : index
    %88 = vector.load %arg14[%c0_36, %c0_37] : memref<8x256xf32, #tpu.memory_space<vmem>>, vector<8x256xf32>
    tpu.vector_store %arg14[%c0_36, %c0_37], %87 {strides = array<i32>} : memref<8x256xf32, #tpu.memory_space<vmem>>, vector<8x256xf32>,
    %89 = arith.index_cast %22 : i32 to index
    %c0_38 = arith.constant 0 : index
    %90 = vector.load %arg9[%89, %c0_38] : memref<40x128xf32, #tpu.memory_space<vmem>>, vector<8x128xf32>
    tpu.vector_store %arg9[%89, %c0_38], %80 {strides = array<i32>} : memref<40x128xf32, #tpu.memory_space<vmem>>, vector<8x128xf32>,
    %91 = arith.index_cast %25 : i32 to index
    %c0_39 = arith.constant 0 : index
    %92 = vector.load %arg10[%91, %c0_39] : memref<40x128xf32, #tpu.memory_space<vmem>>, vector<8x128xf32>
    tpu.vector_store %arg10[%91, %c0_39], %86 {strides = array<i32>} : memref<40x128xf32, #tpu.memory_space<vmem>>, vector<8x128xf32>,
    %c1_i32_40 = arith.constant 1 : i32
    %c8_i32_41 = arith.constant 8 : i32
    %93 = arith.muli %c1_i32_40, %c8_i32_41 : i32
    %94 = tpu.assume_multiple %93, 8 : i32
    %c4_i32_42 = arith.constant 4 : i32
    %95 = arith.subi %c4_i32_42, %c1_i32_40 : i32
    %c8_i32_43 = arith.constant 8 : i32
    %96 = arith.muli %95, %c8_i32_43 : i32
    %97 = tpu.assume_multiple %96, 8 : i32
    %c0_44 = arith.constant 0 : index
    %c0_45 = arith.constant 0 : index
    %98 = vector.load %arg14[%c0_44, %c0_45] : memref<8x256xf32, #tpu.memory_space<vmem>>, vector<8x256xf32>
    %cst_46 = arith.constant dense<0.000000e+00> : vector<8x768xf32>
    %99 = tpu.matmul %98, %17, %cst_46 {dimension_numbers = #tpu.dot_dimension_numbers<[1], [0], [0], [1], [0, 0, 1, 1], [], []>} : vector<8x256xf32>, vector<256x768xf32>, vector<8x768xf32> -> vector<8x768xf32>
    %100 = arith.addf %99, %20 : vector<8x768xf32>
    %101 = vector.extract_strided_slice %98 {offsets = [0, 0], sizes = [8, 128], strides = [1, 1]} : vector<8x256xf32> to vector<8x128xf32>
    %102 = vector.extract_strided_slice %98 {offsets = [0, 128], sizes = [8, 128], strides = [1, 1]} : vector<8x256xf32> to vector<8x128xf32>
    %103 = arith.index_cast %94 : i32 to index
    %c0_47 = arith.constant 0 : index
    %104 = vector.load %arg12[%103, %c0_47] : memref<40x384xf32, #tpu.memory_space<vmem>>, vector<8x384xf32>
    %105 = vector.extract_strided_slice %100 {offsets = [0, 0], sizes = [8, 384], strides = [1, 1]} : vector<8x768xf32> to vector<8x384xf32>
    %106 = vector.extract_strided_slice %104 {offsets = [0, 0], sizes = [8, 256], strides = [1, 1]} : vector<8x384xf32> to vector<8x256xf32>
    %107 = vector.extract_strided_slice %105 {offsets = [0, 0], sizes = [8, 256], strides = [1, 1]} : vector<8x384xf32> to vector<8x256xf32>
    %108 = arith.addf %106, %107 : vector<8x256xf32>
    %109 = arith.negf %108 : vector<8x256xf32>
    %110 = math.exp %109 : vector<8x256xf32>
    %cst_48 = arith.constant 1.000000e+00 : f32
    %111 = vector.broadcast %cst_48 : f32 to vector<8x256xf32>
    %112 = arith.addf %111, %110 : vector<8x256xf32>
    %113 = arith.divf %111, %112 : vector<8x256xf32>
    %114 = vector.extract_strided_slice %113 {offsets = [0, 0], sizes = [8, 128], strides = [1, 1]} : vector<8x256xf32> to vector<8x128xf32>
    %115 = vector.extract_strided_slice %113 {offsets = [0, 128], sizes = [8, 128], strides = [1, 1]} : vector<8x256xf32> to vector<8x128xf32>
    %116 = vector.extract_strided_slice %104 {offsets = [0, 256], sizes = [8, 128], strides = [1, 1]} : vector<8x384xf32> to vector<8x128xf32>
    %117 = vector.extract_strided_slice %105 {offsets = [0, 256], sizes = [8, 128], strides = [1, 1]} : vector<8x384xf32> to vector<8x128xf32>
    %118 = arith.mulf %114, %117 : vector<8x128xf32>
    %119 = arith.addf %116, %118 : vector<8x128xf32>
    %120 = math.tanh %119 : vector<8x128xf32>
    %cst_49 = arith.constant 1.000000e+00 : f32
    %121 = vector.broadcast %cst_49 : f32 to vector<8x128xf32>
    %122 = arith.subf %121, %115 : vector<8x128xf32>
    %123 = arith.mulf %122, %120 : vector<8x128xf32>
    %124 = arith.mulf %115, %101 : vector<8x128xf32>
    %125 = arith.addf %123, %124 : vector<8x128xf32>
    %126 = arith.index_cast %97 : i32 to index
    %c0_50 = arith.constant 0 : index
    %127 = vector.load %arg13[%126, %c0_50] : memref<40x384xf32, #tpu.memory_space<vmem>>, vector<8x384xf32>
    %128 = vector.extract_strided_slice %100 {offsets = [0, 384], sizes = [8, 384], strides = [1, 1]} : vector<8x768xf32> to vector<8x384xf32>
    %129 = vector.extract_strided_slice %127 {offsets = [0, 0], sizes = [8, 256], strides = [1, 1]} : vector<8x384xf32> to vector<8x256xf32>
    %130 = vector.extract_strided_slice %128 {offsets = [0, 0], sizes = [8, 256], strides = [1, 1]} : vector<8x384xf32> to vector<8x256xf32>
    %131 = arith.addf %129, %130 : vector<8x256xf32>
    %132 = arith.negf %131 : vector<8x256xf32>
    %133 = math.exp %132 : vector<8x256xf32>
    %cst_51 = arith.constant 1.000000e+00 : f32
    %134 = vector.broadcast %cst_51 : f32 to vector<8x256xf32>
    %135 = arith.addf %134, %133 : vector<8x256xf32>
    %136 = arith.divf %134, %135 : vector<8x256xf32>
    %137 = vector.extract_strided_slice %136 {offsets = [0, 0], sizes = [8, 128], strides = [1, 1]} : vector<8x256xf32> to vector<8x128xf32>
    %138 = vector.extract_strided_slice %136 {offsets = [0, 128], sizes = [8, 128], strides = [1, 1]} : vector<8x256xf32> to vector<8x128xf32>
    %139 = vector.extract_strided_slice %127 {offsets = [0, 256], sizes = [8, 128], strides = [1, 1]} : vector<8x384xf32> to vector<8x128xf32>
    %140 = vector.extract_strided_slice %128 {offsets = [0, 256], sizes = [8, 128], strides = [1, 1]} : vector<8x384xf32> to vector<8x128xf32>
    %141 = arith.mulf %137, %140 : vector<8x128xf32>
    %142 = arith.addf %139, %141 : vector<8x128xf32>
    %143 = math.tanh %142 : vector<8x128xf32>
    %cst_52 = arith.constant 1.000000e+00 : f32
    %144 = vector.broadcast %cst_52 : f32 to vector<8x128xf32>
    %145 = arith.subf %144, %138 : vector<8x128xf32>
    %146 = arith.mulf %145, %143 : vector<8x128xf32>
    %147 = arith.mulf %138, %102 : vector<8x128xf32>
    %148 = arith.addf %146, %147 : vector<8x128xf32>
    %c5_i32_53 = arith.constant 5 : i32
    %149 = arith.muli %arg0, %c5_i32_53 : i32
    %150 = arith.addi %149, %c1_i32_40 : i32
    %c8_i32_54 = arith.constant 8 : i32
    %151 = arith.cmpi slt, %150, %c8_i32_54 : i32
    %152 = arith.select %151, %125, %101 : vector<8x128xf32>
    %c1_i32_55 = arith.constant 1 : i32
    %153 = arith.subi %c1_i32_55, %arg0 : i32
    %c5_i32_56 = arith.constant 5 : i32
    %154 = arith.muli %153, %c5_i32_56 : i32
    %c4_i32_57 = arith.constant 4 : i32
    %155 = arith.subi %c4_i32_57, %c1_i32_40 : i32
    %156 = arith.addi %154, %155 : i32
    %c8_i32_58 = arith.constant 8 : i32
    %157 = arith.cmpi slt, %156, %c8_i32_58 : i32
    %158 = arith.select %157, %148, %102 : vector<8x128xf32>
    %159 = tpu.concatenate %152, %158 in 1 : vector<8x128xf32>, vector<8x128xf32> -> vector<8x256xf32>
    %c0_59 = arith.constant 0 : index
    %c0_60 = arith.constant 0 : index
    %160 = vector.load %arg14[%c0_59, %c0_60] : memref<8x256xf32, #tpu.memory_space<vmem>>, vector<8x256xf32>
    tpu.vector_store %arg14[%c0_59, %c0_60], %159 {strides = array<i32>} : memref<8x256xf32, #tpu.memory_space<vmem>>, vector<8x256xf32>,
    %161 = arith.index_cast %94 : i32 to index
    %c0_61 = arith.constant 0 : index
    %162 = vector.load %arg9[%161, %c0_61] : memref<40x128xf32, #tpu.memory_space<vmem>>, vector<8x128xf32>
    tpu.vector_store %arg9[%161, %c0_61], %152 {strides = array<i32>} : memref<40x128xf32, #tpu.memory_space<vmem>>, vector<8x128xf32>,
    %163 = arith.index_cast %97 : i32 to index
    %c0_62 = arith.constant 0 : index
    %164 = vector.load %arg10[%163, %c0_62] : memref<40x128xf32, #tpu.memory_space<vmem>>, vector<8x128xf32>
    tpu.vector_store %arg10[%163, %c0_62], %158 {strides = array<i32>} : memref<40x128xf32, #tpu.memory_space<vmem>>, vector<8x128xf32>,
    %c2_i32 = arith.constant 2 : i32
    %c8_i32_63 = arith.constant 8 : i32
    %165 = arith.muli %c2_i32, %c8_i32_63 : i32
    %166 = tpu.assume_multiple %165, 8 : i32
    %c4_i32_64 = arith.constant 4 : i32
    %167 = arith.subi %c4_i32_64, %c2_i32 : i32
    %c8_i32_65 = arith.constant 8 : i32
    %168 = arith.muli %167, %c8_i32_65 : i32
    %169 = tpu.assume_multiple %168, 8 : i32
    %c0_66 = arith.constant 0 : index
    %c0_67 = arith.constant 0 : index
    %170 = vector.load %arg14[%c0_66, %c0_67] : memref<8x256xf32, #tpu.memory_space<vmem>>, vector<8x256xf32>
    %cst_68 = arith.constant dense<0.000000e+00> : vector<8x768xf32>
    %171 = tpu.matmul %170, %17, %cst_68 {dimension_numbers = #tpu.dot_dimension_numbers<[1], [0], [0], [1], [0, 0, 1, 1], [], []>} : vector<8x256xf32>, vector<256x768xf32>, vector<8x768xf32> -> vector<8x768xf32>
    %172 = arith.addf %171, %20 : vector<8x768xf32>
    %173 = vector.extract_strided_slice %170 {offsets = [0, 0], sizes = [8, 128], strides = [1, 1]} : vector<8x256xf32> to vector<8x128xf32>
    %174 = vector.extract_strided_slice %170 {offsets = [0, 128], sizes = [8, 128], strides = [1, 1]} : vector<8x256xf32> to vector<8x128xf32>
    %175 = arith.index_cast %166 : i32 to index
    %c0_69 = arith.constant 0 : index
    %176 = vector.load %arg12[%175, %c0_69] : memref<40x384xf32, #tpu.memory_space<vmem>>, vector<8x384xf32>
    %177 = vector.extract_strided_slice %172 {offsets = [0, 0], sizes = [8, 384], strides = [1, 1]} : vector<8x768xf32> to vector<8x384xf32>
    %178 = vector.extract_strided_slice %176 {offsets = [0, 0], sizes = [8, 256], strides = [1, 1]} : vector<8x384xf32> to vector<8x256xf32>
    %179 = vector.extract_strided_slice %177 {offsets = [0, 0], sizes = [8, 256], strides = [1, 1]} : vector<8x384xf32> to vector<8x256xf32>
    %180 = arith.addf %178, %179 : vector<8x256xf32>
    %181 = arith.negf %180 : vector<8x256xf32>
    %182 = math.exp %181 : vector<8x256xf32>
    %cst_70 = arith.constant 1.000000e+00 : f32
    %183 = vector.broadcast %cst_70 : f32 to vector<8x256xf32>
    %184 = arith.addf %183, %182 : vector<8x256xf32>
    %185 = arith.divf %183, %184 : vector<8x256xf32>
    %186 = vector.extract_strided_slice %185 {offsets = [0, 0], sizes = [8, 128], strides = [1, 1]} : vector<8x256xf32> to vector<8x128xf32>
    %187 = vector.extract_strided_slice %185 {offsets = [0, 128], sizes = [8, 128], strides = [1, 1]} : vector<8x256xf32> to vector<8x128xf32>
    %188 = vector.extract_strided_slice %176 {offsets = [0, 256], sizes = [8, 128], strides = [1, 1]} : vector<8x384xf32> to vector<8x128xf32>
    %189 = vector.extract_strided_slice %177 {offsets = [0, 256], sizes = [8, 128], strides = [1, 1]} : vector<8x384xf32> to vector<8x128xf32>
    %190 = arith.mulf %186, %189 : vector<8x128xf32>
    %191 = arith.addf %188, %190 : vector<8x128xf32>
    %192 = math.tanh %191 : vector<8x128xf32>
    %cst_71 = arith.constant 1.000000e+00 : f32
    %193 = vector.broadcast %cst_71 : f32 to vector<8x128xf32>
    %194 = arith.subf %193, %187 : vector<8x128xf32>
    %195 = arith.mulf %194, %192 : vector<8x128xf32>
    %196 = arith.mulf %187, %173 : vector<8x128xf32>
    %197 = arith.addf %195, %196 : vector<8x128xf32>
    %198 = arith.index_cast %169 : i32 to index
    %c0_72 = arith.constant 0 : index
    %199 = vector.load %arg13[%198, %c0_72] : memref<40x384xf32, #tpu.memory_space<vmem>>, vector<8x384xf32>
    %200 = vector.extract_strided_slice %172 {offsets = [0, 384], sizes = [8, 384], strides = [1, 1]} : vector<8x768xf32> to vector<8x384xf32>
    %201 = vector.extract_strided_slice %199 {offsets = [0, 0], sizes = [8, 256], strides = [1, 1]} : vector<8x384xf32> to vector<8x256xf32>
    %202 = vector.extract_strided_slice %200 {offsets = [0, 0], sizes = [8, 256], strides = [1, 1]} : vector<8x384xf32> to vector<8x256xf32>
    %203 = arith.addf %201, %202 : vector<8x256xf32>
    %204 = arith.negf %203 : vector<8x256xf32>
    %205 = math.exp %204 : vector<8x256xf32>
    %cst_73 = arith.constant 1.000000e+00 : f32
    %206 = vector.broadcast %cst_73 : f32 to vector<8x256xf32>
    %207 = arith.addf %206, %205 : vector<8x256xf32>
    %208 = arith.divf %206, %207 : vector<8x256xf32>
    %209 = vector.extract_strided_slice %208 {offsets = [0, 0], sizes = [8, 128], strides = [1, 1]} : vector<8x256xf32> to vector<8x128xf32>
    %210 = vector.extract_strided_slice %208 {offsets = [0, 128], sizes = [8, 128], strides = [1, 1]} : vector<8x256xf32> to vector<8x128xf32>
    %211 = vector.extract_strided_slice %199 {offsets = [0, 256], sizes = [8, 128], strides = [1, 1]} : vector<8x384xf32> to vector<8x128xf32>
    %212 = vector.extract_strided_slice %200 {offsets = [0, 256], sizes = [8, 128], strides = [1, 1]} : vector<8x384xf32> to vector<8x128xf32>
    %213 = arith.mulf %209, %212 : vector<8x128xf32>
    %214 = arith.addf %211, %213 : vector<8x128xf32>
    %215 = math.tanh %214 : vector<8x128xf32>
    %cst_74 = arith.constant 1.000000e+00 : f32
    %216 = vector.broadcast %cst_74 : f32 to vector<8x128xf32>
    %217 = arith.subf %216, %210 : vector<8x128xf32>
    %218 = arith.mulf %217, %215 : vector<8x128xf32>
    %219 = arith.mulf %210, %174 : vector<8x128xf32>
    %220 = arith.addf %218, %219 : vector<8x128xf32>
    %c5_i32_75 = arith.constant 5 : i32
    %221 = arith.muli %arg0, %c5_i32_75 : i32
    %222 = arith.addi %221, %c2_i32 : i32
    %c8_i32_76 = arith.constant 8 : i32
    %223 = arith.cmpi slt, %222, %c8_i32_76 : i32
    %224 = arith.select %223, %197, %173 : vector<8x128xf32>
    %c1_i32_77 = arith.constant 1 : i32
    %225 = arith.subi %c1_i32_77, %arg0 : i32
    %c5_i32_78 = arith.constant 5 : i32
    %226 = arith.muli %225, %c5_i32_78 : i32
    %c4_i32_79 = arith.constant 4 : i32
    %227 = arith.subi %c4_i32_79, %c2_i32 : i32
    %228 = arith.addi %226, %227 : i32
    %c8_i32_80 = arith.constant 8 : i32
    %229 = arith.cmpi slt, %228, %c8_i32_80 : i32
    %230 = arith.select %229, %220, %174 : vector<8x128xf32>
    %231 = tpu.concatenate %224, %230 in 1 : vector<8x128xf32>, vector<8x128xf32> -> vector<8x256xf32>
    %c0_81 = arith.constant 0 : index
    %c0_82 = arith.constant 0 : index
    %232 = vector.load %arg14[%c0_81, %c0_82] : memref<8x256xf32, #tpu.memory_space<vmem>>, vector<8x256xf32>
    tpu.vector_store %arg14[%c0_81, %c0_82], %231 {strides = array<i32>} : memref<8x256xf32, #tpu.memory_space<vmem>>, vector<8x256xf32>,
    %233 = arith.index_cast %166 : i32 to index
    %c0_83 = arith.constant 0 : index
    %234 = vector.load %arg9[%233, %c0_83] : memref<40x128xf32, #tpu.memory_space<vmem>>, vector<8x128xf32>
    tpu.vector_store %arg9[%233, %c0_83], %224 {strides = array<i32>} : memref<40x128xf32, #tpu.memory_space<vmem>>, vector<8x128xf32>,
    %235 = arith.index_cast %169 : i32 to index
    %c0_84 = arith.constant 0 : index
    %236 = vector.load %arg10[%235, %c0_84] : memref<40x128xf32, #tpu.memory_space<vmem>>, vector<8x128xf32>
    tpu.vector_store %arg10[%235, %c0_84], %230 {strides = array<i32>} : memref<40x128xf32, #tpu.memory_space<vmem>>, vector<8x128xf32>,
    %c3_i32 = arith.constant 3 : i32
    %c8_i32_85 = arith.constant 8 : i32
    %237 = arith.muli %c3_i32, %c8_i32_85 : i32
    %238 = tpu.assume_multiple %237, 8 : i32
    %c4_i32_86 = arith.constant 4 : i32
    %239 = arith.subi %c4_i32_86, %c3_i32 : i32
    %c8_i32_87 = arith.constant 8 : i32
    %240 = arith.muli %239, %c8_i32_87 : i32
    %241 = tpu.assume_multiple %240, 8 : i32
    %c0_88 = arith.constant 0 : index
    %c0_89 = arith.constant 0 : index
    %242 = vector.load %arg14[%c0_88, %c0_89] : memref<8x256xf32, #tpu.memory_space<vmem>>, vector<8x256xf32>
    %cst_90 = arith.constant dense<0.000000e+00> : vector<8x768xf32>
    %243 = tpu.matmul %242, %17, %cst_90 {dimension_numbers = #tpu.dot_dimension_numbers<[1], [0], [0], [1], [0, 0, 1, 1], [], []>} : vector<8x256xf32>, vector<256x768xf32>, vector<8x768xf32> -> vector<8x768xf32>
    %244 = arith.addf %243, %20 : vector<8x768xf32>
    %245 = vector.extract_strided_slice %242 {offsets = [0, 0], sizes = [8, 128], strides = [1, 1]} : vector<8x256xf32> to vector<8x128xf32>
    %246 = vector.extract_strided_slice %242 {offsets = [0, 128], sizes = [8, 128], strides = [1, 1]} : vector<8x256xf32> to vector<8x128xf32>
    %247 = arith.index_cast %238 : i32 to index
    %c0_91 = arith.constant 0 : index
    %248 = vector.load %arg12[%247, %c0_91] : memref<40x384xf32, #tpu.memory_space<vmem>>, vector<8x384xf32>
    %249 = vector.extract_strided_slice %244 {offsets = [0, 0], sizes = [8, 384], strides = [1, 1]} : vector<8x768xf32> to vector<8x384xf32>
    %250 = vector.extract_strided_slice %248 {offsets = [0, 0], sizes = [8, 256], strides = [1, 1]} : vector<8x384xf32> to vector<8x256xf32>
    %251 = vector.extract_strided_slice %249 {offsets = [0, 0], sizes = [8, 256], strides = [1, 1]} : vector<8x384xf32> to vector<8x256xf32>
    %252 = arith.addf %250, %251 : vector<8x256xf32>
    %253 = arith.negf %252 : vector<8x256xf32>
    %254 = math.exp %253 : vector<8x256xf32>
    %cst_92 = arith.constant 1.000000e+00 : f32
    %255 = vector.broadcast %cst_92 : f32 to vector<8x256xf32>
    %256 = arith.addf %255, %254 : vector<8x256xf32>
    %257 = arith.divf %255, %256 : vector<8x256xf32>
    %258 = vector.extract_strided_slice %257 {offsets = [0, 0], sizes = [8, 128], strides = [1, 1]} : vector<8x256xf32> to vector<8x128xf32>
    %259 = vector.extract_strided_slice %257 {offsets = [0, 128], sizes = [8, 128], strides = [1, 1]} : vector<8x256xf32> to vector<8x128xf32>
    %260 = vector.extract_strided_slice %248 {offsets = [0, 256], sizes = [8, 128], strides = [1, 1]} : vector<8x384xf32> to vector<8x128xf32>
    %261 = vector.extract_strided_slice %249 {offsets = [0, 256], sizes = [8, 128], strides = [1, 1]} : vector<8x384xf32> to vector<8x128xf32>
    %262 = arith.mulf %258, %261 : vector<8x128xf32>
    %263 = arith.addf %260, %262 : vector<8x128xf32>
    %264 = math.tanh %263 : vector<8x128xf32>
    %cst_93 = arith.constant 1.000000e+00 : f32
    %265 = vector.broadcast %cst_93 : f32 to vector<8x128xf32>
    %266 = arith.subf %265, %259 : vector<8x128xf32>
    %267 = arith.mulf %266, %264 : vector<8x128xf32>
    %268 = arith.mulf %259, %245 : vector<8x128xf32>
    %269 = arith.addf %267, %268 : vector<8x128xf32>
    %270 = arith.index_cast %241 : i32 to index
    %c0_94 = arith.constant 0 : index
    %271 = vector.load %arg13[%270, %c0_94] : memref<40x384xf32, #tpu.memory_space<vmem>>, vector<8x384xf32>
    %272 = vector.extract_strided_slice %244 {offsets = [0, 384], sizes = [8, 384], strides = [1, 1]} : vector<8x768xf32> to vector<8x384xf32>
    %273 = vector.extract_strided_slice %271 {offsets = [0, 0], sizes = [8, 256], strides = [1, 1]} : vector<8x384xf32> to vector<8x256xf32>
    %274 = vector.extract_strided_slice %272 {offsets = [0, 0], sizes = [8, 256], strides = [1, 1]} : vector<8x384xf32> to vector<8x256xf32>
    %275 = arith.addf %273, %274 : vector<8x256xf32>
    %276 = arith.negf %275 : vector<8x256xf32>
    %277 = math.exp %276 : vector<8x256xf32>
    %cst_95 = arith.constant 1.000000e+00 : f32
    %278 = vector.broadcast %cst_95 : f32 to vector<8x256xf32>
    %279 = arith.addf %278, %277 : vector<8x256xf32>
    %280 = arith.divf %278, %279 : vector<8x256xf32>
    %281 = vector.extract_strided_slice %280 {offsets = [0, 0], sizes = [8, 128], strides = [1, 1]} : vector<8x256xf32> to vector<8x128xf32>
    %282 = vector.extract_strided_slice %280 {offsets = [0, 128], sizes = [8, 128], strides = [1, 1]} : vector<8x256xf32> to vector<8x128xf32>
    %283 = vector.extract_strided_slice %271 {offsets = [0, 256], sizes = [8, 128], strides = [1, 1]} : vector<8x384xf32> to vector<8x128xf32>
    %284 = vector.extract_strided_slice %272 {offsets = [0, 256], sizes = [8, 128], strides = [1, 1]} : vector<8x384xf32> to vector<8x128xf32>
    %285 = arith.mulf %281, %284 : vector<8x128xf32>
    %286 = arith.addf %283, %285 : vector<8x128xf32>
    %287 = math.tanh %286 : vector<8x128xf32>
    %cst_96 = arith.constant 1.000000e+00 : f32
    %288 = vector.broadcast %cst_96 : f32 to vector<8x128xf32>
    %289 = arith.subf %288, %282 : vector<8x128xf32>
    %290 = arith.mulf %289, %287 : vector<8x128xf32>
    %291 = arith.mulf %282, %246 : vector<8x128xf32>
    %292 = arith.addf %290, %291 : vector<8x128xf32>
    %c5_i32_97 = arith.constant 5 : i32
    %293 = arith.muli %arg0, %c5_i32_97 : i32
    %294 = arith.addi %293, %c3_i32 : i32
    %c8_i32_98 = arith.constant 8 : i32
    %295 = arith.cmpi slt, %294, %c8_i32_98 : i32
    %296 = arith.select %295, %269, %245 : vector<8x128xf32>
    %c1_i32_99 = arith.constant 1 : i32
    %297 = arith.subi %c1_i32_99, %arg0 : i32
    %c5_i32_100 = arith.constant 5 : i32
    %298 = arith.muli %297, %c5_i32_100 : i32
    %c4_i32_101 = arith.constant 4 : i32
    %299 = arith.subi %c4_i32_101, %c3_i32 : i32
    %300 = arith.addi %298, %299 : i32
    %c8_i32_102 = arith.constant 8 : i32
    %301 = arith.cmpi slt, %300, %c8_i32_102 : i32
    %302 = arith.select %301, %292, %246 : vector<8x128xf32>
    %303 = tpu.concatenate %296, %302 in 1 : vector<8x128xf32>, vector<8x128xf32> -> vector<8x256xf32>
    %c0_103 = arith.constant 0 : index
    %c0_104 = arith.constant 0 : index
    %304 = vector.load %arg14[%c0_103, %c0_104] : memref<8x256xf32, #tpu.memory_space<vmem>>, vector<8x256xf32>
    tpu.vector_store %arg14[%c0_103, %c0_104], %303 {strides = array<i32>} : memref<8x256xf32, #tpu.memory_space<vmem>>, vector<8x256xf32>,
    %305 = arith.index_cast %238 : i32 to index
    %c0_105 = arith.constant 0 : index
    %306 = vector.load %arg9[%305, %c0_105] : memref<40x128xf32, #tpu.memory_space<vmem>>, vector<8x128xf32>
    tpu.vector_store %arg9[%305, %c0_105], %296 {strides = array<i32>} : memref<40x128xf32, #tpu.memory_space<vmem>>, vector<8x128xf32>,
    %307 = arith.index_cast %241 : i32 to index
    %c0_106 = arith.constant 0 : index
    %308 = vector.load %arg10[%307, %c0_106] : memref<40x128xf32, #tpu.memory_space<vmem>>, vector<8x128xf32>
    tpu.vector_store %arg10[%307, %c0_106], %302 {strides = array<i32>} : memref<40x128xf32, #tpu.memory_space<vmem>>, vector<8x128xf32>,
    %c4_i32_107 = arith.constant 4 : i32
    %c8_i32_108 = arith.constant 8 : i32
    %309 = arith.muli %c4_i32_107, %c8_i32_108 : i32
    %310 = tpu.assume_multiple %309, 8 : i32
    %c4_i32_109 = arith.constant 4 : i32
    %311 = arith.subi %c4_i32_109, %c4_i32_107 : i32
    %c8_i32_110 = arith.constant 8 : i32
    %312 = arith.muli %311, %c8_i32_110 : i32
    %313 = tpu.assume_multiple %312, 8 : i32
    %c0_111 = arith.constant 0 : index
    %c0_112 = arith.constant 0 : index
    %314 = vector.load %arg14[%c0_111, %c0_112] : memref<8x256xf32, #tpu.memory_space<vmem>>, vector<8x256xf32>
    %cst_113 = arith.constant dense<0.000000e+00> : vector<8x768xf32>
    %315 = tpu.matmul %314, %17, %cst_113 {dimension_numbers = #tpu.dot_dimension_numbers<[1], [0], [0], [1], [0, 0, 1, 1], [], []>} : vector<8x256xf32>, vector<256x768xf32>, vector<8x768xf32> -> vector<8x768xf32>
    %316 = arith.addf %315, %20 : vector<8x768xf32>
    %317 = vector.extract_strided_slice %314 {offsets = [0, 0], sizes = [8, 128], strides = [1, 1]} : vector<8x256xf32> to vector<8x128xf32>
    %318 = vector.extract_strided_slice %314 {offsets = [0, 128], sizes = [8, 128], strides = [1, 1]} : vector<8x256xf32> to vector<8x128xf32>
    %319 = arith.index_cast %310 : i32 to index
    %c0_114 = arith.constant 0 : index
    %320 = vector.load %arg12[%319, %c0_114] : memref<40x384xf32, #tpu.memory_space<vmem>>, vector<8x384xf32>
    %321 = vector.extract_strided_slice %316 {offsets = [0, 0], sizes = [8, 384], strides = [1, 1]} : vector<8x768xf32> to vector<8x384xf32>
    %322 = vector.extract_strided_slice %320 {offsets = [0, 0], sizes = [8, 256], strides = [1, 1]} : vector<8x384xf32> to vector<8x256xf32>
    %323 = vector.extract_strided_slice %321 {offsets = [0, 0], sizes = [8, 256], strides = [1, 1]} : vector<8x384xf32> to vector<8x256xf32>
    %324 = arith.addf %322, %323 : vector<8x256xf32>
    %325 = arith.negf %324 : vector<8x256xf32>
    %326 = math.exp %325 : vector<8x256xf32>
    %cst_115 = arith.constant 1.000000e+00 : f32
    %327 = vector.broadcast %cst_115 : f32 to vector<8x256xf32>
    %328 = arith.addf %327, %326 : vector<8x256xf32>
    %329 = arith.divf %327, %328 : vector<8x256xf32>
    %330 = vector.extract_strided_slice %329 {offsets = [0, 0], sizes = [8, 128], strides = [1, 1]} : vector<8x256xf32> to vector<8x128xf32>
    %331 = vector.extract_strided_slice %329 {offsets = [0, 128], sizes = [8, 128], strides = [1, 1]} : vector<8x256xf32> to vector<8x128xf32>
    %332 = vector.extract_strided_slice %320 {offsets = [0, 256], sizes = [8, 128], strides = [1, 1]} : vector<8x384xf32> to vector<8x128xf32>
    %333 = vector.extract_strided_slice %321 {offsets = [0, 256], sizes = [8, 128], strides = [1, 1]} : vector<8x384xf32> to vector<8x128xf32>
    %334 = arith.mulf %330, %333 : vector<8x128xf32>
    %335 = arith.addf %332, %334 : vector<8x128xf32>
    %336 = math.tanh %335 : vector<8x128xf32>
    %cst_116 = arith.constant 1.000000e+00 : f32
    %337 = vector.broadcast %cst_116 : f32 to vector<8x128xf32>
    %338 = arith.subf %337, %331 : vector<8x128xf32>
    %339 = arith.mulf %338, %336 : vector<8x128xf32>
    %340 = arith.mulf %331, %317 : vector<8x128xf32>
    %341 = arith.addf %339, %340 : vector<8x128xf32>
    %342 = arith.index_cast %313 : i32 to index
    %c0_117 = arith.constant 0 : index
    %343 = vector.load %arg13[%342, %c0_117] : memref<40x384xf32, #tpu.memory_space<vmem>>, vector<8x384xf32>
    %344 = vector.extract_strided_slice %316 {offsets = [0, 384], sizes = [8, 384], strides = [1, 1]} : vector<8x768xf32> to vector<8x384xf32>
    %345 = vector.extract_strided_slice %343 {offsets = [0, 0], sizes = [8, 256], strides = [1, 1]} : vector<8x384xf32> to vector<8x256xf32>
    %346 = vector.extract_strided_slice %344 {offsets = [0, 0], sizes = [8, 256], strides = [1, 1]} : vector<8x384xf32> to vector<8x256xf32>
    %347 = arith.addf %345, %346 : vector<8x256xf32>
    %348 = arith.negf %347 : vector<8x256xf32>
    %349 = math.exp %348 : vector<8x256xf32>
    %cst_118 = arith.constant 1.000000e+00 : f32
    %350 = vector.broadcast %cst_118 : f32 to vector<8x256xf32>
    %351 = arith.addf %350, %349 : vector<8x256xf32>
    %352 = arith.divf %350, %351 : vector<8x256xf32>
    %353 = vector.extract_strided_slice %352 {offsets = [0, 0], sizes = [8, 128], strides = [1, 1]} : vector<8x256xf32> to vector<8x128xf32>
    %354 = vector.extract_strided_slice %352 {offsets = [0, 128], sizes = [8, 128], strides = [1, 1]} : vector<8x256xf32> to vector<8x128xf32>
    %355 = vector.extract_strided_slice %343 {offsets = [0, 256], sizes = [8, 128], strides = [1, 1]} : vector<8x384xf32> to vector<8x128xf32>
    %356 = vector.extract_strided_slice %344 {offsets = [0, 256], sizes = [8, 128], strides = [1, 1]} : vector<8x384xf32> to vector<8x128xf32>
    %357 = arith.mulf %353, %356 : vector<8x128xf32>
    %358 = arith.addf %355, %357 : vector<8x128xf32>
    %359 = math.tanh %358 : vector<8x128xf32>
    %cst_119 = arith.constant 1.000000e+00 : f32
    %360 = vector.broadcast %cst_119 : f32 to vector<8x128xf32>
    %361 = arith.subf %360, %354 : vector<8x128xf32>
    %362 = arith.mulf %361, %359 : vector<8x128xf32>
    %363 = arith.mulf %354, %318 : vector<8x128xf32>
    %364 = arith.addf %362, %363 : vector<8x128xf32>
    %c5_i32_120 = arith.constant 5 : i32
    %365 = arith.muli %arg0, %c5_i32_120 : i32
    %366 = arith.addi %365, %c4_i32_107 : i32
    %c8_i32_121 = arith.constant 8 : i32
    %367 = arith.cmpi slt, %366, %c8_i32_121 : i32
    %368 = arith.select %367, %341, %317 : vector<8x128xf32>
    %c1_i32_122 = arith.constant 1 : i32
    %369 = arith.subi %c1_i32_122, %arg0 : i32
    %c5_i32_123 = arith.constant 5 : i32
    %370 = arith.muli %369, %c5_i32_123 : i32
    %c4_i32_124 = arith.constant 4 : i32
    %371 = arith.subi %c4_i32_124, %c4_i32_107 : i32
    %372 = arith.addi %370, %371 : i32
    %c8_i32_125 = arith.constant 8 : i32
    %373 = arith.cmpi slt, %372, %c8_i32_125 : i32
    %374 = arith.select %373, %364, %318 : vector<8x128xf32>
    %375 = tpu.concatenate %368, %374 in 1 : vector<8x128xf32>, vector<8x128xf32> -> vector<8x256xf32>
    %c0_126 = arith.constant 0 : index
    %c0_127 = arith.constant 0 : index
    %376 = vector.load %arg14[%c0_126, %c0_127] : memref<8x256xf32, #tpu.memory_space<vmem>>, vector<8x256xf32>
    tpu.vector_store %arg14[%c0_126, %c0_127], %375 {strides = array<i32>} : memref<8x256xf32, #tpu.memory_space<vmem>>, vector<8x256xf32>,
    %377 = arith.index_cast %310 : i32 to index
    %c0_128 = arith.constant 0 : index
    %378 = vector.load %arg9[%377, %c0_128] : memref<40x128xf32, #tpu.memory_space<vmem>>, vector<8x128xf32>
    tpu.vector_store %arg9[%377, %c0_128], %368 {strides = array<i32>} : memref<40x128xf32, #tpu.memory_space<vmem>>, vector<8x128xf32>,
    %379 = arith.index_cast %313 : i32 to index
    %c0_129 = arith.constant 0 : index
    %380 = vector.load %arg10[%379, %c0_129] : memref<40x128xf32, #tpu.memory_space<vmem>>, vector<8x128xf32>
    tpu.vector_store %arg10[%379, %c0_129], %374 {strides = array<i32>} : memref<40x128xf32, #tpu.memory_space<vmem>>, vector<8x128xf32>,
    %c5_i32_130 = arith.constant 5 : i32
    %c1_i32_131 = arith.constant 1 : i32
    %381 = arith.cmpi eq, %arg0, %c1_i32_131 : i32
    %382 = arith.extui %381 : i1 to i32
    %c0_i32_132 = arith.constant 0 : i32
    %383 = arith.cmpi ne, %382, %c0_i32_132 : i32
    scf.if %383 {
      %c0_133 = arith.constant 0 : index
      %c0_134 = arith.constant 0 : index
      %384 = vector.load %arg14[%c0_133, %c0_134] : memref<8x256xf32, #tpu.memory_space<vmem>>, vector<8x128xf32>
      %c0_135 = arith.constant 0 : index
      %c0_136 = arith.constant 0 : index
      %c0_137 = arith.constant 0 : index
      %385 = vector.load %arg11[%c0_135, %c0_136, %c0_137] : memref<2x8x128xf32, #tpu.memory_space<vmem>>, vector<1x8x128xf32>
      %386 = vector.shape_cast %385 : vector<1x8x128xf32> to vector<8x128xf32>
      %387 = vector.shape_cast %384 : vector<8x128xf32> to vector<1x8x128xf32>
      tpu.vector_store %arg11[%c0_135, %c0_136, %c0_137], %387 {strides = array<i32>} : memref<2x8x128xf32, #tpu.memory_space<vmem>>, vector<1x8x128xf32>,
      %c0_138 = arith.constant 0 : index
      %c128 = arith.constant 128 : index
      %388 = vector.load %arg14[%c0_138, %c128] : memref<8x256xf32, #tpu.memory_space<vmem>>, vector<8x128xf32>
      %c1 = arith.constant 1 : index
      %c0_139 = arith.constant 0 : index
      %c0_140 = arith.constant 0 : index
      %389 = vector.load %arg11[%c1, %c0_139, %c0_140] : memref<2x8x128xf32, #tpu.memory_space<vmem>>, vector<1x8x128xf32>
      %390 = vector.shape_cast %389 : vector<1x8x128xf32> to vector<8x128xf32>
      %391 = vector.shape_cast %388 : vector<8x128xf32> to vector<1x8x128xf32>
      tpu.vector_store %arg11[%c1, %c0_139, %c0_140], %391 {strides = array<i32>} : memref<2x8x128xf32, #tpu.memory_space<vmem>>, vector<1x8x128xf32>,
    } else {
    }
    return
  }
  func.func @transform_0(%arg0: i32) -> (i32, i32) {
    %c0_i32 = arith.constant 0 : i32
    %c0_i32_0 = arith.constant 0 : i32
    return %arg0, %c0_i32 : i32, i32
  }
  func.func @transform_1(%arg0: i32) -> (i32, i32) {
    %c1_i32 = arith.constant 1 : i32
    %0 = arith.subi %c1_i32, %arg0 : i32
    %c0_i32 = arith.constant 0 : i32
    %c0_i32_0 = arith.constant 0 : i32
    return %0, %c0_i32 : i32, i32
  }
  func.func @transform_2(%arg0: i32) -> (i32, i32) {
    %c0_i32 = arith.constant 0 : i32
    %c0_i32_0 = arith.constant 0 : i32
    %c0_i32_1 = arith.constant 0 : i32
    return %c0_i32, %c0_i32_0 : i32, i32
  }
  func.func @transform_3(%arg0: i32) -> (i32, i32) {
    %c0_i32 = arith.constant 0 : i32
    %c0_i32_0 = arith.constant 0 : i32
    %c0_i32_1 = arith.constant 0 : i32
    return %c0_i32, %c0_i32_0 : i32, i32
  }
  func.func @transform_4(%arg0: i32) -> (i32, i32) {
    %c0_i32 = arith.constant 0 : i32
    %c0_i32_0 = arith.constant 0 : i32
    %c0_i32_1 = arith.constant 0 : i32
    return %c0_i32, %c0_i32_0 : i32, i32
  }
  func.func @transform_5(%arg0: i32) -> (i32, i32) {
    %c0_i32 = arith.constant 0 : i32
    %c0_i32_0 = arith.constant 0 : i32
    %c0_i32_1 = arith.constant 0 : i32
    return %c0_i32, %c0_i32_0 : i32, i32
  }
  func.func @transform_6(%arg0: i32) -> (i32, i32) {
    %c0_i32 = arith.constant 0 : i32
    %c0_i32_0 = arith.constant 0 : i32
    %c0_i32_1 = arith.constant 0 : i32
    return %c0_i32, %c0_i32_0 : i32, i32
  }
  func.func @transform_7(%arg0: i32) -> (i32, i32) {
    %c0_i32 = arith.constant 0 : i32
    %c0_i32_0 = arith.constant 0 : i32
    %c0_i32_1 = arith.constant 0 : i32
    return %c0_i32, %c0_i32_0 : i32, i32
  }
  func.func @transform_8(%arg0: i32) -> (i32, i32) {
    %c0_i32 = arith.constant 0 : i32
    %c0_i32_0 = arith.constant 0 : i32
    return %arg0, %c0_i32 : i32, i32
  }
  func.func @transform_9(%arg0: i32) -> (i32, i32) {
    %c1_i32 = arith.constant 1 : i32
    %0 = arith.subi %c1_i32, %arg0 : i32
    %c0_i32 = arith.constant 0 : i32
    %c0_i32_0 = arith.constant 0 : i32
    return %0, %c0_i32 : i32, i32
  }
  func.func @transform_10(%arg0: i32) -> (i32, i32, i32) {
    %c0_i32 = arith.constant 0 : i32
    %c0_i32_0 = arith.constant 0 : i32
    %c0_i32_1 = arith.constant 0 : i32
    %c0_i32_2 = arith.constant 0 : i32
    return %c0_i32, %c0_i32_0, %c0_i32_1 : i32, i32, i32
  }
}

</mosaic_0001>

<llo_original>
// kernel: encoder_forward.2
$region0: #{encoder_forward.2}
  #allocation0 [shape = 'u32[]', space=smem, size = 0x4, offset = 0x4, fixed_abs, tag = 'smem constant byte address 0x4 - core index']
  #allocation1 [shape = 'u32[72,128]{1,0:T(1,128)}', space=vmem, size = 0x9000, scoped, tag = 'internal scratch']
  #allocation2 [shape = 'f32[40,384]{1,0:T(8,128)}', space=vmem, size = 0xf000, scoped, tag = 'scratch operand']
  #allocation3 [shape = 'f32[40,384]{1,0:T(8,128)}', space=vmem, size = 0xf000, scoped, tag = 'scratch operand']
  #allocation4 [shape = 'f32[8,256]{1,0:T(8,128)}', space=vmem, size = 0x2000, scoped, tag = 'scratch operand']
  %s0 = inlined_call_operand.vmem [shape: f32[80,16], index: 0, kind: input, shape index: {}, may-alias: {0,1}]
  %s1 = inlined_call_operand.vmem [shape: f32[80,16], index: 1, kind: input, shape index: {}, may-alias: {0,1}]
  %s2 = inlined_call_operand.vmem [shape: f32[16,384], index: 2, kind: input, shape index: {}]
  %s3 = inlined_call_operand.vmem [shape: f32[16,384], index: 3, kind: input, shape index: {}]
  %s4 = inlined_call_operand.vmem [shape: f32[1,384], index: 4, kind: input, shape index: {}]
  %s5 = inlined_call_operand.vmem [shape: f32[1,384], index: 5, kind: input, shape index: {}]
  %s6 = inlined_call_operand.vmem [shape: f32[256,768], index: 6, kind: input, shape index: {}]
  %s7 = inlined_call_operand.vmem [shape: f32[1,768], index: 7, kind: input, shape index: {}]
  %s8 = inlined_call_operand.vmem [shape: f32[80,128], index: 8, kind: output, shape index: {0}]
  %s9 = inlined_call_operand.vmem [shape: f32[80,128], index: 9, kind: output, shape index: {1}]
  %s10 = inlined_call_operand.vmem [shape: f32[2,8,128], index: 10, kind: output, shape index: {2}]
  %11 = xla_tuple %s8, %s9, %s10
  %s12 = sld [smem:[#allocation0]]
  $region89: #{encoder_forward.2} parent=0
    _
  %s14 = ssub.s32 1, %s12
  %s15 = scalar_select 0, %s14, %s12
  loop: start=0, step=1, limit=4
  $region2: #{encoder_forward.2} parent=0 // loop_pre_header
    _
  $region3: #{encoder_forward.2} parent=0 // loop_header
    %s17 = sphi 0, %s21
    %p18 = scmp.ge.s32.totalorder %s17, 4
    %s27 = sphi 0, %s29
    %s30 = sphi 0, %s27
    %s31 = sphi 0, %s30
    %s47 = sphi 0, %s31
    %s55 = sphi 0, %s57
    %s58 = sphi 0, %s55
    %s59 = sphi 0, %s58
    %s75 = sphi 0, %s59
    %s79 = sphi 0, %s79
    %s81 = sphi 0, %s79
    %s82 = sphi 0, %s81
    %s96 = sphi 0, %s82
    %s100 = sphi 0, %s100
    %s102 = sphi 0, %s100
    %s103 = sphi 0, %s102
    %s117 = sphi 0, %s103
    %s121 = sphi 0, %s121
    %s123 = sphi 0, %s121
    %s124 = sphi 0, %s123
    %s138 = sphi 0, %s124
    %s142 = sphi 0, %s142
    %s144 = sphi 0, %s142
    %s145 = sphi 0, %s144
    %s159 = sphi 0, %s145
    %s163 = sphi 0, %s163
    %s165 = sphi 0, %s163
    %s166 = sphi 0, %s165
    %s180 = sphi 0, %s166
    %s184 = sphi 0, %s184
    %s186 = sphi 0, %s184
    %s187 = sphi 0, %s186
    %s201 = sphi 0, %s187
    %s207 = sphi 0, %s209
    %s210 = sphi 0, %s207
    %s211 = sphi 0, %s210
    %s227 = sphi 0, %s211
    %s235 = sphi 0, %s237
    %s238 = sphi 0, %s235
    %s239 = sphi 0, %s238
    %s255 = sphi 0, %s239
    %s259 = sphi 0, %s259
    %s261 = sphi 0, %s259
    %s262 = sphi 0, %s261
    %s276 = sphi 0, %s262
  $region4: #{encoder_forward.2} parent=0 // loop_header_branch
    %20 = sbr.rel (%p18) target = $region8
  $region5: #{encoder_forward.2} parent=0 // loop_body
    %s22 = ssub.s32 %s17, 1
    %s23 = ssub.s32 %s17, 2
    %s24 = sadd.s32 %s17, 1
    %s25 = ssub.s32 %s17, %s24
    %p26 = scmp.eq.s32.totalorder %s25, 0
    %s28 = sadd.s32 %s27, 1
    %s29 = scalar_select %p26, %s27, %s28
    %p32 = pneg %p26
    %p33 = scmp.eq.s32.totalorder %s17, 1
    %p34 = por %p32, %p33
    %p35 = scmp.ne.s32.totalorder %s27, %s30
    %p36 = scmp.eq.s32.totalorder %s17, 0
    %p37 = por %p35, %p36
    %p38 = scmp.ne.s32.totalorder %s27, %s30
    %p39 = scmp.eq.s32.totalorder %s22, 1
    %p40 = por %p38, %p39
    %p41 = scmp.ne.s32.totalorder %s30, %s31
    %p42 = scmp.eq.s32.totalorder %s22, 0
    %p43 = por %p41, %p42
    %p44 = scmp.ne.s32.totalorder %s30, %s31
    %p45 = scmp.eq.s32.totalorder %s23, 1
    %p46 = por %p44, %p45
    %p48 = scmp.ne.s32.totalorder %s31, %s47
    %p49 = scmp.eq.s32.totalorder %s23, 0
    %p50 = por %p48, %p49
    %s51 = ssub.s32 1, %s17
    %s52 = ssub.s32 1, %s24
    %s53 = ssub.s32 %s51, %s52
    %p54 = scmp.eq.s32.totalorder %s53, 0
    %s56 = sadd.s32 %s55, 1
    %s57 = scalar_select %p54, %s55, %s56
    %p60 = pneg %p54
    %p61 = scmp.eq.s32.totalorder %s17, 1
    %p62 = por %p60, %p61
    %p63 = scmp.ne.s32.totalorder %s55, %s58
    %p64 = scmp.eq.s32.totalorder %s17, 0
    %p65 = por %p63, %p64
    %p66 = scmp.ne.s32.totalorder %s55, %s58
    %p67 = scmp.eq.s32.totalorder %s22, 1
    %p68 = por %p66, %p67
    %p69 = scmp.ne.s32.totalorder %s58, %s59
    %p70 = scmp.eq.s32.totalorder %s22, 0
    %p71 = por %p69, %p70
    %p72 = scmp.ne.s32.totalorder %s58, %s59
    %p73 = scmp.eq.s32.totalorder %s23, 1
    %p74 = por %p72, %p73
    %p76 = scmp.ne.s32.totalorder %s59, %s75
    %p77 = scmp.eq.s32.totalorder %s23, 0
    %p78 = por %p76, %p77
    %s80 = sadd.s32 %s79, 1
    %p83 = scmp.eq.s32.totalorder %s17, 1
    %p84 = scmp.ne.s32.totalorder %s79, %s81
    %p85 = scmp.eq.s32.totalorder %s17, 0
    %p86 = por %p84, %p85
    %p87 = scmp.ne.s32.totalorder %s79, %s81
    %p88 = scmp.eq.s32.totalorder %s22, 1
    %p89 = por %p87, %p88
    %p90 = scmp.ne.s32.totalorder %s81, %s82
    %p91 = scmp.eq.s32.totalorder %s22, 0
    %p92 = por %p90, %p91
    %p93 = scmp.ne.s32.totalorder %s81, %s82
    %p94 = scmp.eq.s32.totalorder %s23, 1
    %p95 = por %p93, %p94
    %p97 = scmp.ne.s32.totalorder %s82, %s96
    %p98 = scmp.eq.s32.totalorder %s23, 0
    %p99 = por %p97, %p98
    %s101 = sadd.s32 %s100, 1
    %p104 = scmp.eq.s32.totalorder %s17, 1
    %p105 = scmp.ne.s32.totalorder %s100, %s102
    %p106 = scmp.eq.s32.totalorder %s17, 0
    %p107 = por %p105, %p106
    %p108 = scmp.ne.s32.totalorder %s100, %s102
    %p109 = scmp.eq.s32.totalorder %s22, 1
    %p110 = por %p108, %p109
    %p111 = scmp.ne.s32.totalorder %s102, %s103
    %p112 = scmp.eq.s32.totalorder %s22, 0
    %p113 = por %p111, %p112
    %p114 = scmp.ne.s32.totalorder %s102, %s103
    %p115 = scmp.eq.s32.totalorder %s23, 1
    %p116 = por %p114, %p115
    %p118 = scmp.ne.s32.totalorder %s103, %s117
    %p119 = scmp.eq.s32.totalorder %s23, 0
    %p120 = por %p118, %p119
    %s122 = sadd.s32 %s121, 1
    %p125 = scmp.eq.s32.totalorder %s17, 1
    %p126 = scmp.ne.s32.totalorder %s121, %s123
    %p127 = scmp.eq.s32.totalorder %s17, 0
    %p128 = por %p126, %p127
    %p129 = scmp.ne.s32.totalorder %s121, %s123
    %p130 = scmp.eq.s32.totalorder %s22, 1
    %p131 = por %p129, %p130
    %p132 = scmp.ne.s32.totalorder %s123, %s124
    %p133 = scmp.eq.s32.totalorder %s22, 0
    %p134 = por %p132, %p133
    %p135 = scmp.ne.s32.totalorder %s123, %s124
    %p136 = scmp.eq.s32.totalorder %s23, 1
    %p137 = por %p135, %p136
    %p139 = scmp.ne.s32.totalorder %s124, %s138
    %p140 = scmp.eq.s32.totalorder %s23, 0
    %p141 = por %p139, %p140
    %s143 = sadd.s32 %s142, 1
    %p146 = scmp.eq.s32.totalorder %s17, 1
    %p147 = scmp.ne.s32.totalorder %s142, %s144
    %p148 = scmp.eq.s32.totalorder %s17, 0
    %p149 = por %p147, %p148
    %p150 = scmp.ne.s32.totalorder %s142, %s144
    %p151 = scmp.eq.s32.totalorder %s22, 1
    %p152 = por %p150, %p151
    %p153 = scmp.ne.s32.totalorder %s144, %s145
    %p154 = scmp.eq.s32.totalorder %s22, 0
    %p155 = por %p153, %p154
    %p156 = scmp.ne.s32.totalorder %s144, %s145
    %p157 = scmp.eq.s32.totalorder %s23, 1
    %p158 = por %p156, %p157
    %p160 = scmp.ne.s32.totalorder %s145, %s159
    %p161 = scmp.eq.s32.totalorder %s23, 0
    %p162 = por %p160, %p161
    %s164 = sadd.s32 %s163, 1
    %p167 = scmp.eq.s32.totalorder %s17, 1
    %p168 = scmp.ne.s32.totalorder %s163, %s165
    %p169 = scmp.eq.s32.totalorder %s17, 0
    %p170 = por %p168, %p169
    %p171 = scmp.ne.s32.totalorder %s163, %s165
    %p172 = scmp.eq.s32.totalorder %s22, 1
    %p173 = por %p171, %p172
    %p174 = scmp.ne.s32.totalorder %s165, %s166
    %p175 = scmp.eq.s32.totalorder %s22, 0
    %p176 = por %p174, %p175
    %p177 = scmp.ne.s32.totalorder %s165, %s166
    %p178 = scmp.eq.s32.totalorder %s23, 1
    %p179 = por %p177, %p178
    %p181 = scmp.ne.s32.totalorder %s166, %s180
    %p182 = scmp.eq.s32.totalorder %s23, 0
    %p183 = por %p181, %p182
    %s185 = sadd.s32 %s184, 1
    %p188 = scmp.eq.s32.totalorder %s17, 1
    %p189 = scmp.ne.s32.totalorder %s184, %s186
    %p190 = scmp.eq.s32.totalorder %s17, 0
    %p191 = por %p189, %p190
    %p192 = scmp.ne.s32.totalorder %s184, %s186
    %p193 = scmp.eq.s32.totalorder %s22, 1
    %p194 = por %p192, %p193
    %p195 = scmp.ne.s32.totalorder %s186, %s187
    %p196 = scmp.eq.s32.totalorder %s22, 0
    %p197 = por %p195, %p196
    %p198 = scmp.ne.s32.totalorder %s186, %s187
    %p199 = scmp.eq.s32.totalorder %s23, 1
    %p200 = por %p198, %p199
    %p202 = scmp.ne.s32.totalorder %s187, %s201
    %p203 = scmp.eq.s32.totalorder %s23, 0
    %p204 = por %p202, %p203
    %s205 = ssub.s32 %s17, %s24
    %p206 = scmp.eq.s32.totalorder %s205, 0
    %s208 = sadd.s32 %s207, 1
    %s209 = scalar_select %p206, %s207, %s208
    %p212 = pneg %p206
    %p213 = scmp.eq.s32.totalorder %s17, 1
    %p214 = por %p212, %p213
    %p215 = scmp.ne.s32.totalorder %s207, %s210
    %p216 = scmp.eq.s32.totalorder %s17, 0
    %p217 = por %p215, %p216
    %p218 = scmp.ne.s32.totalorder %s207, %s210
    %p219 = scmp.eq.s32.totalorder %s22, 1
    %p220 = por %p218, %p219
    %p221 = scmp.ne.s32.totalorder %s210, %s211
    %p222 = scmp.eq.s32.totalorder %s22, 0
    %p223 = por %p221, %p222
    %p224 = scmp.ne.s32.totalorder %s210, %s211
    %p225 = scmp.eq.s32.totalorder %s23, 1
    %p226 = por %p224, %p225
    %p228 = scmp.ne.s32.totalorder %s211, %s227
    %p229 = scmp.eq.s32.totalorder %s23, 0
    %p230 = por %p228, %p229
    %s231 = ssub.s32 1, %s17
    %s232 = ssub.s32 1, %s24
    %s233 = ssub.s32 %s231, %s232
    %p234 = scmp.eq.s32.totalorder %s233, 0
    %s236 = sadd.s32 %s235, 1
    %s237 = scalar_select %p234, %s235, %s236
    %p240 = pneg %p234
    %p241 = scmp.eq.s32.totalorder %s17, 1
    %p242 = por %p240, %p241
    %p243 = scmp.ne.s32.totalorder %s235, %s238
    %p244 = scmp.eq.s32.totalorder %s17, 0
    %p245 = por %p243, %p244
    %p246 = scmp.ne.s32.totalorder %s235, %s238
    %p247 = scmp.eq.s32.totalorder %s22, 1
    %p248 = por %p246, %p247
    %p249 = scmp.ne.s32.totalorder %s238, %s239
    %p250 = scmp.eq.s32.totalorder %s22, 0
    %p251 = por %p249, %p250
    %p252 = scmp.ne.s32.totalorder %s238, %s239
    %p253 = scmp.eq.s32.totalorder %s23, 1
    %p254 = por %p252, %p253
    %p256 = scmp.ne.s32.totalorder %s239, %s255
    %p257 = scmp.eq.s32.totalorder %s23, 0
    %p258 = por %p256, %p257
    %s260 = sadd.s32 %s259, 1
    %p263 = scmp.eq.s32.totalorder %s17, 1
    %p264 = scmp.ne.s32.totalorder %s259, %s261
    %p265 = scmp.eq.s32.totalorder %s17, 0
    %p266 = por %p264, %p265
    %p267 = scmp.ne.s32.totalorder %s259, %s261
    %p268 = scmp.eq.s32.totalorder %s22, 1
    %p269 = por %p267, %p268
    %p270 = scmp.ne.s32.totalorder %s261, %s262
    %p271 = scmp.eq.s32.totalorder %s22, 0
    %p272 = por %p270, %p271
    %p273 = scmp.ne.s32.totalorder %s261, %s262
    %p274 = scmp.eq.s32.totalorder %s23, 1
    %p275 = por %p273, %p274
    %p277 = scmp.ne.s32.totalorder %s262, %s276
    %p278 = scmp.eq.s32.totalorder %s23, 0
    %p279 = por %p277, %p278
    %p280 = scmp.le.s32.totalorder 1, %s17
    %p281 = scmp.lt.s32.totalorder %s17, 3
    %p282 = pnand %p280, %p281
    %p283 = pneg %p282
    // Predicated region
    $region9: #{encoder_forward.2} parent=5 // pred_check
      _
    $region10: #{encoder_forward.2} parent=5 // pred_check_branch
      %285 = sbr.rel (%p282) target = $region12
    $region11: #{encoder_forward.2} parent=5 // pred_region
      %s286 = ssub.s32 %s17, 1
      // Predicated region
      $region13: #{encoder_forward.2} parent=11 // pred_check
        %p287 = pneg %p92
      $region14: #{encoder_forward.2} parent=11 // pred_check_branch
        %289 = sbr.rel (%p287) target = $region16
      $region15: #{encoder_forward.2} parent=11 // pred_region
        _
      $region16: #{encoder_forward.2} parent=11 // pred_fallthru
        _
      // Predicated region
      $region17: #{encoder_forward.2} parent=11 // pred_check
        %p290 = pneg %p113
      $region18: #{encoder_forward.2} parent=11 // pred_check_branch
        %292 = sbr.rel (%p290) target = $region20
      $region19: #{encoder_forward.2} parent=11 // pred_region
        _
      $region20: #{encoder_forward.2} parent=11 // pred_fallthru
        _
      // Predicated region
      $region21: #{encoder_forward.2} parent=11 // pred_check
        %p293 = pneg %p134
      $region22: #{encoder_forward.2} parent=11 // pred_check_branch
        %295 = sbr.rel (%p293) target = $region24
      $region23: #{encoder_forward.2} parent=11 // pred_region
        _
      $region24: #{encoder_forward.2} parent=11 // pred_fallthru
        _
      // Predicated region
      $region25: #{encoder_forward.2} parent=11 // pred_check
        %p296 = pneg %p155
      $region26: #{encoder_forward.2} parent=11 // pred_check_branch
        %298 = sbr.rel (%p296) target = $region28
      $region27: #{encoder_forward.2} parent=11 // pred_region
        _
      $region28: #{encoder_forward.2} parent=11 // pred_fallthru
        _
      // Predicated region
      $region29: #{encoder_forward.2} parent=11 // pred_check
        %p299 = pneg %p176
      $region30: #{encoder_forward.2} parent=11 // pred_check_branch
        %301 = sbr.rel (%p299) target = $region32
      $region31: #{encoder_forward.2} parent=11 // pred_region
        _
      $region32: #{encoder_forward.2} parent=11 // pred_fallthru
        _
      // Predicated region
      $region33: #{encoder_forward.2} parent=11 // pred_check
        %p302 = pneg %p197
      $region34: #{encoder_forward.2} parent=11 // pred_check_branch
        %304 = sbr.rel (%p302) target = $region36
      $region35: #{encoder_forward.2} parent=11 // pred_region
        _
      $region36: #{encoder_forward.2} parent=11 // pred_fallthru
        _
    $region12: #{encoder_forward.2} parent=5 // pred_fallthru
      _
    %p305 = scmp.lt.s32.totalorder %s17, 2
    // Predicated region
    $region37: #{encoder_forward.2} parent=5 // pred_check
      %p306 = pneg %p305
    $region38: #{encoder_forward.2} parent=5 // pred_check_branch
      %308 = sbr.rel (%p306) target = $region40
    $region39: #{encoder_forward.2} parent=5 // pred_region
      // Predicated region
      $region41: #{encoder_forward.2} parent=39 // pred_check
        %p309 = pneg %p37
      $region42: #{encoder_forward.2} parent=39 // pred_check_branch
        %311 = sbr.rel (%p309) target = $region44
      $region43: #{encoder_forward.2} parent=39 // pred_region
        %s312 = smul.u32 5, %s17
        %p313 = scmp.lt.s32.totalorder %s312, 9
        %s314 = scalar_select %p313, %s312, 9
        %s315 = smul.addr %s314, 8
        %s316 = scalar_lea.vmem %s0, %s315
        %s317 = smul.u32 5, %s17
      $region44: #{encoder_forward.2} parent=39 // pred_fallthru
        _
      // Predicated region
      $region45: #{encoder_forward.2} parent=39 // pred_check
        %p318 = pneg %p65
      $region46: #{encoder_forward.2} parent=39 // pred_check_branch
        %320 = sbr.rel (%p318) target = $region48
      $region47: #{encoder_forward.2} parent=39 // pred_region
        %s321 = ssub.s32 1, %s17
        %s322 = smul.u32 5, %s321
        %p323 = scmp.lt.s32.totalorder %s322, 9
        %s324 = scalar_select %p323, %s322, 9
        %s325 = smul.addr %s324, 8
        %s326 = scalar_lea.vmem %s1, %s325
        %s327 = ssub.s32 1, %s17
        %s328 = smul.u32 5, %s327
      $region48: #{encoder_forward.2} parent=39 // pred_fallthru
        _
    $region40: #{encoder_forward.2} parent=5 // pred_fallthru
      _
    %p329 = scmp.le.s32.totalorder 1, %s17
    %p330 = scmp.lt.s32.totalorder %s17, 3
    %p331 = pnand %p329, %p330
    %p332 = pneg %p331
    // Predicated region
    $region49: #{encoder_forward.2} parent=5 // pred_check
      _
    $region50: #{encoder_forward.2} parent=5 // pred_check_branch
      %334 = sbr.rel (%p331) target = $region52
    $region51: #{encoder_forward.2} parent=5 // pred_region
      %s335 = ssub.s32 %s17, 1
      %s336 = smul.u32 5, %s22
      %p337 = scmp.lt.s32.totalorder %s336, 9
      %s338 = scalar_select %p337, %s336, 9
      %s339 = smul.addr %s338, 8
      %s340 = scalar_lea.vmem %s0, %s339
      %p341 = pneg %p43
      %p342 = pneg %p40
      %s343 = ssub.s32 1, %s22
      %s344 = smul.u32 5, %s343
      %p345 = scmp.lt.s32.totalorder %s344, 9
      %s346 = scalar_select %p345, %s344, 9
      %s347 = smul.addr %s346, 8
      %s348 = scalar_lea.vmem %s1, %s347
      %p349 = pneg %p71
      %p350 = pneg %p68
      %p351 = pneg %p92
      %p352 = pneg %p89
      %p353 = pneg %p113
      %p354 = pneg %p110
      %p355 = pneg %p134
      %p356 = pneg %p131
      %p357 = pneg %p155
      %p358 = pneg %p152
      %p359 = pneg %p176
      %p360 = pneg %p173
      %p361 = pneg %p197
      %p362 = pneg %p194
      %p363 = pneg %p223
      %p364 = pneg %p220
      %s365 = smul.u32 5, %s22
      %p366 = scmp.lt.s32.totalorder %s365, 9
      %s367 = scalar_select %p366, %s365, 9
      %s368 = smul.addr %s367, 8
      %s369 = scalar_lea.vmem %s8, %s368
      %p370 = pneg %p251
      %p371 = pneg %p248
      %s372 = ssub.s32 1, %s22
      %s373 = smul.u32 5, %s372
      %p374 = scmp.lt.s32.totalorder %s373, 9
      %s375 = scalar_select %p374, %s373, 9
      %s376 = smul.addr %s375, 8
      %s377 = scalar_lea.vmem %s9, %s376
      %p378 = pneg %p272
      %p379 = pneg %p269
      %s380 = smul.u32 5, %s22
      %p381 = scmp.lt.s32.totalorder %s380, 9
      %s382 = scalar_select %p381, %s380, 9
      %s383 = smul.addr %s382, 8
      %s384 = scalar_lea.vmem %s0, %s383
      %s385 = smul.u32 5, %s22
      %s386 = ssub.s32 1, %s22
      %s387 = smul.u32 5, %s386
      %p388 = scmp.lt.s32.totalorder %s387, 9
      %s389 = scalar_select %p388, %s387, 9
      %s390 = smul.addr %s389, 8
      %s391 = scalar_lea.vmem %s1, %s390
      %s392 = ssub.s32 1, %s22
      %s393 = smul.u32 5, %s392
      %s394 = smul.u32 5, %s22
      %p395 = scmp.lt.s32.totalorder %s394, 9
      %s396 = scalar_select %p395, %s394, 9
      %s397 = smul.addr %s396, 8
      %s398 = scalar_lea.vmem %s8, %s397
      %s399 = smul.u32 5, %s22
      %s400 = ssub.s32 1, %s22
      %s401 = smul.u32 5, %s400
      %p402 = scmp.lt.s32.totalorder %s401, 9
      %s403 = scalar_select %p402, %s401, 9
      %s404 = smul.addr %s403, 8
      %s405 = scalar_lea.vmem %s9, %s404
      %s406 = ssub.s32 1, %s22
      %s407 = smul.u32 5, %s406
      %p408 = scmp.eq.s32.totalorder %s22, 0
      // Predicated region
      $region53: #{encoder_forward.2} parent=51 // pred_check
        %p409 = pneg %p408
      $region54: #{encoder_forward.2} parent=51 // pred_check_branch
        %411 = sbr.rel (%p409) target = $region56
      $region55: #{encoder_forward.2} parent=51 // pred_region
        %412 = vst [vmem:[#allocation4] sm:$0xff] 0.0
        %413 = vst [vmem:[#allocation4 + $0x8] sm:$0xff] 0.0
      $region56: #{encoder_forward.2} parent=51 // pred_fallthru
        _
      %v414 = vld [vmem:[%s384] sm:$0xff]
      %v415 = vld [vmem:[%s384 + $0x8] sm:$0xff]
      %v416 = vld [vmem:[%s384 + $0x10] sm:$0xff]
      %v417 = vld [vmem:[%s384 + $0x18] sm:$0xff]
      %v418 = vld [vmem:[%s384 + $0x20] sm:$0xff]
      %v419 = vld [vmem:[%s2] sm:$0xff]
      %v420 = vld [vmem:[%s2 + $0x8] sm:$0xff]
      %v421 = vld [vmem:[%s2 + $0x10] sm:$0xff]
      %v422 = vld [vmem:[%s2 + $0x18] sm:$0xff]
      %v423 = vld [vmem:[%s2 + $0x20] sm:$0xff]
      %v424 = vld [vmem:[%s2 + $0x28] sm:$0xff]
      %v425 = vld [vmem:[%s4] sm:$0x7]
      %v427 = vperm.slane %v425, 0
      %v428 = vperm.slane %v425, 1
      %v429 = vperm.slane %v425, 2
      %vm433 = vcmask 130048
      %v435 = vsel %vm433, %v414, 0
      %v438 = vsel %vm433, %v415, 0
      %v441 = vsel %vm433, %v416, 0
      %v444 = vsel %vm433, %v417, 0
      %v447 = vsel %vm433, %v418, 0
      %449 = vmatpush.msra.mxu0 0.0
      %450 = vmatpush.msra.mxu0 0.0
      %451 = vmatpush.msra.mxu0 0.0
      %452 = vmatpush.msra.mxu0 0.0
      %453 = vmatpush.msra.mxu0 0.0
      %454 = vmatpush.msra.mxu0 0.0
      %455 = vmatpush.msra.mxu0 0.0
      %456 = vmatpush.msra.mxu0 0.0
      %457 = vmatpush.msra.mxu0 0.0
      %458 = vmatpush.msra.mxu0 0.0
      %459 = vmatpush.msra.mxu0 0.0
      %460 = vmatpush.msra.mxu0 0.0
      %461 = vmatpush.msra.mxu0 0.0
      %462 = vmatpush.msra.mxu0 0.0
      %463 = vmatpush.msra.mxu0 %v422
      %464 = vmatpush.msra.mxu0 %v419
      %465 = vmatmul.f32.gmra.mxu0 %v435
      %v466 = vpop.f32.mrf.mxu0
      %v467 = vadd.f32 %v427, %v466
      %468 = vmatmul.f32.gmra.mxu0 %v438
      %v469 = vpop.f32.mrf.mxu0
      %v470 = vadd.f32 %v427, %v469
      %471 = vmatmul.f32.gmra.mxu0 %v441
      %v472 = vpop.f32.mrf.mxu0
      %v473 = vadd.f32 %v427, %v472
      %474 = vmatmul.f32.gmra.mxu0 %v444
      %v475 = vpop.f32.mrf.mxu0
      %v476 = vadd.f32 %v427, %v475
      %477 = vmatmul.f32.gmra.mxu0 %v447
      %v478 = vpop.f32.mrf.mxu0
      %v479 = vadd.f32 %v427, %v478
      %480 = vdwg.mxu0
      %481 = vmatpush.msra.mxu0 0.0
      %482 = vmatpush.msra.mxu0 0.0
      %483 = vmatpush.msra.mxu0 0.0
      %484 = vmatpush.msra.mxu0 0.0
      %485 = vmatpush.msra.mxu0 0.0
      %486 = vmatpush.msra.mxu0 0.0
      %487 = vmatpush.msra.mxu0 0.0
      %488 = vmatpush.msra.mxu0 0.0
      %489 = vmatpush.msra.mxu0 0.0
      %490 = vmatpush.msra.mxu0 0.0
      %491 = vmatpush.msra.mxu0 0.0
      %492 = vmatpush.msra.mxu0 0.0
      %493 = vmatpush.msra.mxu0 0.0
      %494 = vmatpush.msra.mxu0 0.0
      %495 = vmatpush.msra.mxu0 %v423
      %496 = vmatpush.msra.mxu0 %v420
      %497 = vmatmul.f32.gmra.mxu0 %v435
      %v498 = vpop.f32.mrf.mxu0
      %v499 = vadd.f32 %v428, %v498
      %500 = vmatmul.f32.gmra.mxu0 %v438
      %v501 = vpop.f32.mrf.mxu0
      %v502 = vadd.f32 %v428, %v501
      %503 = vmatmul.f32.gmra.mxu0 %v441
      %v504 = vpop.f32.mrf.mxu0
      %v505 = vadd.f32 %v428, %v504
      %506 = vmatmul.f32.gmra.mxu0 %v444
      %v507 = vpop.f32.mrf.mxu0
      %v508 = vadd.f32 %v428, %v507
      %509 = vmatmul.f32.gmra.mxu0 %v447
      %v510 = vpop.f32.mrf.mxu0
      %v511 = vadd.f32 %v428, %v510
      %512 = vdwg.mxu0
      %513 = vmatpush.msra.mxu0 0.0
      %514 = vmatpush.msra.mxu0 0.0
      %515 = vmatpush.msra.mxu0 0.0
      %516 = vmatpush.msra.mxu0 0.0
      %517 = vmatpush.msra.mxu0 0.0
      %518 = vmatpush.msra.mxu0 0.0
      %519 = vmatpush.msra.mxu0 0.0
      %520 = vmatpush.msra.mxu0 0.0
      %521 = vmatpush.msra.mxu0 0.0
      %522 = vmatpush.msra.mxu0 0.0
      %523 = vmatpush.msra.mxu0 0.0
      %524 = vmatpush.msra.mxu0 0.0
      %525 = vmatpush.msra.mxu0 0.0
      %526 = vmatpush.msra.mxu0 0.0
      %527 = vmatpush.msra.mxu0 %v424
      %528 = vmatpush.msra.mxu0 %v421
      %529 = vmatmul.f32.gmra.mxu0 %v435
      %v530 = vpop.f32.mrf.mxu0
      %v531 = vadd.f32 %v429, %v530
      %532 = vmatmul.f32.gmra.mxu0 %v438
      %v533 = vpop.f32.mrf.mxu0
      %v534 = vadd.f32 %v429, %v533
      %535 = vmatmul.f32.gmra.mxu0 %v441
      %v536 = vpop.f32.mrf.mxu0
      %v537 = vadd.f32 %v429, %v536
      %538 = vmatmul.f32.gmra.mxu0 %v444
      %v539 = vpop.f32.mrf.mxu0
      %v540 = vadd.f32 %v429, %v539
      %541 = vmatmul.f32.gmra.mxu0 %v447
      %v542 = vpop.f32.mrf.mxu0
      %v543 = vadd.f32 %v429, %v542
      %544 = vdwg.mxu0
      %545 = vst [vmem:[#allocation2] sm:$0xff] %v467
      %546 = vst [vmem:[#allocation2 + $0x8] sm:$0xff] %v499
      %547 = vst [vmem:[#allocation2 + $0x10] sm:$0xff] %v531
      %548 = vst [vmem:[#allocation2 + $0x18] sm:$0xff] %v470
      %549 = vst [vmem:[#allocation2 + $0x20] sm:$0xff] %v502
      %550 = vst [vmem:[#allocation2 + $0x28] sm:$0xff] %v534
      %551 = vst [vmem:[#allocation2 + $0x30] sm:$0xff] %v473
      %552 = vst [vmem:[#allocation2 + $0x38] sm:$0xff] %v505
      %553 = vst [vmem:[#allocation2 + $0x40] sm:$0xff] %v537
      %554 = vst [vmem:[#allocation2 + $0x48] sm:$0xff] %v476
      %555 = vst [vmem:[#allocation2 + $0x50] sm:$0xff] %v508
      %556 = vst [vmem:[#allocation2 + $0x58] sm:$0xff] %v540
      %557 = vst [vmem:[#allocation2 + $0x60] sm:$0xff] %v479
      %558 = vst [vmem:[#allocation2 + $0x68] sm:$0xff] %v511
      %559 = vst [vmem:[#allocation2 + $0x70] sm:$0xff] %v543
      %v560 = vld [vmem:[%s391] sm:$0xff]
      %v561 = vld [vmem:[%s391 + $0x8] sm:$0xff]
      %v562 = vld [vmem:[%s391 + $0x10] sm:$0xff]
      %v563 = vld [vmem:[%s391 + $0x18] sm:$0xff]
      %v564 = vld [vmem:[%s391 + $0x20] sm:$0xff]
      %v565 = vld [vmem:[%s3] sm:$0xff]
      %v566 = vld [vmem:[%s3 + $0x8] sm:$0xff]
      %v567 = vld [vmem:[%s3 + $0x10] sm:$0xff]
      %v568 = vld [vmem:[%s3 + $0x18] sm:$0xff]
      %v569 = vld [vmem:[%s3 + $0x20] sm:$0xff]
      %v570 = vld [vmem:[%s3 + $0x28] sm:$0xff]
      %v571 = vld [vmem:[%s5] sm:$0x7]
      %v573 = vperm.slane %v571, 0
      %v574 = vperm.slane %v571, 1
      %v575 = vperm.slane %v571, 2
      %v580 = vsel %vm433, %v560, 0
      %v583 = vsel %vm433, %v561, 0
      %v586 = vsel %vm433, %v562, 0
      %v589 = vsel %vm433, %v563, 0
      %v592 = vsel %vm433, %v564, 0
      %594 = vmatpush.msra.mxu0 0.0
      %595 = vmatpush.msra.mxu0 0.0
      %596 = vmatpush.msra.mxu0 0.0
      %597 = vmatpush.msra.mxu0 0.0
      %598 = vmatpush.msra.mxu0 0.0
      %599 = vmatpush.msra.mxu0 0.0
      %600 = vmatpush.msra.mxu0 0.0
      %601 = vmatpush.msra.mxu0 0.0
      %602 = vmatpush.msra.mxu0 0.0
      %603 = vmatpush.msra.mxu0 0.0
      %604 = vmatpush.msra.mxu0 0.0
      %605 = vmatpush.msra.mxu0 0.0
      %606 = vmatpush.msra.mxu0 0.0
      %607 = vmatpush.msra.mxu0 0.0
      %608 = vmatpush.msra.mxu0 %v568
      %609 = vmatpush.msra.mxu0 %v565
      %610 = vmatmul.f32.gmra.mxu0 %v580
      %v611 = vpop.f32.mrf.mxu0
      %v612 = vadd.f32 %v573, %v611
      %613 = vmatmul.f32.gmra.mxu0 %v583
      %v614 = vpop.f32.mrf.mxu0
      %v615 = vadd.f32 %v573, %v614
      %616 = vmatmul.f32.gmra.mxu0 %v586
      %v617 = vpop.f32.mrf.mxu0
      %v618 = vadd.f32 %v573, %v617
      %619 = vmatmul.f32.gmra.mxu0 %v589
      %v620 = vpop.f32.mrf.mxu0
      %v621 = vadd.f32 %v573, %v620
      %622 = vmatmul.f32.gmra.mxu0 %v592
      %v623 = vpop.f32.mrf.mxu0
      %v624 = vadd.f32 %v573, %v623
      %625 = vdwg.mxu0
      %626 = vmatpush.msra.mxu0 0.0
      %627 = vmatpush.msra.mxu0 0.0
      %628 = vmatpush.msra.mxu0 0.0
      %629 = vmatpush.msra.mxu0 0.0
      %630 = vmatpush.msra.mxu0 0.0
      %631 = vmatpush.msra.mxu0 0.0
      %632 = vmatpush.msra.mxu0 0.0
      %633 = vmatpush.msra.mxu0 0.0
      %634 = vmatpush.msra.mxu0 0.0
      %635 = vmatpush.msra.mxu0 0.0
      %636 = vmatpush.msra.mxu0 0.0
      %637 = vmatpush.msra.mxu0 0.0
      %638 = vmatpush.msra.mxu0 0.0
      %639 = vmatpush.msra.mxu0 0.0
      %640 = vmatpush.msra.mxu0 %v569
      %641 = vmatpush.msra.mxu0 %v566
      %642 = vmatmul.f32.gmra.mxu0 %v580
      %v643 = vpop.f32.mrf.mxu0
      %v644 = vadd.f32 %v574, %v643
      %645 = vmatmul.f32.gmra.mxu0 %v583
      %v646 = vpop.f32.mrf.mxu0
      %v647 = vadd.f32 %v574, %v646
      %648 = vmatmul.f32.gmra.mxu0 %v586
      %v649 = vpop.f32.mrf.mxu0
      %v650 = vadd.f32 %v574, %v649
      %651 = vmatmul.f32.gmra.mxu0 %v589
      %v652 = vpop.f32.mrf.mxu0
      %v653 = vadd.f32 %v574, %v652
      %654 = vmatmul.f32.gmra.mxu0 %v592
      %v655 = vpop.f32.mrf.mxu0
      %v656 = vadd.f32 %v574, %v655
      %657 = vdwg.mxu0
      %658 = vmatpush.msra.mxu0 0.0
      %659 = vmatpush.msra.mxu0 0.0
      %660 = vmatpush.msra.mxu0 0.0
      %661 = vmatpush.msra.mxu0 0.0
      %662 = vmatpush.msra.mxu0 0.0
      %663 = vmatpush.msra.mxu0 0.0
      %664 = vmatpush.msra.mxu0 0.0
      %665 = vmatpush.msra.mxu0 0.0
      %666 = vmatpush.msra.mxu0 0.0
      %667 = vmatpush.msra.mxu0 0.0
      %668 = vmatpush.msra.mxu0 0.0
      %669 = vmatpush.msra.mxu0 0.0
      %670 = vmatpush.msra.mxu0 0.0
      %671 = vmatpush.msra.mxu0 0.0
      %672 = vmatpush.msra.mxu0 %v570
      %673 = vmatpush.msra.mxu0 %v567
      %674 = vmatmul.f32.gmra.mxu0 %v580
      %v675 = vpop.f32.mrf.mxu0
      %v676 = vadd.f32 %v575, %v675
      %677 = vmatmul.f32.gmra.mxu0 %v583
      %v678 = vpop.f32.mrf.mxu0
      %v679 = vadd.f32 %v575, %v678
      %680 = vmatmul.f32.gmra.mxu0 %v586
      %v681 = vpop.f32.mrf.mxu0
      %v682 = vadd.f32 %v575, %v681
      %683 = vmatmul.f32.gmra.mxu0 %v589
      %v684 = vpop.f32.mrf.mxu0
      %v685 = vadd.f32 %v575, %v684
      %686 = vmatmul.f32.gmra.mxu0 %v592
      %v687 = vpop.f32.mrf.mxu0
      %v688 = vadd.f32 %v575, %v687
      %689 = vdwg.mxu0
      %690 = vst [vmem:[#allocation3] sm:$0xff] %v612
      %691 = vst [vmem:[#allocation3 + $0x8] sm:$0xff] %v644
      %692 = vst [vmem:[#allocation3 + $0x10] sm:$0xff] %v676
      %693 = vst [vmem:[#allocation3 + $0x18] sm:$0xff] %v615
      %694 = vst [vmem:[#allocation3 + $0x20] sm:$0xff] %v647
      %695 = vst [vmem:[#allocation3 + $0x28] sm:$0xff] %v679
      %696 = vst [vmem:[#allocation3 + $0x30] sm:$0xff] %v618
      %697 = vst [vmem:[#allocation3 + $0x38] sm:$0xff] %v650
      %698 = vst [vmem:[#allocation3 + $0x40] sm:$0xff] %v682
      %699 = vst [vmem:[#allocation3 + $0x48] sm:$0xff] %v621
      %700 = vst [vmem:[#allocation3 + $0x50] sm:$0xff] %v653
      %701 = vst [vmem:[#allocation3 + $0x58] sm:$0xff] %v685
      %702 = vst [vmem:[#allocation3 + $0x60] sm:$0xff] %v624
      %703 = vst [vmem:[#allocation3 + $0x68] sm:$0xff] %v656
      %704 = vst [vmem:[#allocation3 + $0x70] sm:$0xff] %v688
      %v705 = vld [vmem:[%s6] sm:$0xff]
      %v706 = vld [vmem:[%s6 + $0x8] sm:$0xff]
      %v707 = vld [vmem:[%s6 + $0x10] sm:$0xff]
      %v708 = vld [vmem:[%s6 + $0x18] sm:$0xff]
      %v709 = vld [vmem:[%s6 + $0x20] sm:$0xff]
      %v710 = vld [vmem:[%s6 + $0x28] sm:$0xff]
      %v711 = vld [vmem:[%s6 + $0x30] sm:$0xff]
      %v712 = vld [vmem:[%s6 + $0x38] sm:$0xff]
      %v713 = vld [vmem:[%s6 + $0x40] sm:$0xff]
      %v714 = vld [vmem:[%s6 + $0x48] sm:$0xff]
      %v715 = vld [vmem:[%s6 + $0x50] sm:$0xff]
      %v716 = vld [vmem:[%s6 + $0x58] sm:$0xff]
      %v717 = vld [vmem:[%s6 + $0x60] sm:$0xff]
      %v718 = vld [vmem:[%s6 + $0x68] sm:$0xff]
      %v719 = vld [vmem:[%s6 + $0x70] sm:$0xff]
      %v720 = vld [vmem:[%s6 + $0x78] sm:$0xff]
      %v721 = vld [vmem:[%s6 + $0x80] sm:$0xff]
      %v722 = vld [vmem:[%s6 + $0x88] sm:$0xff]
      %v723 = vld [vmem:[%s6 + $0x90] sm:$0xff]
      %v724 = vld [vmem:[%s6 + $0x98] sm:$0xff]
      %v725 = vld [vmem:[%s6 + $0xa0] sm:$0xff]
      %v726 = vld [vmem:[%s6 + $0xa8] sm:$0xff]
      %v727 = vld [vmem:[%s6 + $0xb0] sm:$0xff]
      %v728 = vld [vmem:[%s6 + $0xb8] sm:$0xff]
      %v729 = vld [vmem:[%s6 + $0xc0] sm:$0xff]
      %v730 = vld [vmem:[%s6 + $0xc8] sm:$0xff]
      %v731 = vld [vmem:[%s6 + $0xd0] sm:$0xff]
      %v732 = vld [vmem:[%s6 + $0xd8] sm:$0xff]
      %v733 = vld [vmem:[%s6 + $0xe0] sm:$0xff]
      %v734 = vld [vmem:[%s6 + $0xe8] sm:$0xff]
      %v735 = vld [vmem:[%s6 + $0xf0] sm:$0xff]
      %v736 = vld [vmem:[%s6 + $0xf8] sm:$0xff]
      %v737 = vld [vmem:[%s6 + $0x100] sm:$0xff]
      %v738 = vld [vmem:[%s6 + $0x108] sm:$0xff]
      %v739 = vld [vmem:[%s6 + $0x110] sm:$0xff]
      %v740 = vld [vmem:[%s6 + $0x118] sm:$0xff]
      %v741 = vld [vmem:[%s6 + $0x120] sm:$0xff]
      %v742 = vld [vmem:[%s6 + $0x128] sm:$0xff]
      %v743 = vld [vmem:[%s6 + $0x130] sm:$0xff]
      %v744 = vld [vmem:[%s6 + $0x138] sm:$0xff]
      %v745 = vld [vmem:[%s6 + $0x140] sm:$0xff]
      %v746 = vld [vmem:[%s6 + $0x148] sm:$0xff]
      %v747 = vld [vmem:[%s6 + $0x150] sm:$0xff]
      %v748 = vld [vmem:[%s6 + $0x158] sm:$0xff]
      %v749 = vld [vmem:[%s6 + $0x160] sm:$0xff]
      %v750 = vld [vmem:[%s6 + $0x168] sm:$0xff]
      %v751 = vld [vmem:[%s6 + $0x170] sm:$0xff]
      %v752 = vld [vmem:[%s6 + $0x178] sm:$0xff]
      %v753 = vld [vmem:[%s6 + $0x180] sm:$0xff]
      %v754 = vld [vmem:[%s6 + $0x188] sm:$0xff]
      %v755 = vld [vmem:[%s6 + $0x190] sm:$0xff]
      %v756 = vld [vmem:[%s6 + $0x198] sm:$0xff]
      %v757 = vld [vmem:[%s6 + $0x1a0] sm:$0xff]
      %v758 = vld [vmem:[%s6 + $0x1a8] sm:$0xff]
      %v759 = vld [vmem:[%s6 + $0x1b0] sm:$0xff]
      %v760 = vld [vmem:[%s6 + $0x1b8] sm:$0xff]
      %v761 = vld [vmem:[%s6 + $0x1c0] sm:$0xff]
      %v762 = vld [vmem:[%s6 + $0x1c8] sm:$0xff]
      %v763 = vld [vmem:[%s6 + $0x1d0] sm:$0xff]
      %v764 = vld [vmem:[%s6 + $0x1d8] sm:$0xff]
      %v765 = vld [vmem:[%s6 + $0x1e0] sm:$0xff]
      %v766 = vld [vmem:[%s6 + $0x1e8] sm:$0xff]
      %v767 = vld [vmem:[%s6 + $0x1f0] sm:$0xff]
      %v768 = vld [vmem:[%s6 + $0x1f8] sm:$0xff]
      %v769 = vld [vmem:[%s6 + $0x200] sm:$0xff]
      %v770 = vld [vmem:[%s6 + $0x208] sm:$0xff]
      %v771 = vld [vmem:[%s6 + $0x210] sm:$0xff]
      %v772 = vld [vmem:[%s6 + $0x218] sm:$0xff]
      %v773 = vld [vmem:[%s6 + $0x220] sm:$0xff]
      %v774 = vld [vmem:[%s6 + $0x228] sm:$0xff]
      %v775 = vld [vmem:[%s6 + $0x230] sm:$0xff]
      %v776 = vld [vmem:[%s6 + $0x238] sm:$0xff]
      %v777 = vld [vmem:[%s6 + $0x240] sm:$0xff]
      %v778 = vld [vmem:[%s6 + $0x248] sm:$0xff]
      %v779 = vld [vmem:[%s6 + $0x250] sm:$0xff]
      %v780 = vld [vmem:[%s6 + $0x258] sm:$0xff]
      %v781 = vld [vmem:[%s6 + $0x260] sm:$0xff]
      %v782 = vld [vmem:[%s6 + $0x268] sm:$0xff]
      %v783 = vld [vmem:[%s6 + $0x270] sm:$0xff]
      %v784 = vld [vmem:[%s6 + $0x278] sm:$0xff]
      %v785 = vld [vmem:[%s6 + $0x280] sm:$0xff]
      %v786 = vld [vmem:[%s6 + $0x288] sm:$0xff]
      %v787 = vld [vmem:[%s6 + $0x290] sm:$0xff]
      %v788 = vld [vmem:[%s6 + $0x298] sm:$0xff]
      %v789 = vld [vmem:[%s6 + $0x2a0] sm:$0xff]
      %v790 = vld [vmem:[%s6 + $0x2a8] sm:$0xff]
      %v791 = vld [vmem:[%s6 + $0x2b0] sm:$0xff]
      %v792 = vld [vmem:[%s6 + $0x2b8] sm:$0xff]
      %v793 = vld [vmem:[%s6 + $0x2c0] sm:$0xff]
      %v794 = vld [vmem:[%s6 + $0x2c8] sm:$0xff]
      %v795 = vld [vmem:[%s6 + $0x2d0] sm:$0xff]
      %v796 = vld [vmem:[%s6 + $0x2d8] sm:$0xff]
      %v797 = vld [vmem:[%s6 + $0x2e0] sm:$0xff]
      %v798 = vld [vmem:[%s6 + $0x2e8] sm:$0xff]
      %v799 = vld [vmem:[%s6 + $0x2f0] sm:$0xff]
      %v800 = vld [vmem:[%s6 + $0x2f8] sm:$0xff]
      %v801 = vld [vmem:[%s6 + $0x300] sm:$0xff]
      %v802 = vld [vmem:[%s6 + $0x308] sm:$0xff]
      %v803 = vld [vmem:[%s6 + $0x310] sm:$0xff]
      %v804 = vld [vmem:[%s6 + $0x318] sm:$0xff]
      %v805 = vld [vmem:[%s6 + $0x320] sm:$0xff]
      %v806 = vld [vmem:[%s6 + $0x328] sm:$0xff]
      %v807 = vld [vmem:[%s6 + $0x330] sm:$0xff]
      %v808 = vld [vmem:[%s6 + $0x338] sm:$0xff]
      %v809 = vld [vmem:[%s6 + $0x340] sm:$0xff]
      %v810 = vld [vmem:[%s6 + $0x348] sm:$0xff]
      %v811 = vld [vmem:[%s6 + $0x350] sm:$0xff]
      %v812 = vld [vmem:[%s6 + $0x358] sm:$0xff]
      %v813 = vld [vmem:[%s6 + $0x360] sm:$0xff]
      %v814 = vld [vmem:[%s6 + $0x368] sm:$0xff]
      %v815 = vld [vmem:[%s6 + $0x370] sm:$0xff]
      %v816 = vld [vmem:[%s6 + $0x378] sm:$0xff]
      %v817 = vld [vmem:[%s6 + $0x380] sm:$0xff]
      %v818 = vld [vmem:[%s6 + $0x388] sm:$0xff]
      %v819 = vld [vmem:[%s6 + $0x390] sm:$0xff]
      %v820 = vld [vmem:[%s6 + $0x398] sm:$0xff]
      %v821 = vld [vmem:[%s6 + $0x3a0] sm:$0xff]
      %v822 = vld [vmem:[%s6 + $0x3a8] sm:$0xff]
      %v823 = vld [vmem:[%s6 + $0x3b0] sm:$0xff]
      %v824 = vld [vmem:[%s6 + $0x3b8] sm:$0xff]
      %v825 = vld [vmem:[%s6 + $0x3c0] sm:$0xff]
      %v826 = vld [vmem:[%s6 + $0x3c8] sm:$0xff]
      %v827 = vld [vmem:[%s6 + $0x3d0] sm:$0xff]
      %v828 = vld [vmem:[%s6 + $0x3d8] sm:$0xff]
      %v829 = vld [vmem:[%s6 + $0x3e0] sm:$0xff]
      %v830 = vld [vmem:[%s6 + $0x3e8] sm:$0xff]
      %v831 = vld [vmem:[%s6 + $0x3f0] sm:$0xff]
      %v832 = vld [vmem:[%s6 + $0x3f8] sm:$0xff]
      %v833 = vld [vmem:[%s6 + $0x400] sm:$0xff]
      %v834 = vld [vmem:[%s6 + $0x408] sm:$0xff]
      %v835 = vld [vmem:[%s6 + $0x410] sm:$0xff]
      %v836 = vld [vmem:[%s6 + $0x418] sm:$0xff]
      %v837 = vld [vmem:[%s6 + $0x420] sm:$0xff]
      %v838 = vld [vmem:[%s6 + $0x428] sm:$0xff]
      %v839 = vld [vmem:[%s6 + $0x430] sm:$0xff]
      %v840 = vld [vmem:[%s6 + $0x438] sm:$0xff]
      %v841 = vld [vmem:[%s6 + $0x440] sm:$0xff]
      %v842 = vld [vmem:[%s6 + $0x448] sm:$0xff]
      %v843 = vld [vmem:[%s6 + $0x450] sm:$0xff]
      %v844 = vld [vmem:[%s6 + $0x458] sm:$0xff]
      %v845 = vld [vmem:[%s6 + $0x460] sm:$0xff]
      %v846 = vld [vmem:[%s6 + $0x468] sm:$0xff]
      %v847 = vld [vmem:[%s6 + $0x470] sm:$0xff]
      %v848 = vld [vmem:[%s6 + $0x478] sm:$0xff]
      %v849 = vld [vmem:[%s6 + $0x480] sm:$0xff]
      %v850 = vld [vmem:[%s6 + $0x488] sm:$0xff]
      %v851 = vld [vmem:[%s6 + $0x490] sm:$0xff]
      %v852 = vld [vmem:[%s6 + $0x498] sm:$0xff]
      %v853 = vld [vmem:[%s6 + $0x4a0] sm:$0xff]
      %v854 = vld [vmem:[%s6 + $0x4a8] sm:$0xff]
      %v855 = vld [vmem:[%s6 + $0x4b0] sm:$0xff]
      %v856 = vld [vmem:[%s6 + $0x4b8] sm:$0xff]
      %v857 = vld [vmem:[%s6 + $0x4c0] sm:$0xff]
      %v858 = vld [vmem:[%s6 + $0x4c8] sm:$0xff]
      %v859 = vld [vmem:[%s6 + $0x4d0] sm:$0xff]
      %v860 = vld [vmem:[%s6 + $0x4d8] sm:$0xff]
      %v861 = vld [vmem:[%s6 + $0x4e0] sm:$0xff]
      %v862 = vld [vmem:[%s6 + $0x4e8] sm:$0xff]
      %v863 = vld [vmem:[%s6 + $0x4f0] sm:$0xff]
      %v864 = vld [vmem:[%s6 + $0x4f8] sm:$0xff]
      %v865 = vld [vmem:[%s6 + $0x500] sm:$0xff]
      %v866 = vld [vmem:[%s6 + $0x508] sm:$0xff]
      %v867 = vld [vmem:[%s6 + $0x510] sm:$0xff]
      %v868 = vld [vmem:[%s6 + $0x518] sm:$0xff]
      %v869 = vld [vmem:[%s6 + $0x520] sm:$0xff]
      %v870 = vld [vmem:[%s6 + $0x528] sm:$0xff]
      %v871 = vld [vmem:[%s6 + $0x530] sm:$0xff]
      %v872 = vld [vmem:[%s6 + $0x538] sm:$0xff]
      %v873 = vld [vmem:[%s6 + $0x540] sm:$0xff]
      %v874 = vld [vmem:[%s6 + $0x548] sm:$0xff]
      %v875 = vld [vmem:[%s6 + $0x550] sm:$0xff]
      %v876 = vld [vmem:[%s6 + $0x558] sm:$0xff]
      %v877 = vld [vmem:[%s6 + $0x560] sm:$0xff]
      %v878 = vld [vmem:[%s6 + $0x568] sm:$0xff]
      %v879 = vld [vmem:[%s6 + $0x570] sm:$0xff]
      %v880 = vld [vmem:[%s6 + $0x578] sm:$0xff]
      %v881 = vld [vmem:[%s6 + $0x580] sm:$0xff]
      %v882 = vld [vmem:[%s6 + $0x588] sm:$0xff]
      %v883 = vld [vmem:[%s6 + $0x590] sm:$0xff]
      %v884 = vld [vmem:[%s6 + $0x598] sm:$0xff]
      %v885 = vld [vmem:[%s6 + $0x5a0] sm:$0xff]
      %v886 = vld [vmem:[%s6 + $0x5a8] sm:$0xff]
      %v887 = vld [vmem:[%s6 + $0x5b0] sm:$0xff]
      %v888 = vld [vmem:[%s6 + $0x5b8] sm:$0xff]
      %v889 = vld [vmem:[%s6 + $0x5c0] sm:$0xff]
      %v890 = vld [vmem:[%s6 + $0x5c8] sm:$0xff]
      %v891 = vld [vmem:[%s6 + $0x5d0] sm:$0xff]
      %v892 = vld [vmem:[%s6 + $0x5d8] sm:$0xff]
      %v893 = vld [vmem:[%s6 + $0x5e0] sm:$0xff]
      %v894 = vld [vmem:[%s6 + $0x5e8] sm:$0xff]
      %v895 = vld [vmem:[%s6 + $0x5f0] sm:$0xff]
      %v896 = vld [vmem:[%s6 + $0x5f8] sm:$0xff]
      %v897 = vld [vmem:[%s7] sm:$0x3f]
      %v899 = vperm.slane %v897, 0
      %v900 = vperm.slane %v897, 1
      %v901 = vperm.slane %v897, 2
      %v902 = vperm.slane %v897, 3
      %v903 = vperm.slane %v897, 4
      %v904 = vperm.slane %v897, 5
      %v911 = vld [vmem:[#allocation4] sm:$0xff]
      %v912 = vld [vmem:[#allocation4 + $0x8] sm:$0xff]
      %913 = vmatpush.msra.mxu0 %v795
      %914 = vmatpush.msra.mxu0 %v789
      %915 = vmatpush.msra.mxu0 %v783
      %916 = vmatpush.msra.mxu0 %v777
      %917 = vmatpush.msra.mxu0 %v771
      %918 = vmatpush.msra.mxu0 %v765
      %919 = vmatpush.msra.mxu0 %v759
      %920 = vmatpush.msra.mxu0 %v753
      %921 = vmatpush.msra.mxu0 %v747
      %922 = vmatpush.msra.mxu0 %v741
      %923 = vmatpush.msra.mxu0 %v735
      %924 = vmatpush.msra.mxu0 %v729
      %925 = vmatpush.msra.mxu0 %v723
      %926 = vmatpush.msra.mxu0 %v717
      %927 = vmatpush.msra.mxu0 %v711
      %928 = vmatpush.msra.mxu0 %v705
      %929 = vmatmul.f32.gmra.mxu0 %v911
      %v930 = vpop.f32.mrf.mxu0
      %v931 = vadd.f32 %v899, %v930
      %932 = vdwg.mxu0
      %933 = vmatpush.msra.mxu0 %v891
      %934 = vmatpush.msra.mxu0 %v885
      %935 = vmatpush.msra.mxu0 %v879
      %936 = vmatpush.msra.mxu0 %v873
      %937 = vmatpush.msra.mxu0 %v867
      %938 = vmatpush.msra.mxu0 %v861
      %939 = vmatpush.msra.mxu0 %v855
      %940 = vmatpush.msra.mxu0 %v849
      %941 = vmatpush.msra.mxu0 %v843
      %942 = vmatpush.msra.mxu0 %v837
      %943 = vmatpush.msra.mxu0 %v831
      %944 = vmatpush.msra.mxu0 %v825
      %945 = vmatpush.msra.mxu0 %v819
      %946 = vmatpush.msra.mxu0 %v813
      %947 = vmatpush.msra.mxu0 %v807
      %948 = vmatpush.msra.mxu0 %v801
      %949 = vmatmul.f32.gmra.mxu0 %v912
      %v950 = vpop.f32.mrf.mxu0
      %v951 = vadd.f32 %v931, %v950
      %952 = vdwg.mxu0
      %953 = vmatpush.msra.mxu0 %v796
      %954 = vmatpush.msra.mxu0 %v790
      %955 = vmatpush.msra.mxu0 %v784
      %956 = vmatpush.msra.mxu0 %v778
      %957 = vmatpush.msra.mxu0 %v772
      %958 = vmatpush.msra.mxu0 %v766
      %959 = vmatpush.msra.mxu0 %v760
      %960 = vmatpush.msra.mxu0 %v754
      %961 = vmatpush.msra.mxu0 %v748
      %962 = vmatpush.msra.mxu0 %v742
      %963 = vmatpush.msra.mxu0 %v736
      %964 = vmatpush.msra.mxu0 %v730
      %965 = vmatpush.msra.mxu0 %v724
      %966 = vmatpush.msra.mxu0 %v718
      %967 = vmatpush.msra.mxu0 %v712
      %968 = vmatpush.msra.mxu0 %v706
      %969 = vmatmul.f32.gmra.mxu0 %v911
      %v970 = vpop.f32.mrf.mxu0
      %v971 = vadd.f32 %v900, %v970
      %972 = vdwg.mxu0
      %973 = vmatpush.msra.mxu0 %v892
      %974 = vmatpush.msra.mxu0 %v886
      %975 = vmatpush.msra.mxu0 %v880
      %976 = vmatpush.msra.mxu0 %v874
      %977 = vmatpush.msra.mxu0 %v868
      %978 = vmatpush.msra.mxu0 %v862
      %979 = vmatpush.msra.mxu0 %v856
      %980 = vmatpush.msra.mxu0 %v850
      %981 = vmatpush.msra.mxu0 %v844
      %982 = vmatpush.msra.mxu0 %v838
      %983 = vmatpush.msra.mxu0 %v832
      %984 = vmatpush.msra.mxu0 %v826
      %985 = vmatpush.msra.mxu0 %v820
      %986 = vmatpush.msra.mxu0 %v814
      %987 = vmatpush.msra.mxu0 %v808
      %988 = vmatpush.msra.mxu0 %v802
      %989 = vmatmul.f32.gmra.mxu0 %v912
      %v990 = vpop.f32.mrf.mxu0
      %v991 = vadd.f32 %v971, %v990
      %992 = vdwg.mxu0
      %993 = vmatpush.msra.mxu0 %v797
      %994 = vmatpush.msra.mxu0 %v791
      %995 = vmatpush.msra.mxu0 %v785
      %996 = vmatpush.msra.mxu0 %v779
      %997 = vmatpush.msra.mxu0 %v773
      %998 = vmatpush.msra.mxu0 %v767
      %999 = vmatpush.msra.mxu0 %v761
      %1000 = vmatpush.msra.mxu0 %v755
      %1001 = vmatpush.msra.mxu0 %v749
      %1002 = vmatpush.msra.mxu0 %v743
      %1003 = vmatpush.msra.mxu0 %v737
      %1004 = vmatpush.msra.mxu0 %v731
      %1005 = vmatpush.msra.mxu0 %v725
      %1006 = vmatpush.msra.mxu0 %v719
      %1007 = vmatpush.msra.mxu0 %v713
      %1008 = vmatpush.msra.mxu0 %v707
      %1009 = vmatmul.f32.gmra.mxu0 %v911
      %v1010 = vpop.f32.mrf.mxu0
      %v1011 = vadd.f32 %v901, %v1010
      %1012 = vdwg.mxu0
      %1013 = vmatpush.msra.mxu0 %v893
      %1014 = vmatpush.msra.mxu0 %v887
      %1015 = vmatpush.msra.mxu0 %v881
      %1016 = vmatpush.msra.mxu0 %v875
      %1017 = vmatpush.msra.mxu0 %v869
      %1018 = vmatpush.msra.mxu0 %v863
      %1019 = vmatpush.msra.mxu0 %v857
      %1020 = vmatpush.msra.mxu0 %v851
      %1021 = vmatpush.msra.mxu0 %v845
      %1022 = vmatpush.msra.mxu0 %v839
      %1023 = vmatpush.msra.mxu0 %v833
      %1024 = vmatpush.msra.mxu0 %v827
      %1025 = vmatpush.msra.mxu0 %v821
      %1026 = vmatpush.msra.mxu0 %v815
      %1027 = vmatpush.msra.mxu0 %v809
      %1028 = vmatpush.msra.mxu0 %v803
      %1029 = vmatmul.f32.gmra.mxu0 %v912
      %v1030 = vpop.f32.mrf.mxu0
      %v1031 = vadd.f32 %v1011, %v1030
      %1032 = vdwg.mxu0
      %1033 = vmatpush.msra.mxu0 %v798
      %1034 = vmatpush.msra.mxu0 %v792
      %1035 = vmatpush.msra.mxu0 %v786
      %1036 = vmatpush.msra.mxu0 %v780
      %1037 = vmatpush.msra.mxu0 %v774
      %1038 = vmatpush.msra.mxu0 %v768
      %1039 = vmatpush.msra.mxu0 %v762
      %1040 = vmatpush.msra.mxu0 %v756
      %1041 = vmatpush.msra.mxu0 %v750
      %1042 = vmatpush.msra.mxu0 %v744
      %1043 = vmatpush.msra.mxu0 %v738
      %1044 = vmatpush.msra.mxu0 %v732
      %1045 = vmatpush.msra.mxu0 %v726
      %1046 = vmatpush.msra.mxu0 %v720
      %1047 = vmatpush.msra.mxu0 %v714
      %1048 = vmatpush.msra.mxu0 %v708
      %1049 = vmatmul.f32.gmra.mxu0 %v911
      %v1050 = vpop.f32.mrf.mxu0
      %v1051 = vadd.f32 %v902, %v1050
      %1052 = vdwg.mxu0
      %1053 = vmatpush.msra.mxu0 %v894
      %1054 = vmatpush.msra.mxu0 %v888
      %1055 = vmatpush.msra.mxu0 %v882
      %1056 = vmatpush.msra.mxu0 %v876
      %1057 = vmatpush.msra.mxu0 %v870
      %1058 = vmatpush.msra.mxu0 %v864
      %1059 = vmatpush.msra.mxu0 %v858
      %1060 = vmatpush.msra.mxu0 %v852
      %1061 = vmatpush.msra.mxu0 %v846
      %1062 = vmatpush.msra.mxu0 %v840
      %1063 = vmatpush.msra.mxu0 %v834
      %1064 = vmatpush.msra.mxu0 %v828
      %1065 = vmatpush.msra.mxu0 %v822
      %1066 = vmatpush.msra.mxu0 %v816
      %1067 = vmatpush.msra.mxu0 %v810
      %1068 = vmatpush.msra.mxu0 %v804
      %1069 = vmatmul.f32.gmra.mxu0 %v912
      %v1070 = vpop.f32.mrf.mxu0
      %v1071 = vadd.f32 %v1051, %v1070
      %1072 = vdwg.mxu0
      %1073 = vmatpush.msra.mxu0 %v799
      %1074 = vmatpush.msra.mxu0 %v793
      %1075 = vmatpush.msra.mxu0 %v787
      %1076 = vmatpush.msra.mxu0 %v781
      %1077 = vmatpush.msra.mxu0 %v775
      %1078 = vmatpush.msra.mxu0 %v769
      %1079 = vmatpush.msra.mxu0 %v763
      %1080 = vmatpush.msra.mxu0 %v757
      %1081 = vmatpush.msra.mxu0 %v751
      %1082 = vmatpush.msra.mxu0 %v745
      %1083 = vmatpush.msra.mxu0 %v739
      %1084 = vmatpush.msra.mxu0 %v733
      %1085 = vmatpush.msra.mxu0 %v727
      %1086 = vmatpush.msra.mxu0 %v721
      %1087 = vmatpush.msra.mxu0 %v715
      %1088 = vmatpush.msra.mxu0 %v709
      %1089 = vmatmul.f32.gmra.mxu0 %v911
      %v1090 = vpop.f32.mrf.mxu0
      %v1091 = vadd.f32 %v903, %v1090
      %1092 = vdwg.mxu0
      %1093 = vmatpush.msra.mxu0 %v895
      %1094 = vmatpush.msra.mxu0 %v889
      %1095 = vmatpush.msra.mxu0 %v883
      %1096 = vmatpush.msra.mxu0 %v877
      %1097 = vmatpush.msra.mxu0 %v871
      %1098 = vmatpush.msra.mxu0 %v865
      %1099 = vmatpush.msra.mxu0 %v859
      %1100 = vmatpush.msra.mxu0 %v853
      %1101 = vmatpush.msra.mxu0 %v847
      %1102 = vmatpush.msra.mxu0 %v841
      %1103 = vmatpush.msra.mxu0 %v835
      %1104 = vmatpush.msra.mxu0 %v829
      %1105 = vmatpush.msra.mxu0 %v823
      %1106 = vmatpush.msra.mxu0 %v817
      %1107 = vmatpush.msra.mxu0 %v811
      %1108 = vmatpush.msra.mxu0 %v805
      %1109 = vmatmul.f32.gmra.mxu0 %v912
      %v1110 = vpop.f32.mrf.mxu0
      %v1111 = vadd.f32 %v1091, %v1110
      %1112 = vdwg.mxu0
      %1113 = vmatpush.msra.mxu0 %v800
      %1114 = vmatpush.msra.mxu0 %v794
      %1115 = vmatpush.msra.mxu0 %v788
      %1116 = vmatpush.msra.mxu0 %v782
      %1117 = vmatpush.msra.mxu0 %v776
      %1118 = vmatpush.msra.mxu0 %v770
      %1119 = vmatpush.msra.mxu0 %v764
      %1120 = vmatpush.msra.mxu0 %v758
      %1121 = vmatpush.msra.mxu0 %v752
      %1122 = vmatpush.msra.mxu0 %v746
      %1123 = vmatpush.msra.mxu0 %v740
      %1124 = vmatpush.msra.mxu0 %v734
      %1125 = vmatpush.msra.mxu0 %v728
      %1126 = vmatpush.msra.mxu0 %v722
      %1127 = vmatpush.msra.mxu0 %v716
      %1128 = vmatpush.msra.mxu0 %v710
      %1129 = vmatmul.f32.gmra.mxu0 %v911
      %v1130 = vpop.f32.mrf.mxu0
      %v1131 = vadd.f32 %v904, %v1130
      %1132 = vdwg.mxu0
      %1133 = vmatpush.msra.mxu0 %v896
      %1134 = vmatpush.msra.mxu0 %v890
      %1135 = vmatpush.msra.mxu0 %v884
      %1136 = vmatpush.msra.mxu0 %v878
      %1137 = vmatpush.msra.mxu0 %v872
      %1138 = vmatpush.msra.mxu0 %v866
      %1139 = vmatpush.msra.mxu0 %v860
      %1140 = vmatpush.msra.mxu0 %v854
      %1141 = vmatpush.msra.mxu0 %v848
      %1142 = vmatpush.msra.mxu0 %v842
      %1143 = vmatpush.msra.mxu0 %v836
      %1144 = vmatpush.msra.mxu0 %v830
      %1145 = vmatpush.msra.mxu0 %v824
      %1146 = vmatpush.msra.mxu0 %v818
      %1147 = vmatpush.msra.mxu0 %v812
      %1148 = vmatpush.msra.mxu0 %v806
      %1149 = vmatmul.f32.gmra.mxu0 %v912
      %v1150 = vpop.f32.mrf.mxu0
      %v1151 = vadd.f32 %v1131, %v1150
      %1152 = vdwg.mxu0
      %s1153 = smul.u32 0, 3
      %s1154 = smul.addr %s1153, 8
      %s1155 = scalar_lea.vmem [#allocation2], %s1154
      %v1156 = vld [vmem:[%s1155] sm:$0xff]
      %v1157 = vld [vmem:[%s1155 + $0x8] sm:$0xff]
      %v1158 = vld [vmem:[%s1155 + $0x10] sm:$0xff]
      %v1159 = vadd.f32 %v1156, %v951
      %v1160 = vadd.f32 %v1157, %v991
      %v1161 = vxor.u32 %v1159, 2147483648
      %v1162 = vxor.u32 %v1160, 2147483648
      %v1163 = vmul.f32 %v1161, 1.442695
      %v1164 = vpow.pop %v1163
      %v1165 = vmul.f32 %v1162, 1.442695
      %v1166 = vpow.pop %v1165
      %v1167 = vadd.f32 %v1164, 1.0
      %v1168 = vadd.f32 %v1166, 1.0
      %v1169 = vrcp.pop %v1167
      %v1170 = vmul.f32 %v1167, %v1169
      %v1171 = vsub.f32 1.0, %v1170
      %v1172 = vmul.f32 %v1169, %v1171
      %v1173 = vadd.f32 %v1169, %v1172
      %vm1174 = vweird.f32 %v1167
      %vm1175 = vweird.f32 %v1169
      %vm1176 = vmor %vm1174, %vm1175
      %v1177 = vsel %vm1176, %v1169, %v1173
      %v1178 = vand.u32 2147483647, %v1167
      %vm1179 = vcmp.eq.f32.partialorder %v1178, 8.507059e+37
      %v1180 = vand.u32 %v1167, 2147483648
      %v1181 = vor.u32 1.1754944e-38, %v1180
      %v1182 = vsel %vm1179, %v1181, %v1177
      %v1183 = vmul.f32 1.0, %v1182
      %v1184 = vrcp.pop %v1168
      %v1185 = vmul.f32 %v1168, %v1184
      %v1186 = vsub.f32 1.0, %v1185
      %v1187 = vmul.f32 %v1184, %v1186
      %v1188 = vadd.f32 %v1184, %v1187
      %vm1189 = vweird.f32 %v1168
      %vm1190 = vweird.f32 %v1184
      %vm1191 = vmor %vm1189, %vm1190
      %v1192 = vsel %vm1191, %v1184, %v1188
      %v1193 = vand.u32 2147483647, %v1168
      %vm1194 = vcmp.eq.f32.partialorder %v1193, 8.507059e+37
      %v1195 = vand.u32 %v1168, 2147483648
      %v1196 = vor.u32 1.1754944e-38, %v1195
      %v1197 = vsel %vm1194, %v1196, %v1192
      %v1198 = vmul.f32 1.0, %v1197
      %v1199 = vmul.f32 %v1183, %v1031
      %v1200 = vadd.f32 %v1158, %v1199
      %v1201 = vtanh.pop %v1200
      %v1202 = vsub.f32 1.0, %v1198
      %v1203 = vmul.f32 %v1202, %v1201
      %v1204 = vmul.f32 %v1198, %v911
      %v1205 = vadd.f32 %v1203, %v1204
      %s1206 = smul.u32 4, 3
      %s1207 = smul.addr %s1206, 8
      %s1208 = scalar_lea.vmem [#allocation3], %s1207
      %v1209 = vld [vmem:[%s1208] sm:$0xff]
      %v1210 = vld [vmem:[%s1208 + $0x8] sm:$0xff]
      %v1211 = vld [vmem:[%s1208 + $0x10] sm:$0xff]
      %v1212 = vadd.f32 %v1209, %v1071
      %v1213 = vadd.f32 %v1210, %v1111
      %v1214 = vxor.u32 %v1212, 2147483648
      %v1215 = vxor.u32 %v1213, 2147483648
      %v1216 = vmul.f32 %v1214, 1.442695
      %v1217 = vpow.pop %v1216
      %v1218 = vmul.f32 %v1215, 1.442695
      %v1219 = vpow.pop %v1218
      %v1220 = vadd.f32 %v1217, 1.0
      %v1221 = vadd.f32 %v1219, 1.0
      %v1222 = vrcp.pop %v1220
      %v1223 = vmul.f32 %v1220, %v1222
      %v1224 = vsub.f32 1.0, %v1223
      %v1225 = vmul.f32 %v1222, %v1224
      %v1226 = vadd.f32 %v1222, %v1225
      %vm1227 = vweird.f32 %v1220
      %vm1228 = vweird.f32 %v1222
      %vm1229 = vmor %vm1227, %vm1228
      %v1230 = vsel %vm1229, %v1222, %v1226
      %v1231 = vand.u32 2147483647, %v1220
      %vm1232 = vcmp.eq.f32.partialorder %v1231, 8.507059e+37
      %v1233 = vand.u32 %v1220, 2147483648
      %v1234 = vor.u32 1.1754944e-38, %v1233
      %v1235 = vsel %vm1232, %v1234, %v1230
      %v1236 = vmul.f32 1.0, %v1235
      %v1237 = vrcp.pop %v1221
      %v1238 = vmul.f32 %v1221, %v1237
      %v1239 = vsub.f32 1.0, %v1238
      %v1240 = vmul.f32 %v1237, %v1239
      %v1241 = vadd.f32 %v1237, %v1240
      %vm1242 = vweird.f32 %v1221
      %vm1243 = vweird.f32 %v1237
      %vm1244 = vmor %vm1242, %vm1243
      %v1245 = vsel %vm1244, %v1237, %v1241
      %v1246 = vand.u32 2147483647, %v1221
      %vm1247 = vcmp.eq.f32.partialorder %v1246, 8.507059e+37
      %v1248 = vand.u32 %v1221, 2147483648
      %v1249 = vor.u32 1.1754944e-38, %v1248
      %v1250 = vsel %vm1247, %v1249, %v1245
      %v1251 = vmul.f32 1.0, %v1250
      %v1252 = vmul.f32 %v1236, %v1151
      %v1253 = vadd.f32 %v1211, %v1252
      %v1254 = vtanh.pop %v1253
      %v1255 = vsub.f32 1.0, %v1251
      %v1256 = vmul.f32 %v1255, %v1254
      %v1257 = vmul.f32 %v1251, %v912
      %v1258 = vadd.f32 %v1256, %v1257
      %s1259 = smul.u32 %s22, 5
      %p1260 = scmp.lt.s32.totalorder %s1259, 8
      %s1261 = scalar_select %p1260, 1, 0
      %v1262 = vstv %s1261
      %vm1263 = vcmp.eq.s32.totalorder %v1262, 1
      %v1264 = vsel %vm1263, %v1205, %v911
      %s1265 = ssub.s32 1, %s22
      %s1266 = smul.u32 %s1265, 5
      %s1267 = sadd.s32 %s1266, 4
      %p1268 = scmp.lt.s32.totalorder %s1267, 8
      %s1269 = scalar_select %p1268, 1, 0
      %v1270 = vstv %s1269
      %vm1271 = vcmp.eq.s32.totalorder %v1270, 1
      %v1272 = vsel %vm1271, %v1258, %v912
      %1273 = vst [vmem:[#allocation4] sm:$0xff] %v1264
      %1274 = vst [vmem:[#allocation4 + $0x8] sm:$0xff] %v1272
      %1275 = vst [vmem:[%s398] sm:$0xff] %v1264
      %s1276 = scalar_lea.vmem %s405, 32
      %1277 = vst [vmem:[%s1276] sm:$0xff] %v1272
      %v1278 = vld [vmem:[#allocation4] sm:$0xff]
      %v1279 = vld [vmem:[#allocation4 + $0x8] sm:$0xff]
      %1280 = vmatpush.msra.mxu0 %v795
      %1281 = vmatpush.msra.mxu0 %v789
      %1282 = vmatpush.msra.mxu0 %v783
      %1283 = vmatpush.msra.mxu0 %v777
      %1284 = vmatpush.msra.mxu0 %v771
      %1285 = vmatpush.msra.mxu0 %v765
      %1286 = vmatpush.msra.mxu0 %v759
      %1287 = vmatpush.msra.mxu0 %v753
      %1288 = vmatpush.msra.mxu0 %v747
      %1289 = vmatpush.msra.mxu0 %v741
      %1290 = vmatpush.msra.mxu0 %v735
      %1291 = vmatpush.msra.mxu0 %v729
      %1292 = vmatpush.msra.mxu0 %v723
      %1293 = vmatpush.msra.mxu0 %v717
      %1294 = vmatpush.msra.mxu0 %v711
      %1295 = vmatpush.msra.mxu0 %v705
      %1296 = vmatmul.f32.gmra.mxu0 %v1278
      %v1297 = vpop.f32.mrf.mxu0
      %v1298 = vadd.f32 %v899, %v1297
      %1299 = vdwg.mxu0
      %1300 = vmatpush.msra.mxu0 %v891
      %1301 = vmatpush.msra.mxu0 %v885
      %1302 = vmatpush.msra.mxu0 %v879
      %1303 = vmatpush.msra.mxu0 %v873
      %1304 = vmatpush.msra.mxu0 %v867
      %1305 = vmatpush.msra.mxu0 %v861
      %1306 = vmatpush.msra.mxu0 %v855
      %1307 = vmatpush.msra.mxu0 %v849
      %1308 = vmatpush.msra.mxu0 %v843
      %1309 = vmatpush.msra.mxu0 %v837
      %1310 = vmatpush.msra.mxu0 %v831
      %1311 = vmatpush.msra.mxu0 %v825
      %1312 = vmatpush.msra.mxu0 %v819
      %1313 = vmatpush.msra.mxu0 %v813
      %1314 = vmatpush.msra.mxu0 %v807
      %1315 = vmatpush.msra.mxu0 %v801
      %1316 = vmatmul.f32.gmra.mxu0 %v1279
      %v1317 = vpop.f32.mrf.mxu0
      %v1318 = vadd.f32 %v1298, %v1317
      %1319 = vdwg.mxu0
      %1320 = vmatpush.msra.mxu0 %v796
      %1321 = vmatpush.msra.mxu0 %v790
      %1322 = vmatpush.msra.mxu0 %v784
      %1323 = vmatpush.msra.mxu0 %v778
      %1324 = vmatpush.msra.mxu0 %v772
      %1325 = vmatpush.msra.mxu0 %v766
      %1326 = vmatpush.msra.mxu0 %v760
      %1327 = vmatpush.msra.mxu0 %v754
      %1328 = vmatpush.msra.mxu0 %v748
      %1329 = vmatpush.msra.mxu0 %v742
      %1330 = vmatpush.msra.mxu0 %v736
      %1331 = vmatpush.msra.mxu0 %v730
      %1332 = vmatpush.msra.mxu0 %v724
      %1333 = vmatpush.msra.mxu0 %v718
      %1334 = vmatpush.msra.mxu0 %v712
      %1335 = vmatpush.msra.mxu0 %v706
      %1336 = vmatmul.f32.gmra.mxu0 %v1278
      %v1337 = vpop.f32.mrf.mxu0
      %v1338 = vadd.f32 %v900, %v1337
      %1339 = vdwg.mxu0
      %1340 = vmatpush.msra.mxu0 %v892
      %1341 = vmatpush.msra.mxu0 %v886
      %1342 = vmatpush.msra.mxu0 %v880
      %1343 = vmatpush.msra.mxu0 %v874
      %1344 = vmatpush.msra.mxu0 %v868
      %1345 = vmatpush.msra.mxu0 %v862
      %1346 = vmatpush.msra.mxu0 %v856
      %1347 = vmatpush.msra.mxu0 %v850
      %1348 = vmatpush.msra.mxu0 %v844
      %1349 = vmatpush.msra.mxu0 %v838
      %1350 = vmatpush.msra.mxu0 %v832
      %1351 = vmatpush.msra.mxu0 %v826
      %1352 = vmatpush.msra.mxu0 %v820
      %1353 = vmatpush.msra.mxu0 %v814
      %1354 = vmatpush.msra.mxu0 %v808
      %1355 = vmatpush.msra.mxu0 %v802
      %1356 = vmatmul.f32.gmra.mxu0 %v1279
      %v1357 = vpop.f32.mrf.mxu0
      %v1358 = vadd.f32 %v1338, %v1357
      %1359 = vdwg.mxu0
      %1360 = vmatpush.msra.mxu0 %v797
      %1361 = vmatpush.msra.mxu0 %v791
      %1362 = vmatpush.msra.mxu0 %v785
      %1363 = vmatpush.msra.mxu0 %v779
      %1364 = vmatpush.msra.mxu0 %v773
      %1365 = vmatpush.msra.mxu0 %v767
      %1366 = vmatpush.msra.mxu0 %v761
      %1367 = vmatpush.msra.mxu0 %v755
      %1368 = vmatpush.msra.mxu0 %v749
      %1369 = vmatpush.msra.mxu0 %v743
      %1370 = vmatpush.msra.mxu0 %v737
      %1371 = vmatpush.msra.mxu0 %v731
      %1372 = vmatpush.msra.mxu0 %v725
      %1373 = vmatpush.msra.mxu0 %v719
      %1374 = vmatpush.msra.mxu0 %v713
      %1375 = vmatpush.msra.mxu0 %v707
      %1376 = vmatmul.f32.gmra.mxu0 %v1278
      %v1377 = vpop.f32.mrf.mxu0
      %v1378 = vadd.f32 %v901, %v1377
      %1379 = vdwg.mxu0
      %1380 = vmatpush.msra.mxu0 %v893
      %1381 = vmatpush.msra.mxu0 %v887
      %1382 = vmatpush.msra.mxu0 %v881
      %1383 = vmatpush.msra.mxu0 %v875
      %1384 = vmatpush.msra.mxu0 %v869
      %1385 = vmatpush.msra.mxu0 %v863
      %1386 = vmatpush.msra.mxu0 %v857
      %1387 = vmatpush.msra.mxu0 %v851
      %1388 = vmatpush.msra.mxu0 %v845
      %1389 = vmatpush.msra.mxu0 %v839
      %1390 = vmatpush.msra.mxu0 %v833
      %1391 = vmatpush.msra.mxu0 %v827
      %1392 = vmatpush.msra.mxu0 %v821
      %1393 = vmatpush.msra.mxu0 %v815
      %1394 = vmatpush.msra.mxu0 %v809
      %1395 = vmatpush.msra.mxu0 %v803
      %1396 = vmatmul.f32.gmra.mxu0 %v1279
      %v1397 = vpop.f32.mrf.mxu0
      %v1398 = vadd.f32 %v1378, %v1397
      %1399 = vdwg.mxu0
      %1400 = vmatpush.msra.mxu0 %v798
      %1401 = vmatpush.msra.mxu0 %v792
      %1402 = vmatpush.msra.mxu0 %v786
      %1403 = vmatpush.msra.mxu0 %v780
      %1404 = vmatpush.msra.mxu0 %v774
      %1405 = vmatpush.msra.mxu0 %v768
      %1406 = vmatpush.msra.mxu0 %v762
      %1407 = vmatpush.msra.mxu0 %v756
      %1408 = vmatpush.msra.mxu0 %v750
      %1409 = vmatpush.msra.mxu0 %v744
      %1410 = vmatpush.msra.mxu0 %v738
      %1411 = vmatpush.msra.mxu0 %v732
      %1412 = vmatpush.msra.mxu0 %v726
      %1413 = vmatpush.msra.mxu0 %v720
      %1414 = vmatpush.msra.mxu0 %v714
      %1415 = vmatpush.msra.mxu0 %v708
      %1416 = vmatmul.f32.gmra.mxu0 %v1278
      %v1417 = vpop.f32.mrf.mxu0
      %v1418 = vadd.f32 %v902, %v1417
      %1419 = vdwg.mxu0
      %1420 = vmatpush.msra.mxu0 %v894
      %1421 = vmatpush.msra.mxu0 %v888
      %1422 = vmatpush.msra.mxu0 %v882
      %1423 = vmatpush.msra.mxu0 %v876
      %1424 = vmatpush.msra.mxu0 %v870
      %1425 = vmatpush.msra.mxu0 %v864
      %1426 = vmatpush.msra.mxu0 %v858
      %1427 = vmatpush.msra.mxu0 %v852
      %1428 = vmatpush.msra.mxu0 %v846
      %1429 = vmatpush.msra.mxu0 %v840
      %1430 = vmatpush.msra.mxu0 %v834
      %1431 = vmatpush.msra.mxu0 %v828
      %1432 = vmatpush.msra.mxu0 %v822
      %1433 = vmatpush.msra.mxu0 %v816
      %1434 = vmatpush.msra.mxu0 %v810
      %1435 = vmatpush.msra.mxu0 %v804
      %1436 = vmatmul.f32.gmra.mxu0 %v1279
      %v1437 = vpop.f32.mrf.mxu0
      %v1438 = vadd.f32 %v1418, %v1437
      %1439 = vdwg.mxu0
      %1440 = vmatpush.msra.mxu0 %v799
      %1441 = vmatpush.msra.mxu0 %v793
      %1442 = vmatpush.msra.mxu0 %v787
      %1443 = vmatpush.msra.mxu0 %v781
      %1444 = vmatpush.msra.mxu0 %v775
      %1445 = vmatpush.msra.mxu0 %v769
      %1446 = vmatpush.msra.mxu0 %v763
      %1447 = vmatpush.msra.mxu0 %v757
      %1448 = vmatpush.msra.mxu0 %v751
      %1449 = vmatpush.msra.mxu0 %v745
      %1450 = vmatpush.msra.mxu0 %v739
      %1451 = vmatpush.msra.mxu0 %v733
      %1452 = vmatpush.msra.mxu0 %v727
      %1453 = vmatpush.msra.mxu0 %v721
      %1454 = vmatpush.msra.mxu0 %v715
      %1455 = vmatpush.msra.mxu0 %v709
      %1456 = vmatmul.f32.gmra.mxu0 %v1278
      %v1457 = vpop.f32.mrf.mxu0
      %v1458 = vadd.f32 %v903, %v1457
      %1459 = vdwg.mxu0
      %1460 = vmatpush.msra.mxu0 %v895
      %1461 = vmatpush.msra.mxu0 %v889
      %1462 = vmatpush.msra.mxu0 %v883
      %1463 = vmatpush.msra.mxu0 %v877
      %1464 = vmatpush.msra.mxu0 %v871
      %1465 = vmatpush.msra.mxu0 %v865
      %1466 = vmatpush.msra.mxu0 %v859
      %1467 = vmatpush.msra.mxu0 %v853
      %1468 = vmatpush.msra.mxu0 %v847
      %1469 = vmatpush.msra.mxu0 %v841
      %1470 = vmatpush.msra.mxu0 %v835
      %1471 = vmatpush.msra.mxu0 %v829
      %1472 = vmatpush.msra.mxu0 %v823
      %1473 = vmatpush.msra.mxu0 %v817
      %1474 = vmatpush.msra.mxu0 %v811
      %1475 = vmatpush.msra.mxu0 %v805
      %1476 = vmatmul.f32.gmra.mxu0 %v1279
      %v1477 = vpop.f32.mrf.mxu0
      %v1478 = vadd.f32 %v1458, %v1477
      %1479 = vdwg.mxu0
      %1480 = vmatpush.msra.mxu0 %v800
      %1481 = vmatpush.msra.mxu0 %v794
      %1482 = vmatpush.msra.mxu0 %v788
      %1483 = vmatpush.msra.mxu0 %v782
      %1484 = vmatpush.msra.mxu0 %v776
      %1485 = vmatpush.msra.mxu0 %v770
      %1486 = vmatpush.msra.mxu0 %v764
      %1487 = vmatpush.msra.mxu0 %v758
      %1488 = vmatpush.msra.mxu0 %v752
      %1489 = vmatpush.msra.mxu0 %v746
      %1490 = vmatpush.msra.mxu0 %v740
      %1491 = vmatpush.msra.mxu0 %v734
      %1492 = vmatpush.msra.mxu0 %v728
      %1493 = vmatpush.msra.mxu0 %v722
      %1494 = vmatpush.msra.mxu0 %v716
      %1495 = vmatpush.msra.mxu0 %v710
      %1496 = vmatmul.f32.gmra.mxu0 %v1278
      %v1497 = vpop.f32.mrf.mxu0
      %v1498 = vadd.f32 %v904, %v1497
      %1499 = vdwg.mxu0
      %1500 = vmatpush.msra.mxu0 %v896
      %1501 = vmatpush.msra.mxu0 %v890
      %1502 = vmatpush.msra.mxu0 %v884
      %1503 = vmatpush.msra.mxu0 %v878
      %1504 = vmatpush.msra.mxu0 %v872
      %1505 = vmatpush.msra.mxu0 %v866
      %1506 = vmatpush.msra.mxu0 %v860
      %1507 = vmatpush.msra.mxu0 %v854
      %1508 = vmatpush.msra.mxu0 %v848
      %1509 = vmatpush.msra.mxu0 %v842
      %1510 = vmatpush.msra.mxu0 %v836
      %1511 = vmatpush.msra.mxu0 %v830
      %1512 = vmatpush.msra.mxu0 %v824
      %1513 = vmatpush.msra.mxu0 %v818
      %1514 = vmatpush.msra.mxu0 %v812
      %1515 = vmatpush.msra.mxu0 %v806
      %1516 = vmatmul.f32.gmra.mxu0 %v1279
      %v1517 = vpop.f32.mrf.mxu0
      %v1518 = vadd.f32 %v1498, %v1517
      %1519 = vdwg.mxu0
      %s1520 = smul.u32 1, 3
      %s1521 = smul.addr %s1520, 8
      %s1522 = scalar_lea.vmem [#allocation2], %s1521
      %v1523 = vld [vmem:[%s1522] sm:$0xff]
      %v1524 = vld [vmem:[%s1522 + $0x8] sm:$0xff]
      %v1525 = vld [vmem:[%s1522 + $0x10] sm:$0xff]
      %v1526 = vadd.f32 %v1523, %v1318
      %v1527 = vadd.f32 %v1524, %v1358
      %v1528 = vxor.u32 %v1526, 2147483648
      %v1529 = vxor.u32 %v1527, 2147483648
      %v1530 = vmul.f32 %v1528, 1.442695
      %v1531 = vpow.pop %v1530
      %v1532 = vmul.f32 %v1529, 1.442695
      %v1533 = vpow.pop %v1532
      %v1534 = vadd.f32 %v1531, 1.0
      %v1535 = vadd.f32 %v1533, 1.0
      %v1536 = vrcp.pop %v1534
      %v1537 = vmul.f32 %v1534, %v1536
      %v1538 = vsub.f32 1.0, %v1537
      %v1539 = vmul.f32 %v1536, %v1538
      %v1540 = vadd.f32 %v1536, %v1539
      %vm1541 = vweird.f32 %v1534
      %vm1542 = vweird.f32 %v1536
      %vm1543 = vmor %vm1541, %vm1542
      %v1544 = vsel %vm1543, %v1536, %v1540
      %v1545 = vand.u32 2147483647, %v1534
      %vm1546 = vcmp.eq.f32.partialorder %v1545, 8.507059e+37
      %v1547 = vand.u32 %v1534, 2147483648
      %v1548 = vor.u32 1.1754944e-38, %v1547
      %v1549 = vsel %vm1546, %v1548, %v1544
      %v1550 = vmul.f32 1.0, %v1549
      %v1551 = vrcp.pop %v1535
      %v1552 = vmul.f32 %v1535, %v1551
      %v1553 = vsub.f32 1.0, %v1552
      %v1554 = vmul.f32 %v1551, %v1553
      %v1555 = vadd.f32 %v1551, %v1554
      %vm1556 = vweird.f32 %v1535
      %vm1557 = vweird.f32 %v1551
      %vm1558 = vmor %vm1556, %vm1557
      %v1559 = vsel %vm1558, %v1551, %v1555
      %v1560 = vand.u32 2147483647, %v1535
      %vm1561 = vcmp.eq.f32.partialorder %v1560, 8.507059e+37
      %v1562 = vand.u32 %v1535, 2147483648
      %v1563 = vor.u32 1.1754944e-38, %v1562
      %v1564 = vsel %vm1561, %v1563, %v1559
      %v1565 = vmul.f32 1.0, %v1564
      %v1566 = vmul.f32 %v1550, %v1398
      %v1567 = vadd.f32 %v1525, %v1566
      %v1568 = vtanh.pop %v1567
      %v1569 = vsub.f32 1.0, %v1565
      %v1570 = vmul.f32 %v1569, %v1568
      %v1571 = vmul.f32 %v1565, %v1278
      %v1572 = vadd.f32 %v1570, %v1571
      %s1573 = smul.u32 3, 3
      %s1574 = smul.addr %s1573, 8
      %s1575 = scalar_lea.vmem [#allocation3], %s1574
      %v1576 = vld [vmem:[%s1575] sm:$0xff]
      %v1577 = vld [vmem:[%s1575 + $0x8] sm:$0xff]
      %v1578 = vld [vmem:[%s1575 + $0x10] sm:$0xff]
      %v1579 = vadd.f32 %v1576, %v1438
      %v1580 = vadd.f32 %v1577, %v1478
      %v1581 = vxor.u32 %v1579, 2147483648
      %v1582 = vxor.u32 %v1580, 2147483648
      %v1583 = vmul.f32 %v1581, 1.442695
      %v1584 = vpow.pop %v1583
      %v1585 = vmul.f32 %v1582, 1.442695
      %v1586 = vpow.pop %v1585
      %v1587 = vadd.f32 %v1584, 1.0
      %v1588 = vadd.f32 %v1586, 1.0
      %v1589 = vrcp.pop %v1587
      %v1590 = vmul.f32 %v1587, %v1589
      %v1591 = vsub.f32 1.0, %v1590
      %v1592 = vmul.f32 %v1589, %v1591
      %v1593 = vadd.f32 %v1589, %v1592
      %vm1594 = vweird.f32 %v1587
      %vm1595 = vweird.f32 %v1589
      %vm1596 = vmor %vm1594, %vm1595
      %v1597 = vsel %vm1596, %v1589, %v1593
      %v1598 = vand.u32 2147483647, %v1587
      %vm1599 = vcmp.eq.f32.partialorder %v1598, 8.507059e+37
      %v1600 = vand.u32 %v1587, 2147483648
      %v1601 = vor.u32 1.1754944e-38, %v1600
      %v1602 = vsel %vm1599, %v1601, %v1597
      %v1603 = vmul.f32 1.0, %v1602
      %v1604 = vrcp.pop %v1588
      %v1605 = vmul.f32 %v1588, %v1604
      %v1606 = vsub.f32 1.0, %v1605
      %v1607 = vmul.f32 %v1604, %v1606
      %v1608 = vadd.f32 %v1604, %v1607
      %vm1609 = vweird.f32 %v1588
      %vm1610 = vweird.f32 %v1604
      %vm1611 = vmor %vm1609, %vm1610
      %v1612 = vsel %vm1611, %v1604, %v1608
      %v1613 = vand.u32 2147483647, %v1588
      %vm1614 = vcmp.eq.f32.partialorder %v1613, 8.507059e+37
      %v1615 = vand.u32 %v1588, 2147483648
      %v1616 = vor.u32 1.1754944e-38, %v1615
      %v1617 = vsel %vm1614, %v1616, %v1612
      %v1618 = vmul.f32 1.0, %v1617
      %v1619 = vmul.f32 %v1603, %v1518
      %v1620 = vadd.f32 %v1578, %v1619
      %v1621 = vtanh.pop %v1620
      %v1622 = vsub.f32 1.0, %v1618
      %v1623 = vmul.f32 %v1622, %v1621
      %v1624 = vmul.f32 %v1618, %v1279
      %v1625 = vadd.f32 %v1623, %v1624
      %s1626 = sadd.s32 %s1259, 1
      %p1627 = scmp.lt.s32.totalorder %s1626, 8
      %s1628 = scalar_select %p1627, 1, 0
      %v1629 = vstv %s1628
      %vm1630 = vcmp.eq.s32.totalorder %v1629, 1
      %v1631 = vsel %vm1630, %v1572, %v1278
      %s1632 = sadd.s32 %s1266, 3
      %p1633 = scmp.lt.s32.totalorder %s1632, 8
      %s1634 = scalar_select %p1633, 1, 0
      %v1635 = vstv %s1634
      %vm1636 = vcmp.eq.s32.totalorder %v1635, 1
      %v1637 = vsel %vm1636, %v1625, %v1279
      %1638 = vst [vmem:[#allocation4] sm:$0xff] %v1631
      %1639 = vst [vmem:[#allocation4 + $0x8] sm:$0xff] %v1637
      %s1640 = scalar_lea.vmem %s398, 8
      %1641 = vst [vmem:[%s1640] sm:$0xff] %v1631
      %s1642 = scalar_lea.vmem %s405, 24
      %1643 = vst [vmem:[%s1642] sm:$0xff] %v1637
      %v1644 = vld [vmem:[#allocation4] sm:$0xff]
      %v1645 = vld [vmem:[#allocation4 + $0x8] sm:$0xff]
      %1646 = vmatpush.msra.mxu0 %v795
      %1647 = vmatpush.msra.mxu0 %v789
      %1648 = vmatpush.msra.mxu0 %v783
      %1649 = vmatpush.msra.mxu0 %v777
      %1650 = vmatpush.msra.mxu0 %v771
      %1651 = vmatpush.msra.mxu0 %v765
      %1652 = vmatpush.msra.mxu0 %v759
      %1653 = vmatpush.msra.mxu0 %v753
      %1654 = vmatpush.msra.mxu0 %v747
      %1655 = vmatpush.msra.mxu0 %v741
      %1656 = vmatpush.msra.mxu0 %v735
      %1657 = vmatpush.msra.mxu0 %v729
      %1658 = vmatpush.msra.mxu0 %v723
      %1659 = vmatpush.msra.mxu0 %v717
      %1660 = vmatpush.msra.mxu0 %v711
      %1661 = vmatpush.msra.mxu0 %v705
      %1662 = vmatmul.f32.gmra.mxu0 %v1644
      %v1663 = vpop.f32.mrf.mxu0
      %v1664 = vadd.f32 %v899, %v1663
      %1665 = vdwg.mxu0
      %1666 = vmatpush.msra.mxu0 %v891
      %1667 = vmatpush.msra.mxu0 %v885
      %1668 = vmatpush.msra.mxu0 %v879
      %1669 = vmatpush.msra.mxu0 %v873
      %1670 = vmatpush.msra.mxu0 %v867
      %1671 = vmatpush.msra.mxu0 %v861
      %1672 = vmatpush.msra.mxu0 %v855
      %1673 = vmatpush.msra.mxu0 %v849
      %1674 = vmatpush.msra.mxu0 %v843
      %1675 = vmatpush.msra.mxu0 %v837
      %1676 = vmatpush.msra.mxu0 %v831
      %1677 = vmatpush.msra.mxu0 %v825
      %1678 = vmatpush.msra.mxu0 %v819
      %1679 = vmatpush.msra.mxu0 %v813
      %1680 = vmatpush.msra.mxu0 %v807
      %1681 = vmatpush.msra.mxu0 %v801
      %1682 = vmatmul.f32.gmra.mxu0 %v1645
      %v1683 = vpop.f32.mrf.mxu0
      %v1684 = vadd.f32 %v1664, %v1683
      %1685 = vdwg.mxu0
      %1686 = vmatpush.msra.mxu0 %v796
      %1687 = vmatpush.msra.mxu0 %v790
      %1688 = vmatpush.msra.mxu0 %v784
      %1689 = vmatpush.msra.mxu0 %v778
      %1690 = vmatpush.msra.mxu0 %v772
      %1691 = vmatpush.msra.mxu0 %v766
      %1692 = vmatpush.msra.mxu0 %v760
      %1693 = vmatpush.msra.mxu0 %v754
      %1694 = vmatpush.msra.mxu0 %v748
      %1695 = vmatpush.msra.mxu0 %v742
      %1696 = vmatpush.msra.mxu0 %v736
      %1697 = vmatpush.msra.mxu0 %v730
      %1698 = vmatpush.msra.mxu0 %v724
      %1699 = vmatpush.msra.mxu0 %v718
      %1700 = vmatpush.msra.mxu0 %v712
      %1701 = vmatpush.msra.mxu0 %v706
      %1702 = vmatmul.f32.gmra.mxu0 %v1644
      %v1703 = vpop.f32.mrf.mxu0
      %v1704 = vadd.f32 %v900, %v1703
      %1705 = vdwg.mxu0
      %1706 = vmatpush.msra.mxu0 %v892
      %1707 = vmatpush.msra.mxu0 %v886
      %1708 = vmatpush.msra.mxu0 %v880
      %1709 = vmatpush.msra.mxu0 %v874
      %1710 = vmatpush.msra.mxu0 %v868
      %1711 = vmatpush.msra.mxu0 %v862
      %1712 = vmatpush.msra.mxu0 %v856
      %1713 = vmatpush.msra.mxu0 %v850
      %1714 = vmatpush.msra.mxu0 %v844
      %1715 = vmatpush.msra.mxu0 %v838
      %1716 = vmatpush.msra.mxu0 %v832
      %1717 = vmatpush.msra.mxu0 %v826
      %1718 = vmatpush.msra.mxu0 %v820
      %1719 = vmatpush.msra.mxu0 %v814
      %1720 = vmatpush.msra.mxu0 %v808
      %1721 = vmatpush.msra.mxu0 %v802
      %1722 = vmatmul.f32.gmra.mxu0 %v1645
      %v1723 = vpop.f32.mrf.mxu0
      %v1724 = vadd.f32 %v1704, %v1723
      %1725 = vdwg.mxu0
      %1726 = vmatpush.msra.mxu0 %v797
      %1727 = vmatpush.msra.mxu0 %v791
      %1728 = vmatpush.msra.mxu0 %v785
      %1729 = vmatpush.msra.mxu0 %v779
      %1730 = vmatpush.msra.mxu0 %v773
      %1731 = vmatpush.msra.mxu0 %v767
      %1732 = vmatpush.msra.mxu0 %v761
      %1733 = vmatpush.msra.mxu0 %v755
      %1734 = vmatpush.msra.mxu0 %v749
      %1735 = vmatpush.msra.mxu0 %v743
      %1736 = vmatpush.msra.mxu0 %v737
      %1737 = vmatpush.msra.mxu0 %v731
      %1738 = vmatpush.msra.mxu0 %v725
      %1739 = vmatpush.msra.mxu0 %v719
      %1740 = vmatpush.msra.mxu0 %v713
      %1741 = vmatpush.msra.mxu0 %v707
      %1742 = vmatmul.f32.gmra.mxu0 %v1644
      %v1743 = vpop.f32.mrf.mxu0
      %v1744 = vadd.f32 %v901, %v1743
      %1745 = vdwg.mxu0
      %1746 = vmatpush.msra.mxu0 %v893
      %1747 = vmatpush.msra.mxu0 %v887
      %1748 = vmatpush.msra.mxu0 %v881
      %1749 = vmatpush.msra.mxu0 %v875
      %1750 = vmatpush.msra.mxu0 %v869
      %1751 = vmatpush.msra.mxu0 %v863
      %1752 = vmatpush.msra.mxu0 %v857
      %1753 = vmatpush.msra.mxu0 %v851
      %1754 = vmatpush.msra.mxu0 %v845
      %1755 = vmatpush.msra.mxu0 %v839
      %1756 = vmatpush.msra.mxu0 %v833
      %1757 = vmatpush.msra.mxu0 %v827
      %1758 = vmatpush.msra.mxu0 %v821
      %1759 = vmatpush.msra.mxu0 %v815
      %1760 = vmatpush.msra.mxu0 %v809
      %1761 = vmatpush.msra.mxu0 %v803
      %1762 = vmatmul.f32.gmra.mxu0 %v1645
      %v1763 = vpop.f32.mrf.mxu0
      %v1764 = vadd.f32 %v1744, %v1763
      %1765 = vdwg.mxu0
      %1766 = vmatpush.msra.mxu0 %v798
      %1767 = vmatpush.msra.mxu0 %v792
      %1768 = vmatpush.msra.mxu0 %v786
      %1769 = vmatpush.msra.mxu0 %v780
      %1770 = vmatpush.msra.mxu0 %v774
      %1771 = vmatpush.msra.mxu0 %v768
      %1772 = vmatpush.msra.mxu0 %v762
      %1773 = vmatpush.msra.mxu0 %v756
      %1774 = vmatpush.msra.mxu0 %v750
      %1775 = vmatpush.msra.mxu0 %v744
      %1776 = vmatpush.msra.mxu0 %v738
      %1777 = vmatpush.msra.mxu0 %v732
      %1778 = vmatpush.msra.mxu0 %v726
      %1779 = vmatpush.msra.mxu0 %v720
      %1780 = vmatpush.msra.mxu0 %v714
      %1781 = vmatpush.msra.mxu0 %v708
      %1782 = vmatmul.f32.gmra.mxu0 %v1644
      %v1783 = vpop.f32.mrf.mxu0
      %v1784 = vadd.f32 %v902, %v1783
      %1785 = vdwg.mxu0
      %1786 = vmatpush.msra.mxu0 %v894
      %1787 = vmatpush.msra.mxu0 %v888
      %1788 = vmatpush.msra.mxu0 %v882
      %1789 = vmatpush.msra.mxu0 %v876
      %1790 = vmatpush.msra.mxu0 %v870
      %1791 = vmatpush.msra.mxu0 %v864
      %1792 = vmatpush.msra.mxu0 %v858
      %1793 = vmatpush.msra.mxu0 %v852
      %1794 = vmatpush.msra.mxu0 %v846
      %1795 = vmatpush.msra.mxu0 %v840
      %1796 = vmatpush.msra.mxu0 %v834
      %1797 = vmatpush.msra.mxu0 %v828
      %1798 = vmatpush.msra.mxu0 %v822
      %1799 = vmatpush.msra.mxu0 %v816
      %1800 = vmatpush.msra.mxu0 %v810
      %1801 = vmatpush.msra.mxu0 %v804
      %1802 = vmatmul.f32.gmra.mxu0 %v1645
      %v1803 = vpop.f32.mrf.mxu0
      %v1804 = vadd.f32 %v1784, %v1803
      %1805 = vdwg.mxu0
      %1806 = vmatpush.msra.mxu0 %v799
      %1807 = vmatpush.msra.mxu0 %v793
      %1808 = vmatpush.msra.mxu0 %v787
      %1809 = vmatpush.msra.mxu0 %v781
      %1810 = vmatpush.msra.mxu0 %v775
      %1811 = vmatpush.msra.mxu0 %v769
      %1812 = vmatpush.msra.mxu0 %v763
      %1813 = vmatpush.msra.mxu0 %v757
      %1814 = vmatpush.msra.mxu0 %v751
      %1815 = vmatpush.msra.mxu0 %v745
      %1816 = vmatpush.msra.mxu0 %v739
      %1817 = vmatpush.msra.mxu0 %v733
      %1818 = vmatpush.msra.mxu0 %v727
      %1819 = vmatpush.msra.mxu0 %v721
      %1820 = vmatpush.msra.mxu0 %v715
      %1821 = vmatpush.msra.mxu0 %v709
      %1822 = vmatmul.f32.gmra.mxu0 %v1644
      %v1823 = vpop.f32.mrf.mxu0
      %v1824 = vadd.f32 %v903, %v1823
      %1825 = vdwg.mxu0
      %1826 = vmatpush.msra.mxu0 %v895
      %1827 = vmatpush.msra.mxu0 %v889
      %1828 = vmatpush.msra.mxu0 %v883
      %1829 = vmatpush.msra.mxu0 %v877
      %1830 = vmatpush.msra.mxu0 %v871
      %1831 = vmatpush.msra.mxu0 %v865
      %1832 = vmatpush.msra.mxu0 %v859
      %1833 = vmatpush.msra.mxu0 %v853
      %1834 = vmatpush.msra.mxu0 %v847
      %1835 = vmatpush.msra.mxu0 %v841
      %1836 = vmatpush.msra.mxu0 %v835
      %1837 = vmatpush.msra.mxu0 %v829
      %1838 = vmatpush.msra.mxu0 %v823
      %1839 = vmatpush.msra.mxu0 %v817
      %1840 = vmatpush.msra.mxu0 %v811
      %1841 = vmatpush.msra.mxu0 %v805
      %1842 = vmatmul.f32.gmra.mxu0 %v1645
      %v1843 = vpop.f32.mrf.mxu0
      %v1844 = vadd.f32 %v1824, %v1843
      %1845 = vdwg.mxu0
      %1846 = vmatpush.msra.mxu0 %v800
      %1847 = vmatpush.msra.mxu0 %v794
      %1848 = vmatpush.msra.mxu0 %v788
      %1849 = vmatpush.msra.mxu0 %v782
      %1850 = vmatpush.msra.mxu0 %v776
      %1851 = vmatpush.msra.mxu0 %v770
      %1852 = vmatpush.msra.mxu0 %v764
      %1853 = vmatpush.msra.mxu0 %v758
      %1854 = vmatpush.msra.mxu0 %v752
      %1855 = vmatpush.msra.mxu0 %v746
      %1856 = vmatpush.msra.mxu0 %v740
      %1857 = vmatpush.msra.mxu0 %v734
      %1858 = vmatpush.msra.mxu0 %v728
      %1859 = vmatpush.msra.mxu0 %v722
      %1860 = vmatpush.msra.mxu0 %v716
      %1861 = vmatpush.msra.mxu0 %v710
      %1862 = vmatmul.f32.gmra.mxu0 %v1644
      %v1863 = vpop.f32.mrf.mxu0
      %v1864 = vadd.f32 %v904, %v1863
      %1865 = vdwg.mxu0
      %1866 = vmatpush.msra.mxu0 %v896
      %1867 = vmatpush.msra.mxu0 %v890
      %1868 = vmatpush.msra.mxu0 %v884
      %1869 = vmatpush.msra.mxu0 %v878
      %1870 = vmatpush.msra.mxu0 %v872
      %1871 = vmatpush.msra.mxu0 %v866
      %1872 = vmatpush.msra.mxu0 %v860
      %1873 = vmatpush.msra.mxu0 %v854
      %1874 = vmatpush.msra.mxu0 %v848
      %1875 = vmatpush.msra.mxu0 %v842
      %1876 = vmatpush.msra.mxu0 %v836
      %1877 = vmatpush.msra.mxu0 %v830
      %1878 = vmatpush.msra.mxu0 %v824
      %1879 = vmatpush.msra.mxu0 %v818
      %1880 = vmatpush.msra.mxu0 %v812
      %1881 = vmatpush.msra.mxu0 %v806
      %1882 = vmatmul.f32.gmra.mxu0 %v1645
      %v1883 = vpop.f32.mrf.mxu0
      %v1884 = vadd.f32 %v1864, %v1883
      %1885 = vdwg.mxu0
      %s1886 = smul.u32 2, 3
      %s1887 = smul.addr %s1886, 8
      %s1888 = scalar_lea.vmem [#allocation2], %s1887
      %v1889 = vld [vmem:[%s1888] sm:$0xff]
      %v1890 = vld [vmem:[%s1888 + $0x8] sm:$0xff]
      %v1891 = vld [vmem:[%s1888 + $0x10] sm:$0xff]
      %v1892 = vadd.f32 %v1889, %v1684
      %v1893 = vadd.f32 %v1890, %v1724
      %v1894 = vxor.u32 %v1892, 2147483648
      %v1895 = vxor.u32 %v1893, 2147483648
      %v1896 = vmul.f32 %v1894, 1.442695
      %v1897 = vpow.pop %v1896
      %v1898 = vmul.f32 %v1895, 1.442695
      %v1899 = vpow.pop %v1898
      %v1900 = vadd.f32 %v1897, 1.0
      %v1901 = vadd.f32 %v1899, 1.0
      %v1902 = vrcp.pop %v1900
      %v1903 = vmul.f32 %v1900, %v1902
      %v1904 = vsub.f32 1.0, %v1903
      %v1905 = vmul.f32 %v1902, %v1904
      %v1906 = vadd.f32 %v1902, %v1905
      %vm1907 = vweird.f32 %v1900
      %vm1908 = vweird.f32 %v1902
      %vm1909 = vmor %vm1907, %vm1908
      %v1910 = vsel %vm1909, %v1902, %v1906
      %v1911 = vand.u32 2147483647, %v1900
      %vm1912 = vcmp.eq.f32.partialorder %v1911, 8.507059e+37
      %v1913 = vand.u32 %v1900, 2147483648
      %v1914 = vor.u32 1.1754944e-38, %v1913
      %v1915 = vsel %vm1912, %v1914, %v1910
      %v1916 = vmul.f32 1.0, %v1915
      %v1917 = vrcp.pop %v1901
      %v1918 = vmul.f32 %v1901, %v1917
      %v1919 = vsub.f32 1.0, %v1918
      %v1920 = vmul.f32 %v1917, %v1919
      %v1921 = vadd.f32 %v1917, %v1920
      %vm1922 = vweird.f32 %v1901
      %vm1923 = vweird.f32 %v1917
      %vm1924 = vmor %vm1922, %vm1923
      %v1925 = vsel %vm1924, %v1917, %v1921
      %v1926 = vand.u32 2147483647, %v1901
      %vm1927 = vcmp.eq.f32.partialorder %v1926, 8.507059e+37
      %v1928 = vand.u32 %v1901, 2147483648
      %v1929 = vor.u32 1.1754944e-38, %v1928
      %v1930 = vsel %vm1927, %v1929, %v1925
      %v1931 = vmul.f32 1.0, %v1930
      %v1932 = vmul.f32 %v1916, %v1764
      %v1933 = vadd.f32 %v1891, %v1932
      %v1934 = vtanh.pop %v1933
      %v1935 = vsub.f32 1.0, %v1931
      %v1936 = vmul.f32 %v1935, %v1934
      %v1937 = vmul.f32 %v1931, %v1644
      %v1938 = vadd.f32 %v1936, %v1937
      %s1939 = smul.addr %s1886, 8
      %s1940 = scalar_lea.vmem [#allocation3], %s1939
      %v1941 = vld [vmem:[%s1940] sm:$0xff]
      %v1942 = vld [vmem:[%s1940 + $0x8] sm:$0xff]
      %v1943 = vld [vmem:[%s1940 + $0x10] sm:$0xff]
      %v1944 = vadd.f32 %v1941, %v1804
      %v1945 = vadd.f32 %v1942, %v1844
      %v1946 = vxor.u32 %v1944, 2147483648
      %v1947 = vxor.u32 %v1945, 2147483648
      %v1948 = vmul.f32 %v1946, 1.442695
      %v1949 = vpow.pop %v1948
      %v1950 = vmul.f32 %v1947, 1.442695
      %v1951 = vpow.pop %v1950
      %v1952 = vadd.f32 %v1949, 1.0
      %v1953 = vadd.f32 %v1951, 1.0
      %v1954 = vrcp.pop %v1952
      %v1955 = vmul.f32 %v1952, %v1954
      %v1956 = vsub.f32 1.0, %v1955
      %v1957 = vmul.f32 %v1954, %v1956
      %v1958 = vadd.f32 %v1954, %v1957
      %vm1959 = vweird.f32 %v1952
      %vm1960 = vweird.f32 %v1954
      %vm1961 = vmor %vm1959, %vm1960
      %v1962 = vsel %vm1961, %v1954, %v1958
      %v1963 = vand.u32 2147483647, %v1952
      %vm1964 = vcmp.eq.f32.partialorder %v1963, 8.507059e+37
      %v1965 = vand.u32 %v1952, 2147483648
      %v1966 = vor.u32 1.1754944e-38, %v1965
      %v1967 = vsel %vm1964, %v1966, %v1962
      %v1968 = vmul.f32 1.0, %v1967
      %v1969 = vrcp.pop %v1953
      %v1970 = vmul.f32 %v1953, %v1969
      %v1971 = vsub.f32 1.0, %v1970
      %v1972 = vmul.f32 %v1969, %v1971
      %v1973 = vadd.f32 %v1969, %v1972
      %vm1974 = vweird.f32 %v1953
      %vm1975 = vweird.f32 %v1969
      %vm1976 = vmor %vm1974, %vm1975
      %v1977 = vsel %vm1976, %v1969, %v1973
      %v1978 = vand.u32 2147483647, %v1953
      %vm1979 = vcmp.eq.f32.partialorder %v1978, 8.507059e+37
      %v1980 = vand.u32 %v1953, 2147483648
      %v1981 = vor.u32 1.1754944e-38, %v1980
      %v1982 = vsel %vm1979, %v1981, %v1977
      %v1983 = vmul.f32 1.0, %v1982
      %v1984 = vmul.f32 %v1968, %v1884
      %v1985 = vadd.f32 %v1943, %v1984
      %v1986 = vtanh.pop %v1985
      %v1987 = vsub.f32 1.0, %v1983
      %v1988 = vmul.f32 %v1987, %v1986
      %v1989 = vmul.f32 %v1983, %v1645
      %v1990 = vadd.f32 %v1988, %v1989
      %s1991 = sadd.s32 %s1259, 2
      %p1992 = scmp.lt.s32.totalorder %s1991, 8
      %s1993 = scalar_select %p1992, 1, 0
      %v1994 = vstv %s1993
      %vm1995 = vcmp.eq.s32.totalorder %v1994, 1
      %v1996 = vsel %vm1995, %v1938, %v1644
      %s1997 = sadd.s32 %s1266, 2
      %p1998 = scmp.lt.s32.totalorder %s1997, 8
      %s1999 = scalar_select %p1998, 1, 0
      %v2000 = vstv %s1999
      %vm2001 = vcmp.eq.s32.totalorder %v2000, 1
      %v2002 = vsel %vm2001, %v1990, %v1645
      %2003 = vst [vmem:[#allocation4] sm:$0xff] %v1996
      %2004 = vst [vmem:[#allocation4 + $0x8] sm:$0xff] %v2002
      %s2005 = scalar_lea.vmem %s398, 16
      %2006 = vst [vmem:[%s2005] sm:$0xff] %v1996
      %s2007 = scalar_lea.vmem %s405, 16
      %2008 = vst [vmem:[%s2007] sm:$0xff] %v2002
      %v2009 = vld [vmem:[#allocation4] sm:$0xff]
      %v2010 = vld [vmem:[#allocation4 + $0x8] sm:$0xff]
      %2011 = vmatpush.msra.mxu0 %v795
      %2012 = vmatpush.msra.mxu0 %v789
      %2013 = vmatpush.msra.mxu0 %v783
      %2014 = vmatpush.msra.mxu0 %v777
      %2015 = vmatpush.msra.mxu0 %v771
      %2016 = vmatpush.msra.mxu0 %v765
      %2017 = vmatpush.msra.mxu0 %v759
      %2018 = vmatpush.msra.mxu0 %v753
      %2019 = vmatpush.msra.mxu0 %v747
      %2020 = vmatpush.msra.mxu0 %v741
      %2021 = vmatpush.msra.mxu0 %v735
      %2022 = vmatpush.msra.mxu0 %v729
      %2023 = vmatpush.msra.mxu0 %v723
      %2024 = vmatpush.msra.mxu0 %v717
      %2025 = vmatpush.msra.mxu0 %v711
      %2026 = vmatpush.msra.mxu0 %v705
      %2027 = vmatmul.f32.gmra.mxu0 %v2009
      %v2028 = vpop.f32.mrf.mxu0
      %v2029 = vadd.f32 %v899, %v2028
      %2030 = vdwg.mxu0
      %2031 = vmatpush.msra.mxu0 %v891
      %2032 = vmatpush.msra.mxu0 %v885
      %2033 = vmatpush.msra.mxu0 %v879
      %2034 = vmatpush.msra.mxu0 %v873
      %2035 = vmatpush.msra.mxu0 %v867
      %2036 = vmatpush.msra.mxu0 %v861
      %2037 = vmatpush.msra.mxu0 %v855
      %2038 = vmatpush.msra.mxu0 %v849
      %2039 = vmatpush.msra.mxu0 %v843
      %2040 = vmatpush.msra.mxu0 %v837
      %2041 = vmatpush.msra.mxu0 %v831
      %2042 = vmatpush.msra.mxu0 %v825
      %2043 = vmatpush.msra.mxu0 %v819
      %2044 = vmatpush.msra.mxu0 %v813
      %2045 = vmatpush.msra.mxu0 %v807
      %2046 = vmatpush.msra.mxu0 %v801
      %2047 = vmatmul.f32.gmra.mxu0 %v2010
      %v2048 = vpop.f32.mrf.mxu0
      %v2049 = vadd.f32 %v2029, %v2048
      %2050 = vdwg.mxu0
      %2051 = vmatpush.msra.mxu0 %v796
      %2052 = vmatpush.msra.mxu0 %v790
      %2053 = vmatpush.msra.mxu0 %v784
      %2054 = vmatpush.msra.mxu0 %v778
      %2055 = vmatpush.msra.mxu0 %v772
      %2056 = vmatpush.msra.mxu0 %v766
      %2057 = vmatpush.msra.mxu0 %v760
      %2058 = vmatpush.msra.mxu0 %v754
      %2059 = vmatpush.msra.mxu0 %v748
      %2060 = vmatpush.msra.mxu0 %v742
      %2061 = vmatpush.msra.mxu0 %v736
      %2062 = vmatpush.msra.mxu0 %v730
      %2063 = vmatpush.msra.mxu0 %v724
      %2064 = vmatpush.msra.mxu0 %v718
      %2065 = vmatpush.msra.mxu0 %v712
      %2066 = vmatpush.msra.mxu0 %v706
      %2067 = vmatmul.f32.gmra.mxu0 %v2009
      %v2068 = vpop.f32.mrf.mxu0
      %v2069 = vadd.f32 %v900, %v2068
      %2070 = vdwg.mxu0
      %2071 = vmatpush.msra.mxu0 %v892
      %2072 = vmatpush.msra.mxu0 %v886
      %2073 = vmatpush.msra.mxu0 %v880
      %2074 = vmatpush.msra.mxu0 %v874
      %2075 = vmatpush.msra.mxu0 %v868
      %2076 = vmatpush.msra.mxu0 %v862
      %2077 = vmatpush.msra.mxu0 %v856
      %2078 = vmatpush.msra.mxu0 %v850
      %2079 = vmatpush.msra.mxu0 %v844
      %2080 = vmatpush.msra.mxu0 %v838
      %2081 = vmatpush.msra.mxu0 %v832
      %2082 = vmatpush.msra.mxu0 %v826
      %2083 = vmatpush.msra.mxu0 %v820
      %2084 = vmatpush.msra.mxu0 %v814
      %2085 = vmatpush.msra.mxu0 %v808
      %2086 = vmatpush.msra.mxu0 %v802
      %2087 = vmatmul.f32.gmra.mxu0 %v2010
      %v2088 = vpop.f32.mrf.mxu0
      %v2089 = vadd.f32 %v2069, %v2088
      %2090 = vdwg.mxu0
      %2091 = vmatpush.msra.mxu0 %v797
      %2092 = vmatpush.msra.mxu0 %v791
      %2093 = vmatpush.msra.mxu0 %v785
      %2094 = vmatpush.msra.mxu0 %v779
      %2095 = vmatpush.msra.mxu0 %v773
      %2096 = vmatpush.msra.mxu0 %v767
      %2097 = vmatpush.msra.mxu0 %v761
      %2098 = vmatpush.msra.mxu0 %v755
      %2099 = vmatpush.msra.mxu0 %v749
      %2100 = vmatpush.msra.mxu0 %v743
      %2101 = vmatpush.msra.mxu0 %v737
      %2102 = vmatpush.msra.mxu0 %v731
      %2103 = vmatpush.msra.mxu0 %v725
      %2104 = vmatpush.msra.mxu0 %v719
      %2105 = vmatpush.msra.mxu0 %v713
      %2106 = vmatpush.msra.mxu0 %v707
      %2107 = vmatmul.f32.gmra.mxu0 %v2009
      %v2108 = vpop.f32.mrf.mxu0
      %v2109 = vadd.f32 %v901, %v2108
      %2110 = vdwg.mxu0
      %2111 = vmatpush.msra.mxu0 %v893
      %2112 = vmatpush.msra.mxu0 %v887
      %2113 = vmatpush.msra.mxu0 %v881
      %2114 = vmatpush.msra.mxu0 %v875
      %2115 = vmatpush.msra.mxu0 %v869
      %2116 = vmatpush.msra.mxu0 %v863
      %2117 = vmatpush.msra.mxu0 %v857
      %2118 = vmatpush.msra.mxu0 %v851
      %2119 = vmatpush.msra.mxu0 %v845
      %2120 = vmatpush.msra.mxu0 %v839
      %2121 = vmatpush.msra.mxu0 %v833
      %2122 = vmatpush.msra.mxu0 %v827
      %2123 = vmatpush.msra.mxu0 %v821
      %2124 = vmatpush.msra.mxu0 %v815
      %2125 = vmatpush.msra.mxu0 %v809
      %2126 = vmatpush.msra.mxu0 %v803
      %2127 = vmatmul.f32.gmra.mxu0 %v2010
      %v2128 = vpop.f32.mrf.mxu0
      %v2129 = vadd.f32 %v2109, %v2128
      %2130 = vdwg.mxu0
      %2131 = vmatpush.msra.mxu0 %v798
      %2132 = vmatpush.msra.mxu0 %v792
      %2133 = vmatpush.msra.mxu0 %v786
      %2134 = vmatpush.msra.mxu0 %v780
      %2135 = vmatpush.msra.mxu0 %v774
      %2136 = vmatpush.msra.mxu0 %v768
      %2137 = vmatpush.msra.mxu0 %v762
      %2138 = vmatpush.msra.mxu0 %v756
      %2139 = vmatpush.msra.mxu0 %v750
      %2140 = vmatpush.msra.mxu0 %v744
      %2141 = vmatpush.msra.mxu0 %v738
      %2142 = vmatpush.msra.mxu0 %v732
      %2143 = vmatpush.msra.mxu0 %v726
      %2144 = vmatpush.msra.mxu0 %v720
      %2145 = vmatpush.msra.mxu0 %v714
      %2146 = vmatpush.msra.mxu0 %v708
      %2147 = vmatmul.f32.gmra.mxu0 %v2009
      %v2148 = vpop.f32.mrf.mxu0
      %v2149 = vadd.f32 %v902, %v2148
      %2150 = vdwg.mxu0
      %2151 = vmatpush.msra.mxu0 %v894
      %2152 = vmatpush.msra.mxu0 %v888
      %2153 = vmatpush.msra.mxu0 %v882
      %2154 = vmatpush.msra.mxu0 %v876
      %2155 = vmatpush.msra.mxu0 %v870
      %2156 = vmatpush.msra.mxu0 %v864
      %2157 = vmatpush.msra.mxu0 %v858
      %2158 = vmatpush.msra.mxu0 %v852
      %2159 = vmatpush.msra.mxu0 %v846
      %2160 = vmatpush.msra.mxu0 %v840
      %2161 = vmatpush.msra.mxu0 %v834
      %2162 = vmatpush.msra.mxu0 %v828
      %2163 = vmatpush.msra.mxu0 %v822
      %2164 = vmatpush.msra.mxu0 %v816
      %2165 = vmatpush.msra.mxu0 %v810
      %2166 = vmatpush.msra.mxu0 %v804
      %2167 = vmatmul.f32.gmra.mxu0 %v2010
      %v2168 = vpop.f32.mrf.mxu0
      %v2169 = vadd.f32 %v2149, %v2168
      %2170 = vdwg.mxu0
      %2171 = vmatpush.msra.mxu0 %v799
      %2172 = vmatpush.msra.mxu0 %v793
      %2173 = vmatpush.msra.mxu0 %v787
      %2174 = vmatpush.msra.mxu0 %v781
      %2175 = vmatpush.msra.mxu0 %v775
      %2176 = vmatpush.msra.mxu0 %v769
      %2177 = vmatpush.msra.mxu0 %v763
      %2178 = vmatpush.msra.mxu0 %v757
      %2179 = vmatpush.msra.mxu0 %v751
      %2180 = vmatpush.msra.mxu0 %v745
      %2181 = vmatpush.msra.mxu0 %v739
      %2182 = vmatpush.msra.mxu0 %v733
      %2183 = vmatpush.msra.mxu0 %v727
      %2184 = vmatpush.msra.mxu0 %v721
      %2185 = vmatpush.msra.mxu0 %v715
      %2186 = vmatpush.msra.mxu0 %v709
      %2187 = vmatmul.f32.gmra.mxu0 %v2009
      %v2188 = vpop.f32.mrf.mxu0
      %v2189 = vadd.f32 %v903, %v2188
      %2190 = vdwg.mxu0
      %2191 = vmatpush.msra.mxu0 %v895
      %2192 = vmatpush.msra.mxu0 %v889
      %2193 = vmatpush.msra.mxu0 %v883
      %2194 = vmatpush.msra.mxu0 %v877
      %2195 = vmatpush.msra.mxu0 %v871
      %2196 = vmatpush.msra.mxu0 %v865
      %2197 = vmatpush.msra.mxu0 %v859
      %2198 = vmatpush.msra.mxu0 %v853
      %2199 = vmatpush.msra.mxu0 %v847
      %2200 = vmatpush.msra.mxu0 %v841
      %2201 = vmatpush.msra.mxu0 %v835
      %2202 = vmatpush.msra.mxu0 %v829
      %2203 = vmatpush.msra.mxu0 %v823
      %2204 = vmatpush.msra.mxu0 %v817
      %2205 = vmatpush.msra.mxu0 %v811
      %2206 = vmatpush.msra.mxu0 %v805
      %2207 = vmatmul.f32.gmra.mxu0 %v2010
      %v2208 = vpop.f32.mrf.mxu0
      %v2209 = vadd.f32 %v2189, %v2208
      %2210 = vdwg.mxu0
      %2211 = vmatpush.msra.mxu0 %v800
      %2212 = vmatpush.msra.mxu0 %v794
      %2213 = vmatpush.msra.mxu0 %v788
      %2214 = vmatpush.msra.mxu0 %v782
      %2215 = vmatpush.msra.mxu0 %v776
      %2216 = vmatpush.msra.mxu0 %v770
      %2217 = vmatpush.msra.mxu0 %v764
      %2218 = vmatpush.msra.mxu0 %v758
      %2219 = vmatpush.msra.mxu0 %v752
      %2220 = vmatpush.msra.mxu0 %v746
      %2221 = vmatpush.msra.mxu0 %v740
      %2222 = vmatpush.msra.mxu0 %v734
      %2223 = vmatpush.msra.mxu0 %v728
      %2224 = vmatpush.msra.mxu0 %v722
      %2225 = vmatpush.msra.mxu0 %v716
      %2226 = vmatpush.msra.mxu0 %v710
      %2227 = vmatmul.f32.gmra.mxu0 %v2009
      %v2228 = vpop.f32.mrf.mxu0
      %v2229 = vadd.f32 %v904, %v2228
      %2230 = vdwg.mxu0
      %2231 = vmatpush.msra.mxu0 %v896
      %2232 = vmatpush.msra.mxu0 %v890
      %2233 = vmatpush.msra.mxu0 %v884
      %2234 = vmatpush.msra.mxu0 %v878
      %2235 = vmatpush.msra.mxu0 %v872
      %2236 = vmatpush.msra.mxu0 %v866
      %2237 = vmatpush.msra.mxu0 %v860
      %2238 = vmatpush.msra.mxu0 %v854
      %2239 = vmatpush.msra.mxu0 %v848
      %2240 = vmatpush.msra.mxu0 %v842
      %2241 = vmatpush.msra.mxu0 %v836
      %2242 = vmatpush.msra.mxu0 %v830
      %2243 = vmatpush.msra.mxu0 %v824
      %2244 = vmatpush.msra.mxu0 %v818
      %2245 = vmatpush.msra.mxu0 %v812
      %2246 = vmatpush.msra.mxu0 %v806
      %2247 = vmatmul.f32.gmra.mxu0 %v2010
      %v2248 = vpop.f32.mrf.mxu0
      %v2249 = vadd.f32 %v2229, %v2248
      %2250 = vdwg.mxu0
      %s2251 = smul.addr %s1573, 8
      %s2252 = scalar_lea.vmem [#allocation2], %s2251
      %v2253 = vld [vmem:[%s2252] sm:$0xff]
      %v2254 = vld [vmem:[%s2252 + $0x8] sm:$0xff]
      %v2255 = vld [vmem:[%s2252 + $0x10] sm:$0xff]
      %v2256 = vadd.f32 %v2253, %v2049
      %v2257 = vadd.f32 %v2254, %v2089
      %v2258 = vxor.u32 %v2256, 2147483648
      %v2259 = vxor.u32 %v2257, 2147483648
      %v2260 = vmul.f32 %v2258, 1.442695
      %v2261 = vpow.pop %v2260
      %v2262 = vmul.f32 %v2259, 1.442695
      %v2263 = vpow.pop %v2262
      %v2264 = vadd.f32 %v2261, 1.0
      %v2265 = vadd.f32 %v2263, 1.0
      %v2266 = vrcp.pop %v2264
      %v2267 = vmul.f32 %v2264, %v2266
      %v2268 = vsub.f32 1.0, %v2267
      %v2269 = vmul.f32 %v2266, %v2268
      %v2270 = vadd.f32 %v2266, %v2269
      %vm2271 = vweird.f32 %v2264
      %vm2272 = vweird.f32 %v2266
      %vm2273 = vmor %vm2271, %vm2272
      %v2274 = vsel %vm2273, %v2266, %v2270
      %v2275 = vand.u32 2147483647, %v2264
      %vm2276 = vcmp.eq.f32.partialorder %v2275, 8.507059e+37
      %v2277 = vand.u32 %v2264, 2147483648
      %v2278 = vor.u32 1.1754944e-38, %v2277
      %v2279 = vsel %vm2276, %v2278, %v2274
      %v2280 = vmul.f32 1.0, %v2279
      %v2281 = vrcp.pop %v2265
      %v2282 = vmul.f32 %v2265, %v2281
      %v2283 = vsub.f32 1.0, %v2282
      %v2284 = vmul.f32 %v2281, %v2283
      %v2285 = vadd.f32 %v2281, %v2284
      %vm2286 = vweird.f32 %v2265
      %vm2287 = vweird.f32 %v2281
      %vm2288 = vmor %vm2286, %vm2287
      %v2289 = vsel %vm2288, %v2281, %v2285
      %v2290 = vand.u32 2147483647, %v2265
      %vm2291 = vcmp.eq.f32.partialorder %v2290, 8.507059e+37
      %v2292 = vand.u32 %v2265, 2147483648
      %v2293 = vor.u32 1.1754944e-38, %v2292
      %v2294 = vsel %vm2291, %v2293, %v2289
      %v2295 = vmul.f32 1.0, %v2294
      %v2296 = vmul.f32 %v2280, %v2129
      %v2297 = vadd.f32 %v2255, %v2296
      %v2298 = vtanh.pop %v2297
      %v2299 = vsub.f32 1.0, %v2295
      %v2300 = vmul.f32 %v2299, %v2298
      %v2301 = vmul.f32 %v2295, %v2009
      %v2302 = vadd.f32 %v2300, %v2301
      %s2303 = smul.addr %s1520, 8
      %s2304 = scalar_lea.vmem [#allocation3], %s2303
      %v2305 = vld [vmem:[%s2304] sm:$0xff]
      %v2306 = vld [vmem:[%s2304 + $0x8] sm:$0xff]
      %v2307 = vld [vmem:[%s2304 + $0x10] sm:$0xff]
      %v2308 = vadd.f32 %v2305, %v2169
      %v2309 = vadd.f32 %v2306, %v2209
      %v2310 = vxor.u32 %v2308, 2147483648
      %v2311 = vxor.u32 %v2309, 2147483648
      %v2312 = vmul.f32 %v2310, 1.442695
      %v2313 = vpow.pop %v2312
      %v2314 = vmul.f32 %v2311, 1.442695
      %v2315 = vpow.pop %v2314
      %v2316 = vadd.f32 %v2313, 1.0
      %v2317 = vadd.f32 %v2315, 1.0
      %v2318 = vrcp.pop %v2316
      %v2319 = vmul.f32 %v2316, %v2318
      %v2320 = vsub.f32 1.0, %v2319
      %v2321 = vmul.f32 %v2318, %v2320
      %v2322 = vadd.f32 %v2318, %v2321
      %vm2323 = vweird.f32 %v2316
      %vm2324 = vweird.f32 %v2318
      %vm2325 = vmor %vm2323, %vm2324
      %v2326 = vsel %vm2325, %v2318, %v2322
      %v2327 = vand.u32 2147483647, %v2316
      %vm2328 = vcmp.eq.f32.partialorder %v2327, 8.507059e+37
      %v2329 = vand.u32 %v2316, 2147483648
      %v2330 = vor.u32 1.1754944e-38, %v2329
      %v2331 = vsel %vm2328, %v2330, %v2326
      %v2332 = vmul.f32 1.0, %v2331
      %v2333 = vrcp.pop %v2317
      %v2334 = vmul.f32 %v2317, %v2333
      %v2335 = vsub.f32 1.0, %v2334
      %v2336 = vmul.f32 %v2333, %v2335
      %v2337 = vadd.f32 %v2333, %v2336
      %vm2338 = vweird.f32 %v2317
      %vm2339 = vweird.f32 %v2333
      %vm2340 = vmor %vm2338, %vm2339
      %v2341 = vsel %vm2340, %v2333, %v2337
      %v2342 = vand.u32 2147483647, %v2317
      %vm2343 = vcmp.eq.f32.partialorder %v2342, 8.507059e+37
      %v2344 = vand.u32 %v2317, 2147483648
      %v2345 = vor.u32 1.1754944e-38, %v2344
      %v2346 = vsel %vm2343, %v2345, %v2341
      %v2347 = vmul.f32 1.0, %v2346
      %v2348 = vmul.f32 %v2332, %v2249
      %v2349 = vadd.f32 %v2307, %v2348
      %v2350 = vtanh.pop %v2349
      %v2351 = vsub.f32 1.0, %v2347
      %v2352 = vmul.f32 %v2351, %v2350
      %v2353 = vmul.f32 %v2347, %v2010
      %v2354 = vadd.f32 %v2352, %v2353
      %s2355 = sadd.s32 %s1259, 3
      %p2356 = scmp.lt.s32.totalorder %s2355, 8
      %s2357 = scalar_select %p2356, 1, 0
      %v2358 = vstv %s2357
      %vm2359 = vcmp.eq.s32.totalorder %v2358, 1
      %v2360 = vsel %vm2359, %v2302, %v2009
      %s2361 = sadd.s32 %s1266, 1
      %p2362 = scmp.lt.s32.totalorder %s2361, 8
      %s2363 = scalar_select %p2362, 1, 0
      %v2364 = vstv %s2363
      %vm2365 = vcmp.eq.s32.totalorder %v2364, 1
      %v2366 = vsel %vm2365, %v2354, %v2010
      %2367 = vst [vmem:[#allocation4] sm:$0xff] %v2360
      %2368 = vst [vmem:[#allocation4 + $0x8] sm:$0xff] %v2366
      %s2369 = scalar_lea.vmem %s398, 24
      %2370 = vst [vmem:[%s2369] sm:$0xff] %v2360
      %s2371 = scalar_lea.vmem %s405, 8
      %2372 = vst [vmem:[%s2371] sm:$0xff] %v2366
      %v2373 = vld [vmem:[#allocation4] sm:$0xff]
      %v2374 = vld [vmem:[#allocation4 + $0x8] sm:$0xff]
      %2375 = vmatpush.msra.mxu0 %v795
      %2376 = vmatpush.msra.mxu0 %v789
      %2377 = vmatpush.msra.mxu0 %v783
      %2378 = vmatpush.msra.mxu0 %v777
      %2379 = vmatpush.msra.mxu0 %v771
      %2380 = vmatpush.msra.mxu0 %v765
      %2381 = vmatpush.msra.mxu0 %v759
      %2382 = vmatpush.msra.mxu0 %v753
      %2383 = vmatpush.msra.mxu0 %v747
      %2384 = vmatpush.msra.mxu0 %v741
      %2385 = vmatpush.msra.mxu0 %v735
      %2386 = vmatpush.msra.mxu0 %v729
      %2387 = vmatpush.msra.mxu0 %v723
      %2388 = vmatpush.msra.mxu0 %v717
      %2389 = vmatpush.msra.mxu0 %v711
      %2390 = vmatpush.msra.mxu0 %v705
      %2391 = vmatmul.f32.gmra.mxu0 %v2373
      %v2392 = vpop.f32.mrf.mxu0
      %v2393 = vadd.f32 %v899, %v2392
      %2394 = vdwg.mxu0
      %2395 = vmatpush.msra.mxu0 %v891
      %2396 = vmatpush.msra.mxu0 %v885
      %2397 = vmatpush.msra.mxu0 %v879
      %2398 = vmatpush.msra.mxu0 %v873
      %2399 = vmatpush.msra.mxu0 %v867
      %2400 = vmatpush.msra.mxu0 %v861
      %2401 = vmatpush.msra.mxu0 %v855
      %2402 = vmatpush.msra.mxu0 %v849
      %2403 = vmatpush.msra.mxu0 %v843
      %2404 = vmatpush.msra.mxu0 %v837
      %2405 = vmatpush.msra.mxu0 %v831
      %2406 = vmatpush.msra.mxu0 %v825
      %2407 = vmatpush.msra.mxu0 %v819
      %2408 = vmatpush.msra.mxu0 %v813
      %2409 = vmatpush.msra.mxu0 %v807
      %2410 = vmatpush.msra.mxu0 %v801
      %2411 = vmatmul.f32.gmra.mxu0 %v2374
      %v2412 = vpop.f32.mrf.mxu0
      %v2413 = vadd.f32 %v2393, %v2412
      %2414 = vdwg.mxu0
      %2415 = vmatpush.msra.mxu0 %v796
      %2416 = vmatpush.msra.mxu0 %v790
      %2417 = vmatpush.msra.mxu0 %v784
      %2418 = vmatpush.msra.mxu0 %v778
      %2419 = vmatpush.msra.mxu0 %v772
      %2420 = vmatpush.msra.mxu0 %v766
      %2421 = vmatpush.msra.mxu0 %v760
      %2422 = vmatpush.msra.mxu0 %v754
      %2423 = vmatpush.msra.mxu0 %v748
      %2424 = vmatpush.msra.mxu0 %v742
      %2425 = vmatpush.msra.mxu0 %v736
      %2426 = vmatpush.msra.mxu0 %v730
      %2427 = vmatpush.msra.mxu0 %v724
      %2428 = vmatpush.msra.mxu0 %v718
      %2429 = vmatpush.msra.mxu0 %v712
      %2430 = vmatpush.msra.mxu0 %v706
      %2431 = vmatmul.f32.gmra.mxu0 %v2373
      %v2432 = vpop.f32.mrf.mxu0
      %v2433 = vadd.f32 %v900, %v2432
      %2434 = vdwg.mxu0
      %2435 = vmatpush.msra.mxu0 %v892
      %2436 = vmatpush.msra.mxu0 %v886
      %2437 = vmatpush.msra.mxu0 %v880
      %2438 = vmatpush.msra.mxu0 %v874
      %2439 = vmatpush.msra.mxu0 %v868
      %2440 = vmatpush.msra.mxu0 %v862
      %2441 = vmatpush.msra.mxu0 %v856
      %2442 = vmatpush.msra.mxu0 %v850
      %2443 = vmatpush.msra.mxu0 %v844
      %2444 = vmatpush.msra.mxu0 %v838
      %2445 = vmatpush.msra.mxu0 %v832
      %2446 = vmatpush.msra.mxu0 %v826
      %2447 = vmatpush.msra.mxu0 %v820
      %2448 = vmatpush.msra.mxu0 %v814
      %2449 = vmatpush.msra.mxu0 %v808
      %2450 = vmatpush.msra.mxu0 %v802
      %2451 = vmatmul.f32.gmra.mxu0 %v2374
      %v2452 = vpop.f32.mrf.mxu0
      %v2453 = vadd.f32 %v2433, %v2452
      %2454 = vdwg.mxu0
      %2455 = vmatpush.msra.mxu0 %v797
      %2456 = vmatpush.msra.mxu0 %v791
      %2457 = vmatpush.msra.mxu0 %v785
      %2458 = vmatpush.msra.mxu0 %v779
      %2459 = vmatpush.msra.mxu0 %v773
      %2460 = vmatpush.msra.mxu0 %v767
      %2461 = vmatpush.msra.mxu0 %v761
      %2462 = vmatpush.msra.mxu0 %v755
      %2463 = vmatpush.msra.mxu0 %v749
      %2464 = vmatpush.msra.mxu0 %v743
      %2465 = vmatpush.msra.mxu0 %v737
      %2466 = vmatpush.msra.mxu0 %v731
      %2467 = vmatpush.msra.mxu0 %v725
      %2468 = vmatpush.msra.mxu0 %v719
      %2469 = vmatpush.msra.mxu0 %v713
      %2470 = vmatpush.msra.mxu0 %v707
      %2471 = vmatmul.f32.gmra.mxu0 %v2373
      %v2472 = vpop.f32.mrf.mxu0
      %v2473 = vadd.f32 %v901, %v2472
      %2474 = vdwg.mxu0
      %2475 = vmatpush.msra.mxu0 %v893
      %2476 = vmatpush.msra.mxu0 %v887
      %2477 = vmatpush.msra.mxu0 %v881
      %2478 = vmatpush.msra.mxu0 %v875
      %2479 = vmatpush.msra.mxu0 %v869
      %2480 = vmatpush.msra.mxu0 %v863
      %2481 = vmatpush.msra.mxu0 %v857
      %2482 = vmatpush.msra.mxu0 %v851
      %2483 = vmatpush.msra.mxu0 %v845
      %2484 = vmatpush.msra.mxu0 %v839
      %2485 = vmatpush.msra.mxu0 %v833
      %2486 = vmatpush.msra.mxu0 %v827
      %2487 = vmatpush.msra.mxu0 %v821
      %2488 = vmatpush.msra.mxu0 %v815
      %2489 = vmatpush.msra.mxu0 %v809
      %2490 = vmatpush.msra.mxu0 %v803
      %2491 = vmatmul.f32.gmra.mxu0 %v2374
      %v2492 = vpop.f32.mrf.mxu0
      %v2493 = vadd.f32 %v2473, %v2492
      %2494 = vdwg.mxu0
      %2495 = vmatpush.msra.mxu0 %v798
      %2496 = vmatpush.msra.mxu0 %v792
      %2497 = vmatpush.msra.mxu0 %v786
      %2498 = vmatpush.msra.mxu0 %v780
      %2499 = vmatpush.msra.mxu0 %v774
      %2500 = vmatpush.msra.mxu0 %v768
      %2501 = vmatpush.msra.mxu0 %v762
      %2502 = vmatpush.msra.mxu0 %v756
      %2503 = vmatpush.msra.mxu0 %v750
      %2504 = vmatpush.msra.mxu0 %v744
      %2505 = vmatpush.msra.mxu0 %v738
      %2506 = vmatpush.msra.mxu0 %v732
      %2507 = vmatpush.msra.mxu0 %v726
      %2508 = vmatpush.msra.mxu0 %v720
      %2509 = vmatpush.msra.mxu0 %v714
      %2510 = vmatpush.msra.mxu0 %v708
      %2511 = vmatmul.f32.gmra.mxu0 %v2373
      %v2512 = vpop.f32.mrf.mxu0
      %v2513 = vadd.f32 %v902, %v2512
      %2514 = vdwg.mxu0
      %2515 = vmatpush.msra.mxu0 %v894
      %2516 = vmatpush.msra.mxu0 %v888
      %2517 = vmatpush.msra.mxu0 %v882
      %2518 = vmatpush.msra.mxu0 %v876
      %2519 = vmatpush.msra.mxu0 %v870
      %2520 = vmatpush.msra.mxu0 %v864
      %2521 = vmatpush.msra.mxu0 %v858
      %2522 = vmatpush.msra.mxu0 %v852
      %2523 = vmatpush.msra.mxu0 %v846
      %2524 = vmatpush.msra.mxu0 %v840
      %2525 = vmatpush.msra.mxu0 %v834
      %2526 = vmatpush.msra.mxu0 %v828
      %2527 = vmatpush.msra.mxu0 %v822
      %2528 = vmatpush.msra.mxu0 %v816
      %2529 = vmatpush.msra.mxu0 %v810
      %2530 = vmatpush.msra.mxu0 %v804
      %2531 = vmatmul.f32.gmra.mxu0 %v2374
      %v2532 = vpop.f32.mrf.mxu0
      %v2533 = vadd.f32 %v2513, %v2532
      %2534 = vdwg.mxu0
      %2535 = vmatpush.msra.mxu0 %v799
      %2536 = vmatpush.msra.mxu0 %v793
      %2537 = vmatpush.msra.mxu0 %v787
      %2538 = vmatpush.msra.mxu0 %v781
      %2539 = vmatpush.msra.mxu0 %v775
      %2540 = vmatpush.msra.mxu0 %v769
      %2541 = vmatpush.msra.mxu0 %v763
      %2542 = vmatpush.msra.mxu0 %v757
      %2543 = vmatpush.msra.mxu0 %v751
      %2544 = vmatpush.msra.mxu0 %v745
      %2545 = vmatpush.msra.mxu0 %v739
      %2546 = vmatpush.msra.mxu0 %v733
      %2547 = vmatpush.msra.mxu0 %v727
      %2548 = vmatpush.msra.mxu0 %v721
      %2549 = vmatpush.msra.mxu0 %v715
      %2550 = vmatpush.msra.mxu0 %v709
      %2551 = vmatmul.f32.gmra.mxu0 %v2373
      %v2552 = vpop.f32.mrf.mxu0
      %v2553 = vadd.f32 %v903, %v2552
      %2554 = vdwg.mxu0
      %2555 = vmatpush.msra.mxu0 %v895
      %2556 = vmatpush.msra.mxu0 %v889
      %2557 = vmatpush.msra.mxu0 %v883
      %2558 = vmatpush.msra.mxu0 %v877
      %2559 = vmatpush.msra.mxu0 %v871
      %2560 = vmatpush.msra.mxu0 %v865
      %2561 = vmatpush.msra.mxu0 %v859
      %2562 = vmatpush.msra.mxu0 %v853
      %2563 = vmatpush.msra.mxu0 %v847
      %2564 = vmatpush.msra.mxu0 %v841
      %2565 = vmatpush.msra.mxu0 %v835
      %2566 = vmatpush.msra.mxu0 %v829
      %2567 = vmatpush.msra.mxu0 %v823
      %2568 = vmatpush.msra.mxu0 %v817
      %2569 = vmatpush.msra.mxu0 %v811
      %2570 = vmatpush.msra.mxu0 %v805
      %2571 = vmatmul.f32.gmra.mxu0 %v2374
      %v2572 = vpop.f32.mrf.mxu0
      %v2573 = vadd.f32 %v2553, %v2572
      %2574 = vdwg.mxu0
      %2575 = vmatpush.msra.mxu0 %v800
      %2576 = vmatpush.msra.mxu0 %v794
      %2577 = vmatpush.msra.mxu0 %v788
      %2578 = vmatpush.msra.mxu0 %v782
      %2579 = vmatpush.msra.mxu0 %v776
      %2580 = vmatpush.msra.mxu0 %v770
      %2581 = vmatpush.msra.mxu0 %v764
      %2582 = vmatpush.msra.mxu0 %v758
      %2583 = vmatpush.msra.mxu0 %v752
      %2584 = vmatpush.msra.mxu0 %v746
      %2585 = vmatpush.msra.mxu0 %v740
      %2586 = vmatpush.msra.mxu0 %v734
      %2587 = vmatpush.msra.mxu0 %v728
      %2588 = vmatpush.msra.mxu0 %v722
      %2589 = vmatpush.msra.mxu0 %v716
      %2590 = vmatpush.msra.mxu0 %v710
      %2591 = vmatmul.f32.gmra.mxu0 %v2373
      %v2592 = vpop.f32.mrf.mxu0
      %v2593 = vadd.f32 %v904, %v2592
      %2594 = vdwg.mxu0
      %2595 = vmatpush.msra.mxu0 %v896
      %2596 = vmatpush.msra.mxu0 %v890
      %2597 = vmatpush.msra.mxu0 %v884
      %2598 = vmatpush.msra.mxu0 %v878
      %2599 = vmatpush.msra.mxu0 %v872
      %2600 = vmatpush.msra.mxu0 %v866
      %2601 = vmatpush.msra.mxu0 %v860
      %2602 = vmatpush.msra.mxu0 %v854
      %2603 = vmatpush.msra.mxu0 %v848
      %2604 = vmatpush.msra.mxu0 %v842
      %2605 = vmatpush.msra.mxu0 %v836
      %2606 = vmatpush.msra.mxu0 %v830
      %2607 = vmatpush.msra.mxu0 %v824
      %2608 = vmatpush.msra.mxu0 %v818
      %2609 = vmatpush.msra.mxu0 %v812
      %2610 = vmatpush.msra.mxu0 %v806
      %2611 = vmatmul.f32.gmra.mxu0 %v2374
      %v2612 = vpop.f32.mrf.mxu0
      %v2613 = vadd.f32 %v2593, %v2612
      %2614 = vdwg.mxu0
      %s2615 = smul.addr %s1206, 8
      %s2616 = scalar_lea.vmem [#allocation2], %s2615
      %v2617 = vld [vmem:[%s2616] sm:$0xff]
      %v2618 = vld [vmem:[%s2616 + $0x8] sm:$0xff]
      %v2619 = vld [vmem:[%s2616 + $0x10] sm:$0xff]
      %v2620 = vadd.f32 %v2617, %v2413
      %v2621 = vadd.f32 %v2618, %v2453
      %v2622 = vxor.u32 %v2620, 2147483648
      %v2623 = vxor.u32 %v2621, 2147483648
      %v2624 = vmul.f32 %v2622, 1.442695
      %v2625 = vpow.pop %v2624
      %v2626 = vmul.f32 %v2623, 1.442695
      %v2627 = vpow.pop %v2626
      %v2628 = vadd.f32 %v2625, 1.0
      %v2629 = vadd.f32 %v2627, 1.0
      %v2630 = vrcp.pop %v2628
      %v2631 = vmul.f32 %v2628, %v2630
      %v2632 = vsub.f32 1.0, %v2631
      %v2633 = vmul.f32 %v2630, %v2632
      %v2634 = vadd.f32 %v2630, %v2633
      %vm2635 = vweird.f32 %v2628
      %vm2636 = vweird.f32 %v2630
      %vm2637 = vmor %vm2635, %vm2636
      %v2638 = vsel %vm2637, %v2630, %v2634
      %v2639 = vand.u32 2147483647, %v2628
      %vm2640 = vcmp.eq.f32.partialorder %v2639, 8.507059e+37
      %v2641 = vand.u32 %v2628, 2147483648
      %v2642 = vor.u32 1.1754944e-38, %v2641
      %v2643 = vsel %vm2640, %v2642, %v2638
      %v2644 = vmul.f32 1.0, %v2643
      %v2645 = vrcp.pop %v2629
      %v2646 = vmul.f32 %v2629, %v2645
      %v2647 = vsub.f32 1.0, %v2646
      %v2648 = vmul.f32 %v2645, %v2647
      %v2649 = vadd.f32 %v2645, %v2648
      %vm2650 = vweird.f32 %v2629
      %vm2651 = vweird.f32 %v2645
      %vm2652 = vmor %vm2650, %vm2651
      %v2653 = vsel %vm2652, %v2645, %v2649
      %v2654 = vand.u32 2147483647, %v2629
      %vm2655 = vcmp.eq.f32.partialorder %v2654, 8.507059e+37
      %v2656 = vand.u32 %v2629, 2147483648
      %v2657 = vor.u32 1.1754944e-38, %v2656
      %v2658 = vsel %vm2655, %v2657, %v2653
      %v2659 = vmul.f32 1.0, %v2658
      %v2660 = vmul.f32 %v2644, %v2493
      %v2661 = vadd.f32 %v2619, %v2660
      %v2662 = vtanh.pop %v2661
      %v2663 = vsub.f32 1.0, %v2659
      %v2664 = vmul.f32 %v2663, %v2662
      %v2665 = vmul.f32 %v2659, %v2373
      %v2666 = vadd.f32 %v2664, %v2665
      %s2667 = smul.addr %s1153, 8
      %s2668 = scalar_lea.vmem [#allocation3], %s2667
      %v2669 = vld [vmem:[%s2668] sm:$0xff]
      %v2670 = vld [vmem:[%s2668 + $0x8] sm:$0xff]
      %v2671 = vld [vmem:[%s2668 + $0x10] sm:$0xff]
      %v2672 = vadd.f32 %v2669, %v2533
      %v2673 = vadd.f32 %v2670, %v2573
      %v2674 = vxor.u32 %v2672, 2147483648
      %v2675 = vxor.u32 %v2673, 2147483648
      %v2676 = vmul.f32 %v2674, 1.442695
      %v2677 = vpow.pop %v2676
      %v2678 = vmul.f32 %v2675, 1.442695
      %v2679 = vpow.pop %v2678
      %v2680 = vadd.f32 %v2677, 1.0
      %v2681 = vadd.f32 %v2679, 1.0
      %v2682 = vrcp.pop %v2680
      %v2683 = vmul.f32 %v2680, %v2682
      %v2684 = vsub.f32 1.0, %v2683
      %v2685 = vmul.f32 %v2682, %v2684
      %v2686 = vadd.f32 %v2682, %v2685
      %vm2687 = vweird.f32 %v2680
      %vm2688 = vweird.f32 %v2682
      %vm2689 = vmor %vm2687, %vm2688
      %v2690 = vsel %vm2689, %v2682, %v2686
      %v2691 = vand.u32 2147483647, %v2680
      %vm2692 = vcmp.eq.f32.partialorder %v2691, 8.507059e+37
      %v2693 = vand.u32 %v2680, 2147483648
      %v2694 = vor.u32 1.1754944e-38, %v2693
      %v2695 = vsel %vm2692, %v2694, %v2690
      %v2696 = vmul.f32 1.0, %v2695
      %v2697 = vrcp.pop %v2681
      %v2698 = vmul.f32 %v2681, %v2697
      %v2699 = vsub.f32 1.0, %v2698
      %v2700 = vmul.f32 %v2697, %v2699
      %v2701 = vadd.f32 %v2697, %v2700
      %vm2702 = vweird.f32 %v2681
      %vm2703 = vweird.f32 %v2697
      %vm2704 = vmor %vm2702, %vm2703
      %v2705 = vsel %vm2704, %v2697, %v2701
      %v2706 = vand.u32 2147483647, %v2681
      %vm2707 = vcmp.eq.f32.partialorder %v2706, 8.507059e+37
      %v2708 = vand.u32 %v2681, 2147483648
      %v2709 = vor.u32 1.1754944e-38, %v2708
      %v2710 = vsel %vm2707, %v2709, %v2705
      %v2711 = vmul.f32 1.0, %v2710
      %v2712 = vmul.f32 %v2696, %v2613
      %v2713 = vadd.f32 %v2671, %v2712
      %v2714 = vtanh.pop %v2713
      %v2715 = vsub.f32 1.0, %v2711
      %v2716 = vmul.f32 %v2715, %v2714
      %v2717 = vmul.f32 %v2711, %v2374
      %v2718 = vadd.f32 %v2716, %v2717
      %s2719 = sadd.s32 %s1259, 4
      %p2720 = scmp.lt.s32.totalorder %s2719, 8
      %s2721 = scalar_select %p2720, 1, 0
      %v2722 = vstv %s2721
      %vm2723 = vcmp.eq.s32.totalorder %v2722, 1
      %v2724 = vsel %vm2723, %v2666, %v2373
      %p2725 = scmp.lt.s32.totalorder %s1266, 8
      %s2726 = scalar_select %p2725, 1, 0
      %v2727 = vstv %s2726
      %vm2728 = vcmp.eq.s32.totalorder %v2727, 1
      %v2729 = vsel %vm2728, %v2718, %v2374
      %2730 = vst [vmem:[#allocation4] sm:$0xff] %v2724
      %2731 = vst [vmem:[#allocation4 + $0x8] sm:$0xff] %v2729
      %s2732 = scalar_lea.vmem %s398, 32
      %2733 = vst [vmem:[%s2732] sm:$0xff] %v2724
      %2734 = vst [vmem:[%s405] sm:$0xff] %v2729
      %p2735 = scmp.eq.s32.totalorder %s22, 1
      // Predicated region
      $region57: #{encoder_forward.2} parent=51 // pred_check
        %p2736 = pneg %p2735
      $region58: #{encoder_forward.2} parent=51 // pred_check_branch
        %2738 = sbr.rel (%p2736) target = $region60
      $region59: #{encoder_forward.2} parent=51 // pred_region
        %v2739 = vld [vmem:[#allocation4] sm:$0xff]
        %2740 = vst [vmem:[%s10] sm:$0xff] %v2739
        %v2741 = vld [vmem:[#allocation4 + $0x8] sm:$0xff]
        %s2742 = scalar_lea.vmem %s10, 8
        %2743 = vst [vmem:[%s2742] sm:$0xff] %v2741
      $region60: #{encoder_forward.2} parent=51 // pred_fallthru
        _
      %s2744 = smul.u32 5, %s22
      %p2745 = scmp.lt.s32.totalorder %s2744, 9
      %s2746 = scalar_select %p2745, %s2744, 9
      %s2747 = smul.addr %s2746, 8
      %s2748 = scalar_lea.vmem %s8, %s2747
      %s2749 = ssub.s32 1, %s22
      %s2750 = smul.u32 5, %s2749
      %p2751 = scmp.lt.s32.totalorder %s2750, 9
      %s2752 = scalar_select %p2751, %s2750, 9
      %s2753 = smul.addr %s2752, 8
      %s2754 = scalar_lea.vmem %s9, %s2753
      // Predicated region
      $region61: #{encoder_forward.2} parent=51 // pred_check
        %p2755 = pneg %p220
      $region62: #{encoder_forward.2} parent=51 // pred_check_branch
        %2757 = sbr.rel (%p2755) target = $region64
      $region63: #{encoder_forward.2} parent=51 // pred_region
        %s2758 = smul.u32 5, %s22
      $region64: #{encoder_forward.2} parent=51 // pred_fallthru
        _
      // Predicated region
      $region65: #{encoder_forward.2} parent=51 // pred_check
        %p2759 = pneg %p248
      $region66: #{encoder_forward.2} parent=51 // pred_check_branch
        %2761 = sbr.rel (%p2759) target = $region68
      $region67: #{encoder_forward.2} parent=51 // pred_region
        %s2762 = ssub.s32 1, %s22
        %s2763 = smul.u32 5, %s2762
      $region68: #{encoder_forward.2} parent=51 // pred_fallthru
        _
      // Predicated region
      $region69: #{encoder_forward.2} parent=51 // pred_check
        %p2764 = pneg %p269
      $region70: #{encoder_forward.2} parent=51 // pred_check_branch
        %2766 = sbr.rel (%p2764) target = $region72
      $region71: #{encoder_forward.2} parent=51 // pred_region
        _
      $region72: #{encoder_forward.2} parent=51 // pred_fallthru
        _
      // Predicated region
      $region73: #{encoder_forward.2} parent=51 // pred_check
        %p2767 = pneg %p269
      $region74: #{encoder_forward.2} parent=51 // pred_check_branch
        %2769 = sbr.rel (%p2767) target = $region76
      $region75: #{encoder_forward.2} parent=51 // pred_region
        _
      $region76: #{encoder_forward.2} parent=51 // pred_fallthru
        _
    $region52: #{encoder_forward.2} parent=5 // pred_fallthru
      _
    %p2770 = scmp.le.s32.totalorder 2, %s17
    // Predicated region
    $region77: #{encoder_forward.2} parent=5 // pred_check
      %p2771 = pneg %p2770
    $region78: #{encoder_forward.2} parent=5 // pred_check_branch
      %2773 = sbr.rel (%p2771) target = $region80
    $region79: #{encoder_forward.2} parent=5 // pred_region
      %s2774 = ssub.s32 %s17, 2
      // Predicated region
      $region81: #{encoder_forward.2} parent=79 // pred_check
        %p2775 = pneg %p226
      $region82: #{encoder_forward.2} parent=79 // pred_check_branch
        %2777 = sbr.rel (%p2775) target = $region84
      $region83: #{encoder_forward.2} parent=79 // pred_region
        %s2778 = smul.u32 5, %s23
        %p2779 = scmp.lt.s32.totalorder %s2778, 9
        %s2780 = scalar_select %p2779, %s2778, 9
        %s2781 = smul.addr %s2780, 8
        %s2782 = scalar_lea.vmem %s8, %s2781
      $region84: #{encoder_forward.2} parent=79 // pred_fallthru
        _
      // Predicated region
      $region85: #{encoder_forward.2} parent=79 // pred_check
        %p2783 = pneg %p254
      $region86: #{encoder_forward.2} parent=79 // pred_check_branch
        %2785 = sbr.rel (%p2783) target = $region88
      $region87: #{encoder_forward.2} parent=79 // pred_region
        %s2786 = ssub.s32 1, %s23
        %s2787 = smul.u32 5, %s2786
        %p2788 = scmp.lt.s32.totalorder %s2787, 9
        %s2789 = scalar_select %p2788, %s2787, 9
        %s2790 = smul.addr %s2789, 8
        %s2791 = scalar_lea.vmem %s9, %s2790
      $region88: #{encoder_forward.2} parent=79 // pred_fallthru
        _
    $region80: #{encoder_forward.2} parent=5 // pred_fallthru
      _
  $region6: #{encoder_forward.2} parent=0 // loop_footer
    %s21 = sadd.s32 1, %s17
  $region7: #{encoder_forward.2} parent=0 // loop_footer_branch
    %16 = sbr.rel target = $region3
  $region8: #{encoder_forward.2} parent=0 // loop_exit
    _

// kernel: encoder_forward.3
$region0: #{encoder_forward.3}
  #allocation0 [shape = 'u32[]', space=smem, size = 0x4, offset = 0x4, fixed_abs, tag = 'smem constant byte address 0x4 - core index']
  #allocation1 [shape = 'u32[72,128]{1,0:T(1,128)}', space=vmem, size = 0x9000, scoped, tag = 'internal scratch']
  #allocation2 [shape = 'f32[40,384]{1,0:T(8,128)}', space=vmem, size = 0xf000, scoped, tag = 'scratch operand']
  #allocation3 [shape = 'f32[40,384]{1,0:T(8,128)}', space=vmem, size = 0xf000, scoped, tag = 'scratch operand']
  #allocation4 [shape = 'f32[8,256]{1,0:T(8,128)}', space=vmem, size = 0x2000, scoped, tag = 'scratch operand']
  %s0 = inlined_call_operand.vmem [shape: f32[80,128], index: 0, kind: input, shape index: {}, may-alias: {0,1}]
  %s1 = inlined_call_operand.vmem [shape: f32[80,128], index: 1, kind: input, shape index: {}, may-alias: {0,1}]
  %s2 = inlined_call_operand.vmem [shape: f32[128,384], index: 2, kind: input, shape index: {}]
  %s3 = inlined_call_operand.vmem [shape: f32[128,384], index: 3, kind: input, shape index: {}]
  %s4 = inlined_call_operand.vmem [shape: f32[80,128], index: 4, kind: input, shape index: {}, may-alias: {4,5}]
  %s5 = inlined_call_operand.vmem [shape: f32[80,128], index: 5, kind: input, shape index: {}, may-alias: {4,5}]
  %s6 = inlined_call_operand.vmem [shape: f32[128,384], index: 6, kind: input, shape index: {}]
  %s7 = inlined_call_operand.vmem [shape: f32[128,384], index: 7, kind: input, shape index: {}]
  %s8 = inlined_call_operand.vmem [shape: f32[1,384], index: 8, kind: input, shape index: {}]
  %s9 = inlined_call_operand.vmem [shape: f32[1,384], index: 9, kind: input, shape index: {}]
  %s10 = inlined_call_operand.vmem [shape: f32[256,768], index: 10, kind: input, shape index: {}]
  %s11 = inlined_call_operand.vmem [shape: f32[1,768], index: 11, kind: input, shape index: {}]
  %s12 = inlined_call_operand.vmem [shape: f32[80,128], index: 12, kind: output, shape index: {0}]
  %s13 = inlined_call_operand.vmem [shape: f32[80,128], index: 13, kind: output, shape index: {1}]
  %s14 = inlined_call_operand.vmem [shape: f32[2,8,128], index: 14, kind: output, shape index: {2}]
  %15 = xla_tuple %s12, %s13, %s14
  %s16 = sld [smem:[#allocation0]]
  $region105: #{encoder_forward.3} parent=0
    _
  %s18 = ssub.s32 1, %s16
  %s19 = scalar_select 0, %s18, %s16
  loop: start=0, step=1, limit=4
  $region2: #{encoder_forward.3} parent=0 // loop_pre_header
    _
  $region3: #{encoder_forward.3} parent=0 // loop_header
    %s21 = sphi 0, %s25
    %p22 = scmp.ge.s32.totalorder %s21, 4
    %s31 = sphi 0, %s33
    %s34 = sphi 0, %s31
    %s35 = sphi 0, %s34
    %s51 = sphi 0, %s35
    %s59 = sphi 0, %s61
    %s62 = sphi 0, %s59
    %s63 = sphi 0, %s62
    %s79 = sphi 0, %s63
    %s83 = sphi 0, %s83
    %s85 = sphi 0, %s83
    %s86 = sphi 0, %s85
    %s100 = sphi 0, %s86
    %s104 = sphi 0, %s104
    %s106 = sphi 0, %s104
    %s107 = sphi 0, %s106
    %s121 = sphi 0, %s107
    %s127 = sphi 0, %s129
    %s130 = sphi 0, %s127
    %s131 = sphi 0, %s130
    %s147 = sphi 0, %s131
    %s155 = sphi 0, %s157
    %s158 = sphi 0, %s155
    %s159 = sphi 0, %s158
    %s175 = sphi 0, %s159
    %s179 = sphi 0, %s179
    %s181 = sphi 0, %s179
    %s182 = sphi 0, %s181
    %s196 = sphi 0, %s182
    %s200 = sphi 0, %s200
    %s202 = sphi 0, %s200
    %s203 = sphi 0, %s202
    %s217 = sphi 0, %s203
    %s221 = sphi 0, %s221
    %s223 = sphi 0, %s221
    %s224 = sphi 0, %s223
    %s238 = sphi 0, %s224
    %s242 = sphi 0, %s242
    %s244 = sphi 0, %s242
    %s245 = sphi 0, %s244
    %s259 = sphi 0, %s245
    %s263 = sphi 0, %s263
    %s265 = sphi 0, %s263
    %s266 = sphi 0, %s265
    %s280 = sphi 0, %s266
    %s284 = sphi 0, %s284
    %s286 = sphi 0, %s284
    %s287 = sphi 0, %s286
    %s301 = sphi 0, %s287
    %s307 = sphi 0, %s309
    %s310 = sphi 0, %s307
    %s311 = sphi 0, %s310
    %s327 = sphi 0, %s311
    %s335 = sphi 0, %s337
    %s338 = sphi 0, %s335
    %s339 = sphi 0, %s338
    %s355 = sphi 0, %s339
    %s359 = sphi 0, %s359
    %s361 = sphi 0, %s359
    %s362 = sphi 0, %s361
    %s376 = sphi 0, %s362
  $region4: #{encoder_forward.3} parent=0 // loop_header_branch
    %24 = sbr.rel (%p22) target = $region8
  $region5: #{encoder_forward.3} parent=0 // loop_body
    %s26 = ssub.s32 %s21, 1
    %s27 = ssub.s32 %s21, 2
    %s28 = sadd.s32 %s21, 1
    %s29 = ssub.s32 %s21, %s28
    %p30 = scmp.eq.s32.totalorder %s29, 0
    %s32 = sadd.s32 %s31, 1
    %s33 = scalar_select %p30, %s31, %s32
    %p36 = pneg %p30
    %p37 = scmp.eq.s32.totalorder %s21, 1
    %p38 = por %p36, %p37
    %p39 = scmp.ne.s32.totalorder %s31, %s34
    %p40 = scmp.eq.s32.totalorder %s21, 0
    %p41 = por %p39, %p40
    %p42 = scmp.ne.s32.totalorder %s31, %s34
    %p43 = scmp.eq.s32.totalorder %s26, 1
    %p44 = por %p42, %p43
    %p45 = scmp.ne.s32.totalorder %s34, %s35
    %p46 = scmp.eq.s32.totalorder %s26, 0
    %p47 = por %p45, %p46
    %p48 = scmp.ne.s32.totalorder %s34, %s35
    %p49 = scmp.eq.s32.totalorder %s27, 1
    %p50 = por %p48, %p49
    %p52 = scmp.ne.s32.totalorder %s35, %s51
    %p53 = scmp.eq.s32.totalorder %s27, 0
    %p54 = por %p52, %p53
    %s55 = ssub.s32 1, %s21
    %s56 = ssub.s32 1, %s28
    %s57 = ssub.s32 %s55, %s56
    %p58 = scmp.eq.s32.totalorder %s57, 0
    %s60 = sadd.s32 %s59, 1
    %s61 = scalar_select %p58, %s59, %s60
    %p64 = pneg %p58
    %p65 = scmp.eq.s32.totalorder %s21, 1
    %p66 = por %p64, %p65
    %p67 = scmp.ne.s32.totalorder %s59, %s62
    %p68 = scmp.eq.s32.totalorder %s21, 0
    %p69 = por %p67, %p68
    %p70 = scmp.ne.s32.totalorder %s59, %s62
    %p71 = scmp.eq.s32.totalorder %s26, 1
    %p72 = por %p70, %p71
    %p73 = scmp.ne.s32.totalorder %s62, %s63
    %p74 = scmp.eq.s32.totalorder %s26, 0
    %p75 = por %p73, %p74
    %p76 = scmp.ne.s32.totalorder %s62, %s63
    %p77 = scmp.eq.s32.totalorder %s27, 1
    %p78 = por %p76, %p77
    %p80 = scmp.ne.s32.totalorder %s63, %s79
    %p81 = scmp.eq.s32.totalorder %s27, 0
    %p82 = por %p80, %p81
    %s84 = sadd.s32 %s83, 1
    %p87 = scmp.eq.s32.totalorder %s21, 1
    %p88 = scmp.ne.s32.totalorder %s83, %s85
    %p89 = scmp.eq.s32.totalorder %s21, 0
    %p90 = por %p88, %p89
    %p91 = scmp.ne.s32.totalorder %s83, %s85
    %p92 = scmp.eq.s32.totalorder %s26, 1
    %p93 = por %p91, %p92
    %p94 = scmp.ne.s32.totalorder %s85, %s86
    %p95 = scmp.eq.s32.totalorder %s26, 0
    %p96 = por %p94, %p95
    %p97 = scmp.ne.s32.totalorder %s85, %s86
    %p98 = scmp.eq.s32.totalorder %s27, 1
    %p99 = por %p97, %p98
    %p101 = scmp.ne.s32.totalorder %s86, %s100
    %p102 = scmp.eq.s32.totalorder %s27, 0
    %p103 = por %p101, %p102
    %s105 = sadd.s32 %s104, 1
    %p108 = scmp.eq.s32.totalorder %s21, 1
    %p109 = scmp.ne.s32.totalorder %s104, %s106
    %p110 = scmp.eq.s32.totalorder %s21, 0
    %p111 = por %p109, %p110
    %p112 = scmp.ne.s32.totalorder %s104, %s106
    %p113 = scmp.eq.s32.totalorder %s26, 1
    %p114 = por %p112, %p113
    %p115 = scmp.ne.s32.totalorder %s106, %s107
    %p116 = scmp.eq.s32.totalorder %s26, 0
    %p117 = por %p115, %p116
    %p118 = scmp.ne.s32.totalorder %s106, %s107
    %p119 = scmp.eq.s32.totalorder %s27, 1
    %p120 = por %p118, %p119
    %p122 = scmp.ne.s32.totalorder %s107, %s121
    %p123 = scmp.eq.s32.totalorder %s27, 0
    %p124 = por %p122, %p123
    %s125 = ssub.s32 %s21, %s28
    %p126 = scmp.eq.s32.totalorder %s125, 0
    %s128 = sadd.s32 %s127, 1
    %s129 = scalar_select %p126, %s127, %s128
    %p132 = pneg %p126
    %p133 = scmp.eq.s32.totalorder %s21, 1
    %p134 = por %p132, %p133
    %p135 = scmp.ne.s32.totalorder %s127, %s130
    %p136 = scmp.eq.s32.totalorder %s21, 0
    %p137 = por %p135, %p136
    %p138 = scmp.ne.s32.totalorder %s127, %s130
    %p139 = scmp.eq.s32.totalorder %s26, 1
    %p140 = por %p138, %p139
    %p141 = scmp.ne.s32.totalorder %s130, %s131
    %p142 = scmp.eq.s32.totalorder %s26, 0
    %p143 = por %p141, %p142
    %p144 = scmp.ne.s32.totalorder %s130, %s131
    %p145 = scmp.eq.s32.totalorder %s27, 1
    %p146 = por %p144, %p145
    %p148 = scmp.ne.s32.totalorder %s131, %s147
    %p149 = scmp.eq.s32.totalorder %s27, 0
    %p150 = por %p148, %p149
    %s151 = ssub.s32 1, %s21
    %s152 = ssub.s32 1, %s28
    %s153 = ssub.s32 %s151, %s152
    %p154 = scmp.eq.s32.totalorder %s153, 0
    %s156 = sadd.s32 %s155, 1
    %s157 = scalar_select %p154, %s155, %s156
    %p160 = pneg %p154
    %p161 = scmp.eq.s32.totalorder %s21, 1
    %p162 = por %p160, %p161
    %p163 = scmp.ne.s32.totalorder %s155, %s158
    %p164 = scmp.eq.s32.totalorder %s21, 0
    %p165 = por %p163, %p164
    %p166 = scmp.ne.s32.totalorder %s155, %s158
    %p167 = scmp.eq.s32.totalorder %s26, 1
    %p168 = por %p166, %p167
    %p169 = scmp.ne.s32.totalorder %s158, %s159
    %p170 = scmp.eq.s32.totalorder %s26, 0
    %p171 = por %p169, %p170
    %p172 = scmp.ne.s32.totalorder %s158, %s159
    %p173 = scmp.eq.s32.totalorder %s27, 1
    %p174 = por %p172, %p173
    %p176 = scmp.ne.s32.totalorder %s159, %s175
    %p177 = scmp.eq.s32.totalorder %s27, 0
    %p178 = por %p176, %p177
    %s180 = sadd.s32 %s179, 1
    %p183 = scmp.eq.s32.totalorder %s21, 1
    %p184 = scmp.ne.s32.totalorder %s179, %s181
    %p185 = scmp.eq.s32.totalorder %s21, 0
    %p186 = por %p184, %p185
    %p187 = scmp.ne.s32.totalorder %s179, %s181
    %p188 = scmp.eq.s32.totalorder %s26, 1
    %p189 = por %p187, %p188
    %p190 = scmp.ne.s32.totalorder %s181, %s182
    %p191 = scmp.eq.s32.totalorder %s26, 0
    %p192 = por %p190, %p191
    %p193 = scmp.ne.s32.totalorder %s181, %s182
    %p194 = scmp.eq.s32.totalorder %s27, 1
    %p195 = por %p193, %p194
    %p197 = scmp.ne.s32.totalorder %s182, %s196
    %p198 = scmp.eq.s32.totalorder %s27, 0
    %p199 = por %p197, %p198
    %s201 = sadd.s32 %s200, 1
    %p204 = scmp.eq.s32.totalorder %s21, 1
    %p205 = scmp.ne.s32.totalorder %s200, %s202
    %p206 = scmp.eq.s32.totalorder %s21, 0
    %p207 = por %p205, %p206
    %p208 = scmp.ne.s32.totalorder %s200, %s202
    %p209 = scmp.eq.s32.totalorder %s26, 1
    %p210 = por %p208, %p209
    %p211 = scmp.ne.s32.totalorder %s202, %s203
    %p212 = scmp.eq.s32.totalorder %s26, 0
    %p213 = por %p211, %p212
    %p214 = scmp.ne.s32.totalorder %s202, %s203
    %p215 = scmp.eq.s32.totalorder %s27, 1
    %p216 = por %p214, %p215
    %p218 = scmp.ne.s32.totalorder %s203, %s217
    %p219 = scmp.eq.s32.totalorder %s27, 0
    %p220 = por %p218, %p219
    %s222 = sadd.s32 %s221, 1
    %p225 = scmp.eq.s32.totalorder %s21, 1
    %p226 = scmp.ne.s32.totalorder %s221, %s223
    %p227 = scmp.eq.s32.totalorder %s21, 0
    %p228 = por %p226, %p227
    %p229 = scmp.ne.s32.totalorder %s221, %s223
    %p230 = scmp.eq.s32.totalorder %s26, 1
    %p231 = por %p229, %p230
    %p232 = scmp.ne.s32.totalorder %s223, %s224
    %p233 = scmp.eq.s32.totalorder %s26, 0
    %p234 = por %p232, %p233
    %p235 = scmp.ne.s32.totalorder %s223, %s224
    %p236 = scmp.eq.s32.totalorder %s27, 1
    %p237 = por %p235, %p236
    %p239 = scmp.ne.s32.totalorder %s224, %s238
    %p240 = scmp.eq.s32.totalorder %s27, 0
    %p241 = por %p239, %p240
    %s243 = sadd.s32 %s242, 1
    %p246 = scmp.eq.s32.totalorder %s21, 1
    %p247 = scmp.ne.s32.totalorder %s242, %s244
    %p248 = scmp.eq.s32.totalorder %s21, 0
    %p249 = por %p247, %p248
    %p250 = scmp.ne.s32.totalorder %s242, %s244
    %p251 = scmp.eq.s32.totalorder %s26, 1
    %p252 = por %p250, %p251
    %p253 = scmp.ne.s32.totalorder %s244, %s245
    %p254 = scmp.eq.s32.totalorder %s26, 0
    %p255 = por %p253, %p254
    %p256 = scmp.ne.s32.totalorder %s244, %s245
    %p257 = scmp.eq.s32.totalorder %s27, 1
    %p258 = por %p256, %p257
    %p260 = scmp.ne.s32.totalorder %s245, %s259
    %p261 = scmp.eq.s32.totalorder %s27, 0
    %p262 = por %p260, %p261
    %s264 = sadd.s32 %s263, 1
    %p267 = scmp.eq.s32.totalorder %s21, 1
    %p268 = scmp.ne.s32.totalorder %s263, %s265
    %p269 = scmp.eq.s32.totalorder %s21, 0
    %p270 = por %p268, %p269
    %p271 = scmp.ne.s32.totalorder %s263, %s265
    %p272 = scmp.eq.s32.totalorder %s26, 1
    %p273 = por %p271, %p272
    %p274 = scmp.ne.s32.totalorder %s265, %s266
    %p275 = scmp.eq.s32.totalorder %s26, 0
    %p276 = por %p274, %p275
    %p277 = scmp.ne.s32.totalorder %s265, %s266
    %p278 = scmp.eq.s32.totalorder %s27, 1
    %p279 = por %p277, %p278
    %p281 = scmp.ne.s32.totalorder %s266, %s280
    %p282 = scmp.eq.s32.totalorder %s27, 0
    %p283 = por %p281, %p282
    %s285 = sadd.s32 %s284, 1
    %p288 = scmp.eq.s32.totalorder %s21, 1
    %p289 = scmp.ne.s32.totalorder %s284, %s286
    %p290 = scmp.eq.s32.totalorder %s21, 0
    %p291 = por %p289, %p290
    %p292 = scmp.ne.s32.totalorder %s284, %s286
    %p293 = scmp.eq.s32.totalorder %s26, 1
    %p294 = por %p292, %p293
    %p295 = scmp.ne.s32.totalorder %s286, %s287
    %p296 = scmp.eq.s32.totalorder %s26, 0
    %p297 = por %p295, %p296
    %p298 = scmp.ne.s32.totalorder %s286, %s287
    %p299 = scmp.eq.s32.totalorder %s27, 1
    %p300 = por %p298, %p299
    %p302 = scmp.ne.s32.totalorder %s287, %s301
    %p303 = scmp.eq.s32.totalorder %s27, 0
    %p304 = por %p302, %p303
    %s305 = ssub.s32 %s21, %s28
    %p306 = scmp.eq.s32.totalorder %s305, 0
    %s308 = sadd.s32 %s307, 1
    %s309 = scalar_select %p306, %s307, %s308
    %p312 = pneg %p306
    %p313 = scmp.eq.s32.totalorder %s21, 1
    %p314 = por %p312, %p313
    %p315 = scmp.ne.s32.totalorder %s307, %s310
    %p316 = scmp.eq.s32.totalorder %s21, 0
    %p317 = por %p315, %p316
    %p318 = scmp.ne.s32.totalorder %s307, %s310
    %p319 = scmp.eq.s32.totalorder %s26, 1
    %p320 = por %p318, %p319
    %p321 = scmp.ne.s32.totalorder %s310, %s311
    %p322 = scmp.eq.s32.totalorder %s26, 0
    %p323 = por %p321, %p322
    %p324 = scmp.ne.s32.totalorder %s310, %s311
    %p325 = scmp.eq.s32.totalorder %s27, 1
    %p326 = por %p324, %p325
    %p328 = scmp.ne.s32.totalorder %s311, %s327
    %p329 = scmp.eq.s32.totalorder %s27, 0
    %p330 = por %p328, %p329
    %s331 = ssub.s32 1, %s21
    %s332 = ssub.s32 1, %s28
    %s333 = ssub.s32 %s331, %s332
    %p334 = scmp.eq.s32.totalorder %s333, 0
    %s336 = sadd.s32 %s335, 1
    %s337 = scalar_select %p334, %s335, %s336
    %p340 = pneg %p334
    %p341 = scmp.eq.s32.totalorder %s21, 1
    %p342 = por %p340, %p341
    %p343 = scmp.ne.s32.totalorder %s335, %s338
    %p344 = scmp.eq.s32.totalorder %s21, 0
    %p345 = por %p343, %p344
    %p346 = scmp.ne.s32.totalorder %s335, %s338
    %p347 = scmp.eq.s32.totalorder %s26, 1
    %p348 = por %p346, %p347
    %p349 = scmp.ne.s32.totalorder %s338, %s339
    %p350 = scmp.eq.s32.totalorder %s26, 0
    %p351 = por %p349, %p350
    %p352 = scmp.ne.s32.totalorder %s338, %s339
    %p353 = scmp.eq.s32.totalorder %s27, 1
    %p354 = por %p352, %p353
    %p356 = scmp.ne.s32.totalorder %s339, %s355
    %p357 = scmp.eq.s32.totalorder %s27, 0
    %p358 = por %p356, %p357
    %s360 = sadd.s32 %s359, 1
    %p363 = scmp.eq.s32.totalorder %s21, 1
    %p364 = scmp.ne.s32.totalorder %s359, %s361
    %p365 = scmp.eq.s32.totalorder %s21, 0
    %p366 = por %p364, %p365
    %p367 = scmp.ne.s32.totalorder %s359, %s361
    %p368 = scmp.eq.s32.totalorder %s26, 1
    %p369 = por %p367, %p368
    %p370 = scmp.ne.s32.totalorder %s361, %s362
    %p371 = scmp.eq.s32.totalorder %s26, 0
    %p372 = por %p370, %p371
    %p373 = scmp.ne.s32.totalorder %s361, %s362
    %p374 = scmp.eq.s32.totalorder %s27, 1
    %p375 = por %p373, %p374
    %p377 = scmp.ne.s32.totalorder %s362, %s376
    %p378 = scmp.eq.s32.totalorder %s27, 0
    %p379 = por %p377, %p378
    %p380 = scmp.le.s32.totalorder 1, %s21
    %p381 = scmp.lt.s32.totalorder %s21, 3
    %p382 = pnand %p380, %p381
    %p383 = pneg %p382
    // Predicated region
    $region9: #{encoder_forward.3} parent=5 // pred_check
      _
    $region10: #{encoder_forward.3} parent=5 // pred_check_branch
      %385 = sbr.rel (%p382) target = $region12
    $region11: #{encoder_forward.3} parent=5 // pred_region
      %s386 = ssub.s32 %s21, 1
      // Predicated region
      $region13: #{encoder_forward.3} parent=11 // pred_check
        %p387 = pneg %p96
      $region14: #{encoder_forward.3} parent=11 // pred_check_branch
        %389 = sbr.rel (%p387) target = $region16
      $region15: #{encoder_forward.3} parent=11 // pred_region
        _
      $region16: #{encoder_forward.3} parent=11 // pred_fallthru
        _
      // Predicated region
      $region17: #{encoder_forward.3} parent=11 // pred_check
        %p390 = pneg %p117
      $region18: #{encoder_forward.3} parent=11 // pred_check_branch
        %392 = sbr.rel (%p390) target = $region20
      $region19: #{encoder_forward.3} parent=11 // pred_region
        _
      $region20: #{encoder_forward.3} parent=11 // pred_fallthru
        _
      // Predicated region
      $region21: #{encoder_forward.3} parent=11 // pred_check
        %p393 = pneg %p192
      $region22: #{encoder_forward.3} parent=11 // pred_check_branch
        %395 = sbr.rel (%p393) target = $region24
      $region23: #{encoder_forward.3} parent=11 // pred_region
        _
      $region24: #{encoder_forward.3} parent=11 // pred_fallthru
        _
      // Predicated region
      $region25: #{encoder_forward.3} parent=11 // pred_check
        %p396 = pneg %p213
      $region26: #{encoder_forward.3} parent=11 // pred_check_branch
        %398 = sbr.rel (%p396) target = $region28
      $region27: #{encoder_forward.3} parent=11 // pred_region
        _
      $region28: #{encoder_forward.3} parent=11 // pred_fallthru
        _
      // Predicated region
      $region29: #{encoder_forward.3} parent=11 // pred_check
        %p399 = pneg %p234
      $region30: #{encoder_forward.3} parent=11 // pred_check_branch
        %401 = sbr.rel (%p399) target = $region32
      $region31: #{encoder_forward.3} parent=11 // pred_region
        _
      $region32: #{encoder_forward.3} parent=11 // pred_fallthru
        _
      // Predicated region
      $region33: #{encoder_forward.3} parent=11 // pred_check
        %p402 = pneg %p255
      $region34: #{encoder_forward.3} parent=11 // pred_check_branch
        %404 = sbr.rel (%p402) target = $region36
      $region35: #{encoder_forward.3} parent=11 // pred_region
        _
      $region36: #{encoder_forward.3} parent=11 // pred_fallthru
        _
      // Predicated region
      $region37: #{encoder_forward.3} parent=11 // pred_check
        %p405 = pneg %p276
      $region38: #{encoder_forward.3} parent=11 // pred_check_branch
        %407 = sbr.rel (%p405) target = $region40
      $region39: #{encoder_forward.3} parent=11 // pred_region
        _
      $region40: #{encoder_forward.3} parent=11 // pred_fallthru
        _
      // Predicated region
      $region41: #{encoder_forward.3} parent=11 // pred_check
        %p408 = pneg %p297
      $region42: #{encoder_forward.3} parent=11 // pred_check_branch
        %410 = sbr.rel (%p408) target = $region44
      $region43: #{encoder_forward.3} parent=11 // pred_region
        _
      $region44: #{encoder_forward.3} parent=11 // pred_fallthru
        _
    $region12: #{encoder_forward.3} parent=5 // pred_fallthru
      _
    %p411 = scmp.lt.s32.totalorder %s21, 2
    // Predicated region
    $region45: #{encoder_forward.3} parent=5 // pred_check
      %p412 = pneg %p411
    $region46: #{encoder_forward.3} parent=5 // pred_check_branch
      %414 = sbr.rel (%p412) target = $region48
    $region47: #{encoder_forward.3} parent=5 // pred_region
      // Predicated region
      $region49: #{encoder_forward.3} parent=47 // pred_check
        %p415 = pneg %p41
      $region50: #{encoder_forward.3} parent=47 // pred_check_branch
        %417 = sbr.rel (%p415) target = $region52
      $region51: #{encoder_forward.3} parent=47 // pred_region
        %s418 = smul.u32 5, %s21
        %p419 = scmp.lt.s32.totalorder %s418, 9
        %s420 = scalar_select %p419, %s418, 9
        %s421 = smul.addr %s420, 8
        %s422 = scalar_lea.vmem %s0, %s421
        %s423 = smul.u32 5, %s21
      $region52: #{encoder_forward.3} parent=47 // pred_fallthru
        _
      // Predicated region
      $region53: #{encoder_forward.3} parent=47 // pred_check
        %p424 = pneg %p69
      $region54: #{encoder_forward.3} parent=47 // pred_check_branch
        %426 = sbr.rel (%p424) target = $region56
      $region55: #{encoder_forward.3} parent=47 // pred_region
        %s427 = ssub.s32 1, %s21
        %s428 = smul.u32 5, %s427
        %p429 = scmp.lt.s32.totalorder %s428, 9
        %s430 = scalar_select %p429, %s428, 9
        %s431 = smul.addr %s430, 8
        %s432 = scalar_lea.vmem %s1, %s431
        %s433 = ssub.s32 1, %s21
        %s434 = smul.u32 5, %s433
      $region56: #{encoder_forward.3} parent=47 // pred_fallthru
        _
      // Predicated region
      $region57: #{encoder_forward.3} parent=47 // pred_check
        %p435 = pneg %p137
      $region58: #{encoder_forward.3} parent=47 // pred_check_branch
        %437 = sbr.rel (%p435) target = $region60
      $region59: #{encoder_forward.3} parent=47 // pred_region
        %s438 = smul.u32 5, %s21
        %p439 = scmp.lt.s32.totalorder %s438, 9
        %s440 = scalar_select %p439, %s438, 9
        %s441 = smul.addr %s440, 8
        %s442 = scalar_lea.vmem %s4, %s441
        %s443 = smul.u32 5, %s21
      $region60: #{encoder_forward.3} parent=47 // pred_fallthru
        _
      // Predicated region
      $region61: #{encoder_forward.3} parent=47 // pred_check
        %p444 = pneg %p165
      $region62: #{encoder_forward.3} parent=47 // pred_check_branch
        %446 = sbr.rel (%p444) target = $region64
      $region63: #{encoder_forward.3} parent=47 // pred_region
        %s447 = ssub.s32 1, %s21
        %s448 = smul.u32 5, %s447
        %p449 = scmp.lt.s32.totalorder %s448, 9
        %s450 = scalar_select %p449, %s448, 9
        %s451 = smul.addr %s450, 8
        %s452 = scalar_lea.vmem %s5, %s451
        %s453 = ssub.s32 1, %s21
        %s454 = smul.u32 5, %s453
      $region64: #{encoder_forward.3} parent=47 // pred_fallthru
        _
    $region48: #{encoder_forward.3} parent=5 // pred_fallthru
      _
    %p455 = scmp.le.s32.totalorder 1, %s21
    %p456 = scmp.lt.s32.totalorder %s21, 3
    %p457 = pnand %p455, %p456
    %p458 = pneg %p457
    // Predicated region
    $region65: #{encoder_forward.3} parent=5 // pred_check
      _
    $region66: #{encoder_forward.3} parent=5 // pred_check_branch
      %460 = sbr.rel (%p457) target = $region68
    $region67: #{encoder_forward.3} parent=5 // pred_region
      %s461 = ssub.s32 %s21, 1
      %s462 = smul.u32 5, %s26
      %p463 = scmp.lt.s32.totalorder %s462, 9
      %s464 = scalar_select %p463, %s462, 9
      %s465 = smul.addr %s464, 8
      %s466 = scalar_lea.vmem %s0, %s465
      %p467 = pneg %p47
      %p468 = pneg %p44
      %s469 = ssub.s32 1, %s26
      %s470 = smul.u32 5, %s469
      %p471 = scmp.lt.s32.totalorder %s470, 9
      %s472 = scalar_select %p471, %s470, 9
      %s473 = smul.addr %s472, 8
      %s474 = scalar_lea.vmem %s1, %s473
      %p475 = pneg %p75
      %p476 = pneg %p72
      %p477 = pneg %p96
      %p478 = pneg %p93
      %p479 = pneg %p117
      %p480 = pneg %p114
      %s481 = smul.u32 5, %s26
      %p482 = scmp.lt.s32.totalorder %s481, 9
      %s483 = scalar_select %p482, %s481, 9
      %s484 = smul.addr %s483, 8
      %s485 = scalar_lea.vmem %s4, %s484
      %p486 = pneg %p143
      %p487 = pneg %p140
      %s488 = ssub.s32 1, %s26
      %s489 = smul.u32 5, %s488
      %p490 = scmp.lt.s32.totalorder %s489, 9
      %s491 = scalar_select %p490, %s489, 9
      %s492 = smul.addr %s491, 8
      %s493 = scalar_lea.vmem %s5, %s492
      %p494 = pneg %p171
      %p495 = pneg %p168
      %p496 = pneg %p192
      %p497 = pneg %p189
      %p498 = pneg %p213
      %p499 = pneg %p210
      %p500 = pneg %p234
      %p501 = pneg %p231
      %p502 = pneg %p255
      %p503 = pneg %p252
      %p504 = pneg %p276
      %p505 = pneg %p273
      %p506 = pneg %p297
      %p507 = pneg %p294
      %p508 = pneg %p323
      %p509 = pneg %p320
      %s510 = smul.u32 5, %s26
      %p511 = scmp.lt.s32.totalorder %s510, 9
      %s512 = scalar_select %p511, %s510, 9
      %s513 = smul.addr %s512, 8
      %s514 = scalar_lea.vmem %s12, %s513
      %p515 = pneg %p351
      %p516 = pneg %p348
      %s517 = ssub.s32 1, %s26
      %s518 = smul.u32 5, %s517
      %p519 = scmp.lt.s32.totalorder %s518, 9
      %s520 = scalar_select %p519, %s518, 9
      %s521 = smul.addr %s520, 8
      %s522 = scalar_lea.vmem %s13, %s521
      %p523 = pneg %p372
      %p524 = pneg %p369
      %s525 = smul.u32 5, %s26
      %p526 = scmp.lt.s32.totalorder %s525, 9
      %s527 = scalar_select %p526, %s525, 9
      %s528 = smul.addr %s527, 8
      %s529 = scalar_lea.vmem %s0, %s528
      %s530 = smul.u32 5, %s26
      %s531 = ssub.s32 1, %s26
      %s532 = smul.u32 5, %s531
      %p533 = scmp.lt.s32.totalorder %s532, 9
      %s534 = scalar_select %p533, %s532, 9
      %s535 = smul.addr %s534, 8
      %s536 = scalar_lea.vmem %s1, %s535
      %s537 = ssub.s32 1, %s26
      %s538 = smul.u32 5, %s537
      %s539 = smul.u32 5, %s26
      %p540 = scmp.lt.s32.totalorder %s539, 9
      %s541 = scalar_select %p540, %s539, 9
      %s542 = smul.addr %s541, 8
      %s543 = scalar_lea.vmem %s4, %s542
      %s544 = smul.u32 5, %s26
      %s545 = ssub.s32 1, %s26
      %s546 = smul.u32 5, %s545
      %p547 = scmp.lt.s32.totalorder %s546, 9
      %s548 = scalar_select %p547, %s546, 9
      %s549 = smul.addr %s548, 8
      %s550 = scalar_lea.vmem %s5, %s549
      %s551 = ssub.s32 1, %s26
      %s552 = smul.u32 5, %s551
      %s553 = smul.u32 5, %s26
      %p554 = scmp.lt.s32.totalorder %s553, 9
      %s555 = scalar_select %p554, %s553, 9
      %s556 = smul.addr %s555, 8
      %s557 = scalar_lea.vmem %s12, %s556
      %s558 = smul.u32 5, %s26
      %s559 = ssub.s32 1, %s26
      %s560 = smul.u32 5, %s559
      %p561 = scmp.lt.s32.totalorder %s560, 9
      %s562 = scalar_select %p561, %s560, 9
      %s563 = smul.addr %s562, 8
      %s564 = scalar_lea.vmem %s13, %s563
      %s565 = ssub.s32 1, %s26
      %s566 = smul.u32 5, %s565
      %p567 = scmp.eq.s32.totalorder %s26, 0
      // Predicated region
      $region69: #{encoder_forward.3} parent=67 // pred_check
        %p568 = pneg %p567
      $region70: #{encoder_forward.3} parent=67 // pred_check_branch
        %570 = sbr.rel (%p568) target = $region72
      $region71: #{encoder_forward.3} parent=67 // pred_region
        %571 = vst [vmem:[#allocation4] sm:$0xff] 0.0
        %572 = vst [vmem:[#allocation4 + $0x8] sm:$0xff] 0.0
      $region72: #{encoder_forward.3} parent=67 // pred_fallthru
        _
      %v573 = vld [vmem:[%s529] sm:$0xff]
      %v574 = vld [vmem:[%s529 + $0x8] sm:$0xff]
      %v575 = vld [vmem:[%s529 + $0x10] sm:$0xff]
      %v576 = vld [vmem:[%s529 + $0x18] sm:$0xff]
      %v577 = vld [vmem:[%s529 + $0x20] sm:$0xff]
      %v578 = vld [vmem:[%s2] sm:$0xff]
      %v579 = vld [vmem:[%s2 + $0x8] sm:$0xff]
      %v580 = vld [vmem:[%s2 + $0x10] sm:$0xff]
      %v581 = vld [vmem:[%s2 + $0x18] sm:$0xff]
      %v582 = vld [vmem:[%s2 + $0x20] sm:$0xff]
      %v583 = vld [vmem:[%s2 + $0x28] sm:$0xff]
      %v584 = vld [vmem:[%s2 + $0x30] sm:$0xff]
      %v585 = vld [vmem:[%s2 + $0x38] sm:$0xff]
      %v586 = vld [vmem:[%s2 + $0x40] sm:$0xff]
      %v587 = vld [vmem:[%s2 + $0x48] sm:$0xff]
      %v588 = vld [vmem:[%s2 + $0x50] sm:$0xff]
      %v589 = vld [vmem:[%s2 + $0x58] sm:$0xff]
      %v590 = vld [vmem:[%s2 + $0x60] sm:$0xff]
      %v591 = vld [vmem:[%s2 + $0x68] sm:$0xff]
      %v592 = vld [vmem:[%s2 + $0x70] sm:$0xff]
      %v593 = vld [vmem:[%s2 + $0x78] sm:$0xff]
      %v594 = vld [vmem:[%s2 + $0x80] sm:$0xff]
      %v595 = vld [vmem:[%s2 + $0x88] sm:$0xff]
      %v596 = vld [vmem:[%s2 + $0x90] sm:$0xff]
      %v597 = vld [vmem:[%s2 + $0x98] sm:$0xff]
      %v598 = vld [vmem:[%s2 + $0xa0] sm:$0xff]
      %v599 = vld [vmem:[%s2 + $0xa8] sm:$0xff]
      %v600 = vld [vmem:[%s2 + $0xb0] sm:$0xff]
      %v601 = vld [vmem:[%s2 + $0xb8] sm:$0xff]
      %v602 = vld [vmem:[%s2 + $0xc0] sm:$0xff]
      %v603 = vld [vmem:[%s2 + $0xc8] sm:$0xff]
      %v604 = vld [vmem:[%s2 + $0xd0] sm:$0xff]
      %v605 = vld [vmem:[%s2 + $0xd8] sm:$0xff]
      %v606 = vld [vmem:[%s2 + $0xe0] sm:$0xff]
      %v607 = vld [vmem:[%s2 + $0xe8] sm:$0xff]
      %v608 = vld [vmem:[%s2 + $0xf0] sm:$0xff]
      %v609 = vld [vmem:[%s2 + $0xf8] sm:$0xff]
      %v610 = vld [vmem:[%s2 + $0x100] sm:$0xff]
      %v611 = vld [vmem:[%s2 + $0x108] sm:$0xff]
      %v612 = vld [vmem:[%s2 + $0x110] sm:$0xff]
      %v613 = vld [vmem:[%s2 + $0x118] sm:$0xff]
      %v614 = vld [vmem:[%s2 + $0x120] sm:$0xff]
      %v615 = vld [vmem:[%s2 + $0x128] sm:$0xff]
      %v616 = vld [vmem:[%s2 + $0x130] sm:$0xff]
      %v617 = vld [vmem:[%s2 + $0x138] sm:$0xff]
      %v618 = vld [vmem:[%s2 + $0x140] sm:$0xff]
      %v619 = vld [vmem:[%s2 + $0x148] sm:$0xff]
      %v620 = vld [vmem:[%s2 + $0x150] sm:$0xff]
      %v621 = vld [vmem:[%s2 + $0x158] sm:$0xff]
      %v622 = vld [vmem:[%s2 + $0x160] sm:$0xff]
      %v623 = vld [vmem:[%s2 + $0x168] sm:$0xff]
      %v624 = vld [vmem:[%s2 + $0x170] sm:$0xff]
      %v625 = vld [vmem:[%s2 + $0x178] sm:$0xff]
      %v626 = vld [vmem:[%s543] sm:$0xff]
      %v627 = vld [vmem:[%s543 + $0x8] sm:$0xff]
      %v628 = vld [vmem:[%s543 + $0x10] sm:$0xff]
      %v629 = vld [vmem:[%s543 + $0x18] sm:$0xff]
      %v630 = vld [vmem:[%s543 + $0x20] sm:$0xff]
      %v631 = vld [vmem:[%s6] sm:$0xff]
      %v632 = vld [vmem:[%s6 + $0x8] sm:$0xff]
      %v633 = vld [vmem:[%s6 + $0x10] sm:$0xff]
      %v634 = vld [vmem:[%s6 + $0x18] sm:$0xff]
      %v635 = vld [vmem:[%s6 + $0x20] sm:$0xff]
      %v636 = vld [vmem:[%s6 + $0x28] sm:$0xff]
      %v637 = vld [vmem:[%s6 + $0x30] sm:$0xff]
      %v638 = vld [vmem:[%s6 + $0x38] sm:$0xff]
      %v639 = vld [vmem:[%s6 + $0x40] sm:$0xff]
      %v640 = vld [vmem:[%s6 + $0x48] sm:$0xff]
      %v641 = vld [vmem:[%s6 + $0x50] sm:$0xff]
      %v642 = vld [vmem:[%s6 + $0x58] sm:$0xff]
      %v643 = vld [vmem:[%s6 + $0x60] sm:$0xff]
      %v644 = vld [vmem:[%s6 + $0x68] sm:$0xff]
      %v645 = vld [vmem:[%s6 + $0x70] sm:$0xff]
      %v646 = vld [vmem:[%s6 + $0x78] sm:$0xff]
      %v647 = vld [vmem:[%s6 + $0x80] sm:$0xff]
      %v648 = vld [vmem:[%s6 + $0x88] sm:$0xff]
      %v649 = vld [vmem:[%s6 + $0x90] sm:$0xff]
      %v650 = vld [vmem:[%s6 + $0x98] sm:$0xff]
      %v651 = vld [vmem:[%s6 + $0xa0] sm:$0xff]
      %v652 = vld [vmem:[%s6 + $0xa8] sm:$0xff]
      %v653 = vld [vmem:[%s6 + $0xb0] sm:$0xff]
      %v654 = vld [vmem:[%s6 + $0xb8] sm:$0xff]
      %v655 = vld [vmem:[%s6 + $0xc0] sm:$0xff]
      %v656 = vld [vmem:[%s6 + $0xc8] sm:$0xff]
      %v657 = vld [vmem:[%s6 + $0xd0] sm:$0xff]
      %v658 = vld [vmem:[%s6 + $0xd8] sm:$0xff]
      %v659 = vld [vmem:[%s6 + $0xe0] sm:$0xff]
      %v660 = vld [vmem:[%s6 + $0xe8] sm:$0xff]
      %v661 = vld [vmem:[%s6 + $0xf0] sm:$0xff]
      %v662 = vld [vmem:[%s6 + $0xf8] sm:$0xff]
      %v663 = vld [vmem:[%s6 + $0x100] sm:$0xff]
      %v664 = vld [vmem:[%s6 + $0x108] sm:$0xff]
      %v665 = vld [vmem:[%s6 + $0x110] sm:$0xff]
      %v666 = vld [vmem:[%s6 + $0x118] sm:$0xff]
      %v667 = vld [vmem:[%s6 + $0x120] sm:$0xff]
      %v668 = vld [vmem:[%s6 + $0x128] sm:$0xff]
      %v669 = vld [vmem:[%s6 + $0x130] sm:$0xff]
      %v670 = vld [vmem:[%s6 + $0x138] sm:$0xff]
      %v671 = vld [vmem:[%s6 + $0x140] sm:$0xff]
      %v672 = vld [vmem:[%s6 + $0x148] sm:$0xff]
      %v673 = vld [vmem:[%s6 + $0x150] sm:$0xff]
      %v674 = vld [vmem:[%s6 + $0x158] sm:$0xff]
      %v675 = vld [vmem:[%s6 + $0x160] sm:$0xff]
      %v676 = vld [vmem:[%s6 + $0x168] sm:$0xff]
      %v677 = vld [vmem:[%s6 + $0x170] sm:$0xff]
      %v678 = vld [vmem:[%s6 + $0x178] sm:$0xff]
      %679 = vmatpush.msra.mxu0 %v676
      %680 = vmatpush.msra.mxu0 %v673
      %681 = vmatpush.msra.mxu0 %v670
      %682 = vmatpush.msra.mxu0 %v667
      %683 = vmatpush.msra.mxu0 %v664
      %684 = vmatpush.msra.mxu0 %v661
      %685 = vmatpush.msra.mxu0 %v658
      %686 = vmatpush.msra.mxu0 %v655
      %687 = vmatpush.msra.mxu0 %v652
      %688 = vmatpush.msra.mxu0 %v649
      %689 = vmatpush.msra.mxu0 %v646
      %690 = vmatpush.msra.mxu0 %v643
      %691 = vmatpush.msra.mxu0 %v640
      %692 = vmatpush.msra.mxu0 %v637
      %693 = vmatpush.msra.mxu0 %v634
      %694 = vmatpush.msra.mxu0 %v631
      %695 = vmatmul.f32.gmra.mxu0 %v626
      %v696 = vpop.f32.mrf.mxu0
      %v697 = vadd.f32 0.0, %v696
      %698 = vmatmul.f32.gmra.mxu0 %v627
      %v699 = vpop.f32.mrf.mxu0
      %v700 = vadd.f32 0.0, %v699
      %701 = vmatmul.f32.gmra.mxu0 %v628
      %v702 = vpop.f32.mrf.mxu0
      %v703 = vadd.f32 0.0, %v702
      %704 = vmatmul.f32.gmra.mxu0 %v629
      %v705 = vpop.f32.mrf.mxu0
      %v706 = vadd.f32 0.0, %v705
      %707 = vmatmul.f32.gmra.mxu0 %v630
      %v708 = vpop.f32.mrf.mxu0
      %v709 = vadd.f32 0.0, %v708
      %710 = vdwg.mxu0
      %711 = vmatpush.msra.mxu0 %v677
      %712 = vmatpush.msra.mxu0 %v674
      %713 = vmatpush.msra.mxu0 %v671
      %714 = vmatpush.msra.mxu0 %v668
      %715 = vmatpush.msra.mxu0 %v665
      %716 = vmatpush.msra.mxu0 %v662
      %717 = vmatpush.msra.mxu0 %v659
      %718 = vmatpush.msra.mxu0 %v656
      %719 = vmatpush.msra.mxu0 %v653
      %720 = vmatpush.msra.mxu0 %v650
      %721 = vmatpush.msra.mxu0 %v647
      %722 = vmatpush.msra.mxu0 %v644
      %723 = vmatpush.msra.mxu0 %v641
      %724 = vmatpush.msra.mxu0 %v638
      %725 = vmatpush.msra.mxu0 %v635
      %726 = vmatpush.msra.mxu0 %v632
      %727 = vmatmul.f32.gmra.mxu0 %v626
      %v728 = vpop.f32.mrf.mxu0
      %v729 = vadd.f32 0.0, %v728
      %730 = vmatmul.f32.gmra.mxu0 %v627
      %v731 = vpop.f32.mrf.mxu0
      %v732 = vadd.f32 0.0, %v731
      %733 = vmatmul.f32.gmra.mxu0 %v628
      %v734 = vpop.f32.mrf.mxu0
      %v735 = vadd.f32 0.0, %v734
      %736 = vmatmul.f32.gmra.mxu0 %v629
      %v737 = vpop.f32.mrf.mxu0
      %v738 = vadd.f32 0.0, %v737
      %739 = vmatmul.f32.gmra.mxu0 %v630
      %v740 = vpop.f32.mrf.mxu0
      %v741 = vadd.f32 0.0, %v740
      %742 = vdwg.mxu0
      %743 = vmatpush.msra.mxu0 %v678
      %744 = vmatpush.msra.mxu0 %v675
      %745 = vmatpush.msra.mxu0 %v672
      %746 = vmatpush.msra.mxu0 %v669
      %747 = vmatpush.msra.mxu0 %v666
      %748 = vmatpush.msra.mxu0 %v663
      %749 = vmatpush.msra.mxu0 %v660
      %750 = vmatpush.msra.mxu0 %v657
      %751 = vmatpush.msra.mxu0 %v654
      %752 = vmatpush.msra.mxu0 %v651
      %753 = vmatpush.msra.mxu0 %v648
      %754 = vmatpush.msra.mxu0 %v645
      %755 = vmatpush.msra.mxu0 %v642
      %756 = vmatpush.msra.mxu0 %v639
      %757 = vmatpush.msra.mxu0 %v636
      %758 = vmatpush.msra.mxu0 %v633
      %759 = vmatmul.f32.gmra.mxu0 %v626
      %v760 = vpop.f32.mrf.mxu0
      %v761 = vadd.f32 0.0, %v760
      %762 = vmatmul.f32.gmra.mxu0 %v627
      %v763 = vpop.f32.mrf.mxu0
      %v764 = vadd.f32 0.0, %v763
      %765 = vmatmul.f32.gmra.mxu0 %v628
      %v766 = vpop.f32.mrf.mxu0
      %v767 = vadd.f32 0.0, %v766
      %768 = vmatmul.f32.gmra.mxu0 %v629
      %v769 = vpop.f32.mrf.mxu0
      %v770 = vadd.f32 0.0, %v769
      %771 = vmatmul.f32.gmra.mxu0 %v630
      %v772 = vpop.f32.mrf.mxu0
      %v773 = vadd.f32 0.0, %v772
      %774 = vdwg.mxu0
      %775 = vmatpush.msra.mxu0 %v623
      %776 = vmatpush.msra.mxu0 %v620
      %777 = vmatpush.msra.mxu0 %v617
      %778 = vmatpush.msra.mxu0 %v614
      %779 = vmatpush.msra.mxu0 %v611
      %780 = vmatpush.msra.mxu0 %v608
      %781 = vmatpush.msra.mxu0 %v605
      %782 = vmatpush.msra.mxu0 %v602
      %783 = vmatpush.msra.mxu0 %v599
      %784 = vmatpush.msra.mxu0 %v596
      %785 = vmatpush.msra.mxu0 %v593
      %786 = vmatpush.msra.mxu0 %v590
      %787 = vmatpush.msra.mxu0 %v587
      %788 = vmatpush.msra.mxu0 %v584
      %789 = vmatpush.msra.mxu0 %v581
      %790 = vmatpush.msra.mxu0 %v578
      %791 = vmatmul.f32.gmra.mxu0 %v573
      %v792 = vpop.f32.mrf.mxu0
      %v793 = vadd.f32 %v697, %v792
      %794 = vmatmul.f32.gmra.mxu0 %v574
      %v795 = vpop.f32.mrf.mxu0
      %v796 = vadd.f32 %v700, %v795
      %797 = vmatmul.f32.gmra.mxu0 %v575
      %v798 = vpop.f32.mrf.mxu0
      %v799 = vadd.f32 %v703, %v798
      %800 = vmatmul.f32.gmra.mxu0 %v576
      %v801 = vpop.f32.mrf.mxu0
      %v802 = vadd.f32 %v706, %v801
      %803 = vmatmul.f32.gmra.mxu0 %v577
      %v804 = vpop.f32.mrf.mxu0
      %v805 = vadd.f32 %v709, %v804
      %806 = vdwg.mxu0
      %807 = vmatpush.msra.mxu0 %v624
      %808 = vmatpush.msra.mxu0 %v621
      %809 = vmatpush.msra.mxu0 %v618
      %810 = vmatpush.msra.mxu0 %v615
      %811 = vmatpush.msra.mxu0 %v612
      %812 = vmatpush.msra.mxu0 %v609
      %813 = vmatpush.msra.mxu0 %v606
      %814 = vmatpush.msra.mxu0 %v603
      %815 = vmatpush.msra.mxu0 %v600
      %816 = vmatpush.msra.mxu0 %v597
      %817 = vmatpush.msra.mxu0 %v594
      %818 = vmatpush.msra.mxu0 %v591
      %819 = vmatpush.msra.mxu0 %v588
      %820 = vmatpush.msra.mxu0 %v585
      %821 = vmatpush.msra.mxu0 %v582
      %822 = vmatpush.msra.mxu0 %v579
      %823 = vmatmul.f32.gmra.mxu0 %v573
      %v824 = vpop.f32.mrf.mxu0
      %v825 = vadd.f32 %v729, %v824
      %826 = vmatmul.f32.gmra.mxu0 %v574
      %v827 = vpop.f32.mrf.mxu0
      %v828 = vadd.f32 %v732, %v827
      %829 = vmatmul.f32.gmra.mxu0 %v575
      %v830 = vpop.f32.mrf.mxu0
      %v831 = vadd.f32 %v735, %v830
      %832 = vmatmul.f32.gmra.mxu0 %v576
      %v833 = vpop.f32.mrf.mxu0
      %v834 = vadd.f32 %v738, %v833
      %835 = vmatmul.f32.gmra.mxu0 %v577
      %v836 = vpop.f32.mrf.mxu0
      %v837 = vadd.f32 %v741, %v836
      %838 = vdwg.mxu0
      %839 = vmatpush.msra.mxu0 %v625
      %840 = vmatpush.msra.mxu0 %v622
      %841 = vmatpush.msra.mxu0 %v619
      %842 = vmatpush.msra.mxu0 %v616
      %843 = vmatpush.msra.mxu0 %v613
      %844 = vmatpush.msra.mxu0 %v610
      %845 = vmatpush.msra.mxu0 %v607
      %846 = vmatpush.msra.mxu0 %v604
      %847 = vmatpush.msra.mxu0 %v601
      %848 = vmatpush.msra.mxu0 %v598
      %849 = vmatpush.msra.mxu0 %v595
      %850 = vmatpush.msra.mxu0 %v592
      %851 = vmatpush.msra.mxu0 %v589
      %852 = vmatpush.msra.mxu0 %v586
      %853 = vmatpush.msra.mxu0 %v583
      %854 = vmatpush.msra.mxu0 %v580
      %855 = vmatmul.f32.gmra.mxu0 %v573
      %v856 = vpop.f32.mrf.mxu0
      %v857 = vadd.f32 %v761, %v856
      %858 = vmatmul.f32.gmra.mxu0 %v574
      %v859 = vpop.f32.mrf.mxu0
      %v860 = vadd.f32 %v764, %v859
      %861 = vmatmul.f32.gmra.mxu0 %v575
      %v862 = vpop.f32.mrf.mxu0
      %v863 = vadd.f32 %v767, %v862
      %864 = vmatmul.f32.gmra.mxu0 %v576
      %v865 = vpop.f32.mrf.mxu0
      %v866 = vadd.f32 %v770, %v865
      %867 = vmatmul.f32.gmra.mxu0 %v577
      %v868 = vpop.f32.mrf.mxu0
      %v869 = vadd.f32 %v773, %v868
      %870 = vdwg.mxu0
      %v871 = vld [vmem:[%s8] sm:$0x7]
      %v873 = vperm.slane %v871, 0
      %v874 = vperm.slane %v871, 1
      %v875 = vperm.slane %v871, 2
      %v879 = vadd.f32 %v793, %v873
      %v880 = vadd.f32 %v825, %v874
      %v881 = vadd.f32 %v857, %v875
      %v882 = vadd.f32 %v796, %v873
      %v883 = vadd.f32 %v828, %v874
      %v884 = vadd.f32 %v860, %v875
      %v885 = vadd.f32 %v799, %v873
      %v886 = vadd.f32 %v831, %v874
      %v887 = vadd.f32 %v863, %v875
      %v888 = vadd.f32 %v802, %v873
      %v889 = vadd.f32 %v834, %v874
      %v890 = vadd.f32 %v866, %v875
      %v891 = vadd.f32 %v805, %v873
      %v892 = vadd.f32 %v837, %v874
      %v893 = vadd.f32 %v869, %v875
      %894 = vst [vmem:[#allocation2] sm:$0xff] %v879
      %895 = vst [vmem:[#allocation2 + $0x8] sm:$0xff] %v880
      %896 = vst [vmem:[#allocation2 + $0x10] sm:$0xff] %v881
      %897 = vst [vmem:[#allocation2 + $0x18] sm:$0xff] %v882
      %898 = vst [vmem:[#allocation2 + $0x20] sm:$0xff] %v883
      %899 = vst [vmem:[#allocation2 + $0x28] sm:$0xff] %v884
      %900 = vst [vmem:[#allocation2 + $0x30] sm:$0xff] %v885
      %901 = vst [vmem:[#allocation2 + $0x38] sm:$0xff] %v886
      %902 = vst [vmem:[#allocation2 + $0x40] sm:$0xff] %v887
      %903 = vst [vmem:[#allocation2 + $0x48] sm:$0xff] %v888
      %904 = vst [vmem:[#allocation2 + $0x50] sm:$0xff] %v889
      %905 = vst [vmem:[#allocation2 + $0x58] sm:$0xff] %v890
      %906 = vst [vmem:[#allocation2 + $0x60] sm:$0xff] %v891
      %907 = vst [vmem:[#allocation2 + $0x68] sm:$0xff] %v892
      %908 = vst [vmem:[#allocation2 + $0x70] sm:$0xff] %v893
      %v909 = vld [vmem:[%s536] sm:$0xff]
      %v910 = vld [vmem:[%s536 + $0x8] sm:$0xff]
      %v911 = vld [vmem:[%s536 + $0x10] sm:$0xff]
      %v912 = vld [vmem:[%s536 + $0x18] sm:$0xff]
      %v913 = vld [vmem:[%s536 + $0x20] sm:$0xff]
      %v914 = vld [vmem:[%s3] sm:$0xff]
      %v915 = vld [vmem:[%s3 + $0x8] sm:$0xff]
      %v916 = vld [vmem:[%s3 + $0x10] sm:$0xff]
      %v917 = vld [vmem:[%s3 + $0x18] sm:$0xff]
      %v918 = vld [vmem:[%s3 + $0x20] sm:$0xff]
      %v919 = vld [vmem:[%s3 + $0x28] sm:$0xff]
      %v920 = vld [vmem:[%s3 + $0x30] sm:$0xff]
      %v921 = vld [vmem:[%s3 + $0x38] sm:$0xff]
      %v922 = vld [vmem:[%s3 + $0x40] sm:$0xff]
      %v923 = vld [vmem:[%s3 + $0x48] sm:$0xff]
      %v924 = vld [vmem:[%s3 + $0x50] sm:$0xff]
      %v925 = vld [vmem:[%s3 + $0x58] sm:$0xff]
      %v926 = vld [vmem:[%s3 + $0x60] sm:$0xff]
      %v927 = vld [vmem:[%s3 + $0x68] sm:$0xff]
      %v928 = vld [vmem:[%s3 + $0x70] sm:$0xff]
      %v929 = vld [vmem:[%s3 + $0x78] sm:$0xff]
      %v930 = vld [vmem:[%s3 + $0x80] sm:$0xff]
      %v931 = vld [vmem:[%s3 + $0x88] sm:$0xff]
      %v932 = vld [vmem:[%s3 + $0x90] sm:$0xff]
      %v933 = vld [vmem:[%s3 + $0x98] sm:$0xff]
      %v934 = vld [vmem:[%s3 + $0xa0] sm:$0xff]
      %v935 = vld [vmem:[%s3 + $0xa8] sm:$0xff]
      %v936 = vld [vmem:[%s3 + $0xb0] sm:$0xff]
      %v937 = vld [vmem:[%s3 + $0xb8] sm:$0xff]
      %v938 = vld [vmem:[%s3 + $0xc0] sm:$0xff]
      %v939 = vld [vmem:[%s3 + $0xc8] sm:$0xff]
      %v940 = vld [vmem:[%s3 + $0xd0] sm:$0xff]
      %v941 = vld [vmem:[%s3 + $0xd8] sm:$0xff]
      %v942 = vld [vmem:[%s3 + $0xe0] sm:$0xff]
      %v943 = vld [vmem:[%s3 + $0xe8] sm:$0xff]
      %v944 = vld [vmem:[%s3 + $0xf0] sm:$0xff]
      %v945 = vld [vmem:[%s3 + $0xf8] sm:$0xff]
      %v946 = vld [vmem:[%s3 + $0x100] sm:$0xff]
      %v947 = vld [vmem:[%s3 + $0x108] sm:$0xff]
      %v948 = vld [vmem:[%s3 + $0x110] sm:$0xff]
      %v949 = vld [vmem:[%s3 + $0x118] sm:$0xff]
      %v950 = vld [vmem:[%s3 + $0x120] sm:$0xff]
      %v951 = vld [vmem:[%s3 + $0x128] sm:$0xff]
      %v952 = vld [vmem:[%s3 + $0x130] sm:$0xff]
      %v953 = vld [vmem:[%s3 + $0x138] sm:$0xff]
      %v954 = vld [vmem:[%s3 + $0x140] sm:$0xff]
      %v955 = vld [vmem:[%s3 + $0x148] sm:$0xff]
      %v956 = vld [vmem:[%s3 + $0x150] sm:$0xff]
      %v957 = vld [vmem:[%s3 + $0x158] sm:$0xff]
      %v958 = vld [vmem:[%s3 + $0x160] sm:$0xff]
      %v959 = vld [vmem:[%s3 + $0x168] sm:$0xff]
      %v960 = vld [vmem:[%s3 + $0x170] sm:$0xff]
      %v961 = vld [vmem:[%s3 + $0x178] sm:$0xff]
      %v962 = vld [vmem:[%s550] sm:$0xff]
      %v963 = vld [vmem:[%s550 + $0x8] sm:$0xff]
      %v964 = vld [vmem:[%s550 + $0x10] sm:$0xff]
      %v965 = vld [vmem:[%s550 + $0x18] sm:$0xff]
      %v966 = vld [vmem:[%s550 + $0x20] sm:$0xff]
      %v967 = vld [vmem:[%s7] sm:$0xff]
      %v968 = vld [vmem:[%s7 + $0x8] sm:$0xff]
      %v969 = vld [vmem:[%s7 + $0x10] sm:$0xff]
      %v970 = vld [vmem:[%s7 + $0x18] sm:$0xff]
      %v971 = vld [vmem:[%s7 + $0x20] sm:$0xff]
      %v972 = vld [vmem:[%s7 + $0x28] sm:$0xff]
      %v973 = vld [vmem:[%s7 + $0x30] sm:$0xff]
      %v974 = vld [vmem:[%s7 + $0x38] sm:$0xff]
      %v975 = vld [vmem:[%s7 + $0x40] sm:$0xff]
      %v976 = vld [vmem:[%s7 + $0x48] sm:$0xff]
      %v977 = vld [vmem:[%s7 + $0x50] sm:$0xff]
      %v978 = vld [vmem:[%s7 + $0x58] sm:$0xff]
      %v979 = vld [vmem:[%s7 + $0x60] sm:$0xff]
      %v980 = vld [vmem:[%s7 + $0x68] sm:$0xff]
      %v981 = vld [vmem:[%s7 + $0x70] sm:$0xff]
      %v982 = vld [vmem:[%s7 + $0x78] sm:$0xff]
      %v983 = vld [vmem:[%s7 + $0x80] sm:$0xff]
      %v984 = vld [vmem:[%s7 + $0x88] sm:$0xff]
      %v985 = vld [vmem:[%s7 + $0x90] sm:$0xff]
      %v986 = vld [vmem:[%s7 + $0x98] sm:$0xff]
      %v987 = vld [vmem:[%s7 + $0xa0] sm:$0xff]
      %v988 = vld [vmem:[%s7 + $0xa8] sm:$0xff]
      %v989 = vld [vmem:[%s7 + $0xb0] sm:$0xff]
      %v990 = vld [vmem:[%s7 + $0xb8] sm:$0xff]
      %v991 = vld [vmem:[%s7 + $0xc0] sm:$0xff]
      %v992 = vld [vmem:[%s7 + $0xc8] sm:$0xff]
      %v993 = vld [vmem:[%s7 + $0xd0] sm:$0xff]
      %v994 = vld [vmem:[%s7 + $0xd8] sm:$0xff]
      %v995 = vld [vmem:[%s7 + $0xe0] sm:$0xff]
      %v996 = vld [vmem:[%s7 + $0xe8] sm:$0xff]
      %v997 = vld [vmem:[%s7 + $0xf0] sm:$0xff]
      %v998 = vld [vmem:[%s7 + $0xf8] sm:$0xff]
      %v999 = vld [vmem:[%s7 + $0x100] sm:$0xff]
      %v1000 = vld [vmem:[%s7 + $0x108] sm:$0xff]
      %v1001 = vld [vmem:[%s7 + $0x110] sm:$0xff]
      %v1002 = vld [vmem:[%s7 + $0x118] sm:$0xff]
      %v1003 = vld [vmem:[%s7 + $0x120] sm:$0xff]
      %v1004 = vld [vmem:[%s7 + $0x128] sm:$0xff]
      %v1005 = vld [vmem:[%s7 + $0x130] sm:$0xff]
      %v1006 = vld [vmem:[%s7 + $0x138] sm:$0xff]
      %v1007 = vld [vmem:[%s7 + $0x140] sm:$0xff]
      %v1008 = vld [vmem:[%s7 + $0x148] sm:$0xff]
      %v1009 = vld [vmem:[%s7 + $0x150] sm:$0xff]
      %v1010 = vld [vmem:[%s7 + $0x158] sm:$0xff]
      %v1011 = vld [vmem:[%s7 + $0x160] sm:$0xff]
      %v1012 = vld [vmem:[%s7 + $0x168] sm:$0xff]
      %v1013 = vld [vmem:[%s7 + $0x170] sm:$0xff]
      %v1014 = vld [vmem:[%s7 + $0x178] sm:$0xff]
      %1015 = vmatpush.msra.mxu0 %v1012
      %1016 = vmatpush.msra.mxu0 %v1009
      %1017 = vmatpush.msra.mxu0 %v1006
      %1018 = vmatpush.msra.mxu0 %v1003
      %1019 = vmatpush.msra.mxu0 %v1000
      %1020 = vmatpush.msra.mxu0 %v997
      %1021 = vmatpush.msra.mxu0 %v994
      %1022 = vmatpush.msra.mxu0 %v991
      %1023 = vmatpush.msra.mxu0 %v988
      %1024 = vmatpush.msra.mxu0 %v985
      %1025 = vmatpush.msra.mxu0 %v982
      %1026 = vmatpush.msra.mxu0 %v979
      %1027 = vmatpush.msra.mxu0 %v976
      %1028 = vmatpush.msra.mxu0 %v973
      %1029 = vmatpush.msra.mxu0 %v970
      %1030 = vmatpush.msra.mxu0 %v967
      %1031 = vmatmul.f32.gmra.mxu0 %v962
      %v1032 = vpop.f32.mrf.mxu0
      %v1033 = vadd.f32 0.0, %v1032
      %1034 = vmatmul.f32.gmra.mxu0 %v963
      %v1035 = vpop.f32.mrf.mxu0
      %v1036 = vadd.f32 0.0, %v1035
      %1037 = vmatmul.f32.gmra.mxu0 %v964
      %v1038 = vpop.f32.mrf.mxu0
      %v1039 = vadd.f32 0.0, %v1038
      %1040 = vmatmul.f32.gmra.mxu0 %v965
      %v1041 = vpop.f32.mrf.mxu0
      %v1042 = vadd.f32 0.0, %v1041
      %1043 = vmatmul.f32.gmra.mxu0 %v966
      %v1044 = vpop.f32.mrf.mxu0
      %v1045 = vadd.f32 0.0, %v1044
      %1046 = vdwg.mxu0
      %1047 = vmatpush.msra.mxu0 %v1013
      %1048 = vmatpush.msra.mxu0 %v1010
      %1049 = vmatpush.msra.mxu0 %v1007
      %1050 = vmatpush.msra.mxu0 %v1004
      %1051 = vmatpush.msra.mxu0 %v1001
      %1052 = vmatpush.msra.mxu0 %v998
      %1053 = vmatpush.msra.mxu0 %v995
      %1054 = vmatpush.msra.mxu0 %v992
      %1055 = vmatpush.msra.mxu0 %v989
      %1056 = vmatpush.msra.mxu0 %v986
      %1057 = vmatpush.msra.mxu0 %v983
      %1058 = vmatpush.msra.mxu0 %v980
      %1059 = vmatpush.msra.mxu0 %v977
      %1060 = vmatpush.msra.mxu0 %v974
      %1061 = vmatpush.msra.mxu0 %v971
      %1062 = vmatpush.msra.mxu0 %v968
      %1063 = vmatmul.f32.gmra.mxu0 %v962
      %v1064 = vpop.f32.mrf.mxu0
      %v1065 = vadd.f32 0.0, %v1064
      %1066 = vmatmul.f32.gmra.mxu0 %v963
      %v1067 = vpop.f32.mrf.mxu0
      %v1068 = vadd.f32 0.0, %v1067
      %1069 = vmatmul.f32.gmra.mxu0 %v964
      %v1070 = vpop.f32.mrf.mxu0
      %v1071 = vadd.f32 0.0, %v1070
      %1072 = vmatmul.f32.gmra.mxu0 %v965
      %v1073 = vpop.f32.mrf.mxu0
      %v1074 = vadd.f32 0.0, %v1073
      %1075 = vmatmul.f32.gmra.mxu0 %v966
      %v1076 = vpop.f32.mrf.mxu0
      %v1077 = vadd.f32 0.0, %v1076
      %1078 = vdwg.mxu0
      %1079 = vmatpush.msra.mxu0 %v1014
      %1080 = vmatpush.msra.mxu0 %v1011
      %1081 = vmatpush.msra.mxu0 %v1008
      %1082 = vmatpush.msra.mxu0 %v1005
      %1083 = vmatpush.msra.mxu0 %v1002
      %1084 = vmatpush.msra.mxu0 %v999
      %1085 = vmatpush.msra.mxu0 %v996
      %1086 = vmatpush.msra.mxu0 %v993
      %1087 = vmatpush.msra.mxu0 %v990
      %1088 = vmatpush.msra.mxu0 %v987
      %1089 = vmatpush.msra.mxu0 %v984
      %1090 = vmatpush.msra.mxu0 %v981
      %1091 = vmatpush.msra.mxu0 %v978
      %1092 = vmatpush.msra.mxu0 %v975
      %1093 = vmatpush.msra.mxu0 %v972
      %1094 = vmatpush.msra.mxu0 %v969
      %1095 = vmatmul.f32.gmra.mxu0 %v962
      %v1096 = vpop.f32.mrf.mxu0
      %v1097 = vadd.f32 0.0, %v1096
      %1098 = vmatmul.f32.gmra.mxu0 %v963
      %v1099 = vpop.f32.mrf.mxu0
      %v1100 = vadd.f32 0.0, %v1099
      %1101 = vmatmul.f32.gmra.mxu0 %v964
      %v1102 = vpop.f32.mrf.mxu0
      %v1103 = vadd.f32 0.0, %v1102
      %1104 = vmatmul.f32.gmra.mxu0 %v965
      %v1105 = vpop.f32.mrf.mxu0
      %v1106 = vadd.f32 0.0, %v1105
      %1107 = vmatmul.f32.gmra.mxu0 %v966
      %v1108 = vpop.f32.mrf.mxu0
      %v1109 = vadd.f32 0.0, %v1108
      %1110 = vdwg.mxu0
      %1111 = vmatpush.msra.mxu0 %v959
      %1112 = vmatpush.msra.mxu0 %v956
      %1113 = vmatpush.msra.mxu0 %v953
      %1114 = vmatpush.msra.mxu0 %v950
      %1115 = vmatpush.msra.mxu0 %v947
      %1116 = vmatpush.msra.mxu0 %v944
      %1117 = vmatpush.msra.mxu0 %v941
      %1118 = vmatpush.msra.mxu0 %v938
      %1119 = vmatpush.msra.mxu0 %v935
      %1120 = vmatpush.msra.mxu0 %v932
      %1121 = vmatpush.msra.mxu0 %v929
      %1122 = vmatpush.msra.mxu0 %v926
      %1123 = vmatpush.msra.mxu0 %v923
      %1124 = vmatpush.msra.mxu0 %v920
      %1125 = vmatpush.msra.mxu0 %v917
      %1126 = vmatpush.msra.mxu0 %v914
      %1127 = vmatmul.f32.gmra.mxu0 %v909
      %v1128 = vpop.f32.mrf.mxu0
      %v1129 = vadd.f32 %v1033, %v1128
      %1130 = vmatmul.f32.gmra.mxu0 %v910
      %v1131 = vpop.f32.mrf.mxu0
      %v1132 = vadd.f32 %v1036, %v1131
      %1133 = vmatmul.f32.gmra.mxu0 %v911
      %v1134 = vpop.f32.mrf.mxu0
      %v1135 = vadd.f32 %v1039, %v1134
      %1136 = vmatmul.f32.gmra.mxu0 %v912
      %v1137 = vpop.f32.mrf.mxu0
      %v1138 = vadd.f32 %v1042, %v1137
      %1139 = vmatmul.f32.gmra.mxu0 %v913
      %v1140 = vpop.f32.mrf.mxu0
      %v1141 = vadd.f32 %v1045, %v1140
      %1142 = vdwg.mxu0
      %1143 = vmatpush.msra.mxu0 %v960
      %1144 = vmatpush.msra.mxu0 %v957
      %1145 = vmatpush.msra.mxu0 %v954
      %1146 = vmatpush.msra.mxu0 %v951
      %1147 = vmatpush.msra.mxu0 %v948
      %1148 = vmatpush.msra.mxu0 %v945
      %1149 = vmatpush.msra.mxu0 %v942
      %1150 = vmatpush.msra.mxu0 %v939
      %1151 = vmatpush.msra.mxu0 %v936
      %1152 = vmatpush.msra.mxu0 %v933
      %1153 = vmatpush.msra.mxu0 %v930
      %1154 = vmatpush.msra.mxu0 %v927
      %1155 = vmatpush.msra.mxu0 %v924
      %1156 = vmatpush.msra.mxu0 %v921
      %1157 = vmatpush.msra.mxu0 %v918
      %1158 = vmatpush.msra.mxu0 %v915
      %1159 = vmatmul.f32.gmra.mxu0 %v909
      %v1160 = vpop.f32.mrf.mxu0
      %v1161 = vadd.f32 %v1065, %v1160
      %1162 = vmatmul.f32.gmra.mxu0 %v910
      %v1163 = vpop.f32.mrf.mxu0
      %v1164 = vadd.f32 %v1068, %v1163
      %1165 = vmatmul.f32.gmra.mxu0 %v911
      %v1166 = vpop.f32.mrf.mxu0
      %v1167 = vadd.f32 %v1071, %v1166
      %1168 = vmatmul.f32.gmra.mxu0 %v912
      %v1169 = vpop.f32.mrf.mxu0
      %v1170 = vadd.f32 %v1074, %v1169
      %1171 = vmatmul.f32.gmra.mxu0 %v913
      %v1172 = vpop.f32.mrf.mxu0
      %v1173 = vadd.f32 %v1077, %v1172
      %1174 = vdwg.mxu0
      %1175 = vmatpush.msra.mxu0 %v961
      %1176 = vmatpush.msra.mxu0 %v958
      %1177 = vmatpush.msra.mxu0 %v955
      %1178 = vmatpush.msra.mxu0 %v952
      %1179 = vmatpush.msra.mxu0 %v949
      %1180 = vmatpush.msra.mxu0 %v946
      %1181 = vmatpush.msra.mxu0 %v943
      %1182 = vmatpush.msra.mxu0 %v940
      %1183 = vmatpush.msra.mxu0 %v937
      %1184 = vmatpush.msra.mxu0 %v934
      %1185 = vmatpush.msra.mxu0 %v931
      %1186 = vmatpush.msra.mxu0 %v928
      %1187 = vmatpush.msra.mxu0 %v925
      %1188 = vmatpush.msra.mxu0 %v922
      %1189 = vmatpush.msra.mxu0 %v919
      %1190 = vmatpush.msra.mxu0 %v916
      %1191 = vmatmul.f32.gmra.mxu0 %v909
      %v1192 = vpop.f32.mrf.mxu0
      %v1193 = vadd.f32 %v1097, %v1192
      %1194 = vmatmul.f32.gmra.mxu0 %v910
      %v1195 = vpop.f32.mrf.mxu0
      %v1196 = vadd.f32 %v1100, %v1195
      %1197 = vmatmul.f32.gmra.mxu0 %v911
      %v1198 = vpop.f32.mrf.mxu0
      %v1199 = vadd.f32 %v1103, %v1198
      %1200 = vmatmul.f32.gmra.mxu0 %v912
      %v1201 = vpop.f32.mrf.mxu0
      %v1202 = vadd.f32 %v1106, %v1201
      %1203 = vmatmul.f32.gmra.mxu0 %v913
      %v1204 = vpop.f32.mrf.mxu0
      %v1205 = vadd.f32 %v1109, %v1204
      %1206 = vdwg.mxu0
      %v1207 = vld [vmem:[%s9] sm:$0x7]
      %v1209 = vperm.slane %v1207, 0
      %v1210 = vperm.slane %v1207, 1
      %v1211 = vperm.slane %v1207, 2
      %v1215 = vadd.f32 %v1129, %v1209
      %v1216 = vadd.f32 %v1161, %v1210
      %v1217 = vadd.f32 %v1193, %v1211
      %v1218 = vadd.f32 %v1132, %v1209
      %v1219 = vadd.f32 %v1164, %v1210
      %v1220 = vadd.f32 %v1196, %v1211
      %v1221 = vadd.f32 %v1135, %v1209
      %v1222 = vadd.f32 %v1167, %v1210
      %v1223 = vadd.f32 %v1199, %v1211
      %v1224 = vadd.f32 %v1138, %v1209
      %v1225 = vadd.f32 %v1170, %v1210
      %v1226 = vadd.f32 %v1202, %v1211
      %v1227 = vadd.f32 %v1141, %v1209
      %v1228 = vadd.f32 %v1173, %v1210
      %v1229 = vadd.f32 %v1205, %v1211
      %1230 = vst [vmem:[#allocation3] sm:$0xff] %v1215
      %1231 = vst [vmem:[#allocation3 + $0x8] sm:$0xff] %v1216
      %1232 = vst [vmem:[#allocation3 + $0x10] sm:$0xff] %v1217
      %1233 = vst [vmem:[#allocation3 + $0x18] sm:$0xff] %v1218
      %1234 = vst [vmem:[#allocation3 + $0x20] sm:$0xff] %v1219
      %1235 = vst [vmem:[#allocation3 + $0x28] sm:$0xff] %v1220
      %1236 = vst [vmem:[#allocation3 + $0x30] sm:$0xff] %v1221
      %1237 = vst [vmem:[#allocation3 + $0x38] sm:$0xff] %v1222
      %1238 = vst [vmem:[#allocation3 + $0x40] sm:$0xff] %v1223
      %1239 = vst [vmem:[#allocation3 + $0x48] sm:$0xff] %v1224
      %1240 = vst [vmem:[#allocation3 + $0x50] sm:$0xff] %v1225
      %1241 = vst [vmem:[#allocation3 + $0x58] sm:$0xff] %v1226
      %1242 = vst [vmem:[#allocation3 + $0x60] sm:$0xff] %v1227
      %1243 = vst [vmem:[#allocation3 + $0x68] sm:$0xff] %v1228
      %1244 = vst [vmem:[#allocation3 + $0x70] sm:$0xff] %v1229
      %v1245 = vld [vmem:[%s10] sm:$0xff]
      %v1246 = vld [vmem:[%s10 + $0x8] sm:$0xff]
      %v1247 = vld [vmem:[%s10 + $0x10] sm:$0xff]
      %v1248 = vld [vmem:[%s10 + $0x18] sm:$0xff]
      %v1249 = vld [vmem:[%s10 + $0x20] sm:$0xff]
      %v1250 = vld [vmem:[%s10 + $0x28] sm:$0xff]
      %v1251 = vld [vmem:[%s10 + $0x30] sm:$0xff]
      %v1252 = vld [vmem:[%s10 + $0x38] sm:$0xff]
      %v1253 = vld [vmem:[%s10 + $0x40] sm:$0xff]
      %v1254 = vld [vmem:[%s10 + $0x48] sm:$0xff]
      %v1255 = vld [vmem:[%s10 + $0x50] sm:$0xff]
      %v1256 = vld [vmem:[%s10 + $0x58] sm:$0xff]
      %v1257 = vld [vmem:[%s10 + $0x60] sm:$0xff]
      %v1258 = vld [vmem:[%s10 + $0x68] sm:$0xff]
      %v1259 = vld [vmem:[%s10 + $0x70] sm:$0xff]
      %v1260 = vld [vmem:[%s10 + $0x78] sm:$0xff]
      %v1261 = vld [vmem:[%s10 + $0x80] sm:$0xff]
      %v1262 = vld [vmem:[%s10 + $0x88] sm:$0xff]
      %v1263 = vld [vmem:[%s10 + $0x90] sm:$0xff]
      %v1264 = vld [vmem:[%s10 + $0x98] sm:$0xff]
      %v1265 = vld [vmem:[%s10 + $0xa0] sm:$0xff]
      %v1266 = vld [vmem:[%s10 + $0xa8] sm:$0xff]
      %v1267 = vld [vmem:[%s10 + $0xb0] sm:$0xff]
      %v1268 = vld [vmem:[%s10 + $0xb8] sm:$0xff]
      %v1269 = vld [vmem:[%s10 + $0xc0] sm:$0xff]
      %v1270 = vld [vmem:[%s10 + $0xc8] sm:$0xff]
      %v1271 = vld [vmem:[%s10 + $0xd0] sm:$0xff]
      %v1272 = vld [vmem:[%s10 + $0xd8] sm:$0xff]
      %v1273 = vld [vmem:[%s10 + $0xe0] sm:$0xff]
      %v1274 = vld [vmem:[%s10 + $0xe8] sm:$0xff]
      %v1275 = vld [vmem:[%s10 + $0xf0] sm:$0xff]
      %v1276 = vld [vmem:[%s10 + $0xf8] sm:$0xff]
      %v1277 = vld [vmem:[%s10 + $0x100] sm:$0xff]
      %v1278 = vld [vmem:[%s10 + $0x108] sm:$0xff]
      %v1279 = vld [vmem:[%s10 + $0x110] sm:$0xff]
      %v1280 = vld [vmem:[%s10 + $0x118] sm:$0xff]
      %v1281 = vld [vmem:[%s10 + $0x120] sm:$0xff]
      %v1282 = vld [vmem:[%s10 + $0x128] sm:$0xff]
      %v1283 = vld [vmem:[%s10 + $0x130] sm:$0xff]
      %v1284 = vld [vmem:[%s10 + $0x138] sm:$0xff]
      %v1285 = vld [vmem:[%s10 + $0x140] sm:$0xff]
      %v1286 = vld [vmem:[%s10 + $0x148] sm:$0xff]
      %v1287 = vld [vmem:[%s10 + $0x150] sm:$0xff]
      %v1288 = vld [vmem:[%s10 + $0x158] sm:$0xff]
      %v1289 = vld [vmem:[%s10 + $0x160] sm:$0xff]
      %v1290 = vld [vmem:[%s10 + $0x168] sm:$0xff]
      %v1291 = vld [vmem:[%s10 + $0x170] sm:$0xff]
      %v1292 = vld [vmem:[%s10 + $0x178] sm:$0xff]
      %v1293 = vld [vmem:[%s10 + $0x180] sm:$0xff]
      %v1294 = vld [vmem:[%s10 + $0x188] sm:$0xff]
      %v1295 = vld [vmem:[%s10 + $0x190] sm:$0xff]
      %v1296 = vld [vmem:[%s10 + $0x198] sm:$0xff]
      %v1297 = vld [vmem:[%s10 + $0x1a0] sm:$0xff]
      %v1298 = vld [vmem:[%s10 + $0x1a8] sm:$0xff]
      %v1299 = vld [vmem:[%s10 + $0x1b0] sm:$0xff]
      %v1300 = vld [vmem:[%s10 + $0x1b8] sm:$0xff]
      %v1301 = vld [vmem:[%s10 + $0x1c0] sm:$0xff]
      %v1302 = vld [vmem:[%s10 + $0x1c8] sm:$0xff]
      %v1303 = vld [vmem:[%s10 + $0x1d0] sm:$0xff]
      %v1304 = vld [vmem:[%s10 + $0x1d8] sm:$0xff]
      %v1305 = vld [vmem:[%s10 + $0x1e0] sm:$0xff]
      %v1306 = vld [vmem:[%s10 + $0x1e8] sm:$0xff]
      %v1307 = vld [vmem:[%s10 + $0x1f0] sm:$0xff]
      %v1308 = vld [vmem:[%s10 + $0x1f8] sm:$0xff]
      %v1309 = vld [vmem:[%s10 + $0x200] sm:$0xff]
      %v1310 = vld [vmem:[%s10 + $0x208] sm:$0xff]
      %v1311 = vld [vmem:[%s10 + $0x210] sm:$0xff]
      %v1312 = vld [vmem:[%s10 + $0x218] sm:$0xff]
      %v1313 = vld [vmem:[%s10 + $0x220] sm:$0xff]
      %v1314 = vld [vmem:[%s10 + $0x228] sm:$0xff]
      %v1315 = vld [vmem:[%s10 + $0x230] sm:$0xff]
      %v1316 = vld [vmem:[%s10 + $0x238] sm:$0xff]
      %v1317 = vld [vmem:[%s10 + $0x240] sm:$0xff]
      %v1318 = vld [vmem:[%s10 + $0x248] sm:$0xff]
      %v1319 = vld [vmem:[%s10 + $0x250] sm:$0xff]
      %v1320 = vld [vmem:[%s10 + $0x258] sm:$0xff]
      %v1321 = vld [vmem:[%s10 + $0x260] sm:$0xff]
      %v1322 = vld [vmem:[%s10 + $0x268] sm:$0xff]
      %v1323 = vld [vmem:[%s10 + $0x270] sm:$0xff]
      %v1324 = vld [vmem:[%s10 + $0x278] sm:$0xff]
      %v1325 = vld [vmem:[%s10 + $0x280] sm:$0xff]
      %v1326 = vld [vmem:[%s10 + $0x288] sm:$0xff]
      %v1327 = vld [vmem:[%s10 + $0x290] sm:$0xff]
      %v1328 = vld [vmem:[%s10 + $0x298] sm:$0xff]
      %v1329 = vld [vmem:[%s10 + $0x2a0] sm:$0xff]
      %v1330 = vld [vmem:[%s10 + $0x2a8] sm:$0xff]
      %v1331 = vld [vmem:[%s10 + $0x2b0] sm:$0xff]
      %v1332 = vld [vmem:[%s10 + $0x2b8] sm:$0xff]
      %v1333 = vld [vmem:[%s10 + $0x2c0] sm:$0xff]
      %v1334 = vld [vmem:[%s10 + $0x2c8] sm:$0xff]
      %v1335 = vld [vmem:[%s10 + $0x2d0] sm:$0xff]
      %v1336 = vld [vmem:[%s10 + $0x2d8] sm:$0xff]
      %v1337 = vld [vmem:[%s10 + $0x2e0] sm:$0xff]
      %v1338 = vld [vmem:[%s10 + $0x2e8] sm:$0xff]
      %v1339 = vld [vmem:[%s10 + $0x2f0] sm:$0xff]
      %v1340 = vld [vmem:[%s10 + $0x2f8] sm:$0xff]
      %v1341 = vld [vmem:[%s10 + $0x300] sm:$0xff]
      %v1342 = vld [vmem:[%s10 + $0x308] sm:$0xff]
      %v1343 = vld [vmem:[%s10 + $0x310] sm:$0xff]
      %v1344 = vld [vmem:[%s10 + $0x318] sm:$0xff]
      %v1345 = vld [vmem:[%s10 + $0x320] sm:$0xff]
      %v1346 = vld [vmem:[%s10 + $0x328] sm:$0xff]
      %v1347 = vld [vmem:[%s10 + $0x330] sm:$0xff]
      %v1348 = vld [vmem:[%s10 + $0x338] sm:$0xff]
      %v1349 = vld [vmem:[%s10 + $0x340] sm:$0xff]
      %v1350 = vld [vmem:[%s10 + $0x348] sm:$0xff]
      %v1351 = vld [vmem:[%s10 + $0x350] sm:$0xff]
      %v1352 = vld [vmem:[%s10 + $0x358] sm:$0xff]
      %v1353 = vld [vmem:[%s10 + $0x360] sm:$0xff]
      %v1354 = vld [vmem:[%s10 + $0x368] sm:$0xff]
      %v1355 = vld [vmem:[%s10 + $0x370] sm:$0xff]
      %v1356 = vld [vmem:[%s10 + $0x378] sm:$0xff]
      %v1357 = vld [vmem:[%s10 + $0x380] sm:$0xff]
      %v1358 = vld [vmem:[%s10 + $0x388] sm:$0xff]
      %v1359 = vld [vmem:[%s10 + $0x390] sm:$0xff]
      %v1360 = vld [vmem:[%s10 + $0x398] sm:$0xff]
      %v1361 = vld [vmem:[%s10 + $0x3a0] sm:$0xff]
      %v1362 = vld [vmem:[%s10 + $0x3a8] sm:$0xff]
      %v1363 = vld [vmem:[%s10 + $0x3b0] sm:$0xff]
      %v1364 = vld [vmem:[%s10 + $0x3b8] sm:$0xff]
      %v1365 = vld [vmem:[%s10 + $0x3c0] sm:$0xff]
      %v1366 = vld [vmem:[%s10 + $0x3c8] sm:$0xff]
      %v1367 = vld [vmem:[%s10 + $0x3d0] sm:$0xff]
      %v1368 = vld [vmem:[%s10 + $0x3d8] sm:$0xff]
      %v1369 = vld [vmem:[%s10 + $0x3e0] sm:$0xff]
      %v1370 = vld [vmem:[%s10 + $0x3e8] sm:$0xff]
      %v1371 = vld [vmem:[%s10 + $0x3f0] sm:$0xff]
      %v1372 = vld [vmem:[%s10 + $0x3f8] sm:$0xff]
      %v1373 = vld [vmem:[%s10 + $0x400] sm:$0xff]
      %v1374 = vld [vmem:[%s10 + $0x408] sm:$0xff]
      %v1375 = vld [vmem:[%s10 + $0x410] sm:$0xff]
      %v1376 = vld [vmem:[%s10 + $0x418] sm:$0xff]
      %v1377 = vld [vmem:[%s10 + $0x420] sm:$0xff]
      %v1378 = vld [vmem:[%s10 + $0x428] sm:$0xff]
      %v1379 = vld [vmem:[%s10 + $0x430] sm:$0xff]
      %v1380 = vld [vmem:[%s10 + $0x438] sm:$0xff]
      %v1381 = vld [vmem:[%s10 + $0x440] sm:$0xff]
      %v1382 = vld [vmem:[%s10 + $0x448] sm:$0xff]
      %v1383 = vld [vmem:[%s10 + $0x450] sm:$0xff]
      %v1384 = vld [vmem:[%s10 + $0x458] sm:$0xff]
      %v1385 = vld [vmem:[%s10 + $0x460] sm:$0xff]
      %v1386 = vld [vmem:[%s10 + $0x468] sm:$0xff]
      %v1387 = vld [vmem:[%s10 + $0x470] sm:$0xff]
      %v1388 = vld [vmem:[%s10 + $0x478] sm:$0xff]
      %v1389 = vld [vmem:[%s10 + $0x480] sm:$0xff]
      %v1390 = vld [vmem:[%s10 + $0x488] sm:$0xff]
      %v1391 = vld [vmem:[%s10 + $0x490] sm:$0xff]
      %v1392 = vld [vmem:[%s10 + $0x498] sm:$0xff]
      %v1393 = vld [vmem:[%s10 + $0x4a0] sm:$0xff]
      %v1394 = vld [vmem:[%s10 + $0x4a8] sm:$0xff]
      %v1395 = vld [vmem:[%s10 + $0x4b0] sm:$0xff]
      %v1396 = vld [vmem:[%s10 + $0x4b8] sm:$0xff]
      %v1397 = vld [vmem:[%s10 + $0x4c0] sm:$0xff]
      %v1398 = vld [vmem:[%s10 + $0x4c8] sm:$0xff]
      %v1399 = vld [vmem:[%s10 + $0x4d0] sm:$0xff]
      %v1400 = vld [vmem:[%s10 + $0x4d8] sm:$0xff]
      %v1401 = vld [vmem:[%s10 + $0x4e0] sm:$0xff]
      %v1402 = vld [vmem:[%s10 + $0x4e8] sm:$0xff]
      %v1403 = vld [vmem:[%s10 + $0x4f0] sm:$0xff]
      %v1404 = vld [vmem:[%s10 + $0x4f8] sm:$0xff]
      %v1405 = vld [vmem:[%s10 + $0x500] sm:$0xff]
      %v1406 = vld [vmem:[%s10 + $0x508] sm:$0xff]
      %v1407 = vld [vmem:[%s10 + $0x510] sm:$0xff]
      %v1408 = vld [vmem:[%s10 + $0x518] sm:$0xff]
      %v1409 = vld [vmem:[%s10 + $0x520] sm:$0xff]
      %v1410 = vld [vmem:[%s10 + $0x528] sm:$0xff]
      %v1411 = vld [vmem:[%s10 + $0x530] sm:$0xff]
      %v1412 = vld [vmem:[%s10 + $0x538] sm:$0xff]
      %v1413 = vld [vmem:[%s10 + $0x540] sm:$0xff]
      %v1414 = vld [vmem:[%s10 + $0x548] sm:$0xff]
      %v1415 = vld [vmem:[%s10 + $0x550] sm:$0xff]
      %v1416 = vld [vmem:[%s10 + $0x558] sm:$0xff]
      %v1417 = vld [vmem:[%s10 + $0x560] sm:$0xff]
      %v1418 = vld [vmem:[%s10 + $0x568] sm:$0xff]
      %v1419 = vld [vmem:[%s10 + $0x570] sm:$0xff]
      %v1420 = vld [vmem:[%s10 + $0x578] sm:$0xff]
      %v1421 = vld [vmem:[%s10 + $0x580] sm:$0xff]
      %v1422 = vld [vmem:[%s10 + $0x588] sm:$0xff]
      %v1423 = vld [vmem:[%s10 + $0x590] sm:$0xff]
      %v1424 = vld [vmem:[%s10 + $0x598] sm:$0xff]
      %v1425 = vld [vmem:[%s10 + $0x5a0] sm:$0xff]
      %v1426 = vld [vmem:[%s10 + $0x5a8] sm:$0xff]
      %v1427 = vld [vmem:[%s10 + $0x5b0] sm:$0xff]
      %v1428 = vld [vmem:[%s10 + $0x5b8] sm:$0xff]
      %v1429 = vld [vmem:[%s10 + $0x5c0] sm:$0xff]
      %v1430 = vld [vmem:[%s10 + $0x5c8] sm:$0xff]
      %v1431 = vld [vmem:[%s10 + $0x5d0] sm:$0xff]
      %v1432 = vld [vmem:[%s10 + $0x5d8] sm:$0xff]
      %v1433 = vld [vmem:[%s10 + $0x5e0] sm:$0xff]
      %v1434 = vld [vmem:[%s10 + $0x5e8] sm:$0xff]
      %v1435 = vld [vmem:[%s10 + $0x5f0] sm:$0xff]
      %v1436 = vld [vmem:[%s10 + $0x5f8] sm:$0xff]
      %v1437 = vld [vmem:[%s11] sm:$0x3f]
      %v1439 = vperm.slane %v1437, 0
      %v1440 = vperm.slane %v1437, 1
      %v1441 = vperm.slane %v1437, 2
      %v1442 = vperm.slane %v1437, 3
      %v1443 = vperm.slane %v1437, 4
      %v1444 = vperm.slane %v1437, 5
      %v1451 = vld [vmem:[#allocation4] sm:$0xff]
      %v1452 = vld [vmem:[#allocation4 + $0x8] sm:$0xff]
      %1453 = vmatpush.msra.mxu0 %v1335
      %1454 = vmatpush.msra.mxu0 %v1329
      %1455 = vmatpush.msra.mxu0 %v1323
      %1456 = vmatpush.msra.mxu0 %v1317
      %1457 = vmatpush.msra.mxu0 %v1311
      %1458 = vmatpush.msra.mxu0 %v1305
      %1459 = vmatpush.msra.mxu0 %v1299
      %1460 = vmatpush.msra.mxu0 %v1293
      %1461 = vmatpush.msra.mxu0 %v1287
      %1462 = vmatpush.msra.mxu0 %v1281
      %1463 = vmatpush.msra.mxu0 %v1275
      %1464 = vmatpush.msra.mxu0 %v1269
      %1465 = vmatpush.msra.mxu0 %v1263
      %1466 = vmatpush.msra.mxu0 %v1257
      %1467 = vmatpush.msra.mxu0 %v1251
      %1468 = vmatpush.msra.mxu0 %v1245
      %1469 = vmatmul.f32.gmra.mxu0 %v1451
      %v1470 = vpop.f32.mrf.mxu0
      %v1471 = vadd.f32 %v1439, %v1470
      %1472 = vdwg.mxu0
      %1473 = vmatpush.msra.mxu0 %v1431
      %1474 = vmatpush.msra.mxu0 %v1425
      %1475 = vmatpush.msra.mxu0 %v1419
      %1476 = vmatpush.msra.mxu0 %v1413
      %1477 = vmatpush.msra.mxu0 %v1407
      %1478 = vmatpush.msra.mxu0 %v1401
      %1479 = vmatpush.msra.mxu0 %v1395
      %1480 = vmatpush.msra.mxu0 %v1389
      %1481 = vmatpush.msra.mxu0 %v1383
      %1482 = vmatpush.msra.mxu0 %v1377
      %1483 = vmatpush.msra.mxu0 %v1371
      %1484 = vmatpush.msra.mxu0 %v1365
      %1485 = vmatpush.msra.mxu0 %v1359
      %1486 = vmatpush.msra.mxu0 %v1353
      %1487 = vmatpush.msra.mxu0 %v1347
      %1488 = vmatpush.msra.mxu0 %v1341
      %1489 = vmatmul.f32.gmra.mxu0 %v1452
      %v1490 = vpop.f32.mrf.mxu0
      %v1491 = vadd.f32 %v1471, %v1490
      %1492 = vdwg.mxu0
      %1493 = vmatpush.msra.mxu0 %v1336
      %1494 = vmatpush.msra.mxu0 %v1330
      %1495 = vmatpush.msra.mxu0 %v1324
      %1496 = vmatpush.msra.mxu0 %v1318
      %1497 = vmatpush.msra.mxu0 %v1312
      %1498 = vmatpush.msra.mxu0 %v1306
      %1499 = vmatpush.msra.mxu0 %v1300
      %1500 = vmatpush.msra.mxu0 %v1294
      %1501 = vmatpush.msra.mxu0 %v1288
      %1502 = vmatpush.msra.mxu0 %v1282
      %1503 = vmatpush.msra.mxu0 %v1276
      %1504 = vmatpush.msra.mxu0 %v1270
      %1505 = vmatpush.msra.mxu0 %v1264
      %1506 = vmatpush.msra.mxu0 %v1258
      %1507 = vmatpush.msra.mxu0 %v1252
      %1508 = vmatpush.msra.mxu0 %v1246
      %1509 = vmatmul.f32.gmra.mxu0 %v1451
      %v1510 = vpop.f32.mrf.mxu0
      %v1511 = vadd.f32 %v1440, %v1510
      %1512 = vdwg.mxu0
      %1513 = vmatpush.msra.mxu0 %v1432
      %1514 = vmatpush.msra.mxu0 %v1426
      %1515 = vmatpush.msra.mxu0 %v1420
      %1516 = vmatpush.msra.mxu0 %v1414
      %1517 = vmatpush.msra.mxu0 %v1408
      %1518 = vmatpush.msra.mxu0 %v1402
      %1519 = vmatpush.msra.mxu0 %v1396
      %1520 = vmatpush.msra.mxu0 %v1390
      %1521 = vmatpush.msra.mxu0 %v1384
      %1522 = vmatpush.msra.mxu0 %v1378
      %1523 = vmatpush.msra.mxu0 %v1372
      %1524 = vmatpush.msra.mxu0 %v1366
      %1525 = vmatpush.msra.mxu0 %v1360
      %1526 = vmatpush.msra.mxu0 %v1354
      %1527 = vmatpush.msra.mxu0 %v1348
      %1528 = vmatpush.msra.mxu0 %v1342
      %1529 = vmatmul.f32.gmra.mxu0 %v1452
      %v1530 = vpop.f32.mrf.mxu0
      %v1531 = vadd.f32 %v1511, %v1530
      %1532 = vdwg.mxu0
      %1533 = vmatpush.msra.mxu0 %v1337
      %1534 = vmatpush.msra.mxu0 %v1331
      %1535 = vmatpush.msra.mxu0 %v1325
      %1536 = vmatpush.msra.mxu0 %v1319
      %1537 = vmatpush.msra.mxu0 %v1313
      %1538 = vmatpush.msra.mxu0 %v1307
      %1539 = vmatpush.msra.mxu0 %v1301
      %1540 = vmatpush.msra.mxu0 %v1295
      %1541 = vmatpush.msra.mxu0 %v1289
      %1542 = vmatpush.msra.mxu0 %v1283
      %1543 = vmatpush.msra.mxu0 %v1277
      %1544 = vmatpush.msra.mxu0 %v1271
      %1545 = vmatpush.msra.mxu0 %v1265
      %1546 = vmatpush.msra.mxu0 %v1259
      %1547 = vmatpush.msra.mxu0 %v1253
      %1548 = vmatpush.msra.mxu0 %v1247
      %1549 = vmatmul.f32.gmra.mxu0 %v1451
      %v1550 = vpop.f32.mrf.mxu0
      %v1551 = vadd.f32 %v1441, %v1550
      %1552 = vdwg.mxu0
      %1553 = vmatpush.msra.mxu0 %v1433
      %1554 = vmatpush.msra.mxu0 %v1427
      %1555 = vmatpush.msra.mxu0 %v1421
      %1556 = vmatpush.msra.mxu0 %v1415
      %1557 = vmatpush.msra.mxu0 %v1409
      %1558 = vmatpush.msra.mxu0 %v1403
      %1559 = vmatpush.msra.mxu0 %v1397
      %1560 = vmatpush.msra.mxu0 %v1391
      %1561 = vmatpush.msra.mxu0 %v1385
      %1562 = vmatpush.msra.mxu0 %v1379
      %1563 = vmatpush.msra.mxu0 %v1373
      %1564 = vmatpush.msra.mxu0 %v1367
      %1565 = vmatpush.msra.mxu0 %v1361
      %1566 = vmatpush.msra.mxu0 %v1355
      %1567 = vmatpush.msra.mxu0 %v1349
      %1568 = vmatpush.msra.mxu0 %v1343
      %1569 = vmatmul.f32.gmra.mxu0 %v1452
      %v1570 = vpop.f32.mrf.mxu0
      %v1571 = vadd.f32 %v1551, %v1570
      %1572 = vdwg.mxu0
      %1573 = vmatpush.msra.mxu0 %v1338
      %1574 = vmatpush.msra.mxu0 %v1332
      %1575 = vmatpush.msra.mxu0 %v1326
      %1576 = vmatpush.msra.mxu0 %v1320
      %1577 = vmatpush.msra.mxu0 %v1314
      %1578 = vmatpush.msra.mxu0 %v1308
      %1579 = vmatpush.msra.mxu0 %v1302
      %1580 = vmatpush.msra.mxu0 %v1296
      %1581 = vmatpush.msra.mxu0 %v1290
      %1582 = vmatpush.msra.mxu0 %v1284
      %1583 = vmatpush.msra.mxu0 %v1278
      %1584 = vmatpush.msra.mxu0 %v1272
      %1585 = vmatpush.msra.mxu0 %v1266
      %1586 = vmatpush.msra.mxu0 %v1260
      %1587 = vmatpush.msra.mxu0 %v1254
      %1588 = vmatpush.msra.mxu0 %v1248
      %1589 = vmatmul.f32.gmra.mxu0 %v1451
      %v1590 = vpop.f32.mrf.mxu0
      %v1591 = vadd.f32 %v1442, %v1590
      %1592 = vdwg.mxu0
      %1593 = vmatpush.msra.mxu0 %v1434
      %1594 = vmatpush.msra.mxu0 %v1428
      %1595 = vmatpush.msra.mxu0 %v1422
      %1596 = vmatpush.msra.mxu0 %v1416
      %1597 = vmatpush.msra.mxu0 %v1410
      %1598 = vmatpush.msra.mxu0 %v1404
      %1599 = vmatpush.msra.mxu0 %v1398
      %1600 = vmatpush.msra.mxu0 %v1392
      %1601 = vmatpush.msra.mxu0 %v1386
      %1602 = vmatpush.msra.mxu0 %v1380
      %1603 = vmatpush.msra.mxu0 %v1374
      %1604 = vmatpush.msra.mxu0 %v1368
      %1605 = vmatpush.msra.mxu0 %v1362
      %1606 = vmatpush.msra.mxu0 %v1356
      %1607 = vmatpush.msra.mxu0 %v1350
      %1608 = vmatpush.msra.mxu0 %v1344
      %1609 = vmatmul.f32.gmra.mxu0 %v1452
      %v1610 = vpop.f32.mrf.mxu0
      %v1611 = vadd.f32 %v1591, %v1610
      %1612 = vdwg.mxu0
      %1613 = vmatpush.msra.mxu0 %v1339
      %1614 = vmatpush.msra.mxu0 %v1333
      %1615 = vmatpush.msra.mxu0 %v1327
      %1616 = vmatpush.msra.mxu0 %v1321
      %1617 = vmatpush.msra.mxu0 %v1315
      %1618 = vmatpush.msra.mxu0 %v1309
      %1619 = vmatpush.msra.mxu0 %v1303
      %1620 = vmatpush.msra.mxu0 %v1297
      %1621 = vmatpush.msra.mxu0 %v1291
      %1622 = vmatpush.msra.mxu0 %v1285
      %1623 = vmatpush.msra.mxu0 %v1279
      %1624 = vmatpush.msra.mxu0 %v1273
      %1625 = vmatpush.msra.mxu0 %v1267
      %1626 = vmatpush.msra.mxu0 %v1261
      %1627 = vmatpush.msra.mxu0 %v1255
      %1628 = vmatpush.msra.mxu0 %v1249
      %1629 = vmatmul.f32.gmra.mxu0 %v1451
      %v1630 = vpop.f32.mrf.mxu0
      %v1631 = vadd.f32 %v1443, %v1630
      %1632 = vdwg.mxu0
      %1633 = vmatpush.msra.mxu0 %v1435
      %1634 = vmatpush.msra.mxu0 %v1429
      %1635 = vmatpush.msra.mxu0 %v1423
      %1636 = vmatpush.msra.mxu0 %v1417
      %1637 = vmatpush.msra.mxu0 %v1411
      %1638 = vmatpush.msra.mxu0 %v1405
      %1639 = vmatpush.msra.mxu0 %v1399
      %1640 = vmatpush.msra.mxu0 %v1393
      %1641 = vmatpush.msra.mxu0 %v1387
      %1642 = vmatpush.msra.mxu0 %v1381
      %1643 = vmatpush.msra.mxu0 %v1375
      %1644 = vmatpush.msra.mxu0 %v1369
      %1645 = vmatpush.msra.mxu0 %v1363
      %1646 = vmatpush.msra.mxu0 %v1357
      %1647 = vmatpush.msra.mxu0 %v1351
      %1648 = vmatpush.msra.mxu0 %v1345
      %1649 = vmatmul.f32.gmra.mxu0 %v1452
      %v1650 = vpop.f32.mrf.mxu0
      %v1651 = vadd.f32 %v1631, %v1650
      %1652 = vdwg.mxu0
      %1653 = vmatpush.msra.mxu0 %v1340
      %1654 = vmatpush.msra.mxu0 %v1334
      %1655 = vmatpush.msra.mxu0 %v1328
      %1656 = vmatpush.msra.mxu0 %v1322
      %1657 = vmatpush.msra.mxu0 %v1316
      %1658 = vmatpush.msra.mxu0 %v1310
      %1659 = vmatpush.msra.mxu0 %v1304
      %1660 = vmatpush.msra.mxu0 %v1298
      %1661 = vmatpush.msra.mxu0 %v1292
      %1662 = vmatpush.msra.mxu0 %v1286
      %1663 = vmatpush.msra.mxu0 %v1280
      %1664 = vmatpush.msra.mxu0 %v1274
      %1665 = vmatpush.msra.mxu0 %v1268
      %1666 = vmatpush.msra.mxu0 %v1262
      %1667 = vmatpush.msra.mxu0 %v1256
      %1668 = vmatpush.msra.mxu0 %v1250
      %1669 = vmatmul.f32.gmra.mxu0 %v1451
      %v1670 = vpop.f32.mrf.mxu0
      %v1671 = vadd.f32 %v1444, %v1670
      %1672 = vdwg.mxu0
      %1673 = vmatpush.msra.mxu0 %v1436
      %1674 = vmatpush.msra.mxu0 %v1430
      %1675 = vmatpush.msra.mxu0 %v1424
      %1676 = vmatpush.msra.mxu0 %v1418
      %1677 = vmatpush.msra.mxu0 %v1412
      %1678 = vmatpush.msra.mxu0 %v1406
      %1679 = vmatpush.msra.mxu0 %v1400
      %1680 = vmatpush.msra.mxu0 %v1394
      %1681 = vmatpush.msra.mxu0 %v1388
      %1682 = vmatpush.msra.mxu0 %v1382
      %1683 = vmatpush.msra.mxu0 %v1376
      %1684 = vmatpush.msra.mxu0 %v1370
      %1685 = vmatpush.msra.mxu0 %v1364
      %1686 = vmatpush.msra.mxu0 %v1358
      %1687 = vmatpush.msra.mxu0 %v1352
      %1688 = vmatpush.msra.mxu0 %v1346
      %1689 = vmatmul.f32.gmra.mxu0 %v1452
      %v1690 = vpop.f32.mrf.mxu0
      %v1691 = vadd.f32 %v1671, %v1690
      %1692 = vdwg.mxu0
      %s1693 = smul.u32 0, 3
      %s1694 = smul.addr %s1693, 8
      %s1695 = scalar_lea.vmem [#allocation2], %s1694
      %v1696 = vld [vmem:[%s1695] sm:$0xff]
      %v1697 = vld [vmem:[%s1695 + $0x8] sm:$0xff]
      %v1698 = vld [vmem:[%s1695 + $0x10] sm:$0xff]
      %v1699 = vadd.f32 %v1696, %v1491
      %v1700 = vadd.f32 %v1697, %v1531
      %v1701 = vxor.u32 %v1699, 2147483648
      %v1702 = vxor.u32 %v1700, 2147483648
      %v1703 = vmul.f32 %v1701, 1.442695
      %v1704 = vpow.pop %v1703
      %v1705 = vmul.f32 %v1702, 1.442695
      %v1706 = vpow.pop %v1705
      %v1707 = vadd.f32 %v1704, 1.0
      %v1708 = vadd.f32 %v1706, 1.0
      %v1709 = vrcp.pop %v1707
      %v1710 = vmul.f32 %v1707, %v1709
      %v1711 = vsub.f32 1.0, %v1710
      %v1712 = vmul.f32 %v1709, %v1711
      %v1713 = vadd.f32 %v1709, %v1712
      %vm1714 = vweird.f32 %v1707
      %vm1715 = vweird.f32 %v1709
      %vm1716 = vmor %vm1714, %vm1715
      %v1717 = vsel %vm1716, %v1709, %v1713
      %v1718 = vand.u32 2147483647, %v1707
      %vm1719 = vcmp.eq.f32.partialorder %v1718, 8.507059e+37
      %v1720 = vand.u32 %v1707, 2147483648
      %v1721 = vor.u32 1.1754944e-38, %v1720
      %v1722 = vsel %vm1719, %v1721, %v1717
      %v1723 = vmul.f32 1.0, %v1722
      %v1724 = vrcp.pop %v1708
      %v1725 = vmul.f32 %v1708, %v1724
      %v1726 = vsub.f32 1.0, %v1725
      %v1727 = vmul.f32 %v1724, %v1726
      %v1728 = vadd.f32 %v1724, %v1727
      %vm1729 = vweird.f32 %v1708
      %vm1730 = vweird.f32 %v1724
      %vm1731 = vmor %vm1729, %vm1730
      %v1732 = vsel %vm1731, %v1724, %v1728
      %v1733 = vand.u32 2147483647, %v1708
      %vm1734 = vcmp.eq.f32.partialorder %v1733, 8.507059e+37
      %v1735 = vand.u32 %v1708, 2147483648
      %v1736 = vor.u32 1.1754944e-38, %v1735
      %v1737 = vsel %vm1734, %v1736, %v1732
      %v1738 = vmul.f32 1.0, %v1737
      %v1739 = vmul.f32 %v1723, %v1571
      %v1740 = vadd.f32 %v1698, %v1739
      %v1741 = vtanh.pop %v1740
      %v1742 = vsub.f32 1.0, %v1738
      %v1743 = vmul.f32 %v1742, %v1741
      %v1744 = vmul.f32 %v1738, %v1451
      %v1745 = vadd.f32 %v1743, %v1744
      %s1746 = smul.u32 4, 3
      %s1747 = smul.addr %s1746, 8
      %s1748 = scalar_lea.vmem [#allocation3], %s1747
      %v1749 = vld [vmem:[%s1748] sm:$0xff]
      %v1750 = vld [vmem:[%s1748 + $0x8] sm:$0xff]
      %v1751 = vld [vmem:[%s1748 + $0x10] sm:$0xff]
      %v1752 = vadd.f32 %v1749, %v1611
      %v1753 = vadd.f32 %v1750, %v1651
      %v1754 = vxor.u32 %v1752, 2147483648
      %v1755 = vxor.u32 %v1753, 2147483648
      %v1756 = vmul.f32 %v1754, 1.442695
      %v1757 = vpow.pop %v1756
      %v1758 = vmul.f32 %v1755, 1.442695
      %v1759 = vpow.pop %v1758
      %v1760 = vadd.f32 %v1757, 1.0
      %v1761 = vadd.f32 %v1759, 1.0
      %v1762 = vrcp.pop %v1760
      %v1763 = vmul.f32 %v1760, %v1762
      %v1764 = vsub.f32 1.0, %v1763
      %v1765 = vmul.f32 %v1762, %v1764
      %v1766 = vadd.f32 %v1762, %v1765
      %vm1767 = vweird.f32 %v1760
      %vm1768 = vweird.f32 %v1762
      %vm1769 = vmor %vm1767, %vm1768
      %v1770 = vsel %vm1769, %v1762, %v1766
      %v1771 = vand.u32 2147483647, %v1760
      %vm1772 = vcmp.eq.f32.partialorder %v1771, 8.507059e+37
      %v1773 = vand.u32 %v1760, 2147483648
      %v1774 = vor.u32 1.1754944e-38, %v1773
      %v1775 = vsel %vm1772, %v1774, %v1770
      %v1776 = vmul.f32 1.0, %v1775
      %v1777 = vrcp.pop %v1761
      %v1778 = vmul.f32 %v1761, %v1777
      %v1779 = vsub.f32 1.0, %v1778
      %v1780 = vmul.f32 %v1777, %v1779
      %v1781 = vadd.f32 %v1777, %v1780
      %vm1782 = vweird.f32 %v1761
      %vm1783 = vweird.f32 %v1777
      %vm1784 = vmor %vm1782, %vm1783
      %v1785 = vsel %vm1784, %v1777, %v1781
      %v1786 = vand.u32 2147483647, %v1761
      %vm1787 = vcmp.eq.f32.partialorder %v1786, 8.507059e+37
      %v1788 = vand.u32 %v1761, 2147483648
      %v1789 = vor.u32 1.1754944e-38, %v1788
      %v1790 = vsel %vm1787, %v1789, %v1785
      %v1791 = vmul.f32 1.0, %v1790
      %v1792 = vmul.f32 %v1776, %v1691
      %v1793 = vadd.f32 %v1751, %v1792
      %v1794 = vtanh.pop %v1793
      %v1795 = vsub.f32 1.0, %v1791
      %v1796 = vmul.f32 %v1795, %v1794
      %v1797 = vmul.f32 %v1791, %v1452
      %v1798 = vadd.f32 %v1796, %v1797
      %s1799 = smul.u32 %s26, 5
      %p1800 = scmp.lt.s32.totalorder %s1799, 8
      %s1801 = scalar_select %p1800, 1, 0
      %v1802 = vstv %s1801
      %vm1803 = vcmp.eq.s32.totalorder %v1802, 1
      %v1804 = vsel %vm1803, %v1745, %v1451
      %s1805 = ssub.s32 1, %s26
      %s1806 = smul.u32 %s1805, 5
      %s1807 = sadd.s32 %s1806, 4
      %p1808 = scmp.lt.s32.totalorder %s1807, 8
      %s1809 = scalar_select %p1808, 1, 0
      %v1810 = vstv %s1809
      %vm1811 = vcmp.eq.s32.totalorder %v1810, 1
      %v1812 = vsel %vm1811, %v1798, %v1452
      %1813 = vst [vmem:[#allocation4] sm:$0xff] %v1804
      %1814 = vst [vmem:[#allocation4 + $0x8] sm:$0xff] %v1812
      %1815 = vst [vmem:[%s557] sm:$0xff] %v1804
      %s1816 = scalar_lea.vmem %s564, 32
      %1817 = vst [vmem:[%s1816] sm:$0xff] %v1812
      %v1818 = vld [vmem:[#allocation4] sm:$0xff]
      %v1819 = vld [vmem:[#allocation4 + $0x8] sm:$0xff]
      %1820 = vmatpush.msra.mxu0 %v1335
      %1821 = vmatpush.msra.mxu0 %v1329
      %1822 = vmatpush.msra.mxu0 %v1323
      %1823 = vmatpush.msra.mxu0 %v1317
      %1824 = vmatpush.msra.mxu0 %v1311
      %1825 = vmatpush.msra.mxu0 %v1305
      %1826 = vmatpush.msra.mxu0 %v1299
      %1827 = vmatpush.msra.mxu0 %v1293
      %1828 = vmatpush.msra.mxu0 %v1287
      %1829 = vmatpush.msra.mxu0 %v1281
      %1830 = vmatpush.msra.mxu0 %v1275
      %1831 = vmatpush.msra.mxu0 %v1269
      %1832 = vmatpush.msra.mxu0 %v1263
      %1833 = vmatpush.msra.mxu0 %v1257
      %1834 = vmatpush.msra.mxu0 %v1251
      %1835 = vmatpush.msra.mxu0 %v1245
      %1836 = vmatmul.f32.gmra.mxu0 %v1818
      %v1837 = vpop.f32.mrf.mxu0
      %v1838 = vadd.f32 %v1439, %v1837
      %1839 = vdwg.mxu0
      %1840 = vmatpush.msra.mxu0 %v1431
      %1841 = vmatpush.msra.mxu0 %v1425
      %1842 = vmatpush.msra.mxu0 %v1419
      %1843 = vmatpush.msra.mxu0 %v1413
      %1844 = vmatpush.msra.mxu0 %v1407
      %1845 = vmatpush.msra.mxu0 %v1401
      %1846 = vmatpush.msra.mxu0 %v1395
      %1847 = vmatpush.msra.mxu0 %v1389
      %1848 = vmatpush.msra.mxu0 %v1383
      %1849 = vmatpush.msra.mxu0 %v1377
      %1850 = vmatpush.msra.mxu0 %v1371
      %1851 = vmatpush.msra.mxu0 %v1365
      %1852 = vmatpush.msra.mxu0 %v1359
      %1853 = vmatpush.msra.mxu0 %v1353
      %1854 = vmatpush.msra.mxu0 %v1347
      %1855 = vmatpush.msra.mxu0 %v1341
      %1856 = vmatmul.f32.gmra.mxu0 %v1819
      %v1857 = vpop.f32.mrf.mxu0
      %v1858 = vadd.f32 %v1838, %v1857
      %1859 = vdwg.mxu0
      %1860 = vmatpush.msra.mxu0 %v1336
      %1861 = vmatpush.msra.mxu0 %v1330
      %1862 = vmatpush.msra.mxu0 %v1324
      %1863 = vmatpush.msra.mxu0 %v1318
      %1864 = vmatpush.msra.mxu0 %v1312
      %1865 = vmatpush.msra.mxu0 %v1306
      %1866 = vmatpush.msra.mxu0 %v1300
      %1867 = vmatpush.msra.mxu0 %v1294
      %1868 = vmatpush.msra.mxu0 %v1288
      %1869 = vmatpush.msra.mxu0 %v1282
      %1870 = vmatpush.msra.mxu0 %v1276
      %1871 = vmatpush.msra.mxu0 %v1270
      %1872 = vmatpush.msra.mxu0 %v1264
      %1873 = vmatpush.msra.mxu0 %v1258
      %1874 = vmatpush.msra.mxu0 %v1252
      %1875 = vmatpush.msra.mxu0 %v1246
      %1876 = vmatmul.f32.gmra.mxu0 %v1818
      %v1877 = vpop.f32.mrf.mxu0
      %v1878 = vadd.f32 %v1440, %v1877
      %1879 = vdwg.mxu0
      %1880 = vmatpush.msra.mxu0 %v1432
      %1881 = vmatpush.msra.mxu0 %v1426
      %1882 = vmatpush.msra.mxu0 %v1420
      %1883 = vmatpush.msra.mxu0 %v1414
      %1884 = vmatpush.msra.mxu0 %v1408
      %1885 = vmatpush.msra.mxu0 %v1402
      %1886 = vmatpush.msra.mxu0 %v1396
      %1887 = vmatpush.msra.mxu0 %v1390
      %1888 = vmatpush.msra.mxu0 %v1384
      %1889 = vmatpush.msra.mxu0 %v1378
      %1890 = vmatpush.msra.mxu0 %v1372
      %1891 = vmatpush.msra.mxu0 %v1366
      %1892 = vmatpush.msra.mxu0 %v1360
      %1893 = vmatpush.msra.mxu0 %v1354
      %1894 = vmatpush.msra.mxu0 %v1348
      %1895 = vmatpush.msra.mxu0 %v1342
      %1896 = vmatmul.f32.gmra.mxu0 %v1819
      %v1897 = vpop.f32.mrf.mxu0
      %v1898 = vadd.f32 %v1878, %v1897
      %1899 = vdwg.mxu0
      %1900 = vmatpush.msra.mxu0 %v1337
      %1901 = vmatpush.msra.mxu0 %v1331
      %1902 = vmatpush.msra.mxu0 %v1325
      %1903 = vmatpush.msra.mxu0 %v1319
      %1904 = vmatpush.msra.mxu0 %v1313
      %1905 = vmatpush.msra.mxu0 %v1307
      %1906 = vmatpush.msra.mxu0 %v1301
      %1907 = vmatpush.msra.mxu0 %v1295
      %1908 = vmatpush.msra.mxu0 %v1289
      %1909 = vmatpush.msra.mxu0 %v1283
      %1910 = vmatpush.msra.mxu0 %v1277
      %1911 = vmatpush.msra.mxu0 %v1271
      %1912 = vmatpush.msra.mxu0 %v1265
      %1913 = vmatpush.msra.mxu0 %v1259
      %1914 = vmatpush.msra.mxu0 %v1253
      %1915 = vmatpush.msra.mxu0 %v1247
      %1916 = vmatmul.f32.gmra.mxu0 %v1818
      %v1917 = vpop.f32.mrf.mxu0
      %v1918 = vadd.f32 %v1441, %v1917
      %1919 = vdwg.mxu0
      %1920 = vmatpush.msra.mxu0 %v1433
      %1921 = vmatpush.msra.mxu0 %v1427
      %1922 = vmatpush.msra.mxu0 %v1421
      %1923 = vmatpush.msra.mxu0 %v1415
      %1924 = vmatpush.msra.mxu0 %v1409
      %1925 = vmatpush.msra.mxu0 %v1403
      %1926 = vmatpush.msra.mxu0 %v1397
      %1927 = vmatpush.msra.mxu0 %v1391
      %1928 = vmatpush.msra.mxu0 %v1385
      %1929 = vmatpush.msra.mxu0 %v1379
      %1930 = vmatpush.msra.mxu0 %v1373
      %1931 = vmatpush.msra.mxu0 %v1367
      %1932 = vmatpush.msra.mxu0 %v1361
      %1933 = vmatpush.msra.mxu0 %v1355
      %1934 = vmatpush.msra.mxu0 %v1349
      %1935 = vmatpush.msra.mxu0 %v1343
      %1936 = vmatmul.f32.gmra.mxu0 %v1819
      %v1937 = vpop.f32.mrf.mxu0
      %v1938 = vadd.f32 %v1918, %v1937
      %1939 = vdwg.mxu0
      %1940 = vmatpush.msra.mxu0 %v1338
      %1941 = vmatpush.msra.mxu0 %v1332
      %1942 = vmatpush.msra.mxu0 %v1326
      %1943 = vmatpush.msra.mxu0 %v1320
      %1944 = vmatpush.msra.mxu0 %v1314
      %1945 = vmatpush.msra.mxu0 %v1308
      %1946 = vmatpush.msra.mxu0 %v1302
      %1947 = vmatpush.msra.mxu0 %v1296
      %1948 = vmatpush.msra.mxu0 %v1290
      %1949 = vmatpush.msra.mxu0 %v1284
      %1950 = vmatpush.msra.mxu0 %v1278
      %1951 = vmatpush.msra.mxu0 %v1272
      %1952 = vmatpush.msra.mxu0 %v1266
      %1953 = vmatpush.msra.mxu0 %v1260
      %1954 = vmatpush.msra.mxu0 %v1254
      %1955 = vmatpush.msra.mxu0 %v1248
      %1956 = vmatmul.f32.gmra.mxu0 %v1818
      %v1957 = vpop.f32.mrf.mxu0
      %v1958 = vadd.f32 %v1442, %v1957
      %1959 = vdwg.mxu0
      %1960 = vmatpush.msra.mxu0 %v1434
      %1961 = vmatpush.msra.mxu0 %v1428
      %1962 = vmatpush.msra.mxu0 %v1422
      %1963 = vmatpush.msra.mxu0 %v1416
      %1964 = vmatpush.msra.mxu0 %v1410
      %1965 = vmatpush.msra.mxu0 %v1404
      %1966 = vmatpush.msra.mxu0 %v1398
      %1967 = vmatpush.msra.mxu0 %v1392
      %1968 = vmatpush.msra.mxu0 %v1386
      %1969 = vmatpush.msra.mxu0 %v1380
      %1970 = vmatpush.msra.mxu0 %v1374
      %1971 = vmatpush.msra.mxu0 %v1368
      %1972 = vmatpush.msra.mxu0 %v1362
      %1973 = vmatpush.msra.mxu0 %v1356
      %1974 = vmatpush.msra.mxu0 %v1350
      %1975 = vmatpush.msra.mxu0 %v1344
      %1976 = vmatmul.f32.gmra.mxu0 %v1819
      %v1977 = vpop.f32.mrf.mxu0
      %v1978 = vadd.f32 %v1958, %v1977
      %1979 = vdwg.mxu0
      %1980 = vmatpush.msra.mxu0 %v1339
      %1981 = vmatpush.msra.mxu0 %v1333
      %1982 = vmatpush.msra.mxu0 %v1327
      %1983 = vmatpush.msra.mxu0 %v1321
      %1984 = vmatpush.msra.mxu0 %v1315
      %1985 = vmatpush.msra.mxu0 %v1309
      %1986 = vmatpush.msra.mxu0 %v1303
      %1987 = vmatpush.msra.mxu0 %v1297
      %1988 = vmatpush.msra.mxu0 %v1291
      %1989 = vmatpush.msra.mxu0 %v1285
      %1990 = vmatpush.msra.mxu0 %v1279
      %1991 = vmatpush.msra.mxu0 %v1273
      %1992 = vmatpush.msra.mxu0 %v1267
      %1993 = vmatpush.msra.mxu0 %v1261
      %1994 = vmatpush.msra.mxu0 %v1255
      %1995 = vmatpush.msra.mxu0 %v1249
      %1996 = vmatmul.f32.gmra.mxu0 %v1818
      %v1997 = vpop.f32.mrf.mxu0
      %v1998 = vadd.f32 %v1443, %v1997
      %1999 = vdwg.mxu0
      %2000 = vmatpush.msra.mxu0 %v1435
      %2001 = vmatpush.msra.mxu0 %v1429
      %2002 = vmatpush.msra.mxu0 %v1423
      %2003 = vmatpush.msra.mxu0 %v1417
      %2004 = vmatpush.msra.mxu0 %v1411
      %2005 = vmatpush.msra.mxu0 %v1405
      %2006 = vmatpush.msra.mxu0 %v1399
      %2007 = vmatpush.msra.mxu0 %v1393
      %2008 = vmatpush.msra.mxu0 %v1387
      %2009 = vmatpush.msra.mxu0 %v1381
      %2010 = vmatpush.msra.mxu0 %v1375
      %2011 = vmatpush.msra.mxu0 %v1369
      %2012 = vmatpush.msra.mxu0 %v1363
      %2013 = vmatpush.msra.mxu0 %v1357
      %2014 = vmatpush.msra.mxu0 %v1351
      %2015 = vmatpush.msra.mxu0 %v1345
      %2016 = vmatmul.f32.gmra.mxu0 %v1819
      %v2017 = vpop.f32.mrf.mxu0
      %v2018 = vadd.f32 %v1998, %v2017
      %2019 = vdwg.mxu0
      %2020 = vmatpush.msra.mxu0 %v1340
      %2021 = vmatpush.msra.mxu0 %v1334
      %2022 = vmatpush.msra.mxu0 %v1328
      %2023 = vmatpush.msra.mxu0 %v1322
      %2024 = vmatpush.msra.mxu0 %v1316
      %2025 = vmatpush.msra.mxu0 %v1310
      %2026 = vmatpush.msra.mxu0 %v1304
      %2027 = vmatpush.msra.mxu0 %v1298
      %2028 = vmatpush.msra.mxu0 %v1292
      %2029 = vmatpush.msra.mxu0 %v1286
      %2030 = vmatpush.msra.mxu0 %v1280
      %2031 = vmatpush.msra.mxu0 %v1274
      %2032 = vmatpush.msra.mxu0 %v1268
      %2033 = vmatpush.msra.mxu0 %v1262
      %2034 = vmatpush.msra.mxu0 %v1256
      %2035 = vmatpush.msra.mxu0 %v1250
      %2036 = vmatmul.f32.gmra.mxu0 %v1818
      %v2037 = vpop.f32.mrf.mxu0
      %v2038 = vadd.f32 %v1444, %v2037
      %2039 = vdwg.mxu0
      %2040 = vmatpush.msra.mxu0 %v1436
      %2041 = vmatpush.msra.mxu0 %v1430
      %2042 = vmatpush.msra.mxu0 %v1424
      %2043 = vmatpush.msra.mxu0 %v1418
      %2044 = vmatpush.msra.mxu0 %v1412
      %2045 = vmatpush.msra.mxu0 %v1406
      %2046 = vmatpush.msra.mxu0 %v1400
      %2047 = vmatpush.msra.mxu0 %v1394
      %2048 = vmatpush.msra.mxu0 %v1388
      %2049 = vmatpush.msra.mxu0 %v1382
      %2050 = vmatpush.msra.mxu0 %v1376
      %2051 = vmatpush.msra.mxu0 %v1370
      %2052 = vmatpush.msra.mxu0 %v1364
      %2053 = vmatpush.msra.mxu0 %v1358
      %2054 = vmatpush.msra.mxu0 %v1352
      %2055 = vmatpush.msra.mxu0 %v1346
      %2056 = vmatmul.f32.gmra.mxu0 %v1819
      %v2057 = vpop.f32.mrf.mxu0
      %v2058 = vadd.f32 %v2038, %v2057
      %2059 = vdwg.mxu0
      %s2060 = smul.u32 1, 3
      %s2061 = smul.addr %s2060, 8
      %s2062 = scalar_lea.vmem [#allocation2], %s2061
      %v2063 = vld [vmem:[%s2062] sm:$0xff]
      %v2064 = vld [vmem:[%s2062 + $0x8] sm:$0xff]
      %v2065 = vld [vmem:[%s2062 + $0x10] sm:$0xff]
      %v2066 = vadd.f32 %v2063, %v1858
      %v2067 = vadd.f32 %v2064, %v1898
      %v2068 = vxor.u32 %v2066, 2147483648
      %v2069 = vxor.u32 %v2067, 2147483648
      %v2070 = vmul.f32 %v2068, 1.442695
      %v2071 = vpow.pop %v2070
      %v2072 = vmul.f32 %v2069, 1.442695
      %v2073 = vpow.pop %v2072
      %v2074 = vadd.f32 %v2071, 1.0
      %v2075 = vadd.f32 %v2073, 1.0
      %v2076 = vrcp.pop %v2074
      %v2077 = vmul.f32 %v2074, %v2076
      %v2078 = vsub.f32 1.0, %v2077
      %v2079 = vmul.f32 %v2076, %v2078
      %v2080 = vadd.f32 %v2076, %v2079
      %vm2081 = vweird.f32 %v2074
      %vm2082 = vweird.f32 %v2076
      %vm2083 = vmor %vm2081, %vm2082
      %v2084 = vsel %vm2083, %v2076, %v2080
      %v2085 = vand.u32 2147483647, %v2074
      %vm2086 = vcmp.eq.f32.partialorder %v2085, 8.507059e+37
      %v2087 = vand.u32 %v2074, 2147483648
      %v2088 = vor.u32 1.1754944e-38, %v2087
      %v2089 = vsel %vm2086, %v2088, %v2084
      %v2090 = vmul.f32 1.0, %v2089
      %v2091 = vrcp.pop %v2075
      %v2092 = vmul.f32 %v2075, %v2091
      %v2093 = vsub.f32 1.0, %v2092
      %v2094 = vmul.f32 %v2091, %v2093
      %v2095 = vadd.f32 %v2091, %v2094
      %vm2096 = vweird.f32 %v2075
      %vm2097 = vweird.f32 %v2091
      %vm2098 = vmor %vm2096, %vm2097
      %v2099 = vsel %vm2098, %v2091, %v2095
      %v2100 = vand.u32 2147483647, %v2075
      %vm2101 = vcmp.eq.f32.partialorder %v2100, 8.507059e+37
      %v2102 = vand.u32 %v2075, 2147483648
      %v2103 = vor.u32 1.1754944e-38, %v2102
      %v2104 = vsel %vm2101, %v2103, %v2099
      %v2105 = vmul.f32 1.0, %v2104
      %v2106 = vmul.f32 %v2090, %v1938
      %v2107 = vadd.f32 %v2065, %v2106
      %v2108 = vtanh.pop %v2107
      %v2109 = vsub.f32 1.0, %v2105
      %v2110 = vmul.f32 %v2109, %v2108
      %v2111 = vmul.f32 %v2105, %v1818
      %v2112 = vadd.f32 %v2110, %v2111
      %s2113 = smul.u32 3, 3
      %s2114 = smul.addr %s2113, 8
      %s2115 = scalar_lea.vmem [#allocation3], %s2114
      %v2116 = vld [vmem:[%s2115] sm:$0xff]
      %v2117 = vld [vmem:[%s2115 + $0x8] sm:$0xff]
      %v2118 = vld [vmem:[%s2115 + $0x10] sm:$0xff]
      %v2119 = vadd.f32 %v2116, %v1978
      %v2120 = vadd.f32 %v2117, %v2018
      %v2121 = vxor.u32 %v2119, 2147483648
      %v2122 = vxor.u32 %v2120, 2147483648
      %v2123 = vmul.f32 %v2121, 1.442695
      %v2124 = vpow.pop %v2123
      %v2125 = vmul.f32 %v2122, 1.442695
      %v2126 = vpow.pop %v2125
      %v2127 = vadd.f32 %v2124, 1.0
      %v2128 = vadd.f32 %v2126, 1.0
      %v2129 = vrcp.pop %v2127
      %v2130 = vmul.f32 %v2127, %v2129
      %v2131 = vsub.f32 1.0, %v2130
      %v2132 = vmul.f32 %v2129, %v2131
      %v2133 = vadd.f32 %v2129, %v2132
      %vm2134 = vweird.f32 %v2127
      %vm2135 = vweird.f32 %v2129
      %vm2136 = vmor %vm2134, %vm2135
      %v2137 = vsel %vm2136, %v2129, %v2133
      %v2138 = vand.u32 2147483647, %v2127
      %vm2139 = vcmp.eq.f32.partialorder %v2138, 8.507059e+37
      %v2140 = vand.u32 %v2127, 2147483648
      %v2141 = vor.u32 1.1754944e-38, %v2140
      %v2142 = vsel %vm2139, %v2141, %v2137
      %v2143 = vmul.f32 1.0, %v2142
      %v2144 = vrcp.pop %v2128
      %v2145 = vmul.f32 %v2128, %v2144
      %v2146 = vsub.f32 1.0, %v2145
      %v2147 = vmul.f32 %v2144, %v2146
      %v2148 = vadd.f32 %v2144, %v2147
      %vm2149 = vweird.f32 %v2128
      %vm2150 = vweird.f32 %v2144
      %vm2151 = vmor %vm2149, %vm2150
      %v2152 = vsel %vm2151, %v2144, %v2148
      %v2153 = vand.u32 2147483647, %v2128
      %vm2154 = vcmp.eq.f32.partialorder %v2153, 8.507059e+37
      %v2155 = vand.u32 %v2128, 2147483648
      %v2156 = vor.u32 1.1754944e-38, %v2155
      %v2157 = vsel %vm2154, %v2156, %v2152
      %v2158 = vmul.f32 1.0, %v2157
      %v2159 = vmul.f32 %v2143, %v2058
      %v2160 = vadd.f32 %v2118, %v2159
      %v2161 = vtanh.pop %v2160
      %v2162 = vsub.f32 1.0, %v2158
      %v2163 = vmul.f32 %v2162, %v2161
      %v2164 = vmul.f32 %v2158, %v1819
      %v2165 = vadd.f32 %v2163, %v2164
      %s2166 = sadd.s32 %s1799, 1
      %p2167 = scmp.lt.s32.totalorder %s2166, 8
      %s2168 = scalar_select %p2167, 1, 0
      %v2169 = vstv %s2168
      %vm2170 = vcmp.eq.s32.totalorder %v2169, 1
      %v2171 = vsel %vm2170, %v2112, %v1818
      %s2172 = sadd.s32 %s1806, 3
      %p2173 = scmp.lt.s32.totalorder %s2172, 8
      %s2174 = scalar_select %p2173, 1, 0
      %v2175 = vstv %s2174
      %vm2176 = vcmp.eq.s32.totalorder %v2175, 1
      %v2177 = vsel %vm2176, %v2165, %v1819
      %2178 = vst [vmem:[#allocation4] sm:$0xff] %v2171
      %2179 = vst [vmem:[#allocation4 + $0x8] sm:$0xff] %v2177
      %s2180 = scalar_lea.vmem %s557, 8
      %2181 = vst [vmem:[%s2180] sm:$0xff] %v2171
      %s2182 = scalar_lea.vmem %s564, 24
      %2183 = vst [vmem:[%s2182] sm:$0xff] %v2177
      %v2184 = vld [vmem:[#allocation4] sm:$0xff]
      %v2185 = vld [vmem:[#allocation4 + $0x8] sm:$0xff]
      %2186 = vmatpush.msra.mxu0 %v1335
      %2187 = vmatpush.msra.mxu0 %v1329
      %2188 = vmatpush.msra.mxu0 %v1323
      %2189 = vmatpush.msra.mxu0 %v1317
      %2190 = vmatpush.msra.mxu0 %v1311
      %2191 = vmatpush.msra.mxu0 %v1305
      %2192 = vmatpush.msra.mxu0 %v1299
      %2193 = vmatpush.msra.mxu0 %v1293
      %2194 = vmatpush.msra.mxu0 %v1287
      %2195 = vmatpush.msra.mxu0 %v1281
      %2196 = vmatpush.msra.mxu0 %v1275
      %2197 = vmatpush.msra.mxu0 %v1269
      %2198 = vmatpush.msra.mxu0 %v1263
      %2199 = vmatpush.msra.mxu0 %v1257
      %2200 = vmatpush.msra.mxu0 %v1251
      %2201 = vmatpush.msra.mxu0 %v1245
      %2202 = vmatmul.f32.gmra.mxu0 %v2184
      %v2203 = vpop.f32.mrf.mxu0
      %v2204 = vadd.f32 %v1439, %v2203
      %2205 = vdwg.mxu0
      %2206 = vmatpush.msra.mxu0 %v1431
      %2207 = vmatpush.msra.mxu0 %v1425
      %2208 = vmatpush.msra.mxu0 %v1419
      %2209 = vmatpush.msra.mxu0 %v1413
      %2210 = vmatpush.msra.mxu0 %v1407
      %2211 = vmatpush.msra.mxu0 %v1401
      %2212 = vmatpush.msra.mxu0 %v1395
      %2213 = vmatpush.msra.mxu0 %v1389
      %2214 = vmatpush.msra.mxu0 %v1383
      %2215 = vmatpush.msra.mxu0 %v1377
      %2216 = vmatpush.msra.mxu0 %v1371
      %2217 = vmatpush.msra.mxu0 %v1365
      %2218 = vmatpush.msra.mxu0 %v1359
      %2219 = vmatpush.msra.mxu0 %v1353
      %2220 = vmatpush.msra.mxu0 %v1347
      %2221 = vmatpush.msra.mxu0 %v1341
      %2222 = vmatmul.f32.gmra.mxu0 %v2185
      %v2223 = vpop.f32.mrf.mxu0
      %v2224 = vadd.f32 %v2204, %v2223
      %2225 = vdwg.mxu0
      %2226 = vmatpush.msra.mxu0 %v1336
      %2227 = vmatpush.msra.mxu0 %v1330
      %2228 = vmatpush.msra.mxu0 %v1324
      %2229 = vmatpush.msra.mxu0 %v1318
      %2230 = vmatpush.msra.mxu0 %v1312
      %2231 = vmatpush.msra.mxu0 %v1306
      %2232 = vmatpush.msra.mxu0 %v1300
      %2233 = vmatpush.msra.mxu0 %v1294
      %2234 = vmatpush.msra.mxu0 %v1288
      %2235 = vmatpush.msra.mxu0 %v1282
      %2236 = vmatpush.msra.mxu0 %v1276
      %2237 = vmatpush.msra.mxu0 %v1270
      %2238 = vmatpush.msra.mxu0 %v1264
      %2239 = vmatpush.msra.mxu0 %v1258
      %2240 = vmatpush.msra.mxu0 %v1252
      %2241 = vmatpush.msra.mxu0 %v1246
      %2242 = vmatmul.f32.gmra.mxu0 %v2184
      %v2243 = vpop.f32.mrf.mxu0
      %v2244 = vadd.f32 %v1440, %v2243
      %2245 = vdwg.mxu0
      %2246 = vmatpush.msra.mxu0 %v1432
      %2247 = vmatpush.msra.mxu0 %v1426
      %2248 = vmatpush.msra.mxu0 %v1420
      %2249 = vmatpush.msra.mxu0 %v1414
      %2250 = vmatpush.msra.mxu0 %v1408
      %2251 = vmatpush.msra.mxu0 %v1402
      %2252 = vmatpush.msra.mxu0 %v1396
      %2253 = vmatpush.msra.mxu0 %v1390
      %2254 = vmatpush.msra.mxu0 %v1384
      %2255 = vmatpush.msra.mxu0 %v1378
      %2256 = vmatpush.msra.mxu0 %v1372
      %2257 = vmatpush.msra.mxu0 %v1366
      %2258 = vmatpush.msra.mxu0 %v1360
      %2259 = vmatpush.msra.mxu0 %v1354
      %2260 = vmatpush.msra.mxu0 %v1348
      %2261 = vmatpush.msra.mxu0 %v1342
      %2262 = vmatmul.f32.gmra.mxu0 %v2185
      %v2263 = vpop.f32.mrf.mxu0
      %v2264 = vadd.f32 %v2244, %v2263
      %2265 = vdwg.mxu0
      %2266 = vmatpush.msra.mxu0 %v1337
      %2267 = vmatpush.msra.mxu0 %v1331
      %2268 = vmatpush.msra.mxu0 %v1325
      %2269 = vmatpush.msra.mxu0 %v1319
      %2270 = vmatpush.msra.mxu0 %v1313
      %2271 = vmatpush.msra.mxu0 %v1307
      %2272 = vmatpush.msra.mxu0 %v1301
      %2273 = vmatpush.msra.mxu0 %v1295
      %2274 = vmatpush.msra.mxu0 %v1289
      %2275 = vmatpush.msra.mxu0 %v1283
      %2276 = vmatpush.msra.mxu0 %v1277
      %2277 = vmatpush.msra.mxu0 %v1271
      %2278 = vmatpush.msra.mxu0 %v1265
      %2279 = vmatpush.msra.mxu0 %v1259
      %2280 = vmatpush.msra.mxu0 %v1253
      %2281 = vmatpush.msra.mxu0 %v1247
      %2282 = vmatmul.f32.gmra.mxu0 %v2184
      %v2283 = vpop.f32.mrf.mxu0
      %v2284 = vadd.f32 %v1441, %v2283
      %2285 = vdwg.mxu0
      %2286 = vmatpush.msra.mxu0 %v1433
      %2287 = vmatpush.msra.mxu0 %v1427
      %2288 = vmatpush.msra.mxu0 %v1421
      %2289 = vmatpush.msra.mxu0 %v1415
      %2290 = vmatpush.msra.mxu0 %v1409
      %2291 = vmatpush.msra.mxu0 %v1403
      %2292 = vmatpush.msra.mxu0 %v1397
      %2293 = vmatpush.msra.mxu0 %v1391
      %2294 = vmatpush.msra.mxu0 %v1385
      %2295 = vmatpush.msra.mxu0 %v1379
      %2296 = vmatpush.msra.mxu0 %v1373
      %2297 = vmatpush.msra.mxu0 %v1367
      %2298 = vmatpush.msra.mxu0 %v1361
      %2299 = vmatpush.msra.mxu0 %v1355
      %2300 = vmatpush.msra.mxu0 %v1349
      %2301 = vmatpush.msra.mxu0 %v1343
      %2302 = vmatmul.f32.gmra.mxu0 %v2185
      %v2303 = vpop.f32.mrf.mxu0
      %v2304 = vadd.f32 %v2284, %v2303
      %2305 = vdwg.mxu0
      %2306 = vmatpush.msra.mxu0 %v1338
      %2307 = vmatpush.msra.mxu0 %v1332
      %2308 = vmatpush.msra.mxu0 %v1326
      %2309 = vmatpush.msra.mxu0 %v1320
      %2310 = vmatpush.msra.mxu0 %v1314
      %2311 = vmatpush.msra.mxu0 %v1308
      %2312 = vmatpush.msra.mxu0 %v1302
      %2313 = vmatpush.msra.mxu0 %v1296
      %2314 = vmatpush.msra.mxu0 %v1290
      %2315 = vmatpush.msra.mxu0 %v1284
      %2316 = vmatpush.msra.mxu0 %v1278
      %2317 = vmatpush.msra.mxu0 %v1272
      %2318 = vmatpush.msra.mxu0 %v1266
      %2319 = vmatpush.msra.mxu0 %v1260
      %2320 = vmatpush.msra.mxu0 %v1254
      %2321 = vmatpush.msra.mxu0 %v1248
      %2322 = vmatmul.f32.gmra.mxu0 %v2184
      %v2323 = vpop.f32.mrf.mxu0
      %v2324 = vadd.f32 %v1442, %v2323
      %2325 = vdwg.mxu0
      %2326 = vmatpush.msra.mxu0 %v1434
      %2327 = vmatpush.msra.mxu0 %v1428
      %2328 = vmatpush.msra.mxu0 %v1422
      %2329 = vmatpush.msra.mxu0 %v1416
      %2330 = vmatpush.msra.mxu0 %v1410
      %2331 = vmatpush.msra.mxu0 %v1404
      %2332 = vmatpush.msra.mxu0 %v1398
      %2333 = vmatpush.msra.mxu0 %v1392
      %2334 = vmatpush.msra.mxu0 %v1386
      %2335 = vmatpush.msra.mxu0 %v1380
      %2336 = vmatpush.msra.mxu0 %v1374
      %2337 = vmatpush.msra.mxu0 %v1368
      %2338 = vmatpush.msra.mxu0 %v1362
      %2339 = vmatpush.msra.mxu0 %v1356
      %2340 = vmatpush.msra.mxu0 %v1350
      %2341 = vmatpush.msra.mxu0 %v1344
      %2342 = vmatmul.f32.gmra.mxu0 %v2185
      %v2343 = vpop.f32.mrf.mxu0
      %v2344 = vadd.f32 %v2324, %v2343
      %2345 = vdwg.mxu0
      %2346 = vmatpush.msra.mxu0 %v1339
      %2347 = vmatpush.msra.mxu0 %v1333
      %2348 = vmatpush.msra.mxu0 %v1327
      %2349 = vmatpush.msra.mxu0 %v1321
      %2350 = vmatpush.msra.mxu0 %v1315
      %2351 = vmatpush.msra.mxu0 %v1309
      %2352 = vmatpush.msra.mxu0 %v1303
      %2353 = vmatpush.msra.mxu0 %v1297
      %2354 = vmatpush.msra.mxu0 %v1291
      %2355 = vmatpush.msra.mxu0 %v1285
      %2356 = vmatpush.msra.mxu0 %v1279
      %2357 = vmatpush.msra.mxu0 %v1273
      %2358 = vmatpush.msra.mxu0 %v1267
      %2359 = vmatpush.msra.mxu0 %v1261
      %2360 = vmatpush.msra.mxu0 %v1255
      %2361 = vmatpush.msra.mxu0 %v1249
      %2362 = vmatmul.f32.gmra.mxu0 %v2184
      %v2363 = vpop.f32.mrf.mxu0
      %v2364 = vadd.f32 %v1443, %v2363
      %2365 = vdwg.mxu0
      %2366 = vmatpush.msra.mxu0 %v1435
      %2367 = vmatpush.msra.mxu0 %v1429
      %2368 = vmatpush.msra.mxu0 %v1423
      %2369 = vmatpush.msra.mxu0 %v1417
      %2370 = vmatpush.msra.mxu0 %v1411
      %2371 = vmatpush.msra.mxu0 %v1405
      %2372 = vmatpush.msra.mxu0 %v1399
      %2373 = vmatpush.msra.mxu0 %v1393
      %2374 = vmatpush.msra.mxu0 %v1387
      %2375 = vmatpush.msra.mxu0 %v1381
      %2376 = vmatpush.msra.mxu0 %v1375
      %2377 = vmatpush.msra.mxu0 %v1369
      %2378 = vmatpush.msra.mxu0 %v1363
      %2379 = vmatpush.msra.mxu0 %v1357
      %2380 = vmatpush.msra.mxu0 %v1351
      %2381 = vmatpush.msra.mxu0 %v1345
      %2382 = vmatmul.f32.gmra.mxu0 %v2185
      %v2383 = vpop.f32.mrf.mxu0
      %v2384 = vadd.f32 %v2364, %v2383
      %2385 = vdwg.mxu0
      %2386 = vmatpush.msra.mxu0 %v1340
      %2387 = vmatpush.msra.mxu0 %v1334
      %2388 = vmatpush.msra.mxu0 %v1328
      %2389 = vmatpush.msra.mxu0 %v1322
      %2390 = vmatpush.msra.mxu0 %v1316
      %2391 = vmatpush.msra.mxu0 %v1310
      %2392 = vmatpush.msra.mxu0 %v1304
      %2393 = vmatpush.msra.mxu0 %v1298
      %2394 = vmatpush.msra.mxu0 %v1292
      %2395 = vmatpush.msra.mxu0 %v1286
      %2396 = vmatpush.msra.mxu0 %v1280
      %2397 = vmatpush.msra.mxu0 %v1274
      %2398 = vmatpush.msra.mxu0 %v1268
      %2399 = vmatpush.msra.mxu0 %v1262
      %2400 = vmatpush.msra.mxu0 %v1256
      %2401 = vmatpush.msra.mxu0 %v1250
      %2402 = vmatmul.f32.gmra.mxu0 %v2184
      %v2403 = vpop.f32.mrf.mxu0
      %v2404 = vadd.f32 %v1444, %v2403
      %2405 = vdwg.mxu0
      %2406 = vmatpush.msra.mxu0 %v1436
      %2407 = vmatpush.msra.mxu0 %v1430
      %2408 = vmatpush.msra.mxu0 %v1424
      %2409 = vmatpush.msra.mxu0 %v1418
      %2410 = vmatpush.msra.mxu0 %v1412
      %2411 = vmatpush.msra.mxu0 %v1406
      %2412 = vmatpush.msra.mxu0 %v1400
      %2413 = vmatpush.msra.mxu0 %v1394
      %2414 = vmatpush.msra.mxu0 %v1388
      %2415 = vmatpush.msra.mxu0 %v1382
      %2416 = vmatpush.msra.mxu0 %v1376
      %2417 = vmatpush.msra.mxu0 %v1370
      %2418 = vmatpush.msra.mxu0 %v1364
      %2419 = vmatpush.msra.mxu0 %v1358
      %2420 = vmatpush.msra.mxu0 %v1352
      %2421 = vmatpush.msra.mxu0 %v1346
      %2422 = vmatmul.f32.gmra.mxu0 %v2185
      %v2423 = vpop.f32.mrf.mxu0
      %v2424 = vadd.f32 %v2404, %v2423
      %2425 = vdwg.mxu0
      %s2426 = smul.u32 2, 3
      %s2427 = smul.addr %s2426, 8
      %s2428 = scalar_lea.vmem [#allocation2], %s2427
      %v2429 = vld [vmem:[%s2428] sm:$0xff]
      %v2430 = vld [vmem:[%s2428 + $0x8] sm:$0xff]
      %v2431 = vld [vmem:[%s2428 + $0x10] sm:$0xff]
      %v2432 = vadd.f32 %v2429, %v2224
      %v2433 = vadd.f32 %v2430, %v2264
      %v2434 = vxor.u32 %v2432, 2147483648
      %v2435 = vxor.u32 %v2433, 2147483648
      %v2436 = vmul.f32 %v2434, 1.442695
      %v2437 = vpow.pop %v2436
      %v2438 = vmul.f32 %v2435, 1.442695
      %v2439 = vpow.pop %v2438
      %v2440 = vadd.f32 %v2437, 1.0
      %v2441 = vadd.f32 %v2439, 1.0
      %v2442 = vrcp.pop %v2440
      %v2443 = vmul.f32 %v2440, %v2442
      %v2444 = vsub.f32 1.0, %v2443
      %v2445 = vmul.f32 %v2442, %v2444
      %v2446 = vadd.f32 %v2442, %v2445
      %vm2447 = vweird.f32 %v2440
      %vm2448 = vweird.f32 %v2442
      %vm2449 = vmor %vm2447, %vm2448
      %v2450 = vsel %vm2449, %v2442, %v2446
      %v2451 = vand.u32 2147483647, %v2440
      %vm2452 = vcmp.eq.f32.partialorder %v2451, 8.507059e+37
      %v2453 = vand.u32 %v2440, 2147483648
      %v2454 = vor.u32 1.1754944e-38, %v2453
      %v2455 = vsel %vm2452, %v2454, %v2450
      %v2456 = vmul.f32 1.0, %v2455
      %v2457 = vrcp.pop %v2441
      %v2458 = vmul.f32 %v2441, %v2457
      %v2459 = vsub.f32 1.0, %v2458
      %v2460 = vmul.f32 %v2457, %v2459
      %v2461 = vadd.f32 %v2457, %v2460
      %vm2462 = vweird.f32 %v2441
      %vm2463 = vweird.f32 %v2457
      %vm2464 = vmor %vm2462, %vm2463
      %v2465 = vsel %vm2464, %v2457, %v2461
      %v2466 = vand.u32 2147483647, %v2441
      %vm2467 = vcmp.eq.f32.partialorder %v2466, 8.507059e+37
      %v2468 = vand.u32 %v2441, 2147483648
      %v2469 = vor.u32 1.1754944e-38, %v2468
      %v2470 = vsel %vm2467, %v2469, %v2465
      %v2471 = vmul.f32 1.0, %v2470
      %v2472 = vmul.f32 %v2456, %v2304
      %v2473 = vadd.f32 %v2431, %v2472
      %v2474 = vtanh.pop %v2473
      %v2475 = vsub.f32 1.0, %v2471
      %v2476 = vmul.f32 %v2475, %v2474
      %v2477 = vmul.f32 %v2471, %v2184
      %v2478 = vadd.f32 %v2476, %v2477
      %s2479 = smul.addr %s2426, 8
      %s2480 = scalar_lea.vmem [#allocation3], %s2479
      %v2481 = vld [vmem:[%s2480] sm:$0xff]
      %v2482 = vld [vmem:[%s2480 + $0x8] sm:$0xff]
      %v2483 = vld [vmem:[%s2480 + $0x10] sm:$0xff]
      %v2484 = vadd.f32 %v2481, %v2344
      %v2485 = vadd.f32 %v2482, %v2384
      %v2486 = vxor.u32 %v2484, 2147483648
      %v2487 = vxor.u32 %v2485, 2147483648
      %v2488 = vmul.f32 %v2486, 1.442695
      %v2489 = vpow.pop %v2488
      %v2490 = vmul.f32 %v2487, 1.442695
      %v2491 = vpow.pop %v2490
      %v2492 = vadd.f32 %v2489, 1.0
      %v2493 = vadd.f32 %v2491, 1.0
      %v2494 = vrcp.pop %v2492
      %v2495 = vmul.f32 %v2492, %v2494
      %v2496 = vsub.f32 1.0, %v2495
      %v2497 = vmul.f32 %v2494, %v2496
      %v2498 = vadd.f32 %v2494, %v2497
      %vm2499 = vweird.f32 %v2492
      %vm2500 = vweird.f32 %v2494
      %vm2501 = vmor %vm2499, %vm2500
      %v2502 = vsel %vm2501, %v2494, %v2498
      %v2503 = vand.u32 2147483647, %v2492
      %vm2504 = vcmp.eq.f32.partialorder %v2503, 8.507059e+37
      %v2505 = vand.u32 %v2492, 2147483648
      %v2506 = vor.u32 1.1754944e-38, %v2505
      %v2507 = vsel %vm2504, %v2506, %v2502
      %v2508 = vmul.f32 1.0, %v2507
      %v2509 = vrcp.pop %v2493
      %v2510 = vmul.f32 %v2493, %v2509
      %v2511 = vsub.f32 1.0, %v2510
      %v2512 = vmul.f32 %v2509, %v2511
      %v2513 = vadd.f32 %v2509, %v2512
      %vm2514 = vweird.f32 %v2493
      %vm2515 = vweird.f32 %v2509
      %vm2516 = vmor %vm2514, %vm2515
      %v2517 = vsel %vm2516, %v2509, %v2513
      %v2518 = vand.u32 2147483647, %v2493
      %vm2519 = vcmp.eq.f32.partialorder %v2518, 8.507059e+37
      %v2520 = vand.u32 %v2493, 2147483648
      %v2521 = vor.u32 1.1754944e-38, %v2520
      %v2522 = vsel %vm2519, %v2521, %v2517
      %v2523 = vmul.f32 1.0, %v2522
      %v2524 = vmul.f32 %v2508, %v2424
      %v2525 = vadd.f32 %v2483, %v2524
      %v2526 = vtanh.pop %v2525
      %v2527 = vsub.f32 1.0, %v2523
      %v2528 = vmul.f32 %v2527, %v2526
      %v2529 = vmul.f32 %v2523, %v2185
      %v2530 = vadd.f32 %v2528, %v2529
      %s2531 = sadd.s32 %s1799, 2
      %p2532 = scmp.lt.s32.totalorder %s2531, 8
      %s2533 = scalar_select %p2532, 1, 0
      %v2534 = vstv %s2533
      %vm2535 = vcmp.eq.s32.totalorder %v2534, 1
      %v2536 = vsel %vm2535, %v2478, %v2184
      %s2537 = sadd.s32 %s1806, 2
      %p2538 = scmp.lt.s32.totalorder %s2537, 8
      %s2539 = scalar_select %p2538, 1, 0
      %v2540 = vstv %s2539
      %vm2541 = vcmp.eq.s32.totalorder %v2540, 1
      %v2542 = vsel %vm2541, %v2530, %v2185
      %2543 = vst [vmem:[#allocation4] sm:$0xff] %v2536
      %2544 = vst [vmem:[#allocation4 + $0x8] sm:$0xff] %v2542
      %s2545 = scalar_lea.vmem %s557, 16
      %2546 = vst [vmem:[%s2545] sm:$0xff] %v2536
      %s2547 = scalar_lea.vmem %s564, 16
      %2548 = vst [vmem:[%s2547] sm:$0xff] %v2542
      %v2549 = vld [vmem:[#allocation4] sm:$0xff]
      %v2550 = vld [vmem:[#allocation4 + $0x8] sm:$0xff]
      %2551 = vmatpush.msra.mxu0 %v1335
      %2552 = vmatpush.msra.mxu0 %v1329
      %2553 = vmatpush.msra.mxu0 %v1323
      %2554 = vmatpush.msra.mxu0 %v1317
      %2555 = vmatpush.msra.mxu0 %v1311
      %2556 = vmatpush.msra.mxu0 %v1305
      %2557 = vmatpush.msra.mxu0 %v1299
      %2558 = vmatpush.msra.mxu0 %v1293
      %2559 = vmatpush.msra.mxu0 %v1287
      %2560 = vmatpush.msra.mxu0 %v1281
      %2561 = vmatpush.msra.mxu0 %v1275
      %2562 = vmatpush.msra.mxu0 %v1269
      %2563 = vmatpush.msra.mxu0 %v1263
      %2564 = vmatpush.msra.mxu0 %v1257
      %2565 = vmatpush.msra.mxu0 %v1251
      %2566 = vmatpush.msra.mxu0 %v1245
      %2567 = vmatmul.f32.gmra.mxu0 %v2549
      %v2568 = vpop.f32.mrf.mxu0
      %v2569 = vadd.f32 %v1439, %v2568
      %2570 = vdwg.mxu0
      %2571 = vmatpush.msra.mxu0 %v1431
      %2572 = vmatpush.msra.mxu0 %v1425
      %2573 = vmatpush.msra.mxu0 %v1419
      %2574 = vmatpush.msra.mxu0 %v1413
      %2575 = vmatpush.msra.mxu0 %v1407
      %2576 = vmatpush.msra.mxu0 %v1401
      %2577 = vmatpush.msra.mxu0 %v1395
      %2578 = vmatpush.msra.mxu0 %v1389
      %2579 = vmatpush.msra.mxu0 %v1383
      %2580 = vmatpush.msra.mxu0 %v1377
      %2581 = vmatpush.msra.mxu0 %v1371
      %2582 = vmatpush.msra.mxu0 %v1365
      %2583 = vmatpush.msra.mxu0 %v1359
      %2584 = vmatpush.msra.mxu0 %v1353
      %2585 = vmatpush.msra.mxu0 %v1347
      %2586 = vmatpush.msra.mxu0 %v1341
      %2587 = vmatmul.f32.gmra.mxu0 %v2550
      %v2588 = vpop.f32.mrf.mxu0
      %v2589 = vadd.f32 %v2569, %v2588
      %2590 = vdwg.mxu0
      %2591 = vmatpush.msra.mxu0 %v1336
      %2592 = vmatpush.msra.mxu0 %v1330
      %2593 = vmatpush.msra.mxu0 %v1324
      %2594 = vmatpush.msra.mxu0 %v1318
      %2595 = vmatpush.msra.mxu0 %v1312
      %2596 = vmatpush.msra.mxu0 %v1306
      %2597 = vmatpush.msra.mxu0 %v1300
      %2598 = vmatpush.msra.mxu0 %v1294
      %2599 = vmatpush.msra.mxu0 %v1288
      %2600 = vmatpush.msra.mxu0 %v1282
      %2601 = vmatpush.msra.mxu0 %v1276
      %2602 = vmatpush.msra.mxu0 %v1270
      %2603 = vmatpush.msra.mxu0 %v1264
      %2604 = vmatpush.msra.mxu0 %v1258
      %2605 = vmatpush.msra.mxu0 %v1252
      %2606 = vmatpush.msra.mxu0 %v1246
      %2607 = vmatmul.f32.gmra.mxu0 %v2549
      %v2608 = vpop.f32.mrf.mxu0
      %v2609 = vadd.f32 %v1440, %v2608
      %2610 = vdwg.mxu0
      %2611 = vmatpush.msra.mxu0 %v1432
      %2612 = vmatpush.msra.mxu0 %v1426
      %2613 = vmatpush.msra.mxu0 %v1420
      %2614 = vmatpush.msra.mxu0 %v1414
      %2615 = vmatpush.msra.mxu0 %v1408
      %2616 = vmatpush.msra.mxu0 %v1402
      %2617 = vmatpush.msra.mxu0 %v1396
      %2618 = vmatpush.msra.mxu0 %v1390
      %2619 = vmatpush.msra.mxu0 %v1384
      %2620 = vmatpush.msra.mxu0 %v1378
      %2621 = vmatpush.msra.mxu0 %v1372
      %2622 = vmatpush.msra.mxu0 %v1366
      %2623 = vmatpush.msra.mxu0 %v1360
      %2624 = vmatpush.msra.mxu0 %v1354
      %2625 = vmatpush.msra.mxu0 %v1348
      %2626 = vmatpush.msra.mxu0 %v1342
      %2627 = vmatmul.f32.gmra.mxu0 %v2550
      %v2628 = vpop.f32.mrf.mxu0
      %v2629 = vadd.f32 %v2609, %v2628
      %2630 = vdwg.mxu0
      %2631 = vmatpush.msra.mxu0 %v1337
      %2632 = vmatpush.msra.mxu0 %v1331
      %2633 = vmatpush.msra.mxu0 %v1325
      %2634 = vmatpush.msra.mxu0 %v1319
      %2635 = vmatpush.msra.mxu0 %v1313
      %2636 = vmatpush.msra.mxu0 %v1307
      %2637 = vmatpush.msra.mxu0 %v1301
      %2638 = vmatpush.msra.mxu0 %v1295
      %2639 = vmatpush.msra.mxu0 %v1289
      %2640 = vmatpush.msra.mxu0 %v1283
      %2641 = vmatpush.msra.mxu0 %v1277
      %2642 = vmatpush.msra.mxu0 %v1271
      %2643 = vmatpush.msra.mxu0 %v1265
      %2644 = vmatpush.msra.mxu0 %v1259
      %2645 = vmatpush.msra.mxu0 %v1253
      %2646 = vmatpush.msra.mxu0 %v1247
      %2647 = vmatmul.f32.gmra.mxu0 %v2549
      %v2648 = vpop.f32.mrf.mxu0
      %v2649 = vadd.f32 %v1441, %v2648
      %2650 = vdwg.mxu0
      %2651 = vmatpush.msra.mxu0 %v1433
      %2652 = vmatpush.msra.mxu0 %v1427
      %2653 = vmatpush.msra.mxu0 %v1421
      %2654 = vmatpush.msra.mxu0 %v1415
      %2655 = vmatpush.msra.mxu0 %v1409
      %2656 = vmatpush.msra.mxu0 %v1403
      %2657 = vmatpush.msra.mxu0 %v1397
      %2658 = vmatpush.msra.mxu0 %v1391
      %2659 = vmatpush.msra.mxu0 %v1385
      %2660 = vmatpush.msra.mxu0 %v1379
      %2661 = vmatpush.msra.mxu0 %v1373
      %2662 = vmatpush.msra.mxu0 %v1367
      %2663 = vmatpush.msra.mxu0 %v1361
      %2664 = vmatpush.msra.mxu0 %v1355
      %2665 = vmatpush.msra.mxu0 %v1349
      %2666 = vmatpush.msra.mxu0 %v1343
      %2667 = vmatmul.f32.gmra.mxu0 %v2550
      %v2668 = vpop.f32.mrf.mxu0
      %v2669 = vadd.f32 %v2649, %v2668
      %2670 = vdwg.mxu0
      %2671 = vmatpush.msra.mxu0 %v1338
      %2672 = vmatpush.msra.mxu0 %v1332
      %2673 = vmatpush.msra.mxu0 %v1326
      %2674 = vmatpush.msra.mxu0 %v1320
      %2675 = vmatpush.msra.mxu0 %v1314
      %2676 = vmatpush.msra.mxu0 %v1308
      %2677 = vmatpush.msra.mxu0 %v1302
      %2678 = vmatpush.msra.mxu0 %v1296
      %2679 = vmatpush.msra.mxu0 %v1290
      %2680 = vmatpush.msra.mxu0 %v1284
      %2681 = vmatpush.msra.mxu0 %v1278
      %2682 = vmatpush.msra.mxu0 %v1272
      %2683 = vmatpush.msra.mxu0 %v1266
      %2684 = vmatpush.msra.mxu0 %v1260
      %2685 = vmatpush.msra.mxu0 %v1254
      %2686 = vmatpush.msra.mxu0 %v1248
      %2687 = vmatmul.f32.gmra.mxu0 %v2549
      %v2688 = vpop.f32.mrf.mxu0
      %v2689 = vadd.f32 %v1442, %v2688
      %2690 = vdwg.mxu0
      %2691 = vmatpush.msra.mxu0 %v1434
      %2692 = vmatpush.msra.mxu0 %v1428
      %2693 = vmatpush.msra.mxu0 %v1422
      %2694 = vmatpush.msra.mxu0 %v1416
      %2695 = vmatpush.msra.mxu0 %v1410
      %2696 = vmatpush.msra.mxu0 %v1404
      %2697 = vmatpush.msra.mxu0 %v1398
      %2698 = vmatpush.msra.mxu0 %v1392
      %2699 = vmatpush.msra.mxu0 %v1386
      %2700 = vmatpush.msra.mxu0 %v1380
      %2701 = vmatpush.msra.mxu0 %v1374
      %2702 = vmatpush.msra.mxu0 %v1368
      %2703 = vmatpush.msra.mxu0 %v1362
      %2704 = vmatpush.msra.mxu0 %v1356
      %2705 = vmatpush.msra.mxu0 %v1350
      %2706 = vmatpush.msra.mxu0 %v1344
      %2707 = vmatmul.f32.gmra.mxu0 %v2550
      %v2708 = vpop.f32.mrf.mxu0
      %v2709 = vadd.f32 %v2689, %v2708
      %2710 = vdwg.mxu0
      %2711 = vmatpush.msra.mxu0 %v1339
      %2712 = vmatpush.msra.mxu0 %v1333
      %2713 = vmatpush.msra.mxu0 %v1327
      %2714 = vmatpush.msra.mxu0 %v1321
      %2715 = vmatpush.msra.mxu0 %v1315
      %2716 = vmatpush.msra.mxu0 %v1309
      %2717 = vmatpush.msra.mxu0 %v1303
      %2718 = vmatpush.msra.mxu0 %v1297
      %2719 = vmatpush.msra.mxu0 %v1291
      %2720 = vmatpush.msra.mxu0 %v1285
      %2721 = vmatpush.msra.mxu0 %v1279
      %2722 = vmatpush.msra.mxu0 %v1273
      %2723 = vmatpush.msra.mxu0 %v1267
      %2724 = vmatpush.msra.mxu0 %v1261
      %2725 = vmatpush.msra.mxu0 %v1255
      %2726 = vmatpush.msra.mxu0 %v1249
      %2727 = vmatmul.f32.gmra.mxu0 %v2549
      %v2728 = vpop.f32.mrf.mxu0
      %v2729 = vadd.f32 %v1443, %v2728
      %2730 = vdwg.mxu0
      %2731 = vmatpush.msra.mxu0 %v1435
      %2732 = vmatpush.msra.mxu0 %v1429
      %2733 = vmatpush.msra.mxu0 %v1423
      %2734 = vmatpush.msra.mxu0 %v1417
      %2735 = vmatpush.msra.mxu0 %v1411
      %2736 = vmatpush.msra.mxu0 %v1405
      %2737 = vmatpush.msra.mxu0 %v1399
      %2738 = vmatpush.msra.mxu0 %v1393
      %2739 = vmatpush.msra.mxu0 %v1387
      %2740 = vmatpush.msra.mxu0 %v1381
      %2741 = vmatpush.msra.mxu0 %v1375
      %2742 = vmatpush.msra.mxu0 %v1369
      %2743 = vmatpush.msra.mxu0 %v1363
      %2744 = vmatpush.msra.mxu0 %v1357
      %2745 = vmatpush.msra.mxu0 %v1351
      %2746 = vmatpush.msra.mxu0 %v1345
      %2747 = vmatmul.f32.gmra.mxu0 %v2550
      %v2748 = vpop.f32.mrf.mxu0
      %v2749 = vadd.f32 %v2729, %v2748
      %2750 = vdwg.mxu0
      %2751 = vmatpush.msra.mxu0 %v1340
      %2752 = vmatpush.msra.mxu0 %v1334
      %2753 = vmatpush.msra.mxu0 %v1328
      %2754 = vmatpush.msra.mxu0 %v1322
      %2755 = vmatpush.msra.mxu0 %v1316
      %2756 = vmatpush.msra.mxu0 %v1310
      %2757 = vmatpush.msra.mxu0 %v1304
      %2758 = vmatpush.msra.mxu0 %v1298
      %2759 = vmatpush.msra.mxu0 %v1292
      %2760 = vmatpush.msra.mxu0 %v1286
      %2761 = vmatpush.msra.mxu0 %v1280
      %2762 = vmatpush.msra.mxu0 %v1274
      %2763 = vmatpush.msra.mxu0 %v1268
      %2764 = vmatpush.msra.mxu0 %v1262
      %2765 = vmatpush.msra.mxu0 %v1256
      %2766 = vmatpush.msra.mxu0 %v1250
      %2767 = vmatmul.f32.gmra.mxu0 %v2549
      %v2768 = vpop.f32.mrf.mxu0
      %v2769 = vadd.f32 %v1444, %v2768
      %2770 = vdwg.mxu0
      %2771 = vmatpush.msra.mxu0 %v1436
      %2772 = vmatpush.msra.mxu0 %v1430
      %2773 = vmatpush.msra.mxu0 %v1424
      %2774 = vmatpush.msra.mxu0 %v1418
      %2775 = vmatpush.msra.mxu0 %v1412
      %2776 = vmatpush.msra.mxu0 %v1406
      %2777 = vmatpush.msra.mxu0 %v1400
      %2778 = vmatpush.msra.mxu0 %v1394
      %2779 = vmatpush.msra.mxu0 %v1388
      %2780 = vmatpush.msra.mxu0 %v1382
      %2781 = vmatpush.msra.mxu0 %v1376
      %2782 = vmatpush.msra.mxu0 %v1370
      %2783 = vmatpush.msra.mxu0 %v1364
      %2784 = vmatpush.msra.mxu0 %v1358
      %2785 = vmatpush.msra.mxu0 %v1352
      %2786 = vmatpush.msra.mxu0 %v1346
      %2787 = vmatmul.f32.gmra.mxu0 %v2550
      %v2788 = vpop.f32.mrf.mxu0
      %v2789 = vadd.f32 %v2769, %v2788
      %2790 = vdwg.mxu0
      %s2791 = smul.addr %s2113, 8
      %s2792 = scalar_lea.vmem [#allocation2], %s2791
      %v2793 = vld [vmem:[%s2792] sm:$0xff]
      %v2794 = vld [vmem:[%s2792 + $0x8] sm:$0xff]
      %v2795 = vld [vmem:[%s2792 + $0x10] sm:$0xff]
      %v2796 = vadd.f32 %v2793, %v2589
      %v2797 = vadd.f32 %v2794, %v2629
      %v2798 = vxor.u32 %v2796, 2147483648
      %v2799 = vxor.u32 %v2797, 2147483648
      %v2800 = vmul.f32 %v2798, 1.442695
      %v2801 = vpow.pop %v2800
      %v2802 = vmul.f32 %v2799, 1.442695
      %v2803 = vpow.pop %v2802
      %v2804 = vadd.f32 %v2801, 1.0
      %v2805 = vadd.f32 %v2803, 1.0
      %v2806 = vrcp.pop %v2804
      %v2807 = vmul.f32 %v2804, %v2806
      %v2808 = vsub.f32 1.0, %v2807
      %v2809 = vmul.f32 %v2806, %v2808
      %v2810 = vadd.f32 %v2806, %v2809
      %vm2811 = vweird.f32 %v2804
      %vm2812 = vweird.f32 %v2806
      %vm2813 = vmor %vm2811, %vm2812
      %v2814 = vsel %vm2813, %v2806, %v2810
      %v2815 = vand.u32 2147483647, %v2804
      %vm2816 = vcmp.eq.f32.partialorder %v2815, 8.507059e+37
      %v2817 = vand.u32 %v2804, 2147483648
      %v2818 = vor.u32 1.1754944e-38, %v2817
      %v2819 = vsel %vm2816, %v2818, %v2814
      %v2820 = vmul.f32 1.0, %v2819
      %v2821 = vrcp.pop %v2805
      %v2822 = vmul.f32 %v2805, %v2821
      %v2823 = vsub.f32 1.0, %v2822
      %v2824 = vmul.f32 %v2821, %v2823
      %v2825 = vadd.f32 %v2821, %v2824
      %vm2826 = vweird.f32 %v2805
      %vm2827 = vweird.f32 %v2821
      %vm2828 = vmor %vm2826, %vm2827
      %v2829 = vsel %vm2828, %v2821, %v2825
      %v2830 = vand.u32 2147483647, %v2805
      %vm2831 = vcmp.eq.f32.partialorder %v2830, 8.507059e+37
      %v2832 = vand.u32 %v2805, 2147483648
      %v2833 = vor.u32 1.1754944e-38, %v2832
      %v2834 = vsel %vm2831, %v2833, %v2829
      %v2835 = vmul.f32 1.0, %v2834
      %v2836 = vmul.f32 %v2820, %v2669
      %v2837 = vadd.f32 %v2795, %v2836
      %v2838 = vtanh.pop %v2837
      %v2839 = vsub.f32 1.0, %v2835
      %v2840 = vmul.f32 %v2839, %v2838
      %v2841 = vmul.f32 %v2835, %v2549
      %v2842 = vadd.f32 %v2840, %v2841
      %s2843 = smul.addr %s2060, 8
      %s2844 = scalar_lea.vmem [#allocation3], %s2843
      %v2845 = vld [vmem:[%s2844] sm:$0xff]
      %v2846 = vld [vmem:[%s2844 + $0x8] sm:$0xff]
      %v2847 = vld [vmem:[%s2844 + $0x10] sm:$0xff]
      %v2848 = vadd.f32 %v2845, %v2709
      %v2849 = vadd.f32 %v2846, %v2749
      %v2850 = vxor.u32 %v2848, 2147483648
      %v2851 = vxor.u32 %v2849, 2147483648
      %v2852 = vmul.f32 %v2850, 1.442695
      %v2853 = vpow.pop %v2852
      %v2854 = vmul.f32 %v2851, 1.442695
      %v2855 = vpow.pop %v2854
      %v2856 = vadd.f32 %v2853, 1.0
      %v2857 = vadd.f32 %v2855, 1.0
      %v2858 = vrcp.pop %v2856
      %v2859 = vmul.f32 %v2856, %v2858
      %v2860 = vsub.f32 1.0, %v2859
      %v2861 = vmul.f32 %v2858, %v2860
      %v2862 = vadd.f32 %v2858, %v2861
      %vm2863 = vweird.f32 %v2856
      %vm2864 = vweird.f32 %v2858
      %vm2865 = vmor %vm2863, %vm2864
      %v2866 = vsel %vm2865, %v2858, %v2862
      %v2867 = vand.u32 2147483647, %v2856
      %vm2868 = vcmp.eq.f32.partialorder %v2867, 8.507059e+37
      %v2869 = vand.u32 %v2856, 2147483648
      %v2870 = vor.u32 1.1754944e-38, %v2869
      %v2871 = vsel %vm2868, %v2870, %v2866
      %v2872 = vmul.f32 1.0, %v2871
      %v2873 = vrcp.pop %v2857
      %v2874 = vmul.f32 %v2857, %v2873
      %v2875 = vsub.f32 1.0, %v2874
      %v2876 = vmul.f32 %v2873, %v2875
      %v2877 = vadd.f32 %v2873, %v2876
      %vm2878 = vweird.f32 %v2857
      %vm2879 = vweird.f32 %v2873
      %vm2880 = vmor %vm2878, %vm2879
      %v2881 = vsel %vm2880, %v2873, %v2877
      %v2882 = vand.u32 2147483647, %v2857
      %vm2883 = vcmp.eq.f32.partialorder %v2882, 8.507059e+37
      %v2884 = vand.u32 %v2857, 2147483648
      %v2885 = vor.u32 1.1754944e-38, %v2884
      %v2886 = vsel %vm2883, %v2885, %v2881
      %v2887 = vmul.f32 1.0, %v2886
      %v2888 = vmul.f32 %v2872, %v2789
      %v2889 = vadd.f32 %v2847, %v2888
      %v2890 = vtanh.pop %v2889
      %v2891 = vsub.f32 1.0, %v2887
      %v2892 = vmul.f32 %v2891, %v2890
      %v2893 = vmul.f32 %v2887, %v2550
      %v2894 = vadd.f32 %v2892, %v2893
      %s2895 = sadd.s32 %s1799, 3
      %p2896 = scmp.lt.s32.totalorder %s2895, 8
      %s2897 = scalar_select %p2896, 1, 0
      %v2898 = vstv %s2897
      %vm2899 = vcmp.eq.s32.totalorder %v2898, 1
      %v2900 = vsel %vm2899, %v2842, %v2549
      %s2901 = sadd.s32 %s1806, 1
      %p2902 = scmp.lt.s32.totalorder %s2901, 8
      %s2903 = scalar_select %p2902, 1, 0
      %v2904 = vstv %s2903
      %vm2905 = vcmp.eq.s32.totalorder %v2904, 1
      %v2906 = vsel %vm2905, %v2894, %v2550
      %2907 = vst [vmem:[#allocation4] sm:$0xff] %v2900
      %2908 = vst [vmem:[#allocation4 + $0x8] sm:$0xff] %v2906
      %s2909 = scalar_lea.vmem %s557, 24
      %2910 = vst [vmem:[%s2909] sm:$0xff] %v2900
      %s2911 = scalar_lea.vmem %s564, 8
      %2912 = vst [vmem:[%s2911] sm:$0xff] %v2906
      %v2913 = vld [vmem:[#allocation4] sm:$0xff]
      %v2914 = vld [vmem:[#allocation4 + $0x8] sm:$0xff]
      %2915 = vmatpush.msra.mxu0 %v1335
      %2916 = vmatpush.msra.mxu0 %v1329
      %2917 = vmatpush.msra.mxu0 %v1323
      %2918 = vmatpush.msra.mxu0 %v1317
      %2919 = vmatpush.msra.mxu0 %v1311
      %2920 = vmatpush.msra.mxu0 %v1305
      %2921 = vmatpush.msra.mxu0 %v1299
      %2922 = vmatpush.msra.mxu0 %v1293
      %2923 = vmatpush.msra.mxu0 %v1287
      %2924 = vmatpush.msra.mxu0 %v1281
      %2925 = vmatpush.msra.mxu0 %v1275
      %2926 = vmatpush.msra.mxu0 %v1269
      %2927 = vmatpush.msra.mxu0 %v1263
      %2928 = vmatpush.msra.mxu0 %v1257
      %2929 = vmatpush.msra.mxu0 %v1251
      %2930 = vmatpush.msra.mxu0 %v1245
      %2931 = vmatmul.f32.gmra.mxu0 %v2913
      %v2932 = vpop.f32.mrf.mxu0
      %v2933 = vadd.f32 %v1439, %v2932
      %2934 = vdwg.mxu0
      %2935 = vmatpush.msra.mxu0 %v1431
      %2936 = vmatpush.msra.mxu0 %v1425
      %2937 = vmatpush.msra.mxu0 %v1419
      %2938 = vmatpush.msra.mxu0 %v1413
      %2939 = vmatpush.msra.mxu0 %v1407
      %2940 = vmatpush.msra.mxu0 %v1401
      %2941 = vmatpush.msra.mxu0 %v1395
      %2942 = vmatpush.msra.mxu0 %v1389
      %2943 = vmatpush.msra.mxu0 %v1383
      %2944 = vmatpush.msra.mxu0 %v1377
      %2945 = vmatpush.msra.mxu0 %v1371
      %2946 = vmatpush.msra.mxu0 %v1365
      %2947 = vmatpush.msra.mxu0 %v1359
      %2948 = vmatpush.msra.mxu0 %v1353
      %2949 = vmatpush.msra.mxu0 %v1347
      %2950 = vmatpush.msra.mxu0 %v1341
      %2951 = vmatmul.f32.gmra.mxu0 %v2914
      %v2952 = vpop.f32.mrf.mxu0
      %v2953 = vadd.f32 %v2933, %v2952
      %2954 = vdwg.mxu0
      %2955 = vmatpush.msra.mxu0 %v1336
      %2956 = vmatpush.msra.mxu0 %v1330
      %2957 = vmatpush.msra.mxu0 %v1324
      %2958 = vmatpush.msra.mxu0 %v1318
      %2959 = vmatpush.msra.mxu0 %v1312
      %2960 = vmatpush.msra.mxu0 %v1306
      %2961 = vmatpush.msra.mxu0 %v1300
      %2962 = vmatpush.msra.mxu0 %v1294
      %2963 = vmatpush.msra.mxu0 %v1288
      %2964 = vmatpush.msra.mxu0 %v1282
      %2965 = vmatpush.msra.mxu0 %v1276
      %2966 = vmatpush.msra.mxu0 %v1270
      %2967 = vmatpush.msra.mxu0 %v1264
      %2968 = vmatpush.msra.mxu0 %v1258
      %2969 = vmatpush.msra.mxu0 %v1252
      %2970 = vmatpush.msra.mxu0 %v1246
      %2971 = vmatmul.f32.gmra.mxu0 %v2913
      %v2972 = vpop.f32.mrf.mxu0
      %v2973 = vadd.f32 %v1440, %v2972
      %2974 = vdwg.mxu0
      %2975 = vmatpush.msra.mxu0 %v1432
      %2976 = vmatpush.msra.mxu0 %v1426
      %2977 = vmatpush.msra.mxu0 %v1420
      %2978 = vmatpush.msra.mxu0 %v1414
      %2979 = vmatpush.msra.mxu0 %v1408
      %2980 = vmatpush.msra.mxu0 %v1402
      %2981 = vmatpush.msra.mxu0 %v1396
      %2982 = vmatpush.msra.mxu0 %v1390
      %2983 = vmatpush.msra.mxu0 %v1384
      %2984 = vmatpush.msra.mxu0 %v1378
      %2985 = vmatpush.msra.mxu0 %v1372
      %2986 = vmatpush.msra.mxu0 %v1366
      %2987 = vmatpush.msra.mxu0 %v1360
      %2988 = vmatpush.msra.mxu0 %v1354
      %2989 = vmatpush.msra.mxu0 %v1348
      %2990 = vmatpush.msra.mxu0 %v1342
      %2991 = vmatmul.f32.gmra.mxu0 %v2914
      %v2992 = vpop.f32.mrf.mxu0
      %v2993 = vadd.f32 %v2973, %v2992
      %2994 = vdwg.mxu0
      %2995 = vmatpush.msra.mxu0 %v1337
      %2996 = vmatpush.msra.mxu0 %v1331
      %2997 = vmatpush.msra.mxu0 %v1325
      %2998 = vmatpush.msra.mxu0 %v1319
      %2999 = vmatpush.msra.mxu0 %v1313
      %3000 = vmatpush.msra.mxu0 %v1307
      %3001 = vmatpush.msra.mxu0 %v1301
      %3002 = vmatpush.msra.mxu0 %v1295
      %3003 = vmatpush.msra.mxu0 %v1289
      %3004 = vmatpush.msra.mxu0 %v1283
      %3005 = vmatpush.msra.mxu0 %v1277
      %3006 = vmatpush.msra.mxu0 %v1271
      %3007 = vmatpush.msra.mxu0 %v1265
      %3008 = vmatpush.msra.mxu0 %v1259
      %3009 = vmatpush.msra.mxu0 %v1253
      %3010 = vmatpush.msra.mxu0 %v1247
      %3011 = vmatmul.f32.gmra.mxu0 %v2913
      %v3012 = vpop.f32.mrf.mxu0
      %v3013 = vadd.f32 %v1441, %v3012
      %3014 = vdwg.mxu0
      %3015 = vmatpush.msra.mxu0 %v1433
      %3016 = vmatpush.msra.mxu0 %v1427
      %3017 = vmatpush.msra.mxu0 %v1421
      %3018 = vmatpush.msra.mxu0 %v1415
      %3019 = vmatpush.msra.mxu0 %v1409
      %3020 = vmatpush.msra.mxu0 %v1403
      %3021 = vmatpush.msra.mxu0 %v1397
      %3022 = vmatpush.msra.mxu0 %v1391
      %3023 = vmatpush.msra.mxu0 %v1385
      %3024 = vmatpush.msra.mxu0 %v1379
      %3025 = vmatpush.msra.mxu0 %v1373
      %3026 = vmatpush.msra.mxu0 %v1367
      %3027 = vmatpush.msra.mxu0 %v1361
      %3028 = vmatpush.msra.mxu0 %v1355
      %3029 = vmatpush.msra.mxu0 %v1349
      %3030 = vmatpush.msra.mxu0 %v1343
      %3031 = vmatmul.f32.gmra.mxu0 %v2914
      %v3032 = vpop.f32.mrf.mxu0
      %v3033 = vadd.f32 %v3013, %v3032
      %3034 = vdwg.mxu0
      %3035 = vmatpush.msra.mxu0 %v1338
      %3036 = vmatpush.msra.mxu0 %v1332
      %3037 = vmatpush.msra.mxu0 %v1326
      %3038 = vmatpush.msra.mxu0 %v1320
      %3039 = vmatpush.msra.mxu0 %v1314
      %3040 = vmatpush.msra.mxu0 %v1308
      %3041 = vmatpush.msra.mxu0 %v1302
      %3042 = vmatpush.msra.mxu0 %v1296
      %3043 = vmatpush.msra.mxu0 %v1290
      %3044 = vmatpush.msra.mxu0 %v1284
      %3045 = vmatpush.msra.mxu0 %v1278
      %3046 = vmatpush.msra.mxu0 %v1272
      %3047 = vmatpush.msra.mxu0 %v1266
      %3048 = vmatpush.msra.mxu0 %v1260
      %3049 = vmatpush.msra.mxu0 %v1254
      %3050 = vmatpush.msra.mxu0 %v1248
      %3051 = vmatmul.f32.gmra.mxu0 %v2913
      %v3052 = vpop.f32.mrf.mxu0
      %v3053 = vadd.f32 %v1442, %v3052
      %3054 = vdwg.mxu0
      %3055 = vmatpush.msra.mxu0 %v1434
      %3056 = vmatpush.msra.mxu0 %v1428
      %3057 = vmatpush.msra.mxu0 %v1422
      %3058 = vmatpush.msra.mxu0 %v1416
      %3059 = vmatpush.msra.mxu0 %v1410
      %3060 = vmatpush.msra.mxu0 %v1404
      %3061 = vmatpush.msra.mxu0 %v1398
      %3062 = vmatpush.msra.mxu0 %v1392
      %3063 = vmatpush.msra.mxu0 %v1386
      %3064 = vmatpush.msra.mxu0 %v1380
      %3065 = vmatpush.msra.mxu0 %v1374
      %3066 = vmatpush.msra.mxu0 %v1368
      %3067 = vmatpush.msra.mxu0 %v1362
      %3068 = vmatpush.msra.mxu0 %v1356
      %3069 = vmatpush.msra.mxu0 %v1350
      %3070 = vmatpush.msra.mxu0 %v1344
      %3071 = vmatmul.f32.gmra.mxu0 %v2914
      %v3072 = vpop.f32.mrf.mxu0
      %v3073 = vadd.f32 %v3053, %v3072
      %3074 = vdwg.mxu0
      %3075 = vmatpush.msra.mxu0 %v1339
      %3076 = vmatpush.msra.mxu0 %v1333
      %3077 = vmatpush.msra.mxu0 %v1327
      %3078 = vmatpush.msra.mxu0 %v1321
      %3079 = vmatpush.msra.mxu0 %v1315
      %3080 = vmatpush.msra.mxu0 %v1309
      %3081 = vmatpush.msra.mxu0 %v1303
      %3082 = vmatpush.msra.mxu0 %v1297
      %3083 = vmatpush.msra.mxu0 %v1291
      %3084 = vmatpush.msra.mxu0 %v1285
      %3085 = vmatpush.msra.mxu0 %v1279
      %3086 = vmatpush.msra.mxu0 %v1273
      %3087 = vmatpush.msra.mxu0 %v1267
      %3088 = vmatpush.msra.mxu0 %v1261
      %3089 = vmatpush.msra.mxu0 %v1255
      %3090 = vmatpush.msra.mxu0 %v1249
      %3091 = vmatmul.f32.gmra.mxu0 %v2913
      %v3092 = vpop.f32.mrf.mxu0
      %v3093 = vadd.f32 %v1443, %v3092
      %3094 = vdwg.mxu0
      %3095 = vmatpush.msra.mxu0 %v1435
      %3096 = vmatpush.msra.mxu0 %v1429
      %3097 = vmatpush.msra.mxu0 %v1423
      %3098 = vmatpush.msra.mxu0 %v1417
      %3099 = vmatpush.msra.mxu0 %v1411
      %3100 = vmatpush.msra.mxu0 %v1405
      %3101 = vmatpush.msra.mxu0 %v1399
      %3102 = vmatpush.msra.mxu0 %v1393
      %3103 = vmatpush.msra.mxu0 %v1387
      %3104 = vmatpush.msra.mxu0 %v1381
      %3105 = vmatpush.msra.mxu0 %v1375
      %3106 = vmatpush.msra.mxu0 %v1369
      %3107 = vmatpush.msra.mxu0 %v1363
      %3108 = vmatpush.msra.mxu0 %v1357
      %3109 = vmatpush.msra.mxu0 %v1351
      %3110 = vmatpush.msra.mxu0 %v1345
      %3111 = vmatmul.f32.gmra.mxu0 %v2914
      %v3112 = vpop.f32.mrf.mxu0
      %v3113 = vadd.f32 %v3093, %v3112
      %3114 = vdwg.mxu0
      %3115 = vmatpush.msra.mxu0 %v1340
      %3116 = vmatpush.msra.mxu0 %v1334
      %3117 = vmatpush.msra.mxu0 %v1328
      %3118 = vmatpush.msra.mxu0 %v1322
      %3119 = vmatpush.msra.mxu0 %v1316
      %3120 = vmatpush.msra.mxu0 %v1310
      %3121 = vmatpush.msra.mxu0 %v1304
      %3122 = vmatpush.msra.mxu0 %v1298
      %3123 = vmatpush.msra.mxu0 %v1292
      %3124 = vmatpush.msra.mxu0 %v1286
      %3125 = vmatpush.msra.mxu0 %v1280
      %3126 = vmatpush.msra.mxu0 %v1274
      %3127 = vmatpush.msra.mxu0 %v1268
      %3128 = vmatpush.msra.mxu0 %v1262
      %3129 = vmatpush.msra.mxu0 %v1256
      %3130 = vmatpush.msra.mxu0 %v1250
      %3131 = vmatmul.f32.gmra.mxu0 %v2913
      %v3132 = vpop.f32.mrf.mxu0
      %v3133 = vadd.f32 %v1444, %v3132
      %3134 = vdwg.mxu0
      %3135 = vmatpush.msra.mxu0 %v1436
      %3136 = vmatpush.msra.mxu0 %v1430
      %3137 = vmatpush.msra.mxu0 %v1424
      %3138 = vmatpush.msra.mxu0 %v1418
      %3139 = vmatpush.msra.mxu0 %v1412
      %3140 = vmatpush.msra.mxu0 %v1406
      %3141 = vmatpush.msra.mxu0 %v1400
      %3142 = vmatpush.msra.mxu0 %v1394
      %3143 = vmatpush.msra.mxu0 %v1388
      %3144 = vmatpush.msra.mxu0 %v1382
      %3145 = vmatpush.msra.mxu0 %v1376
      %3146 = vmatpush.msra.mxu0 %v1370
      %3147 = vmatpush.msra.mxu0 %v1364
      %3148 = vmatpush.msra.mxu0 %v1358
      %3149 = vmatpush.msra.mxu0 %v1352
      %3150 = vmatpush.msra.mxu0 %v1346
      %3151 = vmatmul.f32.gmra.mxu0 %v2914
      %v3152 = vpop.f32.mrf.mxu0
      %v3153 = vadd.f32 %v3133, %v3152
      %3154 = vdwg.mxu0
      %s3155 = smul.addr %s1746, 8
      %s3156 = scalar_lea.vmem [#allocation2], %s3155
      %v3157 = vld [vmem:[%s3156] sm:$0xff]
      %v3158 = vld [vmem:[%s3156 + $0x8] sm:$0xff]
      %v3159 = vld [vmem:[%s3156 + $0x10] sm:$0xff]
      %v3160 = vadd.f32 %v3157, %v2953
      %v3161 = vadd.f32 %v3158, %v2993
      %v3162 = vxor.u32 %v3160, 2147483648
      %v3163 = vxor.u32 %v3161, 2147483648
      %v3164 = vmul.f32 %v3162, 1.442695
      %v3165 = vpow.pop %v3164
      %v3166 = vmul.f32 %v3163, 1.442695
      %v3167 = vpow.pop %v3166
      %v3168 = vadd.f32 %v3165, 1.0
      %v3169 = vadd.f32 %v3167, 1.0
      %v3170 = vrcp.pop %v3168
      %v3171 = vmul.f32 %v3168, %v3170
      %v3172 = vsub.f32 1.0, %v3171
      %v3173 = vmul.f32 %v3170, %v3172
      %v3174 = vadd.f32 %v3170, %v3173
      %vm3175 = vweird.f32 %v3168
      %vm3176 = vweird.f32 %v3170
      %vm3177 = vmor %vm3175, %vm3176
      %v3178 = vsel %vm3177, %v3170, %v3174
      %v3179 = vand.u32 2147483647, %v3168
      %vm3180 = vcmp.eq.f32.partialorder %v3179, 8.507059e+37
      %v3181 = vand.u32 %v3168, 2147483648
      %v3182 = vor.u32 1.1754944e-38, %v3181
      %v3183 = vsel %vm3180, %v3182, %v3178
      %v3184 = vmul.f32 1.0, %v3183
      %v3185 = vrcp.pop %v3169
      %v3186 = vmul.f32 %v3169, %v3185
      %v3187 = vsub.f32 1.0, %v3186
      %v3188 = vmul.f32 %v3185, %v3187
      %v3189 = vadd.f32 %v3185, %v3188
      %vm3190 = vweird.f32 %v3169
      %vm3191 = vweird.f32 %v3185
      %vm3192 = vmor %vm3190, %vm3191
      %v3193 = vsel %vm3192, %v3185, %v3189
      %v3194 = vand.u32 2147483647, %v3169
      %vm3195 = vcmp.eq.f32.partialorder %v3194, 8.507059e+37
      %v3196 = vand.u32 %v3169, 2147483648
      %v3197 = vor.u32 1.1754944e-38, %v3196
      %v3198 = vsel %vm3195, %v3197, %v3193
      %v3199 = vmul.f32 1.0, %v3198
      %v3200 = vmul.f32 %v3184, %v3033
      %v3201 = vadd.f32 %v3159, %v3200
      %v3202 = vtanh.pop %v3201
      %v3203 = vsub.f32 1.0, %v3199
      %v3204 = vmul.f32 %v3203, %v3202
      %v3205 = vmul.f32 %v3199, %v2913
      %v3206 = vadd.f32 %v3204, %v3205
      %s3207 = smul.addr %s1693, 8
      %s3208 = scalar_lea.vmem [#allocation3], %s3207
      %v3209 = vld [vmem:[%s3208] sm:$0xff]
      %v3210 = vld [vmem:[%s3208 + $0x8] sm:$0xff]
      %v3211 = vld [vmem:[%s3208 + $0x10] sm:$0xff]
      %v3212 = vadd.f32 %v3209, %v3073
      %v3213 = vadd.f32 %v3210, %v3113
      %v3214 = vxor.u32 %v3212, 2147483648
      %v3215 = vxor.u32 %v3213, 2147483648
      %v3216 = vmul.f32 %v3214, 1.442695
      %v3217 = vpow.pop %v3216
      %v3218 = vmul.f32 %v3215, 1.442695
      %v3219 = vpow.pop %v3218
      %v3220 = vadd.f32 %v3217, 1.0
      %v3221 = vadd.f32 %v3219, 1.0
      %v3222 = vrcp.pop %v3220
      %v3223 = vmul.f32 %v3220, %v3222
      %v3224 = vsub.f32 1.0, %v3223
      %v3225 = vmul.f32 %v3222, %v3224
      %v3226 = vadd.f32 %v3222, %v3225
      %vm3227 = vweird.f32 %v3220
      %vm3228 = vweird.f32 %v3222
      %vm3229 = vmor %vm3227, %vm3228
      %v3230 = vsel %vm3229, %v3222, %v3226
      %v3231 = vand.u32 2147483647, %v3220
      %vm3232 = vcmp.eq.f32.partialorder %v3231, 8.507059e+37
      %v3233 = vand.u32 %v3220, 2147483648
      %v3234 = vor.u32 1.1754944e-38, %v3233
      %v3235 = vsel %vm3232, %v3234, %v3230
      %v3236 = vmul.f32 1.0, %v3235
      %v3237 = vrcp.pop %v3221
      %v3238 = vmul.f32 %v3221, %v3237
      %v3239 = vsub.f32 1.0, %v3238
      %v3240 = vmul.f32 %v3237, %v3239
      %v3241 = vadd.f32 %v3237, %v3240
      %vm3242 = vweird.f32 %v3221
      %vm3243 = vweird.f32 %v3237
      %vm3244 = vmor %vm3242, %vm3243
      %v3245 = vsel %vm3244, %v3237, %v3241
      %v3246 = vand.u32 2147483647, %v3221
      %vm3247 = vcmp.eq.f32.partialorder %v3246, 8.507059e+37
      %v3248 = vand.u32 %v3221, 2147483648
      %v3249 = vor.u32 1.1754944e-38, %v3248
      %v3250 = vsel %vm3247, %v3249, %v3245
      %v3251 = vmul.f32 1.0, %v3250
      %v3252 = vmul.f32 %v3236, %v3153
      %v3253 = vadd.f32 %v3211, %v3252
      %v3254 = vtanh.pop %v3253
      %v3255 = vsub.f32 1.0, %v3251
      %v3256 = vmul.f32 %v3255, %v3254
      %v3257 = vmul.f32 %v3251, %v2914
      %v3258 = vadd.f32 %v3256, %v3257
      %s3259 = sadd.s32 %s1799, 4
      %p3260 = scmp.lt.s32.totalorder %s3259, 8
      %s3261 = scalar_select %p3260, 1, 0
      %v3262 = vstv %s3261
      %vm3263 = vcmp.eq.s32.totalorder %v3262, 1
      %v3264 = vsel %vm3263, %v3206, %v2913
      %p3265 = scmp.lt.s32.totalorder %s1806, 8
      %s3266 = scalar_select %p3265, 1, 0
      %v3267 = vstv %s3266
      %vm3268 = vcmp.eq.s32.totalorder %v3267, 1
      %v3269 = vsel %vm3268, %v3258, %v2914
      %3270 = vst [vmem:[#allocation4] sm:$0xff] %v3264
      %3271 = vst [vmem:[#allocation4 + $0x8] sm:$0xff] %v3269
      %s3272 = scalar_lea.vmem %s557, 32
      %3273 = vst [vmem:[%s3272] sm:$0xff] %v3264
      %3274 = vst [vmem:[%s564] sm:$0xff] %v3269
      %p3275 = scmp.eq.s32.totalorder %s26, 1
      // Predicated region
      $region73: #{encoder_forward.3} parent=67 // pred_check
        %p3276 = pneg %p3275
      $region74: #{encoder_forward.3} parent=67 // pred_check_branch
        %3278 = sbr.rel (%p3276) target = $region76
      $region75: #{encoder_forward.3} parent=67 // pred_region
        %v3279 = vld [vmem:[#allocation4] sm:$0xff]
        %3280 = vst [vmem:[%s14] sm:$0xff] %v3279
        %v3281 = vld [vmem:[#allocation4 + $0x8] sm:$0xff]
        %s3282 = scalar_lea.vmem %s14, 8
        %3283 = vst [vmem:[%s3282] sm:$0xff] %v3281
      $region76: #{encoder_forward.3} parent=67 // pred_fallthru
        _
      %s3284 = smul.u32 5, %s26
      %p3285 = scmp.lt.s32.totalorder %s3284, 9
      %s3286 = scalar_select %p3285, %s3284, 9
      %s3287 = smul.addr %s3286, 8
      %s3288 = scalar_lea.vmem %s12, %s3287
      %s3289 = ssub.s32 1, %s26
      %s3290 = smul.u32 5, %s3289
      %p3291 = scmp.lt.s32.totalorder %s3290, 9
      %s3292 = scalar_select %p3291, %s3290, 9
      %s3293 = smul.addr %s3292, 8
      %s3294 = scalar_lea.vmem %s13, %s3293
      // Predicated region
      $region77: #{encoder_forward.3} parent=67 // pred_check
        %p3295 = pneg %p320
      $region78: #{encoder_forward.3} parent=67 // pred_check_branch
        %3297 = sbr.rel (%p3295) target = $region80
      $region79: #{encoder_forward.3} parent=67 // pred_region
        %s3298 = smul.u32 5, %s26
      $region80: #{encoder_forward.3} parent=67 // pred_fallthru
        _
      // Predicated region
      $region81: #{encoder_forward.3} parent=67 // pred_check
        %p3299 = pneg %p348
      $region82: #{encoder_forward.3} parent=67 // pred_check_branch
        %3301 = sbr.rel (%p3299) target = $region84
      $region83: #{encoder_forward.3} parent=67 // pred_region
        %s3302 = ssub.s32 1, %s26
        %s3303 = smul.u32 5, %s3302
      $region84: #{encoder_forward.3} parent=67 // pred_fallthru
        _
      // Predicated region
      $region85: #{encoder_forward.3} parent=67 // pred_check
        %p3304 = pneg %p369
      $region86: #{encoder_forward.3} parent=67 // pred_check_branch
        %3306 = sbr.rel (%p3304) target = $region88
      $region87: #{encoder_forward.3} parent=67 // pred_region
        _
      $region88: #{encoder_forward.3} parent=67 // pred_fallthru
        _
      // Predicated region
      $region89: #{encoder_forward.3} parent=67 // pred_check
        %p3307 = pneg %p369
      $region90: #{encoder_forward.3} parent=67 // pred_check_branch
        %3309 = sbr.rel (%p3307) target = $region92
      $region91: #{encoder_forward.3} parent=67 // pred_region
        _
      $region92: #{encoder_forward.3} parent=67 // pred_fallthru
        _
    $region68: #{encoder_forward.3} parent=5 // pred_fallthru
      _
    %p3310 = scmp.le.s32.totalorder 2, %s21
    // Predicated region
    $region93: #{encoder_forward.3} parent=5 // pred_check
      %p3311 = pneg %p3310
    $region94: #{encoder_forward.3} parent=5 // pred_check_branch
      %3313 = sbr.rel (%p3311) target = $region96
    $region95: #{encoder_forward.3} parent=5 // pred_region
      %s3314 = ssub.s32 %s21, 2
      // Predicated region
      $region97: #{encoder_forward.3} parent=95 // pred_check
        %p3315 = pneg %p326
      $region98: #{encoder_forward.3} parent=95 // pred_check_branch
        %3317 = sbr.rel (%p3315) target = $region100
      $region99: #{encoder_forward.3} parent=95 // pred_region
        %s3318 = smul.u32 5, %s27
        %p3319 = scmp.lt.s32.totalorder %s3318, 9
        %s3320 = scalar_select %p3319, %s3318, 9
        %s3321 = smul.addr %s3320, 8
        %s3322 = scalar_lea.vmem %s12, %s3321
      $region100: #{encoder_forward.3} parent=95 // pred_fallthru
        _
      // Predicated region
      $region101: #{encoder_forward.3} parent=95 // pred_check
        %p3323 = pneg %p354
      $region102: #{encoder_forward.3} parent=95 // pred_check_branch
        %3325 = sbr.rel (%p3323) target = $region104
      $region103: #{encoder_forward.3} parent=95 // pred_region
        %s3326 = ssub.s32 1, %s27
        %s3327 = smul.u32 5, %s3326
        %p3328 = scmp.lt.s32.totalorder %s3327, 9
        %s3329 = scalar_select %p3328, %s3327, 9
        %s3330 = smul.addr %s3329, 8
        %s3331 = scalar_lea.vmem %s13, %s3330
      $region104: #{encoder_forward.3} parent=95 // pred_fallthru
        _
    $region96: #{encoder_forward.3} parent=5 // pred_fallthru
      _
  $region6: #{encoder_forward.3} parent=0 // loop_footer
    %s25 = sadd.s32 1, %s21
  $region7: #{encoder_forward.3} parent=0 // loop_footer_branch
    %20 = sbr.rel target = $region3
  $region8: #{encoder_forward.3} parent=0 // loop_exit
    _

</llo_original>
